<compile_context>
chip_gen: v5e
topology: v5e:2x2
jax: 0.10.0
libtpu: 0.0.40
codegen_flags: <defaults>
</compile_context>

<pallas_src>
import functools

import jax
import jax.numpy as jnp
from jax.experimental import pallas as pl
from jax.experimental.pallas import tpu as pltpu

_EPS = 1e-5


# --------------------------------------------------------------------------
# in-kernel helpers
# --------------------------------------------------------------------------
def _stage_padded(val, pad_ref):
    """Stage `val` (NB,H,W,C) into the interior of the (NB,H+2,W+2,Cp) pad
    scratch.  The spatial halo (and, when C < Cp, the channel padding) is
    re-zeroed every grid step so the persistent scratch is megacore-safe."""
    NB, Hp2, Wp2, Cp = pad_ref.shape
    H, W = Hp2 - 2, Wp2 - 2
    C = val.shape[-1]
    if C == Cp:
        # interior is fully overwritten below -> zero only the 1-px border
        zrow = jnp.zeros((NB, 1, Wp2, Cp), pad_ref.dtype)
        pad_ref[:, 0:1, :, :] = zrow
        pad_ref[:, H + 1:H + 2, :, :] = zrow
        zcol = jnp.zeros((NB, H, 1, Cp), pad_ref.dtype)
        pad_ref[:, 1:H + 1, 0:1, :] = zcol
        pad_ref[:, 1:H + 1, W + 1:W + 2, :] = zcol
    else:
        # small-C path: one bulk zero covers halo + channel padding
        pad_ref[...] = jnp.zeros_like(pad_ref)
    pad_ref[:, 1:H + 1, 1:W + 1, 0:C] = val.astype(pad_ref.dtype)


def _im2col_conv3x3(pad_ref, col_ref, w_ref, b_ref):
    """3x3 SAME conv as a single im2col matmul.

    The 9 shifted taps are staged as lane-aligned column blocks of the
    (flat, 9*Cp) scratch, then ONE MXU matmul against the pre-reshaped
    (9*Cp, Cp) weights produces the f32 result (bias fused), kept in vregs."""
    NB, Hp2, Wp2, Cp = pad_ref.shape
    H, W = Hp2 - 2, Wp2 - 2
    flat = NB * H * W
    for dy in range(3):
        for dx in range(3):
            j = dy * 3 + dx
            col_ref[:, j * Cp:(j + 1) * Cp] = (
                pad_ref[:, dy:dy + H, dx:dx + W, :].reshape(flat, Cp))
    y = jnp.dot(col_ref[...], w_ref[...], preferred_element_type=jnp.float32)
    return y + b_ref[...]


def _store_out_and_stats(y_f32, y_ref, stats_ref):
    """Single output store + single (1,2,Cp) per-tile stats store, both taken
    from the in-vreg f32 accumulator (no re-read of the output ref)."""
    NB, H, W, C = y_ref.shape
    Cp = y_f32.shape[-1]
    y_ref[...] = y_f32[:, 0:C].reshape(NB, H, W, C).astype(y_ref.dtype)
    s = jnp.sum(y_f32, axis=0, keepdims=True)             # (1, Cp)
    ss = jnp.sum(y_f32 * y_f32, axis=0, keepdims=True)    # (1, Cp)
    # NOTE: variance is later formed as E[x^2]-E[x]^2 in f32 -- adequate at
    # these scales; switch to centered partial sums if tolerances tighten.
    stats_ref[...] = jnp.concatenate([s, ss], axis=0).reshape(1, 2, Cp)


# --------------------------- pass 1 kernel --------------------------------
def _conv1_kernel(x_ref, w_ref, b_ref, y_ref, stats_ref, pad_ref, col_ref):
    _stage_padded(x_ref[...], pad_ref)
    y = _im2col_conv3x3(pad_ref, col_ref, w_ref, b_ref)
    _store_out_and_stats(y, y_ref, stats_ref)


# --------------------------- pass 2 kernel --------------------------------
def _bn_relu_conv2_kernel(y1_ref, s_ref, t_ref, w_ref, b_ref,
                          y2_ref, stats_ref, pad_ref, col_ref):
    NB, H, W, C = y1_ref.shape
    flat = NB * H * W
    # BN1 folded to one scale/shift FMA, fused with ReLU.
    z = jnp.maximum(y1_ref[...].reshape(flat, C) * s_ref[...] + t_ref[...],
                    0.0)
    _stage_padded(z.reshape(NB, H, W, C), pad_ref)
    y = _im2col_conv3x3(pad_ref, col_ref, w_ref, b_ref)
    _store_out_and_stats(y, y2_ref, stats_ref)


# --------------------------- pass 3 kernel --------------------------------
def _bn_add_relu_kernel(y2_ref, x_ref, s_ref, t_ref, o_ref):
    NB, H, W, C = o_ref.shape
    flat = NB * H * W
    y = y2_ref[...].reshape(flat, C) * s_ref[...] + t_ref[...]
    o = jnp.maximum(y + x_ref[...].reshape(flat, C), 0.0)
    o_ref[...] = o.reshape(NB, H, W, C)


# --------------------------------------------------------------------------
# wrapper-side sizing helpers (all run at trace time on static shapes)
# --------------------------------------------------------------------------
def _vmem_capacity_bytes():
    try:
        return int(pltpu.get_tpu_info().vmem_capacity_bytes)
    except Exception:            # conservative fallback = v7x per-TC VMEM
        return 64 << 20


def _vmem_estimate(nb, H, W, C, Cp, mxu_bytes):
    """Rough per-pass VMEM working set (pass 2 is the largest)."""
    act = nb * H * W * C * 4                              # f32 activation tile
    pad = nb * (H + 2) * (W + 2) * Cp * mxu_bytes         # padded-halo scratch
    col = nb * H * W * 9 * Cp * mxu_bytes                 # im2col scratch
    wts = 9 * Cp * Cp * mxu_bytes                         # reshaped weights
    # 2x for double-buffered in/out activation tiles and weights, plus
    # headroom for in-kernel temporaries / compiler scratch.
    return 4 * act + pad + col + 2 * wts + (8 << 20)


def _pick_nb(N, H, W, C, Cp, mxu_bytes, vmem_cap):
    divisors = [d for d in range(1, N + 1) if N % d == 0]
    feasible = [d for d in divisors
                if _vmem_estimate(d, H, W, C, Cp, mxu_bytes) <= vmem_cap]
    if not feasible:
        return 1
    # prefer >=2 grid steps (v7x has 2 TensorCores), an even step count, then
    # the largest tile (amortize per-grid-step overhead).
    return max(feasible, key=lambda d: (N // d >= 2, (N // d) % 2 == 0, d))


# --------------------------------------------------------------------------
# wrapper
# --------------------------------------------------------------------------
@functools.partial(jax.jit, static_argnames=("nb", "mxu_dtype"))
def residual_block(x_nchw, params, *, nb=None, mxu_dtype=jnp.float32):
    """PyTorch-compatible entry point: x_nchw is (N, C, H, W) float32.

    Conv weights in `params` are HWIO (3,3,Cin,Cout); a PyTorch OIHW weight
    maps via w.transpose(2, 3, 1, 0)."""
    f32 = jnp.float32
    mdt = jnp.dtype(mxu_dtype)
    mxu_bytes = mdt.itemsize

    N, C, H, W = x_nchw.shape
    Cp = ((C + 127) // 128) * 128          # lane-/MXU-dense channel padding

    vmem_cap_hw = _vmem_capacity_bytes()
    # keep headroom below physical VMEM (v7x: 64 MiB/TC, v5e/v6e: 128 MiB)
    vmem_cap = min(int(0.85 * vmem_cap_hw), vmem_cap_hw - (8 << 20))

    if nb is None:
        nb = _pick_nb(N, H, W, C, Cp, mxu_bytes, vmem_cap)
    assert N % nb == 0, (N, nb)
    n_tiles = N // nb

    est = _vmem_estimate(nb, H, W, C, Cp, mxu_bytes)
    # generation-aware cap, but never clamp below the working-set estimate
    vmem_limit = int(max(min(max(est, 32 << 20), vmem_cap), est))

    cparams = pltpu.CompilerParams(dimension_semantics=("parallel",),
                                   vmem_limit_bytes=vmem_limit)

    # ---- layout glue: only NCHW<->NHWC transposes; no halo pad / channel pad
    # of activations in HBM ---------------------------------------------------
    x_nhwc = jnp.transpose(x_nchw, (0, 2, 3, 1)).astype(f32)      # (N,H,W,C)

    def prep_w(w):   # (3,3,C,C) HWIO -> (9*Cp, Cp) for the im2col matmul
        wp = jnp.pad(w.astype(f32),
                     ((0, 0), (0, 0), (0, Cp - C), (0, Cp - C)))
        return wp.reshape(9 * Cp, Cp).astype(mdt)

    def prep_b(b):   # (C,) / (1,C) -> (1, Cp) f32
        return jnp.pad(b.astype(f32).reshape(1, C), ((0, 0), (0, Cp - C)))

    w1, b1 = prep_w(params["w1"]), prep_b(params["b1"])
    w2, b2 = prep_w(params["w2"]), prep_b(params["b2"])
    g1 = params["g1"].astype(f32).reshape(C)
    be1 = params["be1"].astype(f32).reshape(C)
    g2 = params["g2"].astype(f32).reshape(C)
    be2 = params["be2"].astype(f32).reshape(C)

    # ---- specs ---------------------------------------------------------------
    act_spec = pl.BlockSpec((nb, H, W, C), lambda i: (i, 0, 0, 0))
    w_spec = pl.BlockSpec((9 * Cp, Cp), lambda i: (0, 0))
    bias_spec = pl.BlockSpec((1, Cp), lambda i: (0, 0))
    vec_spec = pl.BlockSpec((1, C), lambda i: (0, 0))
    stats_spec = pl.BlockSpec((1, 2, Cp), lambda i: (i, 0, 0))

    act_shape = jax.ShapeDtypeStruct((N, H, W, C), f32)
    stats_shape = jax.ShapeDtypeStruct((n_tiles, 2, Cp), f32)

    def conv_scratch():
        return [pltpu.VMEM((nb, H + 2, W + 2, Cp), mdt),    # padded-halo taps
                pltpu.VMEM((nb * H * W, 9 * Cp), mdt)]      # im2col buffer

    cnt = float(N * H * W)

    def fold_bn(stats, gamma, beta):
        s = jnp.sum(stats, axis=0)[:, :C]        # tiny cross-tile reduction
        mean = s[0] / cnt
        var = jnp.maximum(s[1] / cnt - mean * mean, 0.0)
        inv = jax.lax.rsqrt(var + _EPS)
        scale = gamma * inv
        shift = beta - mean * scale
        return scale.reshape(1, C), shift.reshape(1, C)

    # --- pass 1: conv1 + bias, fused per-tile BN stats ------------------------
    y1, st1 = pl.pallas_call(
        _conv1_kernel,
        out_shape=(act_shape, stats_shape),
        grid=(n_tiles,),
        in_specs=[act_spec, w_spec, bias_spec],
        out_specs=(act_spec, stats_spec),
        scratch_shapes=conv_scratch(),
        compiler_params=cparams,
    )(x_nhwc, w1, b1)

    scale1, shift1 = fold_bn(st1, g1, be1)

    # --- pass 2: BN1 scale/shift + ReLU + conv2 + bias + fused stats ----------
    y2, st2 = pl.pallas_call(
        _bn_relu_conv2_kernel,
        out_shape=(act_shape, stats_shape),
        grid=(n_tiles,),
        in_specs=[act_spec, vec_spec, vec_spec, w_spec, bias_spec],
        out_specs=(act_spec, stats_spec),
        scratch_shapes=conv_scratch(),
        compiler_params=cparams,
    )(y1, scale1, shift1, w2, b2)

    scale2, shift2 = fold_bn(st2, g2, be2)

    # --- pass 3: BN2 scale/shift + residual add + ReLU ------------------------
    out_nhwc = pl.pallas_call(
        _bn_add_relu_kernel,
        out_shape=act_shape,
        grid=(n_tiles,),
        in_specs=[act_spec, act_spec, vec_spec, vec_spec],
        out_specs=act_spec,
        compiler_params=cparams,
    )(y2, x_nhwc, scale2, shift2)

    return jnp.transpose(out_nhwc, (0, 3, 1, 2))     # NHWC -> NCHW


# ---------------- pure-JAX reference (for correctness check only) ----------
def _ref_forward(x_nchw, params):
    x = jnp.transpose(x_nchw, (0, 2, 3, 1))  # NHWC
    dn = ("NHWC", "HWIO", "NHWC")

    def conv(x, w, b):
        y = jax.lax.conv_general_dilated(x, w, (1, 1), "SAME",
                                         dimension_numbers=dn)
        return y + b.reshape(1, 1, 1, -1)

    def bn(y, g, be, eps=_EPS):
        mean = y.mean(axis=(0, 1, 2), keepdims=True)
        var = ((y - mean) ** 2).mean(axis=(0, 1, 2), keepdims=True)
        return (y - mean) * jax.lax.rsqrt(var + eps) * g.reshape(1, 1, 1, -1) \
            + be.reshape(1, 1, 1, -1)

    y = jnp.maximum(bn(conv(x, params["w1"], params["b1"]),
                       params["g1"], params["be1"]), 0.0)
    y = bn(conv(y, params["w2"], params["b2"]), params["g2"], params["be2"])
    y = jnp.maximum(y + x, 0.0)
    return jnp.transpose(y, (0, 3, 1, 2))


if __name__ == "__main__":
    # Small shapes consistent with the module: residual add forces Cin == Cout.
    N, C, H, W = 2, 4, 16, 16

    key = jax.random.PRNGKey(0)
    kx, kw1, kb1, kw2, kb2 = jax.random.split(key, 5)

    x = jax.random.normal(kx, (N, C, H, W), jnp.float32)

    params = {
        # conv weights in HWIO layout (3, 3, Cin, Cout), deterministic init
        "w1": 0.1 * jax.random.normal(kw1, (3, 3, C, C), jnp.float32),
        "b1": 0.1 * jax.random.normal(kb1, (C,), jnp.float32),
        "g1": jnp.ones((C,), jnp.float32),     # BatchNorm2d default gamma
        "be1": jnp.zeros((C,), jnp.float32),   # BatchNorm2d default beta
        "w2": 0.1 * jax.random.normal(kw2, (3, 3, C, C), jnp.float32),
        "b2": 0.1 * jax.random.normal(kb2, (C,), jnp.float32),
        "g2": jnp.ones((C,), jnp.float32),
        "be2": jnp.zeros((C,), jnp.float32),
    }

    out = jax.block_until_ready(residual_block(x, params))
    ref = jax.block_until_ready(_ref_forward(x, params))

    assert out.shape == (N, C, H, W), out.shape
    err = float(jnp.max(jnp.abs(out - ref)))
    assert jnp.allclose(out, ref, atol=2e-3, rtol=2e-3), err

    print("KERNEL_OK")
</pallas_src>

<mosaic_0001>
module attributes {stable_mosaic.version = 11 : i64} {
  func.func @_conv1_kernel(%arg0: i32, %arg1: memref<1x16x16x4xf32, #tpu.memory_space<vmem>>, %arg2: memref<1152x128xf32, #tpu.memory_space<vmem>>, %arg3: memref<1x128xf32, #tpu.memory_space<vmem>>, %arg4: memref<1x16x16x4xf32, #tpu.memory_space<vmem>>, %arg5: memref<1x2x128xf32, #tpu.memory_space<vmem>>, %arg6: memref<1x18x18x128xf32, #tpu.memory_space<vmem>>, %arg7: memref<256x1152xf32, #tpu.memory_space<vmem>>) attributes {dimension_semantics = [#tpu.dimension_semantics<parallel>], iteration_bounds = array<i64: 2>, scalar_prefetch = 0 : i64, scratch_operands = 2 : i64, tpu.core_type = #tpu.core_type<tc>, window_params = [{transform_indices = @transform_0, window_bounds = array<i64: 1, 16, 16, 4>}, {pipeline_mode = #tpu.pipeline_mode<synchronous>, transform_indices = @transform_1, window_bounds = array<i64: 1152, 128>}, {pipeline_mode = #tpu.pipeline_mode<synchronous>, transform_indices = @transform_2, window_bounds = array<i64: 1, 128>}, {transform_indices = @transform_3, window_bounds = array<i64: 1, 16, 16, 4>}, {transform_indices = @transform_4, window_bounds = array<i64: 1, 2, 128>}]} {
    %c0 = arith.constant 0 : index
    %c0_0 = arith.constant 0 : index
    %c0_1 = arith.constant 0 : index
    %c0_2 = arith.constant 0 : index
    %0 = vector.load %arg1[%c0, %c0_0, %c0_1, %c0_2] : memref<1x16x16x4xf32, #tpu.memory_space<vmem>>, vector<1x16x16x4xf32>
    %cst = arith.constant 0.000000e+00 : f32
    %1 = vector.broadcast %cst : f32 to vector<1x18x18x128xf32>
    %c0_3 = arith.constant 0 : index
    %c0_4 = arith.constant 0 : index
    %c0_5 = arith.constant 0 : index
    %c0_6 = arith.constant 0 : index
    %2 = vector.load %arg6[%c0_3, %c0_4, %c0_5, %c0_6] : memref<1x18x18x128xf32, #tpu.memory_space<vmem>>, vector<1x18x18x128xf32>
    tpu.vector_store %arg6[%c0_3, %c0_4, %c0_5, %c0_6], %1 {strides = array<i32>} : memref<1x18x18x128xf32, #tpu.memory_space<vmem>>, vector<1x18x18x128xf32>,
    %c0_7 = arith.constant 0 : index
    %c1 = arith.constant 1 : index
    %c1_8 = arith.constant 1 : index
    %c0_9 = arith.constant 0 : index
    %3 = vector.load %arg6[%c0_7, %c1, %c1_8, %c0_9] : memref<1x18x18x128xf32, #tpu.memory_space<vmem>>, vector<1x16x16x4xf32>
    tpu.vector_store %arg6[%c0_7, %c1, %c1_8, %c0_9], %0 {strides = array<i32>} : memref<1x18x18x128xf32, #tpu.memory_space<vmem>>, vector<1x16x16x4xf32>,
    %c0_10 = arith.constant 0 : index
    %c0_11 = arith.constant 0 : index
    %c0_12 = arith.constant 0 : index
    %c0_13 = arith.constant 0 : index
    %4 = vector.load %arg6[%c0_10, %c0_11, %c0_12, %c0_13] : memref<1x18x18x128xf32, #tpu.memory_space<vmem>>, vector<1x16x16x128xf32>
    %5 = vector.shape_cast %4 : vector<1x16x16x128xf32> to vector<256x128xf32>
    %c0_14 = arith.constant 0 : index
    %c0_15 = arith.constant 0 : index
    %6 = vector.load %arg7[%c0_14, %c0_15] : memref<256x1152xf32, #tpu.memory_space<vmem>>, vector<256x128xf32>
    tpu.vector_store %arg7[%c0_14, %c0_15], %5 {strides = array<i32>} : memref<256x1152xf32, #tpu.memory_space<vmem>>, vector<256x128xf32>,
    %c0_16 = arith.constant 0 : index
    %c0_17 = arith.constant 0 : index
    %c1_18 = arith.constant 1 : index
    %c0_19 = arith.constant 0 : index
    %7 = vector.load %arg6[%c0_16, %c0_17, %c1_18, %c0_19] : memref<1x18x18x128xf32, #tpu.memory_space<vmem>>, vector<1x16x16x128xf32>
    %8 = vector.shape_cast %7 : vector<1x16x16x128xf32> to vector<256x128xf32>
    %c0_20 = arith.constant 0 : index
    %c128 = arith.constant 128 : index
    %9 = vector.load %arg7[%c0_20, %c128] : memref<256x1152xf32, #tpu.memory_space<vmem>>, vector<256x128xf32>
    tpu.vector_store %arg7[%c0_20, %c128], %8 {strides = array<i32>} : memref<256x1152xf32, #tpu.memory_space<vmem>>, vector<256x128xf32>,
    %c0_21 = arith.constant 0 : index
    %c0_22 = arith.constant 0 : index
    %c2 = arith.constant 2 : index
    %c0_23 = arith.constant 0 : index
    %10 = vector.load %arg6[%c0_21, %c0_22, %c2, %c0_23] : memref<1x18x18x128xf32, #tpu.memory_space<vmem>>, vector<1x16x16x128xf32>
    %11 = vector.shape_cast %10 : vector<1x16x16x128xf32> to vector<256x128xf32>
    %c0_24 = arith.constant 0 : index
    %c256 = arith.constant 256 : index
    %12 = vector.load %arg7[%c0_24, %c256] : memref<256x1152xf32, #tpu.memory_space<vmem>>, vector<256x128xf32>
    tpu.vector_store %arg7[%c0_24, %c256], %11 {strides = array<i32>} : memref<256x1152xf32, #tpu.memory_space<vmem>>, vector<256x128xf32>,
    %c0_25 = arith.constant 0 : index
    %c1_26 = arith.constant 1 : index
    %c0_27 = arith.constant 0 : index
    %c0_28 = arith.constant 0 : index
    %13 = vector.load %arg6[%c0_25, %c1_26, %c0_27, %c0_28] : memref<1x18x18x128xf32, #tpu.memory_space<vmem>>, vector<1x16x16x128xf32>
    %14 = vector.shape_cast %13 : vector<1x16x16x128xf32> to vector<256x128xf32>
    %c0_29 = arith.constant 0 : index
    %c384 = arith.constant 384 : index
    %15 = vector.load %arg7[%c0_29, %c384] : memref<256x1152xf32, #tpu.memory_space<vmem>>, vector<256x128xf32>
    tpu.vector_store %arg7[%c0_29, %c384], %14 {strides = array<i32>} : memref<256x1152xf32, #tpu.memory_space<vmem>>, vector<256x128xf32>,
    %c0_30 = arith.constant 0 : index
    %c1_31 = arith.constant 1 : index
    %c1_32 = arith.constant 1 : index
    %c0_33 = arith.constant 0 : index
    %16 = vector.load %arg6[%c0_30, %c1_31, %c1_32, %c0_33] : memref<1x18x18x128xf32, #tpu.memory_space<vmem>>, vector<1x16x16x128xf32>
    %17 = vector.shape_cast %16 : vector<1x16x16x128xf32> to vector<256x128xf32>
    %c0_34 = arith.constant 0 : index
    %c512 = arith.constant 512 : index
    %18 = vector.load %arg7[%c0_34, %c512] : memref<256x1152xf32, #tpu.memory_space<vmem>>, vector<256x128xf32>
    tpu.vector_store %arg7[%c0_34, %c512], %17 {strides = array<i32>} : memref<256x1152xf32, #tpu.memory_space<vmem>>, vector<256x128xf32>,
    %c0_35 = arith.constant 0 : index
    %c1_36 = arith.constant 1 : index
    %c2_37 = arith.constant 2 : index
    %c0_38 = arith.constant 0 : index
    %19 = vector.load %arg6[%c0_35, %c1_36, %c2_37, %c0_38] : memref<1x18x18x128xf32, #tpu.memory_space<vmem>>, vector<1x16x16x128xf32>
    %20 = vector.shape_cast %19 : vector<1x16x16x128xf32> to vector<256x128xf32>
    %c0_39 = arith.constant 0 : index
    %c640 = arith.constant 640 : index
    %21 = vector.load %arg7[%c0_39, %c640] : memref<256x1152xf32, #tpu.memory_space<vmem>>, vector<256x128xf32>
    tpu.vector_store %arg7[%c0_39, %c640], %20 {strides = array<i32>} : memref<256x1152xf32, #tpu.memory_space<vmem>>, vector<256x128xf32>,
    %c0_40 = arith.constant 0 : index
    %c2_41 = arith.constant 2 : index
    %c0_42 = arith.constant 0 : index
    %c0_43 = arith.constant 0 : index
    %22 = vector.load %arg6[%c0_40, %c2_41, %c0_42, %c0_43] : memref<1x18x18x128xf32, #tpu.memory_space<vmem>>, vector<1x16x16x128xf32>
    %23 = vector.shape_cast %22 : vector<1x16x16x128xf32> to vector<256x128xf32>
    %c0_44 = arith.constant 0 : index
    %c768 = arith.constant 768 : index
    %24 = vector.load %arg7[%c0_44, %c768] : memref<256x1152xf32, #tpu.memory_space<vmem>>, vector<256x128xf32>
    tpu.vector_store %arg7[%c0_44, %c768], %23 {strides = array<i32>} : memref<256x1152xf32, #tpu.memory_space<vmem>>, vector<256x128xf32>,
    %c0_45 = arith.constant 0 : index
    %c2_46 = arith.constant 2 : index
    %c1_47 = arith.constant 1 : index
    %c0_48 = arith.constant 0 : index
    %25 = vector.load %arg6[%c0_45, %c2_46, %c1_47, %c0_48] : memref<1x18x18x128xf32, #tpu.memory_space<vmem>>, vector<1x16x16x128xf32>
    %26 = vector.shape_cast %25 : vector<1x16x16x128xf32> to vector<256x128xf32>
    %c0_49 = arith.constant 0 : index
    %c896 = arith.constant 896 : index
    %27 = vector.load %arg7[%c0_49, %c896] : memref<256x1152xf32, #tpu.memory_space<vmem>>, vector<256x128xf32>
    tpu.vector_store %arg7[%c0_49, %c896], %26 {strides = array<i32>} : memref<256x1152xf32, #tpu.memory_space<vmem>>, vector<256x128xf32>,
    %c0_50 = arith.constant 0 : index
    %c2_51 = arith.constant 2 : index
    %c2_52 = arith.constant 2 : index
    %c0_53 = arith.constant 0 : index
    %28 = vector.load %arg6[%c0_50, %c2_51, %c2_52, %c0_53] : memref<1x18x18x128xf32, #tpu.memory_space<vmem>>, vector<1x16x16x128xf32>
    %29 = vector.shape_cast %28 : vector<1x16x16x128xf32> to vector<256x128xf32>
    %c0_54 = arith.constant 0 : index
    %c1024 = arith.constant 1024 : index
    %30 = vector.load %arg7[%c0_54, %c1024] : memref<256x1152xf32, #tpu.memory_space<vmem>>, vector<256x128xf32>
    tpu.vector_store %arg7[%c0_54, %c1024], %29 {strides = array<i32>} : memref<256x1152xf32, #tpu.memory_space<vmem>>, vector<256x128xf32>,
    %c0_55 = arith.constant 0 : index
    %c0_56 = arith.constant 0 : index
    %31 = vector.load %arg7[%c0_55, %c0_56] : memref<256x1152xf32, #tpu.memory_space<vmem>>, vector<256x1152xf32>
    %c0_57 = arith.constant 0 : index
    %c0_58 = arith.constant 0 : index
    %32 = vector.load %arg2[%c0_57, %c0_58] : memref<1152x128xf32, #tpu.memory_space<vmem>>, vector<1152x128xf32>
    %cst_59 = arith.constant dense<0.000000e+00> : vector<256x128xf32>
    %33 = tpu.matmul %31, %32, %cst_59 {dimension_numbers = #tpu.dot_dimension_numbers<[1], [0], [0], [1], [0, 0, 1, 1], [], []>} : vector<256x1152xf32>, vector<1152x128xf32>, vector<256x128xf32> -> vector<256x128xf32>
    %c0_60 = arith.constant 0 : index
    %c0_61 = arith.constant 0 : index
    %34 = vector.load %arg3[%c0_60, %c0_61] : memref<1x128xf32, #tpu.memory_space<vmem>>, vector<1x128xf32>
    %35 = vector.broadcast %34 : vector<1x128xf32> to vector<256x128xf32>
    %36 = arith.addf %33, %35 : vector<256x128xf32>
    %37 = vector.extract_strided_slice %36 {offsets = [0, 0], sizes = [256, 4], strides = [1, 1]} : vector<256x128xf32> to vector<256x4xf32>
    %38 = vector.shape_cast %37 : vector<256x4xf32> to vector<1x16x16x4xf32>
    %c0_62 = arith.constant 0 : index
    %c0_63 = arith.constant 0 : index
    %c0_64 = arith.constant 0 : index
    %c0_65 = arith.constant 0 : index
    %39 = vector.load %arg4[%c0_62, %c0_63, %c0_64, %c0_65] : memref<1x16x16x4xf32, #tpu.memory_space<vmem>>, vector<1x16x16x4xf32>
    tpu.vector_store %arg4[%c0_62, %c0_63, %c0_64, %c0_65], %38 {strides = array<i32>} : memref<1x16x16x4xf32, #tpu.memory_space<vmem>>, vector<1x16x16x4xf32>,
    %cst_66 = arith.constant dense<0.000000e+00> : vector<128xf32>
    %40 = vector.multi_reduction <add>, %36, %cst_66 [0] : vector<256x128xf32> to vector<128xf32>
    %41 = vector.shape_cast %40 : vector<128xf32> to vector<1x128xf32>
    %42 = arith.mulf %36, %36 : vector<256x128xf32>
    %cst_67 = arith.constant dense<0.000000e+00> : vector<128xf32>
    %43 = vector.multi_reduction <add>, %42, %cst_67 [0] : vector<256x128xf32> to vector<128xf32>
    %44 = vector.shape_cast %43 : vector<128xf32> to vector<1x128xf32>
    %45 = tpu.concatenate %41, %44 in 0 : vector<1x128xf32>, vector<1x128xf32> -> vector<2x128xf32>
    %46 = vector.shape_cast %45 : vector<2x128xf32> to vector<1x2x128xf32>
    %c0_68 = arith.constant 0 : index
    %c0_69 = arith.constant 0 : index
    %c0_70 = arith.constant 0 : index
    %47 = vector.load %arg5[%c0_68, %c0_69, %c0_70] : memref<1x2x128xf32, #tpu.memory_space<vmem>>, vector<1x2x128xf32>
    tpu.vector_store %arg5[%c0_68, %c0_69, %c0_70], %46 {strides = array<i32>} : memref<1x2x128xf32, #tpu.memory_space<vmem>>, vector<1x2x128xf32>,
    return
  }
  func.func @transform_0(%arg0: i32) -> (i32, i32, i32, i32) {
    %c0_i32 = arith.constant 0 : i32
    %c0_i32_0 = arith.constant 0 : i32
    %c0_i32_1 = arith.constant 0 : i32
    %c0_i32_2 = arith.constant 0 : i32
    return %arg0, %c0_i32, %c0_i32_0, %c0_i32_1 : i32, i32, i32, i32
  }
  func.func @transform_1(%arg0: i32) -> (i32, i32) {
    %c0_i32 = arith.constant 0 : i32
    %c0_i32_0 = arith.constant 0 : i32
    %c0_i32_1 = arith.constant 0 : i32
    return %c0_i32, %c0_i32_0 : i32, i32
  }
  func.func @transform_2(%arg0: i32) -> (i32, i32) {
    %c0_i32 = arith.constant 0 : i32
    %c0_i32_0 = arith.constant 0 : i32
    %c0_i32_1 = arith.constant 0 : i32
    return %c0_i32, %c0_i32_0 : i32, i32
  }
  func.func @transform_3(%arg0: i32) -> (i32, i32, i32, i32) {
    %c0_i32 = arith.constant 0 : i32
    %c0_i32_0 = arith.constant 0 : i32
    %c0_i32_1 = arith.constant 0 : i32
    %c0_i32_2 = arith.constant 0 : i32
    return %arg0, %c0_i32, %c0_i32_0, %c0_i32_1 : i32, i32, i32, i32
  }
  func.func @transform_4(%arg0: i32) -> (i32, i32, i32) {
    %c0_i32 = arith.constant 0 : i32
    %c0_i32_0 = arith.constant 0 : i32
    %c0_i32_1 = arith.constant 0 : i32
    return %arg0, %c0_i32, %c0_i32_0 : i32, i32, i32
  }
}

module attributes {stable_mosaic.version = 11 : i64} {
  func.func @_bn_relu_conv2_kernel(%arg0: i32, %arg1: memref<1x16x16x4xf32, #tpu.memory_space<vmem>>, %arg2: memref<1x4xf32, #tpu.memory_space<vmem>>, %arg3: memref<1x4xf32, #tpu.memory_space<vmem>>, %arg4: memref<1152x128xf32, #tpu.memory_space<vmem>>, %arg5: memref<1x128xf32, #tpu.memory_space<vmem>>, %arg6: memref<1x16x16x4xf32, #tpu.memory_space<vmem>>, %arg7: memref<1x2x128xf32, #tpu.memory_space<vmem>>, %arg8: memref<1x18x18x128xf32, #tpu.memory_space<vmem>>, %arg9: memref<256x1152xf32, #tpu.memory_space<vmem>>) attributes {dimension_semantics = [#tpu.dimension_semantics<parallel>], iteration_bounds = array<i64: 2>, scalar_prefetch = 0 : i64, scratch_operands = 2 : i64, tpu.core_type = #tpu.core_type<tc>, window_params = [{transform_indices = @transform_0, window_bounds = array<i64: 1, 16, 16, 4>}, {pipeline_mode = #tpu.pipeline_mode<synchronous>, transform_indices = @transform_1, window_bounds = array<i64: 1, 4>}, {pipeline_mode = #tpu.pipeline_mode<synchronous>, transform_indices = @transform_2, window_bounds = array<i64: 1, 4>}, {pipeline_mode = #tpu.pipeline_mode<synchronous>, transform_indices = @transform_3, window_bounds = array<i64: 1152, 128>}, {pipeline_mode = #tpu.pipeline_mode<synchronous>, transform_indices = @transform_4, window_bounds = array<i64: 1, 128>}, {transform_indices = @transform_5, window_bounds = array<i64: 1, 16, 16, 4>}, {transform_indices = @transform_6, window_bounds = array<i64: 1, 2, 128>}]} {
    %c0 = arith.constant 0 : index
    %c0_0 = arith.constant 0 : index
    %c0_1 = arith.constant 0 : index
    %c0_2 = arith.constant 0 : index
    %0 = vector.load %arg1[%c0, %c0_0, %c0_1, %c0_2] : memref<1x16x16x4xf32, #tpu.memory_space<vmem>>, vector<1x16x16x4xf32>
    %1 = vector.shape_cast %0 : vector<1x16x16x4xf32> to vector<256x4xf32>
    %c0_3 = arith.constant 0 : index
    %c0_4 = arith.constant 0 : index
    %2 = vector.load %arg2[%c0_3, %c0_4] : memref<1x4xf32, #tpu.memory_space<vmem>>, vector<1x4xf32>
    %3 = vector.broadcast %2 : vector<1x4xf32> to vector<256x4xf32>
    %4 = arith.mulf %1, %3 : vector<256x4xf32>
    %c0_5 = arith.constant 0 : index
    %c0_6 = arith.constant 0 : index
    %5 = vector.load %arg3[%c0_5, %c0_6] : memref<1x4xf32, #tpu.memory_space<vmem>>, vector<1x4xf32>
    %6 = vector.broadcast %5 : vector<1x4xf32> to vector<256x4xf32>
    %7 = arith.addf %4, %6 : vector<256x4xf32>
    %cst = arith.constant 0.000000e+00 : f32
    %8 = vector.broadcast %cst : f32 to vector<256x4xf32>
    %9 = arith.maximumf %7, %8 : vector<256x4xf32>
    %10 = vector.shape_cast %9 : vector<256x4xf32> to vector<1x16x16x4xf32>
    %cst_7 = arith.constant 0.000000e+00 : f32
    %11 = vector.broadcast %cst_7 : f32 to vector<1x18x18x128xf32>
    %c0_8 = arith.constant 0 : index
    %c0_9 = arith.constant 0 : index
    %c0_10 = arith.constant 0 : index
    %c0_11 = arith.constant 0 : index
    %12 = vector.load %arg8[%c0_8, %c0_9, %c0_10, %c0_11] : memref<1x18x18x128xf32, #tpu.memory_space<vmem>>, vector<1x18x18x128xf32>
    tpu.vector_store %arg8[%c0_8, %c0_9, %c0_10, %c0_11], %11 {strides = array<i32>} : memref<1x18x18x128xf32, #tpu.memory_space<vmem>>, vector<1x18x18x128xf32>,
    %c0_12 = arith.constant 0 : index
    %c1 = arith.constant 1 : index
    %c1_13 = arith.constant 1 : index
    %c0_14 = arith.constant 0 : index
    %13 = vector.load %arg8[%c0_12, %c1, %c1_13, %c0_14] : memref<1x18x18x128xf32, #tpu.memory_space<vmem>>, vector<1x16x16x4xf32>
    tpu.vector_store %arg8[%c0_12, %c1, %c1_13, %c0_14], %10 {strides = array<i32>} : memref<1x18x18x128xf32, #tpu.memory_space<vmem>>, vector<1x16x16x4xf32>,
    %c0_15 = arith.constant 0 : index
    %c0_16 = arith.constant 0 : index
    %c0_17 = arith.constant 0 : index
    %c0_18 = arith.constant 0 : index
    %14 = vector.load %arg8[%c0_15, %c0_16, %c0_17, %c0_18] : memref<1x18x18x128xf32, #tpu.memory_space<vmem>>, vector<1x16x16x128xf32>
    %15 = vector.shape_cast %14 : vector<1x16x16x128xf32> to vector<256x128xf32>
    %c0_19 = arith.constant 0 : index
    %c0_20 = arith.constant 0 : index
    %16 = vector.load %arg9[%c0_19, %c0_20] : memref<256x1152xf32, #tpu.memory_space<vmem>>, vector<256x128xf32>
    tpu.vector_store %arg9[%c0_19, %c0_20], %15 {strides = array<i32>} : memref<256x1152xf32, #tpu.memory_space<vmem>>, vector<256x128xf32>,
    %c0_21 = arith.constant 0 : index
    %c0_22 = arith.constant 0 : index
    %c1_23 = arith.constant 1 : index
    %c0_24 = arith.constant 0 : index
    %17 = vector.load %arg8[%c0_21, %c0_22, %c1_23, %c0_24] : memref<1x18x18x128xf32, #tpu.memory_space<vmem>>, vector<1x16x16x128xf32>
    %18 = vector.shape_cast %17 : vector<1x16x16x128xf32> to vector<256x128xf32>
    %c0_25 = arith.constant 0 : index
    %c128 = arith.constant 128 : index
    %19 = vector.load %arg9[%c0_25, %c128] : memref<256x1152xf32, #tpu.memory_space<vmem>>, vector<256x128xf32>
    tpu.vector_store %arg9[%c0_25, %c128], %18 {strides = array<i32>} : memref<256x1152xf32, #tpu.memory_space<vmem>>, vector<256x128xf32>,
    %c0_26 = arith.constant 0 : index
    %c0_27 = arith.constant 0 : index
    %c2 = arith.constant 2 : index
    %c0_28 = arith.constant 0 : index
    %20 = vector.load %arg8[%c0_26, %c0_27, %c2, %c0_28] : memref<1x18x18x128xf32, #tpu.memory_space<vmem>>, vector<1x16x16x128xf32>
    %21 = vector.shape_cast %20 : vector<1x16x16x128xf32> to vector<256x128xf32>
    %c0_29 = arith.constant 0 : index
    %c256 = arith.constant 256 : index
    %22 = vector.load %arg9[%c0_29, %c256] : memref<256x1152xf32, #tpu.memory_space<vmem>>, vector<256x128xf32>
    tpu.vector_store %arg9[%c0_29, %c256], %21 {strides = array<i32>} : memref<256x1152xf32, #tpu.memory_space<vmem>>, vector<256x128xf32>,
    %c0_30 = arith.constant 0 : index
    %c1_31 = arith.constant 1 : index
    %c0_32 = arith.constant 0 : index
    %c0_33 = arith.constant 0 : index
    %23 = vector.load %arg8[%c0_30, %c1_31, %c0_32, %c0_33] : memref<1x18x18x128xf32, #tpu.memory_space<vmem>>, vector<1x16x16x128xf32>
    %24 = vector.shape_cast %23 : vector<1x16x16x128xf32> to vector<256x128xf32>
    %c0_34 = arith.constant 0 : index
    %c384 = arith.constant 384 : index
    %25 = vector.load %arg9[%c0_34, %c384] : memref<256x1152xf32, #tpu.memory_space<vmem>>, vector<256x128xf32>
    tpu.vector_store %arg9[%c0_34, %c384], %24 {strides = array<i32>} : memref<256x1152xf32, #tpu.memory_space<vmem>>, vector<256x128xf32>,
    %c0_35 = arith.constant 0 : index
    %c1_36 = arith.constant 1 : index
    %c1_37 = arith.constant 1 : index
    %c0_38 = arith.constant 0 : index
    %26 = vector.load %arg8[%c0_35, %c1_36, %c1_37, %c0_38] : memref<1x18x18x128xf32, #tpu.memory_space<vmem>>, vector<1x16x16x128xf32>
    %27 = vector.shape_cast %26 : vector<1x16x16x128xf32> to vector<256x128xf32>
    %c0_39 = arith.constant 0 : index
    %c512 = arith.constant 512 : index
    %28 = vector.load %arg9[%c0_39, %c512] : memref<256x1152xf32, #tpu.memory_space<vmem>>, vector<256x128xf32>
    tpu.vector_store %arg9[%c0_39, %c512], %27 {strides = array<i32>} : memref<256x1152xf32, #tpu.memory_space<vmem>>, vector<256x128xf32>,
    %c0_40 = arith.constant 0 : index
    %c1_41 = arith.constant 1 : index
    %c2_42 = arith.constant 2 : index
    %c0_43 = arith.constant 0 : index
    %29 = vector.load %arg8[%c0_40, %c1_41, %c2_42, %c0_43] : memref<1x18x18x128xf32, #tpu.memory_space<vmem>>, vector<1x16x16x128xf32>
    %30 = vector.shape_cast %29 : vector<1x16x16x128xf32> to vector<256x128xf32>
    %c0_44 = arith.constant 0 : index
    %c640 = arith.constant 640 : index
    %31 = vector.load %arg9[%c0_44, %c640] : memref<256x1152xf32, #tpu.memory_space<vmem>>, vector<256x128xf32>
    tpu.vector_store %arg9[%c0_44, %c640], %30 {strides = array<i32>} : memref<256x1152xf32, #tpu.memory_space<vmem>>, vector<256x128xf32>,
    %c0_45 = arith.constant 0 : index
    %c2_46 = arith.constant 2 : index
    %c0_47 = arith.constant 0 : index
    %c0_48 = arith.constant 0 : index
    %32 = vector.load %arg8[%c0_45, %c2_46, %c0_47, %c0_48] : memref<1x18x18x128xf32, #tpu.memory_space<vmem>>, vector<1x16x16x128xf32>
    %33 = vector.shape_cast %32 : vector<1x16x16x128xf32> to vector<256x128xf32>
    %c0_49 = arith.constant 0 : index
    %c768 = arith.constant 768 : index
    %34 = vector.load %arg9[%c0_49, %c768] : memref<256x1152xf32, #tpu.memory_space<vmem>>, vector<256x128xf32>
    tpu.vector_store %arg9[%c0_49, %c768], %33 {strides = array<i32>} : memref<256x1152xf32, #tpu.memory_space<vmem>>, vector<256x128xf32>,
    %c0_50 = arith.constant 0 : index
    %c2_51 = arith.constant 2 : index
    %c1_52 = arith.constant 1 : index
    %c0_53 = arith.constant 0 : index
    %35 = vector.load %arg8[%c0_50, %c2_51, %c1_52, %c0_53] : memref<1x18x18x128xf32, #tpu.memory_space<vmem>>, vector<1x16x16x128xf32>
    %36 = vector.shape_cast %35 : vector<1x16x16x128xf32> to vector<256x128xf32>
    %c0_54 = arith.constant 0 : index
    %c896 = arith.constant 896 : index
    %37 = vector.load %arg9[%c0_54, %c896] : memref<256x1152xf32, #tpu.memory_space<vmem>>, vector<256x128xf32>
    tpu.vector_store %arg9[%c0_54, %c896], %36 {strides = array<i32>} : memref<256x1152xf32, #tpu.memory_space<vmem>>, vector<256x128xf32>,
    %c0_55 = arith.constant 0 : index
    %c2_56 = arith.constant 2 : index
    %c2_57 = arith.constant 2 : index
    %c0_58 = arith.constant 0 : index
    %38 = vector.load %arg8[%c0_55, %c2_56, %c2_57, %c0_58] : memref<1x18x18x128xf32, #tpu.memory_space<vmem>>, vector<1x16x16x128xf32>
    %39 = vector.shape_cast %38 : vector<1x16x16x128xf32> to vector<256x128xf32>
    %c0_59 = arith.constant 0 : index
    %c1024 = arith.constant 1024 : index
    %40 = vector.load %arg9[%c0_59, %c1024] : memref<256x1152xf32, #tpu.memory_space<vmem>>, vector<256x128xf32>
    tpu.vector_store %arg9[%c0_59, %c1024], %39 {strides = array<i32>} : memref<256x1152xf32, #tpu.memory_space<vmem>>, vector<256x128xf32>,
    %c0_60 = arith.constant 0 : index
    %c0_61 = arith.constant 0 : index
    %41 = vector.load %arg9[%c0_60, %c0_61] : memref<256x1152xf32, #tpu.memory_space<vmem>>, vector<256x1152xf32>
    %c0_62 = arith.constant 0 : index
    %c0_63 = arith.constant 0 : index
    %42 = vector.load %arg4[%c0_62, %c0_63] : memref<1152x128xf32, #tpu.memory_space<vmem>>, vector<1152x128xf32>
    %cst_64 = arith.constant dense<0.000000e+00> : vector<256x128xf32>
    %43 = tpu.matmul %41, %42, %cst_64 {dimension_numbers = #tpu.dot_dimension_numbers<[1], [0], [0], [1], [0, 0, 1, 1], [], []>} : vector<256x1152xf32>, vector<1152x128xf32>, vector<256x128xf32> -> vector<256x128xf32>
    %c0_65 = arith.constant 0 : index
    %c0_66 = arith.constant 0 : index
    %44 = vector.load %arg5[%c0_65, %c0_66] : memref<1x128xf32, #tpu.memory_space<vmem>>, vector<1x128xf32>
    %45 = vector.broadcast %44 : vector<1x128xf32> to vector<256x128xf32>
    %46 = arith.addf %43, %45 : vector<256x128xf32>
    %47 = vector.extract_strided_slice %46 {offsets = [0, 0], sizes = [256, 4], strides = [1, 1]} : vector<256x128xf32> to vector<256x4xf32>
    %48 = vector.shape_cast %47 : vector<256x4xf32> to vector<1x16x16x4xf32>
    %c0_67 = arith.constant 0 : index
    %c0_68 = arith.constant 0 : index
    %c0_69 = arith.constant 0 : index
    %c0_70 = arith.constant 0 : index
    %49 = vector.load %arg6[%c0_67, %c0_68, %c0_69, %c0_70] : memref<1x16x16x4xf32, #tpu.memory_space<vmem>>, vector<1x16x16x4xf32>
    tpu.vector_store %arg6[%c0_67, %c0_68, %c0_69, %c0_70], %48 {strides = array<i32>} : memref<1x16x16x4xf32, #tpu.memory_space<vmem>>, vector<1x16x16x4xf32>,
    %cst_71 = arith.constant dense<0.000000e+00> : vector<128xf32>
    %50 = vector.multi_reduction <add>, %46, %cst_71 [0] : vector<256x128xf32> to vector<128xf32>
    %51 = vector.shape_cast %50 : vector<128xf32> to vector<1x128xf32>
    %52 = arith.mulf %46, %46 : vector<256x128xf32>
    %cst_72 = arith.constant dense<0.000000e+00> : vector<128xf32>
    %53 = vector.multi_reduction <add>, %52, %cst_72 [0] : vector<256x128xf32> to vector<128xf32>
    %54 = vector.shape_cast %53 : vector<128xf32> to vector<1x128xf32>
    %55 = tpu.concatenate %51, %54 in 0 : vector<1x128xf32>, vector<1x128xf32> -> vector<2x128xf32>
    %56 = vector.shape_cast %55 : vector<2x128xf32> to vector<1x2x128xf32>
    %c0_73 = arith.constant 0 : index
    %c0_74 = arith.constant 0 : index
    %c0_75 = arith.constant 0 : index
    %57 = vector.load %arg7[%c0_73, %c0_74, %c0_75] : memref<1x2x128xf32, #tpu.memory_space<vmem>>, vector<1x2x128xf32>
    tpu.vector_store %arg7[%c0_73, %c0_74, %c0_75], %56 {strides = array<i32>} : memref<1x2x128xf32, #tpu.memory_space<vmem>>, vector<1x2x128xf32>,
    return
  }
  func.func @transform_0(%arg0: i32) -> (i32, i32, i32, i32) {
    %c0_i32 = arith.constant 0 : i32
    %c0_i32_0 = arith.constant 0 : i32
    %c0_i32_1 = arith.constant 0 : i32
    %c0_i32_2 = arith.constant 0 : i32
    return %arg0, %c0_i32, %c0_i32_0, %c0_i32_1 : i32, i32, i32, i32
  }
  func.func @transform_1(%arg0: i32) -> (i32, i32) {
    %c0_i32 = arith.constant 0 : i32
    %c0_i32_0 = arith.constant 0 : i32
    %c0_i32_1 = arith.constant 0 : i32
    return %c0_i32, %c0_i32_0 : i32, i32
  }
  func.func @transform_2(%arg0: i32) -> (i32, i32) {
    %c0_i32 = arith.constant 0 : i32
    %c0_i32_0 = arith.constant 0 : i32
    %c0_i32_1 = arith.constant 0 : i32
    return %c0_i32, %c0_i32_0 : i32, i32
  }
  func.func @transform_3(%arg0: i32) -> (i32, i32) {
    %c0_i32 = arith.constant 0 : i32
    %c0_i32_0 = arith.constant 0 : i32
    %c0_i32_1 = arith.constant 0 : i32
    return %c0_i32, %c0_i32_0 : i32, i32
  }
  func.func @transform_4(%arg0: i32) -> (i32, i32) {
    %c0_i32 = arith.constant 0 : i32
    %c0_i32_0 = arith.constant 0 : i32
    %c0_i32_1 = arith.constant 0 : i32
    return %c0_i32, %c0_i32_0 : i32, i32
  }
  func.func @transform_5(%arg0: i32) -> (i32, i32, i32, i32) {
    %c0_i32 = arith.constant 0 : i32
    %c0_i32_0 = arith.constant 0 : i32
    %c0_i32_1 = arith.constant 0 : i32
    %c0_i32_2 = arith.constant 0 : i32
    return %arg0, %c0_i32, %c0_i32_0, %c0_i32_1 : i32, i32, i32, i32
  }
  func.func @transform_6(%arg0: i32) -> (i32, i32, i32) {
    %c0_i32 = arith.constant 0 : i32
    %c0_i32_0 = arith.constant 0 : i32
    %c0_i32_1 = arith.constant 0 : i32
    return %arg0, %c0_i32, %c0_i32_0 : i32, i32, i32
  }
}

module attributes {stable_mosaic.version = 11 : i64} {
  func.func @_bn_add_relu_kernel(%arg0: i32, %arg1: memref<1x16x16x4xf32, #tpu.memory_space<vmem>>, %arg2: memref<1x16x16x4xf32, #tpu.memory_space<vmem>>, %arg3: memref<1x4xf32, #tpu.memory_space<vmem>>, %arg4: memref<1x4xf32, #tpu.memory_space<vmem>>, %arg5: memref<1x16x16x4xf32, #tpu.memory_space<vmem>>) attributes {dimension_semantics = [#tpu.dimension_semantics<parallel>], iteration_bounds = array<i64: 2>, scalar_prefetch = 0 : i64, scratch_operands = 0 : i64, tpu.core_type = #tpu.core_type<tc>, window_params = [{transform_indices = @transform_0, window_bounds = array<i64: 1, 16, 16, 4>}, {transform_indices = @transform_1, window_bounds = array<i64: 1, 16, 16, 4>}, {pipeline_mode = #tpu.pipeline_mode<synchronous>, transform_indices = @transform_2, window_bounds = array<i64: 1, 4>}, {pipeline_mode = #tpu.pipeline_mode<synchronous>, transform_indices = @transform_3, window_bounds = array<i64: 1, 4>}, {transform_indices = @transform_4, window_bounds = array<i64: 1, 16, 16, 4>}]} {
    %c0 = arith.constant 0 : index
    %c0_0 = arith.constant 0 : index
    %c0_1 = arith.constant 0 : index
    %c0_2 = arith.constant 0 : index
    %0 = vector.load %arg1[%c0, %c0_0, %c0_1, %c0_2] : memref<1x16x16x4xf32, #tpu.memory_space<vmem>>, vector<1x16x16x4xf32>
    %1 = vector.shape_cast %0 : vector<1x16x16x4xf32> to vector<256x4xf32>
    %c0_3 = arith.constant 0 : index
    %c0_4 = arith.constant 0 : index
    %2 = vector.load %arg3[%c0_3, %c0_4] : memref<1x4xf32, #tpu.memory_space<vmem>>, vector<1x4xf32>
    %3 = vector.broadcast %2 : vector<1x4xf32> to vector<256x4xf32>
    %4 = arith.mulf %1, %3 : vector<256x4xf32>
    %c0_5 = arith.constant 0 : index
    %c0_6 = arith.constant 0 : index
    %5 = vector.load %arg4[%c0_5, %c0_6] : memref<1x4xf32, #tpu.memory_space<vmem>>, vector<1x4xf32>
    %6 = vector.broadcast %5 : vector<1x4xf32> to vector<256x4xf32>
    %7 = arith.addf %4, %6 : vector<256x4xf32>
    %c0_7 = arith.constant 0 : index
    %c0_8 = arith.constant 0 : index
    %c0_9 = arith.constant 0 : index
    %c0_10 = arith.constant 0 : index
    %8 = vector.load %arg2[%c0_7, %c0_8, %c0_9, %c0_10] : memref<1x16x16x4xf32, #tpu.memory_space<vmem>>, vector<1x16x16x4xf32>
    %9 = vector.shape_cast %8 : vector<1x16x16x4xf32> to vector<256x4xf32>
    %10 = arith.addf %7, %9 : vector<256x4xf32>
    %cst = arith.constant 0.000000e+00 : f32
    %11 = vector.broadcast %cst : f32 to vector<256x4xf32>
    %12 = arith.maximumf %10, %11 : vector<256x4xf32>
    %13 = vector.shape_cast %12 : vector<256x4xf32> to vector<1x16x16x4xf32>
    %c0_11 = arith.constant 0 : index
    %c0_12 = arith.constant 0 : index
    %c0_13 = arith.constant 0 : index
    %c0_14 = arith.constant 0 : index
    %14 = vector.load %arg5[%c0_11, %c0_12, %c0_13, %c0_14] : memref<1x16x16x4xf32, #tpu.memory_space<vmem>>, vector<1x16x16x4xf32>
    tpu.vector_store %arg5[%c0_11, %c0_12, %c0_13, %c0_14], %13 {strides = array<i32>} : memref<1x16x16x4xf32, #tpu.memory_space<vmem>>, vector<1x16x16x4xf32>,
    return
  }
  func.func @transform_0(%arg0: i32) -> (i32, i32, i32, i32) {
    %c0_i32 = arith.constant 0 : i32
    %c0_i32_0 = arith.constant 0 : i32
    %c0_i32_1 = arith.constant 0 : i32
    %c0_i32_2 = arith.constant 0 : i32
    return %arg0, %c0_i32, %c0_i32_0, %c0_i32_1 : i32, i32, i32, i32
  }
  func.func @transform_1(%arg0: i32) -> (i32, i32, i32, i32) {
    %c0_i32 = arith.constant 0 : i32
    %c0_i32_0 = arith.constant 0 : i32
    %c0_i32_1 = arith.constant 0 : i32
    %c0_i32_2 = arith.constant 0 : i32
    return %arg0, %c0_i32, %c0_i32_0, %c0_i32_1 : i32, i32, i32, i32
  }
  func.func @transform_2(%arg0: i32) -> (i32, i32) {
    %c0_i32 = arith.constant 0 : i32
    %c0_i32_0 = arith.constant 0 : i32
    %c0_i32_1 = arith.constant 0 : i32
    return %c0_i32, %c0_i32_0 : i32, i32
  }
  func.func @transform_3(%arg0: i32) -> (i32, i32) {
    %c0_i32 = arith.constant 0 : i32
    %c0_i32_0 = arith.constant 0 : i32
    %c0_i32_1 = arith.constant 0 : i32
    return %c0_i32, %c0_i32_0 : i32, i32
  }
  func.func @transform_4(%arg0: i32) -> (i32, i32, i32, i32) {
    %c0_i32 = arith.constant 0 : i32
    %c0_i32_0 = arith.constant 0 : i32
    %c0_i32_1 = arith.constant 0 : i32
    %c0_i32_2 = arith.constant 0 : i32
    return %arg0, %c0_i32, %c0_i32_0, %c0_i32_1 : i32, i32, i32, i32
  }
}

</mosaic_0001>

<llo_original>
// kernel: residual_block.5
$region0: #{residual_block.5}
  #allocation0 [shape = 'u32[]', space=smem, size = 0x4, offset = 0x4, fixed_abs, tag = 'smem constant byte address 0x4 - core index']
  #allocation1 [shape = 'u32[72,128]{1,0:T(1,128)}', space=vmem, size = 0x9000, scoped, tag = 'internal scratch']
  %s0 = inlined_call_operand.vmem [shape: f32[2,16,16,4], index: 0, kind: input, shape index: {}]
  %s1 = inlined_call_operand.vmem [shape: f32[2,16,16,4], index: 1, kind: input, shape index: {}]
  %s2 = inlined_call_operand.vmem [shape: f32[1,4], index: 2, kind: input, shape index: {}]
  %s3 = inlined_call_operand.vmem [shape: f32[1,4], index: 3, kind: input, shape index: {}]
  %s4 = inlined_call_operand.vmem [shape: f32[2,16,16,4], index: 4, kind: output, shape index: {}]
  %s5 = sld [smem:[#allocation0]]
  $region49: #{residual_block.5} parent=0
    _
  %s7 = ssub.s32 1, %s5
  %s8 = scalar_select 0, %s7, %s5
  loop: start=0, step=1, limit=4
  $region2: #{residual_block.5} parent=0 // loop_pre_header
    _
  $region3: #{residual_block.5} parent=0 // loop_header
    %s10 = sphi 0, %s14
    %p11 = scmp.ge.s32.totalorder %s10, 4
    %s20 = sphi 0, %s22
    %s23 = sphi 0, %s20
    %s24 = sphi 0, %s23
    %s40 = sphi 0, %s24
    %s46 = sphi 0, %s48
    %s49 = sphi 0, %s46
    %s50 = sphi 0, %s49
    %s66 = sphi 0, %s50
    %s70 = sphi 0, %s70
    %s72 = sphi 0, %s70
    %s73 = sphi 0, %s72
    %s87 = sphi 0, %s73
    %s91 = sphi 0, %s91
    %s93 = sphi 0, %s91
    %s94 = sphi 0, %s93
    %s108 = sphi 0, %s94
    %s114 = sphi 0, %s116
    %s117 = sphi 0, %s114
    %s118 = sphi 0, %s117
    %s134 = sphi 0, %s118
  $region4: #{residual_block.5} parent=0 // loop_header_branch
    %13 = sbr.rel (%p11) target = $region8
  $region5: #{residual_block.5} parent=0 // loop_body
    %s15 = ssub.s32 %s10, 1
    %s16 = ssub.s32 %s10, 2
    %s17 = sadd.s32 %s10, 1
    %s18 = ssub.s32 %s10, %s17
    %p19 = scmp.eq.s32.totalorder %s18, 0
    %s21 = sadd.s32 %s20, 1
    %s22 = scalar_select %p19, %s20, %s21
    %p25 = pneg %p19
    %p26 = scmp.eq.s32.totalorder %s10, 1
    %p27 = por %p25, %p26
    %p28 = scmp.ne.s32.totalorder %s20, %s23
    %p29 = scmp.eq.s32.totalorder %s10, 0
    %p30 = por %p28, %p29
    %p31 = scmp.ne.s32.totalorder %s20, %s23
    %p32 = scmp.eq.s32.totalorder %s15, 1
    %p33 = por %p31, %p32
    %p34 = scmp.ne.s32.totalorder %s23, %s24
    %p35 = scmp.eq.s32.totalorder %s15, 0
    %p36 = por %p34, %p35
    %p37 = scmp.ne.s32.totalorder %s23, %s24
    %p38 = scmp.eq.s32.totalorder %s16, 1
    %p39 = por %p37, %p38
    %p41 = scmp.ne.s32.totalorder %s24, %s40
    %p42 = scmp.eq.s32.totalorder %s16, 0
    %p43 = por %p41, %p42
    %s44 = ssub.s32 %s10, %s17
    %p45 = scmp.eq.s32.totalorder %s44, 0
    %s47 = sadd.s32 %s46, 1
    %s48 = scalar_select %p45, %s46, %s47
    %p51 = pneg %p45
    %p52 = scmp.eq.s32.totalorder %s10, 1
    %p53 = por %p51, %p52
    %p54 = scmp.ne.s32.totalorder %s46, %s49
    %p55 = scmp.eq.s32.totalorder %s10, 0
    %p56 = por %p54, %p55
    %p57 = scmp.ne.s32.totalorder %s46, %s49
    %p58 = scmp.eq.s32.totalorder %s15, 1
    %p59 = por %p57, %p58
    %p60 = scmp.ne.s32.totalorder %s49, %s50
    %p61 = scmp.eq.s32.totalorder %s15, 0
    %p62 = por %p60, %p61
    %p63 = scmp.ne.s32.totalorder %s49, %s50
    %p64 = scmp.eq.s32.totalorder %s16, 1
    %p65 = por %p63, %p64
    %p67 = scmp.ne.s32.totalorder %s50, %s66
    %p68 = scmp.eq.s32.totalorder %s16, 0
    %p69 = por %p67, %p68
    %s71 = sadd.s32 %s70, 1
    %p74 = scmp.eq.s32.totalorder %s10, 1
    %p75 = scmp.ne.s32.totalorder %s70, %s72
    %p76 = scmp.eq.s32.totalorder %s10, 0
    %p77 = por %p75, %p76
    %p78 = scmp.ne.s32.totalorder %s70, %s72
    %p79 = scmp.eq.s32.totalorder %s15, 1
    %p80 = por %p78, %p79
    %p81 = scmp.ne.s32.totalorder %s72, %s73
    %p82 = scmp.eq.s32.totalorder %s15, 0
    %p83 = por %p81, %p82
    %p84 = scmp.ne.s32.totalorder %s72, %s73
    %p85 = scmp.eq.s32.totalorder %s16, 1
    %p86 = por %p84, %p85
    %p88 = scmp.ne.s32.totalorder %s73, %s87
    %p89 = scmp.eq.s32.totalorder %s16, 0
    %p90 = por %p88, %p89
    %s92 = sadd.s32 %s91, 1
    %p95 = scmp.eq.s32.totalorder %s10, 1
    %p96 = scmp.ne.s32.totalorder %s91, %s93
    %p97 = scmp.eq.s32.totalorder %s10, 0
    %p98 = por %p96, %p97
    %p99 = scmp.ne.s32.totalorder %s91, %s93
    %p100 = scmp.eq.s32.totalorder %s15, 1
    %p101 = por %p99, %p100
    %p102 = scmp.ne.s32.totalorder %s93, %s94
    %p103 = scmp.eq.s32.totalorder %s15, 0
    %p104 = por %p102, %p103
    %p105 = scmp.ne.s32.totalorder %s93, %s94
    %p106 = scmp.eq.s32.totalorder %s16, 1
    %p107 = por %p105, %p106
    %p109 = scmp.ne.s32.totalorder %s94, %s108
    %p110 = scmp.eq.s32.totalorder %s16, 0
    %p111 = por %p109, %p110
    %s112 = ssub.s32 %s10, %s17
    %p113 = scmp.eq.s32.totalorder %s112, 0
    %s115 = sadd.s32 %s114, 1
    %s116 = scalar_select %p113, %s114, %s115
    %p119 = pneg %p113
    %p120 = scmp.eq.s32.totalorder %s10, 1
    %p121 = por %p119, %p120
    %p122 = scmp.ne.s32.totalorder %s114, %s117
    %p123 = scmp.eq.s32.totalorder %s10, 0
    %p124 = por %p122, %p123
    %p125 = scmp.ne.s32.totalorder %s114, %s117
    %p126 = scmp.eq.s32.totalorder %s15, 1
    %p127 = por %p125, %p126
    %p128 = scmp.ne.s32.totalorder %s117, %s118
    %p129 = scmp.eq.s32.totalorder %s15, 0
    %p130 = por %p128, %p129
    %p131 = scmp.ne.s32.totalorder %s117, %s118
    %p132 = scmp.eq.s32.totalorder %s16, 1
    %p133 = por %p131, %p132
    %p135 = scmp.ne.s32.totalorder %s118, %s134
    %p136 = scmp.eq.s32.totalorder %s16, 0
    %p137 = por %p135, %p136
    %p138 = scmp.le.s32.totalorder 1, %s10
    %p139 = scmp.lt.s32.totalorder %s10, 3
    %p140 = pnand %p138, %p139
    %p141 = pneg %p140
    // Predicated region
    $region9: #{residual_block.5} parent=5 // pred_check
      _
    $region10: #{residual_block.5} parent=5 // pred_check_branch
      %143 = sbr.rel (%p140) target = $region12
    $region11: #{residual_block.5} parent=5 // pred_region
      %s144 = ssub.s32 %s10, 1
      // Predicated region
      $region13: #{residual_block.5} parent=11 // pred_check
        %p145 = pneg %p83
      $region14: #{residual_block.5} parent=11 // pred_check_branch
        %147 = sbr.rel (%p145) target = $region16
      $region15: #{residual_block.5} parent=11 // pred_region
        _
      $region16: #{residual_block.5} parent=11 // pred_fallthru
        _
      // Predicated region
      $region17: #{residual_block.5} parent=11 // pred_check
        %p148 = pneg %p104
      $region18: #{residual_block.5} parent=11 // pred_check_branch
        %150 = sbr.rel (%p148) target = $region20
      $region19: #{residual_block.5} parent=11 // pred_region
        _
      $region20: #{residual_block.5} parent=11 // pred_fallthru
        _
    $region12: #{residual_block.5} parent=5 // pred_fallthru
      _
    %p151 = scmp.lt.s32.totalorder %s10, 2
    // Predicated region
    $region21: #{residual_block.5} parent=5 // pred_check
      %p152 = pneg %p151
    $region22: #{residual_block.5} parent=5 // pred_check_branch
      %154 = sbr.rel (%p152) target = $region24
    $region23: #{residual_block.5} parent=5 // pred_region
      // Predicated region
      $region25: #{residual_block.5} parent=23 // pred_check
        %p155 = pneg %p30
      $region26: #{residual_block.5} parent=23 // pred_check_branch
        %157 = sbr.rel (%p155) target = $region28
      $region27: #{residual_block.5} parent=23 // pred_region
        %p158 = scmp.lt.s32.totalorder %s10, 1
        %s159 = scalar_select %p158, %s10, 1
        %s160 = smul.addr %s159, 32
        %s161 = smul.addr %s160, 8
        %s162 = scalar_lea.vmem %s0, %s161
      $region28: #{residual_block.5} parent=23 // pred_fallthru
        _
      // Predicated region
      $region29: #{residual_block.5} parent=23 // pred_check
        %p163 = pneg %p56
      $region30: #{residual_block.5} parent=23 // pred_check_branch
        %165 = sbr.rel (%p163) target = $region32
      $region31: #{residual_block.5} parent=23 // pred_region
        %p166 = scmp.lt.s32.totalorder %s10, 1
        %s167 = scalar_select %p166, %s10, 1
        %s168 = smul.addr %s167, 32
        %s169 = smul.addr %s168, 8
        %s170 = scalar_lea.vmem %s1, %s169
      $region32: #{residual_block.5} parent=23 // pred_fallthru
        _
    $region24: #{residual_block.5} parent=5 // pred_fallthru
      _
    %p171 = scmp.le.s32.totalorder 1, %s10
    %p172 = scmp.lt.s32.totalorder %s10, 3
    %p173 = pnand %p171, %p172
    %p174 = pneg %p173
    // Predicated region
    $region33: #{residual_block.5} parent=5 // pred_check
      _
    $region34: #{residual_block.5} parent=5 // pred_check_branch
      %176 = sbr.rel (%p173) target = $region36
    $region35: #{residual_block.5} parent=5 // pred_region
      %s177 = ssub.s32 %s10, 1
      %p178 = scmp.lt.s32.totalorder %s15, 1
      %s179 = scalar_select %p178, %s15, 1
      %s180 = smul.addr %s179, 32
      %s181 = smul.addr %s180, 8
      %s182 = scalar_lea.vmem %s0, %s181
      %p183 = pneg %p36
      %p184 = pneg %p33
      %p185 = scmp.lt.s32.totalorder %s15, 1
      %s186 = scalar_select %p185, %s15, 1
      %s187 = smul.addr %s186, 32
      %s188 = smul.addr %s187, 8
      %s189 = scalar_lea.vmem %s1, %s188
      %p190 = pneg %p62
      %p191 = pneg %p59
      %p192 = pneg %p83
      %p193 = pneg %p80
      %p194 = pneg %p104
      %p195 = pneg %p101
      %p196 = pneg %p130
      %p197 = pneg %p127
      %p198 = scmp.lt.s32.totalorder %s15, 1
      %s199 = scalar_select %p198, %s15, 1
      %s200 = smul.addr %s199, 32
      %s201 = smul.addr %s200, 8
      %s202 = scalar_lea.vmem %s4, %s201
      %p203 = scmp.lt.s32.totalorder %s15, 1
      %s204 = scalar_select %p203, %s15, 1
      %s205 = smul.addr %s204, 32
      %s206 = smul.addr %s205, 8
      %s207 = scalar_lea.vmem %s0, %s206
      %p208 = scmp.lt.s32.totalorder %s15, 1
      %s209 = scalar_select %p208, %s15, 1
      %s210 = smul.addr %s209, 32
      %s211 = smul.addr %s210, 8
      %s212 = scalar_lea.vmem %s1, %s211
      %p213 = scmp.lt.s32.totalorder %s15, 1
      %s214 = scalar_select %p213, %s15, 1
      %s215 = smul.addr %s214, 32
      %s216 = smul.addr %s215, 8
      %s217 = scalar_lea.vmem %s4, %s216
      %v218 = vld [vmem:[%s207] sm:$0xff]
      %v219 = vld [vmem:[%s207 + $0x8] sm:$0xff]
      %v220 = vld [vmem:[%s207 + $0x10] sm:$0xff]
      %v221 = vld [vmem:[%s207 + $0x18] sm:$0xff]
      %v222 = vld [vmem:[%s207 + $0x20] sm:$0xff]
      %v223 = vld [vmem:[%s207 + $0x28] sm:$0xff]
      %v224 = vld [vmem:[%s207 + $0x30] sm:$0xff]
      %v225 = vld [vmem:[%s207 + $0x38] sm:$0xff]
      %v226 = vld [vmem:[%s207 + $0x40] sm:$0xff]
      %v227 = vld [vmem:[%s207 + $0x48] sm:$0xff]
      %v228 = vld [vmem:[%s207 + $0x50] sm:$0xff]
      %v229 = vld [vmem:[%s207 + $0x58] sm:$0xff]
      %v230 = vld [vmem:[%s207 + $0x60] sm:$0xff]
      %v231 = vld [vmem:[%s207 + $0x68] sm:$0xff]
      %v232 = vld [vmem:[%s207 + $0x70] sm:$0xff]
      %v233 = vld [vmem:[%s207 + $0x78] sm:$0xff]
      %v234 = vld [vmem:[%s207 + $0x80] sm:$0xff]
      %v235 = vld [vmem:[%s207 + $0x88] sm:$0xff]
      %v236 = vld [vmem:[%s207 + $0x90] sm:$0xff]
      %v237 = vld [vmem:[%s207 + $0x98] sm:$0xff]
      %v238 = vld [vmem:[%s207 + $0xa0] sm:$0xff]
      %v239 = vld [vmem:[%s207 + $0xa8] sm:$0xff]
      %v240 = vld [vmem:[%s207 + $0xb0] sm:$0xff]
      %v241 = vld [vmem:[%s207 + $0xb8] sm:$0xff]
      %v242 = vld [vmem:[%s207 + $0xc0] sm:$0xff]
      %v243 = vld [vmem:[%s207 + $0xc8] sm:$0xff]
      %v244 = vld [vmem:[%s207 + $0xd0] sm:$0xff]
      %v245 = vld [vmem:[%s207 + $0xd8] sm:$0xff]
      %v246 = vld [vmem:[%s207 + $0xe0] sm:$0xff]
      %v247 = vld [vmem:[%s207 + $0xe8] sm:$0xff]
      %v248 = vld [vmem:[%s207 + $0xf0] sm:$0xff]
      %v249 = vld [vmem:[%s207 + $0xf8] sm:$0xff]
      %v250 = vld [vmem:[%s2] sm:$0x1]
      %v252 = vperm.slane %v250, 0
      %v254 = vmul.f32 %v218, %v252
      %v255 = vmul.f32 %v219, %v252
      %v256 = vmul.f32 %v220, %v252
      %v257 = vmul.f32 %v221, %v252
      %v258 = vmul.f32 %v222, %v252
      %v259 = vmul.f32 %v223, %v252
      %v260 = vmul.f32 %v224, %v252
      %v261 = vmul.f32 %v225, %v252
      %v262 = vmul.f32 %v226, %v252
      %v263 = vmul.f32 %v227, %v252
      %v264 = vmul.f32 %v228, %v252
      %v265 = vmul.f32 %v229, %v252
      %v266 = vmul.f32 %v230, %v252
      %v267 = vmul.f32 %v231, %v252
      %v268 = vmul.f32 %v232, %v252
      %v269 = vmul.f32 %v233, %v252
      %v270 = vmul.f32 %v234, %v252
      %v271 = vmul.f32 %v235, %v252
      %v272 = vmul.f32 %v236, %v252
      %v273 = vmul.f32 %v237, %v252
      %v274 = vmul.f32 %v238, %v252
      %v275 = vmul.f32 %v239, %v252
      %v276 = vmul.f32 %v240, %v252
      %v277 = vmul.f32 %v241, %v252
      %v278 = vmul.f32 %v242, %v252
      %v279 = vmul.f32 %v243, %v252
      %v280 = vmul.f32 %v244, %v252
      %v281 = vmul.f32 %v245, %v252
      %v282 = vmul.f32 %v246, %v252
      %v283 = vmul.f32 %v247, %v252
      %v284 = vmul.f32 %v248, %v252
      %v285 = vmul.f32 %v249, %v252
      %v286 = vld [vmem:[%s3] sm:$0x1]
      %v288 = vperm.slane %v286, 0
      %v290 = vadd.f32 %v254, %v288
      %v291 = vadd.f32 %v255, %v288
      %v292 = vadd.f32 %v256, %v288
      %v293 = vadd.f32 %v257, %v288
      %v294 = vadd.f32 %v258, %v288
      %v295 = vadd.f32 %v259, %v288
      %v296 = vadd.f32 %v260, %v288
      %v297 = vadd.f32 %v261, %v288
      %v298 = vadd.f32 %v262, %v288
      %v299 = vadd.f32 %v263, %v288
      %v300 = vadd.f32 %v264, %v288
      %v301 = vadd.f32 %v265, %v288
      %v302 = vadd.f32 %v266, %v288
      %v303 = vadd.f32 %v267, %v288
      %v304 = vadd.f32 %v268, %v288
      %v305 = vadd.f32 %v269, %v288
      %v306 = vadd.f32 %v270, %v288
      %v307 = vadd.f32 %v271, %v288
      %v308 = vadd.f32 %v272, %v288
      %v309 = vadd.f32 %v273, %v288
      %v310 = vadd.f32 %v274, %v288
      %v311 = vadd.f32 %v275, %v288
      %v312 = vadd.f32 %v276, %v288
      %v313 = vadd.f32 %v277, %v288
      %v314 = vadd.f32 %v278, %v288
      %v315 = vadd.f32 %v279, %v288
      %v316 = vadd.f32 %v280, %v288
      %v317 = vadd.f32 %v281, %v288
      %v318 = vadd.f32 %v282, %v288
      %v319 = vadd.f32 %v283, %v288
      %v320 = vadd.f32 %v284, %v288
      %v321 = vadd.f32 %v285, %v288
      %v322 = vld [vmem:[%s212] sm:$0xff]
      %v323 = vld [vmem:[%s212 + $0x8] sm:$0xff]
      %v324 = vld [vmem:[%s212 + $0x10] sm:$0xff]
      %v325 = vld [vmem:[%s212 + $0x18] sm:$0xff]
      %v326 = vld [vmem:[%s212 + $0x20] sm:$0xff]
      %v327 = vld [vmem:[%s212 + $0x28] sm:$0xff]
      %v328 = vld [vmem:[%s212 + $0x30] sm:$0xff]
      %v329 = vld [vmem:[%s212 + $0x38] sm:$0xff]
      %v330 = vld [vmem:[%s212 + $0x40] sm:$0xff]
      %v331 = vld [vmem:[%s212 + $0x48] sm:$0xff]
      %v332 = vld [vmem:[%s212 + $0x50] sm:$0xff]
      %v333 = vld [vmem:[%s212 + $0x58] sm:$0xff]
      %v334 = vld [vmem:[%s212 + $0x60] sm:$0xff]
      %v335 = vld [vmem:[%s212 + $0x68] sm:$0xff]
      %v336 = vld [vmem:[%s212 + $0x70] sm:$0xff]
      %v337 = vld [vmem:[%s212 + $0x78] sm:$0xff]
      %v338 = vld [vmem:[%s212 + $0x80] sm:$0xff]
      %v339 = vld [vmem:[%s212 + $0x88] sm:$0xff]
      %v340 = vld [vmem:[%s212 + $0x90] sm:$0xff]
      %v341 = vld [vmem:[%s212 + $0x98] sm:$0xff]
      %v342 = vld [vmem:[%s212 + $0xa0] sm:$0xff]
      %v343 = vld [vmem:[%s212 + $0xa8] sm:$0xff]
      %v344 = vld [vmem:[%s212 + $0xb0] sm:$0xff]
      %v345 = vld [vmem:[%s212 + $0xb8] sm:$0xff]
      %v346 = vld [vmem:[%s212 + $0xc0] sm:$0xff]
      %v347 = vld [vmem:[%s212 + $0xc8] sm:$0xff]
      %v348 = vld [vmem:[%s212 + $0xd0] sm:$0xff]
      %v349 = vld [vmem:[%s212 + $0xd8] sm:$0xff]
      %v350 = vld [vmem:[%s212 + $0xe0] sm:$0xff]
      %v351 = vld [vmem:[%s212 + $0xe8] sm:$0xff]
      %v352 = vld [vmem:[%s212 + $0xf0] sm:$0xff]
      %v353 = vld [vmem:[%s212 + $0xf8] sm:$0xff]
      %v354 = vadd.f32 %v290, %v322
      %v355 = vadd.f32 %v291, %v323
      %v356 = vadd.f32 %v292, %v324
      %v357 = vadd.f32 %v293, %v325
      %v358 = vadd.f32 %v294, %v326
      %v359 = vadd.f32 %v295, %v327
      %v360 = vadd.f32 %v296, %v328
      %v361 = vadd.f32 %v297, %v329
      %v362 = vadd.f32 %v298, %v330
      %v363 = vadd.f32 %v299, %v331
      %v364 = vadd.f32 %v300, %v332
      %v365 = vadd.f32 %v301, %v333
      %v366 = vadd.f32 %v302, %v334
      %v367 = vadd.f32 %v303, %v335
      %v368 = vadd.f32 %v304, %v336
      %v369 = vadd.f32 %v305, %v337
      %v370 = vadd.f32 %v306, %v338
      %v371 = vadd.f32 %v307, %v339
      %v372 = vadd.f32 %v308, %v340
      %v373 = vadd.f32 %v309, %v341
      %v374 = vadd.f32 %v310, %v342
      %v375 = vadd.f32 %v311, %v343
      %v376 = vadd.f32 %v312, %v344
      %v377 = vadd.f32 %v313, %v345
      %v378 = vadd.f32 %v314, %v346
      %v379 = vadd.f32 %v315, %v347
      %v380 = vadd.f32 %v316, %v348
      %v381 = vadd.f32 %v317, %v349
      %v382 = vadd.f32 %v318, %v350
      %v383 = vadd.f32 %v319, %v351
      %v384 = vadd.f32 %v320, %v352
      %v385 = vadd.f32 %v321, %v353
      %v386 = vmax.f32 %v354, 0.0
      %v387 = vmax.f32 %v355, 0.0
      %v388 = vmax.f32 %v356, 0.0
      %v389 = vmax.f32 %v357, 0.0
      %v390 = vmax.f32 %v358, 0.0
      %v391 = vmax.f32 %v359, 0.0
      %v392 = vmax.f32 %v360, 0.0
      %v393 = vmax.f32 %v361, 0.0
      %v394 = vmax.f32 %v362, 0.0
      %v395 = vmax.f32 %v363, 0.0
      %v396 = vmax.f32 %v364, 0.0
      %v397 = vmax.f32 %v365, 0.0
      %v398 = vmax.f32 %v366, 0.0
      %v399 = vmax.f32 %v367, 0.0
      %v400 = vmax.f32 %v368, 0.0
      %v401 = vmax.f32 %v369, 0.0
      %v402 = vmax.f32 %v370, 0.0
      %v403 = vmax.f32 %v371, 0.0
      %v404 = vmax.f32 %v372, 0.0
      %v405 = vmax.f32 %v373, 0.0
      %v406 = vmax.f32 %v374, 0.0
      %v407 = vmax.f32 %v375, 0.0
      %v408 = vmax.f32 %v376, 0.0
      %v409 = vmax.f32 %v377, 0.0
      %v410 = vmax.f32 %v378, 0.0
      %v411 = vmax.f32 %v379, 0.0
      %v412 = vmax.f32 %v380, 0.0
      %v413 = vmax.f32 %v381, 0.0
      %v414 = vmax.f32 %v382, 0.0
      %v415 = vmax.f32 %v383, 0.0
      %v416 = vmax.f32 %v384, 0.0
      %v417 = vmax.f32 %v385, 0.0
      %vm418 = vcmask 31744
      %419 = vst.msk [vmem:[%s217] sm:$0xff] %vm418, %v386
      %420 = vst.msk [vmem:[%s217 + $0x8] sm:$0xff] %vm418, %v387
      %421 = vst.msk [vmem:[%s217 + $0x10] sm:$0xff] %vm418, %v388
      %422 = vst.msk [vmem:[%s217 + $0x18] sm:$0xff] %vm418, %v389
      %423 = vst.msk [vmem:[%s217 + $0x20] sm:$0xff] %vm418, %v390
      %424 = vst.msk [vmem:[%s217 + $0x28] sm:$0xff] %vm418, %v391
      %425 = vst.msk [vmem:[%s217 + $0x30] sm:$0xff] %vm418, %v392
      %426 = vst.msk [vmem:[%s217 + $0x38] sm:$0xff] %vm418, %v393
      %427 = vst.msk [vmem:[%s217 + $0x40] sm:$0xff] %vm418, %v394
      %428 = vst.msk [vmem:[%s217 + $0x48] sm:$0xff] %vm418, %v395
      %429 = vst.msk [vmem:[%s217 + $0x50] sm:$0xff] %vm418, %v396
      %430 = vst.msk [vmem:[%s217 + $0x58] sm:$0xff] %vm418, %v397
      %431 = vst.msk [vmem:[%s217 + $0x60] sm:$0xff] %vm418, %v398
      %432 = vst.msk [vmem:[%s217 + $0x68] sm:$0xff] %vm418, %v399
      %433 = vst.msk [vmem:[%s217 + $0x70] sm:$0xff] %vm418, %v400
      %434 = vst.msk [vmem:[%s217 + $0x78] sm:$0xff] %vm418, %v401
      %435 = vst.msk [vmem:[%s217 + $0x80] sm:$0xff] %vm418, %v402
      %436 = vst.msk [vmem:[%s217 + $0x88] sm:$0xff] %vm418, %v403
      %437 = vst.msk [vmem:[%s217 + $0x90] sm:$0xff] %vm418, %v404
      %438 = vst.msk [vmem:[%s217 + $0x98] sm:$0xff] %vm418, %v405
      %439 = vst.msk [vmem:[%s217 + $0xa0] sm:$0xff] %vm418, %v406
      %440 = vst.msk [vmem:[%s217 + $0xa8] sm:$0xff] %vm418, %v407
      %441 = vst.msk [vmem:[%s217 + $0xb0] sm:$0xff] %vm418, %v408
      %442 = vst.msk [vmem:[%s217 + $0xb8] sm:$0xff] %vm418, %v409
      %443 = vst.msk [vmem:[%s217 + $0xc0] sm:$0xff] %vm418, %v410
      %444 = vst.msk [vmem:[%s217 + $0xc8] sm:$0xff] %vm418, %v411
      %445 = vst.msk [vmem:[%s217 + $0xd0] sm:$0xff] %vm418, %v412
      %446 = vst.msk [vmem:[%s217 + $0xd8] sm:$0xff] %vm418, %v413
      %447 = vst.msk [vmem:[%s217 + $0xe0] sm:$0xff] %vm418, %v414
      %448 = vst.msk [vmem:[%s217 + $0xe8] sm:$0xff] %vm418, %v415
      %449 = vst.msk [vmem:[%s217 + $0xf0] sm:$0xff] %vm418, %v416
      %450 = vst.msk [vmem:[%s217 + $0xf8] sm:$0xff] %vm418, %v417
      %p451 = scmp.lt.s32.totalorder %s15, 1
      %s452 = scalar_select %p451, %s15, 1
      %s453 = smul.addr %s452, 32
      %s454 = smul.addr %s453, 8
      %s455 = scalar_lea.vmem %s4, %s454
      // Predicated region
      $region37: #{residual_block.5} parent=35 // pred_check
        %p456 = pneg %p127
      $region38: #{residual_block.5} parent=35 // pred_check_branch
        %458 = sbr.rel (%p456) target = $region40
      $region39: #{residual_block.5} parent=35 // pred_region
        _
      $region40: #{residual_block.5} parent=35 // pred_fallthru
        _
    $region36: #{residual_block.5} parent=5 // pred_fallthru
      _
    %p459 = scmp.le.s32.totalorder 2, %s10
    // Predicated region
    $region41: #{residual_block.5} parent=5 // pred_check
      %p460 = pneg %p459
    $region42: #{residual_block.5} parent=5 // pred_check_branch
      %462 = sbr.rel (%p460) target = $region44
    $region43: #{residual_block.5} parent=5 // pred_region
      %s463 = ssub.s32 %s10, 2
      // Predicated region
      $region45: #{residual_block.5} parent=43 // pred_check
        %p464 = pneg %p133
      $region46: #{residual_block.5} parent=43 // pred_check_branch
        %466 = sbr.rel (%p464) target = $region48
      $region47: #{residual_block.5} parent=43 // pred_region
        %p467 = scmp.lt.s32.totalorder %s16, 1
        %s468 = scalar_select %p467, %s16, 1
        %s469 = smul.addr %s468, 32
        %s470 = smul.addr %s469, 8
        %s471 = scalar_lea.vmem %s4, %s470
      $region48: #{residual_block.5} parent=43 // pred_fallthru
        _
    $region44: #{residual_block.5} parent=5 // pred_fallthru
      _
  $region6: #{residual_block.5} parent=0 // loop_footer
    %s14 = sadd.s32 1, %s10
  $region7: #{residual_block.5} parent=0 // loop_footer_branch
    %9 = sbr.rel target = $region3
  $region8: #{residual_block.5} parent=0 // loop_exit
    _

// kernel: residual_block.4
$region0: #{residual_block.4}
  #allocation0 [shape = 'u32[]', space=smem, size = 0x4, offset = 0x4, fixed_abs, tag = 'smem constant byte address 0x4 - core index']
  #allocation1 [shape = 'u32[72,128]{1,0:T(1,128)}', space=vmem, size = 0x9000, scoped, tag = 'internal scratch']
  #allocation2 [shape = 'f32[1,18,18,128]{3,2,1,0:T(8,128)}', space=vmem, size = 0x36000, scoped, tag = 'scratch operand']
  #allocation3 [shape = 'f32[256,1152]{1,0:T(8,128)}', space=vmem, size = 0x120000, scoped, tag = 'scratch operand']
  %s0 = inlined_call_operand.vmem [shape: f32[2,16,16,4], index: 0, kind: input, shape index: {}]
  %s1 = inlined_call_operand.vmem [shape: f32[1,4], index: 1, kind: input, shape index: {}]
  %s2 = inlined_call_operand.vmem [shape: f32[1,4], index: 2, kind: input, shape index: {}]
  %s3 = inlined_call_operand.vmem [shape: f32[1152,128], index: 3, kind: input, shape index: {}]
  %s4 = inlined_call_operand.vmem [shape: f32[1,128], index: 4, kind: input, shape index: {}]
  %s5 = inlined_call_operand.vmem [shape: f32[2,16,16,4], index: 5, kind: output, shape index: {0}]
  %s6 = inlined_call_operand.vmem [shape: f32[2,2,128], index: 6, kind: output, shape index: {1}]
  %7 = xla_tuple %s5, %s6
  %s8 = sld [smem:[#allocation0]]
  $region61: #{residual_block.4} parent=0
    _
  %s10 = ssub.s32 1, %s8
  %s11 = scalar_select 0, %s10, %s8
  loop: start=0, step=1, limit=4
  $region2: #{residual_block.4} parent=0 // loop_pre_header
    _
  $region3: #{residual_block.4} parent=0 // loop_header
    %s13 = sphi 0, %s17
    %p14 = scmp.ge.s32.totalorder %s13, 4
    %s23 = sphi 0, %s25
    %s26 = sphi 0, %s23
    %s27 = sphi 0, %s26
    %s43 = sphi 0, %s27
    %s47 = sphi 0, %s47
    %s49 = sphi 0, %s47
    %s50 = sphi 0, %s49
    %s64 = sphi 0, %s50
    %s68 = sphi 0, %s68
    %s70 = sphi 0, %s68
    %s71 = sphi 0, %s70
    %s85 = sphi 0, %s71
    %s89 = sphi 0, %s89
    %s91 = sphi 0, %s89
    %s92 = sphi 0, %s91
    %s106 = sphi 0, %s92
    %s110 = sphi 0, %s110
    %s112 = sphi 0, %s110
    %s113 = sphi 0, %s112
    %s127 = sphi 0, %s113
    %s133 = sphi 0, %s135
    %s136 = sphi 0, %s133
    %s137 = sphi 0, %s136
    %s153 = sphi 0, %s137
    %s159 = sphi 0, %s161
    %s162 = sphi 0, %s159
    %s163 = sphi 0, %s162
    %s179 = sphi 0, %s163
  $region4: #{residual_block.4} parent=0 // loop_header_branch
    %16 = sbr.rel (%p14) target = $region8
  $region5: #{residual_block.4} parent=0 // loop_body
    %s18 = ssub.s32 %s13, 1
    %s19 = ssub.s32 %s13, 2
    %s20 = sadd.s32 %s13, 1
    %s21 = ssub.s32 %s13, %s20
    %p22 = scmp.eq.s32.totalorder %s21, 0
    %s24 = sadd.s32 %s23, 1
    %s25 = scalar_select %p22, %s23, %s24
    %p28 = pneg %p22
    %p29 = scmp.eq.s32.totalorder %s13, 1
    %p30 = por %p28, %p29
    %p31 = scmp.ne.s32.totalorder %s23, %s26
    %p32 = scmp.eq.s32.totalorder %s13, 0
    %p33 = por %p31, %p32
    %p34 = scmp.ne.s32.totalorder %s23, %s26
    %p35 = scmp.eq.s32.totalorder %s18, 1
    %p36 = por %p34, %p35
    %p37 = scmp.ne.s32.totalorder %s26, %s27
    %p38 = scmp.eq.s32.totalorder %s18, 0
    %p39 = por %p37, %p38
    %p40 = scmp.ne.s32.totalorder %s26, %s27
    %p41 = scmp.eq.s32.totalorder %s19, 1
    %p42 = por %p40, %p41
    %p44 = scmp.ne.s32.totalorder %s27, %s43
    %p45 = scmp.eq.s32.totalorder %s19, 0
    %p46 = por %p44, %p45
    %s48 = sadd.s32 %s47, 1
    %p51 = scmp.eq.s32.totalorder %s13, 1
    %p52 = scmp.ne.s32.totalorder %s47, %s49
    %p53 = scmp.eq.s32.totalorder %s13, 0
    %p54 = por %p52, %p53
    %p55 = scmp.ne.s32.totalorder %s47, %s49
    %p56 = scmp.eq.s32.totalorder %s18, 1
    %p57 = por %p55, %p56
    %p58 = scmp.ne.s32.totalorder %s49, %s50
    %p59 = scmp.eq.s32.totalorder %s18, 0
    %p60 = por %p58, %p59
    %p61 = scmp.ne.s32.totalorder %s49, %s50
    %p62 = scmp.eq.s32.totalorder %s19, 1
    %p63 = por %p61, %p62
    %p65 = scmp.ne.s32.totalorder %s50, %s64
    %p66 = scmp.eq.s32.totalorder %s19, 0
    %p67 = por %p65, %p66
    %s69 = sadd.s32 %s68, 1
    %p72 = scmp.eq.s32.totalorder %s13, 1
    %p73 = scmp.ne.s32.totalorder %s68, %s70
    %p74 = scmp.eq.s32.totalorder %s13, 0
    %p75 = por %p73, %p74
    %p76 = scmp.ne.s32.totalorder %s68, %s70
    %p77 = scmp.eq.s32.totalorder %s18, 1
    %p78 = por %p76, %p77
    %p79 = scmp.ne.s32.totalorder %s70, %s71
    %p80 = scmp.eq.s32.totalorder %s18, 0
    %p81 = por %p79, %p80
    %p82 = scmp.ne.s32.totalorder %s70, %s71
    %p83 = scmp.eq.s32.totalorder %s19, 1
    %p84 = por %p82, %p83
    %p86 = scmp.ne.s32.totalorder %s71, %s85
    %p87 = scmp.eq.s32.totalorder %s19, 0
    %p88 = por %p86, %p87
    %s90 = sadd.s32 %s89, 1
    %p93 = scmp.eq.s32.totalorder %s13, 1
    %p94 = scmp.ne.s32.totalorder %s89, %s91
    %p95 = scmp.eq.s32.totalorder %s13, 0
    %p96 = por %p94, %p95
    %p97 = scmp.ne.s32.totalorder %s89, %s91
    %p98 = scmp.eq.s32.totalorder %s18, 1
    %p99 = por %p97, %p98
    %p100 = scmp.ne.s32.totalorder %s91, %s92
    %p101 = scmp.eq.s32.totalorder %s18, 0
    %p102 = por %p100, %p101
    %p103 = scmp.ne.s32.totalorder %s91, %s92
    %p104 = scmp.eq.s32.totalorder %s19, 1
    %p105 = por %p103, %p104
    %p107 = scmp.ne.s32.totalorder %s92, %s106
    %p108 = scmp.eq.s32.totalorder %s19, 0
    %p109 = por %p107, %p108
    %s111 = sadd.s32 %s110, 1
    %p114 = scmp.eq.s32.totalorder %s13, 1
    %p115 = scmp.ne.s32.totalorder %s110, %s112
    %p116 = scmp.eq.s32.totalorder %s13, 0
    %p117 = por %p115, %p116
    %p118 = scmp.ne.s32.totalorder %s110, %s112
    %p119 = scmp.eq.s32.totalorder %s18, 1
    %p120 = por %p118, %p119
    %p121 = scmp.ne.s32.totalorder %s112, %s113
    %p122 = scmp.eq.s32.totalorder %s18, 0
    %p123 = por %p121, %p122
    %p124 = scmp.ne.s32.totalorder %s112, %s113
    %p125 = scmp.eq.s32.totalorder %s19, 1
    %p126 = por %p124, %p125
    %p128 = scmp.ne.s32.totalorder %s113, %s127
    %p129 = scmp.eq.s32.totalorder %s19, 0
    %p130 = por %p128, %p129
    %s131 = ssub.s32 %s13, %s20
    %p132 = scmp.eq.s32.totalorder %s131, 0
    %s134 = sadd.s32 %s133, 1
    %s135 = scalar_select %p132, %s133, %s134
    %p138 = pneg %p132
    %p139 = scmp.eq.s32.totalorder %s13, 1
    %p140 = por %p138, %p139
    %p141 = scmp.ne.s32.totalorder %s133, %s136
    %p142 = scmp.eq.s32.totalorder %s13, 0
    %p143 = por %p141, %p142
    %p144 = scmp.ne.s32.totalorder %s133, %s136
    %p145 = scmp.eq.s32.totalorder %s18, 1
    %p146 = por %p144, %p145
    %p147 = scmp.ne.s32.totalorder %s136, %s137
    %p148 = scmp.eq.s32.totalorder %s18, 0
    %p149 = por %p147, %p148
    %p150 = scmp.ne.s32.totalorder %s136, %s137
    %p151 = scmp.eq.s32.totalorder %s19, 1
    %p152 = por %p150, %p151
    %p154 = scmp.ne.s32.totalorder %s137, %s153
    %p155 = scmp.eq.s32.totalorder %s19, 0
    %p156 = por %p154, %p155
    %s157 = ssub.s32 %s13, %s20
    %p158 = scmp.eq.s32.totalorder %s157, 0
    %s160 = sadd.s32 %s159, 1
    %s161 = scalar_select %p158, %s159, %s160
    %p164 = pneg %p158
    %p165 = scmp.eq.s32.totalorder %s13, 1
    %p166 = por %p164, %p165
    %p167 = scmp.ne.s32.totalorder %s159, %s162
    %p168 = scmp.eq.s32.totalorder %s13, 0
    %p169 = por %p167, %p168
    %p170 = scmp.ne.s32.totalorder %s159, %s162
    %p171 = scmp.eq.s32.totalorder %s18, 1
    %p172 = por %p170, %p171
    %p173 = scmp.ne.s32.totalorder %s162, %s163
    %p174 = scmp.eq.s32.totalorder %s18, 0
    %p175 = por %p173, %p174
    %p176 = scmp.ne.s32.totalorder %s162, %s163
    %p177 = scmp.eq.s32.totalorder %s19, 1
    %p178 = por %p176, %p177
    %p180 = scmp.ne.s32.totalorder %s163, %s179
    %p181 = scmp.eq.s32.totalorder %s19, 0
    %p182 = por %p180, %p181
    %p183 = scmp.le.s32.totalorder 1, %s13
    %p184 = scmp.lt.s32.totalorder %s13, 3
    %p185 = pnand %p183, %p184
    %p186 = pneg %p185
    // Predicated region
    $region9: #{residual_block.4} parent=5 // pred_check
      _
    $region10: #{residual_block.4} parent=5 // pred_check_branch
      %188 = sbr.rel (%p185) target = $region12
    $region11: #{residual_block.4} parent=5 // pred_region
      %s189 = ssub.s32 %s13, 1
      // Predicated region
      $region13: #{residual_block.4} parent=11 // pred_check
        %p190 = pneg %p60
      $region14: #{residual_block.4} parent=11 // pred_check_branch
        %192 = sbr.rel (%p190) target = $region16
      $region15: #{residual_block.4} parent=11 // pred_region
        _
      $region16: #{residual_block.4} parent=11 // pred_fallthru
        _
      // Predicated region
      $region17: #{residual_block.4} parent=11 // pred_check
        %p193 = pneg %p81
      $region18: #{residual_block.4} parent=11 // pred_check_branch
        %195 = sbr.rel (%p193) target = $region20
      $region19: #{residual_block.4} parent=11 // pred_region
        _
      $region20: #{residual_block.4} parent=11 // pred_fallthru
        _
      // Predicated region
      $region21: #{residual_block.4} parent=11 // pred_check
        %p196 = pneg %p102
      $region22: #{residual_block.4} parent=11 // pred_check_branch
        %198 = sbr.rel (%p196) target = $region24
      $region23: #{residual_block.4} parent=11 // pred_region
        _
      $region24: #{residual_block.4} parent=11 // pred_fallthru
        _
      // Predicated region
      $region25: #{residual_block.4} parent=11 // pred_check
        %p199 = pneg %p123
      $region26: #{residual_block.4} parent=11 // pred_check_branch
        %201 = sbr.rel (%p199) target = $region28
      $region27: #{residual_block.4} parent=11 // pred_region
        _
      $region28: #{residual_block.4} parent=11 // pred_fallthru
        _
    $region12: #{residual_block.4} parent=5 // pred_fallthru
      _
    %p202 = scmp.lt.s32.totalorder %s13, 2
    // Predicated region
    $region29: #{residual_block.4} parent=5 // pred_check
      %p203 = pneg %p202
    $region30: #{residual_block.4} parent=5 // pred_check_branch
      %205 = sbr.rel (%p203) target = $region32
    $region31: #{residual_block.4} parent=5 // pred_region
      // Predicated region
      $region33: #{residual_block.4} parent=31 // pred_check
        %p206 = pneg %p33
      $region34: #{residual_block.4} parent=31 // pred_check_branch
        %208 = sbr.rel (%p206) target = $region36
      $region35: #{residual_block.4} parent=31 // pred_region
        %p209 = scmp.lt.s32.totalorder %s13, 1
        %s210 = scalar_select %p209, %s13, 1
        %s211 = smul.addr %s210, 32
        %s212 = smul.addr %s211, 8
        %s213 = scalar_lea.vmem %s0, %s212
      $region36: #{residual_block.4} parent=31 // pred_fallthru
        _
    $region32: #{residual_block.4} parent=5 // pred_fallthru
      _
    %p214 = scmp.le.s32.totalorder 1, %s13
    %p215 = scmp.lt.s32.totalorder %s13, 3
    %p216 = pnand %p214, %p215
    %p217 = pneg %p216
    // Predicated region
    $region37: #{residual_block.4} parent=5 // pred_check
      _
    $region38: #{residual_block.4} parent=5 // pred_check_branch
      %219 = sbr.rel (%p216) target = $region40
    $region39: #{residual_block.4} parent=5 // pred_region
      %s220 = ssub.s32 %s13, 1
      %p221 = scmp.lt.s32.totalorder %s18, 1
      %s222 = scalar_select %p221, %s18, 1
      %s223 = smul.addr %s222, 32
      %s224 = smul.addr %s223, 8
      %s225 = scalar_lea.vmem %s0, %s224
      %p226 = pneg %p39
      %p227 = pneg %p36
      %p228 = pneg %p60
      %p229 = pneg %p57
      %p230 = pneg %p81
      %p231 = pneg %p78
      %p232 = pneg %p102
      %p233 = pneg %p99
      %p234 = pneg %p123
      %p235 = pneg %p120
      %p236 = pneg %p149
      %p237 = pneg %p146
      %p238 = scmp.lt.s32.totalorder %s18, 1
      %s239 = scalar_select %p238, %s18, 1
      %s240 = smul.addr %s239, 32
      %s241 = smul.addr %s240, 8
      %s242 = scalar_lea.vmem %s5, %s241
      %p243 = pneg %p175
      %p244 = pneg %p172
      %p245 = scmp.lt.s32.totalorder %s18, 1
      %s246 = scalar_select %p245, %s18, 1
      %s247 = smul.addr %s246, 2
      %s248 = scalar_lea.vmem %s6, %s247
      %p249 = scmp.lt.s32.totalorder %s18, 1
      %s250 = scalar_select %p249, %s18, 1
      %s251 = smul.addr %s250, 32
      %s252 = smul.addr %s251, 8
      %s253 = scalar_lea.vmem %s0, %s252
      %p254 = scmp.lt.s32.totalorder %s18, 1
      %s255 = scalar_select %p254, %s18, 1
      %s256 = smul.addr %s255, 32
      %s257 = smul.addr %s256, 8
      %s258 = scalar_lea.vmem %s5, %s257
      %p259 = scmp.lt.s32.totalorder %s18, 1
      %s260 = scalar_select %p259, %s18, 1
      %s261 = smul.addr %s260, 2
      %s262 = scalar_lea.vmem %s6, %s261
      %v263 = vld [vmem:[%s253] sm:$0xff]
      %v264 = vld [vmem:[%s253 + $0x8] sm:$0xff]
      %v265 = vld [vmem:[%s253 + $0x10] sm:$0xff]
      %v266 = vld [vmem:[%s253 + $0x18] sm:$0xff]
      %v267 = vld [vmem:[%s253 + $0x20] sm:$0xff]
      %v268 = vld [vmem:[%s253 + $0x28] sm:$0xff]
      %v269 = vld [vmem:[%s253 + $0x30] sm:$0xff]
      %v270 = vld [vmem:[%s253 + $0x38] sm:$0xff]
      %v271 = vld [vmem:[%s253 + $0x40] sm:$0xff]
      %v272 = vld [vmem:[%s253 + $0x48] sm:$0xff]
      %v273 = vld [vmem:[%s253 + $0x50] sm:$0xff]
      %v274 = vld [vmem:[%s253 + $0x58] sm:$0xff]
      %v275 = vld [vmem:[%s253 + $0x60] sm:$0xff]
      %v276 = vld [vmem:[%s253 + $0x68] sm:$0xff]
      %v277 = vld [vmem:[%s253 + $0x70] sm:$0xff]
      %v278 = vld [vmem:[%s253 + $0x78] sm:$0xff]
      %v279 = vld [vmem:[%s253 + $0x80] sm:$0xff]
      %v280 = vld [vmem:[%s253 + $0x88] sm:$0xff]
      %v281 = vld [vmem:[%s253 + $0x90] sm:$0xff]
      %v282 = vld [vmem:[%s253 + $0x98] sm:$0xff]
      %v283 = vld [vmem:[%s253 + $0xa0] sm:$0xff]
      %v284 = vld [vmem:[%s253 + $0xa8] sm:$0xff]
      %v285 = vld [vmem:[%s253 + $0xb0] sm:$0xff]
      %v286 = vld [vmem:[%s253 + $0xb8] sm:$0xff]
      %v287 = vld [vmem:[%s253 + $0xc0] sm:$0xff]
      %v288 = vld [vmem:[%s253 + $0xc8] sm:$0xff]
      %v289 = vld [vmem:[%s253 + $0xd0] sm:$0xff]
      %v290 = vld [vmem:[%s253 + $0xd8] sm:$0xff]
      %v291 = vld [vmem:[%s253 + $0xe0] sm:$0xff]
      %v292 = vld [vmem:[%s253 + $0xe8] sm:$0xff]
      %v293 = vld [vmem:[%s253 + $0xf0] sm:$0xff]
      %v294 = vld [vmem:[%s253 + $0xf8] sm:$0xff]
      %v295 = vld [vmem:[%s1] sm:$0x1]
      %v297 = vperm.slane %v295, 0
      %v299 = vmul.f32 %v263, %v297
      %v300 = vmul.f32 %v264, %v297
      %v301 = vmul.f32 %v265, %v297
      %v302 = vmul.f32 %v266, %v297
      %v303 = vmul.f32 %v267, %v297
      %v304 = vmul.f32 %v268, %v297
      %v305 = vmul.f32 %v269, %v297
      %v306 = vmul.f32 %v270, %v297
      %v307 = vmul.f32 %v271, %v297
      %v308 = vmul.f32 %v272, %v297
      %v309 = vmul.f32 %v273, %v297
      %v310 = vmul.f32 %v274, %v297
      %v311 = vmul.f32 %v275, %v297
      %v312 = vmul.f32 %v276, %v297
      %v313 = vmul.f32 %v277, %v297
      %v314 = vmul.f32 %v278, %v297
      %v315 = vmul.f32 %v279, %v297
      %v316 = vmul.f32 %v280, %v297
      %v317 = vmul.f32 %v281, %v297
      %v318 = vmul.f32 %v282, %v297
      %v319 = vmul.f32 %v283, %v297
      %v320 = vmul.f32 %v284, %v297
      %v321 = vmul.f32 %v285, %v297
      %v322 = vmul.f32 %v286, %v297
      %v323 = vmul.f32 %v287, %v297
      %v324 = vmul.f32 %v288, %v297
      %v325 = vmul.f32 %v289, %v297
      %v326 = vmul.f32 %v290, %v297
      %v327 = vmul.f32 %v291, %v297
      %v328 = vmul.f32 %v292, %v297
      %v329 = vmul.f32 %v293, %v297
      %v330 = vmul.f32 %v294, %v297
      %v331 = vld [vmem:[%s2] sm:$0x1]
      %v333 = vperm.slane %v331, 0
      %v335 = vadd.f32 %v299, %v333
      %v336 = vadd.f32 %v300, %v333
      %v337 = vadd.f32 %v301, %v333
      %v338 = vadd.f32 %v302, %v333
      %v339 = vadd.f32 %v303, %v333
      %v340 = vadd.f32 %v304, %v333
      %v341 = vadd.f32 %v305, %v333
      %v342 = vadd.f32 %v306, %v333
      %v343 = vadd.f32 %v307, %v333
      %v344 = vadd.f32 %v308, %v333
      %v345 = vadd.f32 %v309, %v333
      %v346 = vadd.f32 %v310, %v333
      %v347 = vadd.f32 %v311, %v333
      %v348 = vadd.f32 %v312, %v333
      %v349 = vadd.f32 %v313, %v333
      %v350 = vadd.f32 %v314, %v333
      %v351 = vadd.f32 %v315, %v333
      %v352 = vadd.f32 %v316, %v333
      %v353 = vadd.f32 %v317, %v333
      %v354 = vadd.f32 %v318, %v333
      %v355 = vadd.f32 %v319, %v333
      %v356 = vadd.f32 %v320, %v333
      %v357 = vadd.f32 %v321, %v333
      %v358 = vadd.f32 %v322, %v333
      %v359 = vadd.f32 %v323, %v333
      %v360 = vadd.f32 %v324, %v333
      %v361 = vadd.f32 %v325, %v333
      %v362 = vadd.f32 %v326, %v333
      %v363 = vadd.f32 %v327, %v333
      %v364 = vadd.f32 %v328, %v333
      %v365 = vadd.f32 %v329, %v333
      %v366 = vadd.f32 %v330, %v333
      %v367 = vmax.f32 %v335, 0.0
      %v368 = vmax.f32 %v336, 0.0
      %v369 = vmax.f32 %v337, 0.0
      %v370 = vmax.f32 %v338, 0.0
      %v371 = vmax.f32 %v339, 0.0
      %v372 = vmax.f32 %v340, 0.0
      %v373 = vmax.f32 %v341, 0.0
      %v374 = vmax.f32 %v342, 0.0
      %v375 = vmax.f32 %v343, 0.0
      %v376 = vmax.f32 %v344, 0.0
      %v377 = vmax.f32 %v345, 0.0
      %v378 = vmax.f32 %v346, 0.0
      %v379 = vmax.f32 %v347, 0.0
      %v380 = vmax.f32 %v348, 0.0
      %v381 = vmax.f32 %v349, 0.0
      %v382 = vmax.f32 %v350, 0.0
      %v383 = vmax.f32 %v351, 0.0
      %v384 = vmax.f32 %v352, 0.0
      %v385 = vmax.f32 %v353, 0.0
      %v386 = vmax.f32 %v354, 0.0
      %v387 = vmax.f32 %v355, 0.0
      %v388 = vmax.f32 %v356, 0.0
      %v389 = vmax.f32 %v357, 0.0
      %v390 = vmax.f32 %v358, 0.0
      %v391 = vmax.f32 %v359, 0.0
      %v392 = vmax.f32 %v360, 0.0
      %v393 = vmax.f32 %v361, 0.0
      %v394 = vmax.f32 %v362, 0.0
      %v395 = vmax.f32 %v363, 0.0
      %v396 = vmax.f32 %v364, 0.0
      %v397 = vmax.f32 %v365, 0.0
      %v398 = vmax.f32 %v366, 0.0
      %399 = vst [vmem:[#allocation2] sm:$0xff] 0.0
      %400 = vst [vmem:[#allocation2 + $0x8] sm:$0xff] 0.0
      %401 = vst [vmem:[#allocation2 + $0x10] sm:$0x3] 0.0
      %402 = vst [vmem:[#allocation2 + $0x18] sm:$0xff] 0.0
      %403 = vst [vmem:[#allocation2 + $0x20] sm:$0xff] 0.0
      %404 = vst [vmem:[#allocation2 + $0x28] sm:$0x3] 0.0
      %405 = vst [vmem:[#allocation2 + $0x30] sm:$0xff] 0.0
      %406 = vst [vmem:[#allocation2 + $0x38] sm:$0xff] 0.0
      %407 = vst [vmem:[#allocation2 + $0x40] sm:$0x3] 0.0
      %408 = vst [vmem:[#allocation2 + $0x48] sm:$0xff] 0.0
      %409 = vst [vmem:[#allocation2 + $0x50] sm:$0xff] 0.0
      %410 = vst [vmem:[#allocation2 + $0x58] sm:$0x3] 0.0
      %411 = vst [vmem:[#allocation2 + $0x60] sm:$0xff] 0.0
      %412 = vst [vmem:[#allocation2 + $0x68] sm:$0xff] 0.0
      %413 = vst [vmem:[#allocation2 + $0x70] sm:$0x3] 0.0
      %414 = vst [vmem:[#allocation2 + $0x78] sm:$0xff] 0.0
      %415 = vst [vmem:[#allocation2 + $0x80] sm:$0xff] 0.0
      %416 = vst [vmem:[#allocation2 + $0x88] sm:$0x3] 0.0
      %417 = vst [vmem:[#allocation2 + $0x90] sm:$0xff] 0.0
      %418 = vst [vmem:[#allocation2 + $0x98] sm:$0xff] 0.0
      %419 = vst [vmem:[#allocation2 + $0xa0] sm:$0x3] 0.0
      %420 = vst [vmem:[#allocation2 + $0xa8] sm:$0xff] 0.0
      %421 = vst [vmem:[#allocation2 + $0xb0] sm:$0xff] 0.0
      %422 = vst [vmem:[#allocation2 + $0xb8] sm:$0x3] 0.0
      %423 = vst [vmem:[#allocation2 + $0xc0] sm:$0xff] 0.0
      %424 = vst [vmem:[#allocation2 + $0xc8] sm:$0xff] 0.0
      %425 = vst [vmem:[#allocation2 + $0xd0] sm:$0x3] 0.0
      %426 = vst [vmem:[#allocation2 + $0xd8] sm:$0xff] 0.0
      %427 = vst [vmem:[#allocation2 + $0xe0] sm:$0xff] 0.0
      %428 = vst [vmem:[#allocation2 + $0xe8] sm:$0x3] 0.0
      %429 = vst [vmem:[#allocation2 + $0xf0] sm:$0xff] 0.0
      %430 = vst [vmem:[#allocation2 + $0xf8] sm:$0xff] 0.0
      %431 = vst [vmem:[#allocation2 + $0x100] sm:$0x3] 0.0
      %432 = vst [vmem:[#allocation2 + $0x108] sm:$0xff] 0.0
      %433 = vst [vmem:[#allocation2 + $0x110] sm:$0xff] 0.0
      %434 = vst [vmem:[#allocation2 + $0x118] sm:$0x3] 0.0
      %435 = vst [vmem:[#allocation2 + $0x120] sm:$0xff] 0.0
      %436 = vst [vmem:[#allocation2 + $0x128] sm:$0xff] 0.0
      %437 = vst [vmem:[#allocation2 + $0x130] sm:$0x3] 0.0
      %438 = vst [vmem:[#allocation2 + $0x138] sm:$0xff] 0.0
      %439 = vst [vmem:[#allocation2 + $0x140] sm:$0xff] 0.0
      %440 = vst [vmem:[#allocation2 + $0x148] sm:$0x3] 0.0
      %441 = vst [vmem:[#allocation2 + $0x150] sm:$0xff] 0.0
      %442 = vst [vmem:[#allocation2 + $0x158] sm:$0xff] 0.0
      %443 = vst [vmem:[#allocation2 + $0x160] sm:$0x3] 0.0
      %444 = vst [vmem:[#allocation2 + $0x168] sm:$0xff] 0.0
      %445 = vst [vmem:[#allocation2 + $0x170] sm:$0xff] 0.0
      %446 = vst [vmem:[#allocation2 + $0x178] sm:$0x3] 0.0
      %447 = vst [vmem:[#allocation2 + $0x180] sm:$0xff] 0.0
      %448 = vst [vmem:[#allocation2 + $0x188] sm:$0xff] 0.0
      %449 = vst [vmem:[#allocation2 + $0x190] sm:$0x3] 0.0
      %450 = vst [vmem:[#allocation2 + $0x198] sm:$0xff] 0.0
      %451 = vst [vmem:[#allocation2 + $0x1a0] sm:$0xff] 0.0
      %452 = vst [vmem:[#allocation2 + $0x1a8] sm:$0x3] 0.0
      %s453 = scalar_lea.vmem [#allocation2], 24
      %vm454 = vcmask 31744
      %455 = vst.msk [vmem:[%s453 + $0x1] sm:$0xff] %vm454, %v367
      %456 = vst.msk [vmem:[%s453 + $0x9] sm:$0xff] %vm454, %v368
      %457 = vst.msk [vmem:[%s453 + $0x19] sm:$0xff] %vm454, %v369
      %458 = vst.msk [vmem:[%s453 + $0x21] sm:$0xff] %vm454, %v370
      %459 = vst.msk [vmem:[%s453 + $0x31] sm:$0xff] %vm454, %v371
      %460 = vst.msk [vmem:[%s453 + $0x39] sm:$0xff] %vm454, %v372
      %461 = vst.msk [vmem:[%s453 + $0x49] sm:$0xff] %vm454, %v373
      %462 = vst.msk [vmem:[%s453 + $0x51] sm:$0xff] %vm454, %v374
      %463 = vst.msk [vmem:[%s453 + $0x61] sm:$0xff] %vm454, %v375
      %464 = vst.msk [vmem:[%s453 + $0x69] sm:$0xff] %vm454, %v376
      %465 = vst.msk [vmem:[%s453 + $0x79] sm:$0xff] %vm454, %v377
      %466 = vst.msk [vmem:[%s453 + $0x81] sm:$0xff] %vm454, %v378
      %467 = vst.msk [vmem:[%s453 + $0x91] sm:$0xff] %vm454, %v379
      %468 = vst.msk [vmem:[%s453 + $0x99] sm:$0xff] %vm454, %v380
      %469 = vst.msk [vmem:[%s453 + $0xa9] sm:$0xff] %vm454, %v381
      %470 = vst.msk [vmem:[%s453 + $0xb1] sm:$0xff] %vm454, %v382
      %471 = vst.msk [vmem:[%s453 + $0xc1] sm:$0xff] %vm454, %v383
      %472 = vst.msk [vmem:[%s453 + $0xc9] sm:$0xff] %vm454, %v384
      %473 = vst.msk [vmem:[%s453 + $0xd9] sm:$0xff] %vm454, %v385
      %474 = vst.msk [vmem:[%s453 + $0xe1] sm:$0xff] %vm454, %v386
      %475 = vst.msk [vmem:[%s453 + $0xf1] sm:$0xff] %vm454, %v387
      %476 = vst.msk [vmem:[%s453 + $0xf9] sm:$0xff] %vm454, %v388
      %477 = vst.msk [vmem:[%s453 + $0x109] sm:$0xff] %vm454, %v389
      %478 = vst.msk [vmem:[%s453 + $0x111] sm:$0xff] %vm454, %v390
      %479 = vst.msk [vmem:[%s453 + $0x121] sm:$0xff] %vm454, %v391
      %480 = vst.msk [vmem:[%s453 + $0x129] sm:$0xff] %vm454, %v392
      %481 = vst.msk [vmem:[%s453 + $0x139] sm:$0xff] %vm454, %v393
      %482 = vst.msk [vmem:[%s453 + $0x141] sm:$0xff] %vm454, %v394
      %483 = vst.msk [vmem:[%s453 + $0x151] sm:$0xff] %vm454, %v395
      %484 = vst.msk [vmem:[%s453 + $0x159] sm:$0xff] %vm454, %v396
      %485 = vst.msk [vmem:[%s453 + $0x169] sm:$0xff] %vm454, %v397
      %486 = vst.msk [vmem:[%s453 + $0x171] sm:$0xff] %vm454, %v398
      %v487 = vld [vmem:[#allocation2] sm:$0xff]
      %v488 = vld [vmem:[#allocation2 + $0x8] sm:$0xff]
      %v489 = vld [vmem:[#allocation2 + $0x18] sm:$0xff]
      %v490 = vld [vmem:[#allocation2 + $0x20] sm:$0xff]
      %v491 = vld [vmem:[#allocation2 + $0x30] sm:$0xff]
      %v492 = vld [vmem:[#allocation2 + $0x38] sm:$0xff]
      %v493 = vld [vmem:[#allocation2 + $0x48] sm:$0xff]
      %v494 = vld [vmem:[#allocation2 + $0x50] sm:$0xff]
      %v495 = vld [vmem:[#allocation2 + $0x60] sm:$0xff]
      %v496 = vld [vmem:[#allocation2 + $0x68] sm:$0xff]
      %v497 = vld [vmem:[#allocation2 + $0x78] sm:$0xff]
      %v498 = vld [vmem:[#allocation2 + $0x80] sm:$0xff]
      %v499 = vld [vmem:[#allocation2 + $0x90] sm:$0xff]
      %v500 = vld [vmem:[#allocation2 + $0x98] sm:$0xff]
      %v501 = vld [vmem:[#allocation2 + $0xa8] sm:$0xff]
      %v502 = vld [vmem:[#allocation2 + $0xb0] sm:$0xff]
      %v503 = vld [vmem:[#allocation2 + $0xc0] sm:$0xff]
      %v504 = vld [vmem:[#allocation2 + $0xc8] sm:$0xff]
      %v505 = vld [vmem:[#allocation2 + $0xd8] sm:$0xff]
      %v506 = vld [vmem:[#allocation2 + $0xe0] sm:$0xff]
      %v507 = vld [vmem:[#allocation2 + $0xf0] sm:$0xff]
      %v508 = vld [vmem:[#allocation2 + $0xf8] sm:$0xff]
      %v509 = vld [vmem:[#allocation2 + $0x108] sm:$0xff]
      %v510 = vld [vmem:[#allocation2 + $0x110] sm:$0xff]
      %v511 = vld [vmem:[#allocation2 + $0x120] sm:$0xff]
      %v512 = vld [vmem:[#allocation2 + $0x128] sm:$0xff]
      %v513 = vld [vmem:[#allocation2 + $0x138] sm:$0xff]
      %v514 = vld [vmem:[#allocation2 + $0x140] sm:$0xff]
      %v515 = vld [vmem:[#allocation2 + $0x150] sm:$0xff]
      %v516 = vld [vmem:[#allocation2 + $0x158] sm:$0xff]
      %v517 = vld [vmem:[#allocation2 + $0x168] sm:$0xff]
      %v518 = vld [vmem:[#allocation2 + $0x170] sm:$0xff]
      %519 = vst [vmem:[#allocation3] sm:$0xff] %v487
      %520 = vst [vmem:[#allocation3 + $0x48] sm:$0xff] %v488
      %521 = vst [vmem:[#allocation3 + $0x90] sm:$0xff] %v489
      %522 = vst [vmem:[#allocation3 + $0xd8] sm:$0xff] %v490
      %523 = vst [vmem:[#allocation3 + $0x120] sm:$0xff] %v491
      %524 = vst [vmem:[#allocation3 + $0x168] sm:$0xff] %v492
      %525 = vst [vmem:[#allocation3 + $0x1b0] sm:$0xff] %v493
      %526 = vst [vmem:[#allocation3 + $0x1f8] sm:$0xff] %v494
      %527 = vst [vmem:[#allocation3 + $0x240] sm:$0xff] %v495
      %528 = vst [vmem:[#allocation3 + $0x288] sm:$0xff] %v496
      %529 = vst [vmem:[#allocation3 + $0x2d0] sm:$0xff] %v497
      %530 = vst [vmem:[#allocation3 + $0x318] sm:$0xff] %v498
      %531 = vst [vmem:[#allocation3 + $0x360] sm:$0xff] %v499
      %532 = vst [vmem:[#allocation3 + $0x3a8] sm:$0xff] %v500
      %533 = vst [vmem:[#allocation3 + $0x3f0] sm:$0xff] %v501
      %534 = vst [vmem:[#allocation3 + $0x438] sm:$0xff] %v502
      %535 = vst [vmem:[#allocation3 + $0x480] sm:$0xff] %v503
      %536 = vst [vmem:[#allocation3 + $0x4c8] sm:$0xff] %v504
      %537 = vst [vmem:[#allocation3 + $0x510] sm:$0xff] %v505
      %538 = vst [vmem:[#allocation3 + $0x558] sm:$0xff] %v506
      %539 = vst [vmem:[#allocation3 + $0x5a0] sm:$0xff] %v507
      %540 = vst [vmem:[#allocation3 + $0x5e8] sm:$0xff] %v508
      %541 = vst [vmem:[#allocation3 + $0x630] sm:$0xff] %v509
      %542 = vst [vmem:[#allocation3 + $0x678] sm:$0xff] %v510
      %543 = vst [vmem:[#allocation3 + $0x6c0] sm:$0xff] %v511
      %544 = vst [vmem:[#allocation3 + $0x708] sm:$0xff] %v512
      %545 = vst [vmem:[#allocation3 + $0x750] sm:$0xff] %v513
      %546 = vst [vmem:[#allocation3 + $0x798] sm:$0xff] %v514
      %547 = vst [vmem:[#allocation3 + $0x7e0] sm:$0xff] %v515
      %548 = vst [vmem:[#allocation3 + $0x828] sm:$0xff] %v516
      %549 = vst [vmem:[#allocation3 + $0x870] sm:$0xff] %v517
      %550 = vst [vmem:[#allocation3 + $0x8b8] sm:$0xff] %v518
      %v551 = vld [vmem:[#allocation2 + $0x1] sm:$0xff]
      %v552 = vld [vmem:[#allocation2 + $0x9] sm:$0xff]
      %v553 = vld [vmem:[#allocation2 + $0x19] sm:$0xff]
      %v554 = vld [vmem:[#allocation2 + $0x21] sm:$0xff]
      %v555 = vld [vmem:[#allocation2 + $0x31] sm:$0xff]
      %v556 = vld [vmem:[#allocation2 + $0x39] sm:$0xff]
      %v557 = vld [vmem:[#allocation2 + $0x49] sm:$0xff]
      %v558 = vld [vmem:[#allocation2 + $0x51] sm:$0xff]
      %v559 = vld [vmem:[#allocation2 + $0x61] sm:$0xff]
      %v560 = vld [vmem:[#allocation2 + $0x69] sm:$0xff]
      %v561 = vld [vmem:[#allocation2 + $0x79] sm:$0xff]
      %v562 = vld [vmem:[#allocation2 + $0x81] sm:$0xff]
      %v563 = vld [vmem:[#allocation2 + $0x91] sm:$0xff]
      %v564 = vld [vmem:[#allocation2 + $0x99] sm:$0xff]
      %v565 = vld [vmem:[#allocation2 + $0xa9] sm:$0xff]
      %v566 = vld [vmem:[#allocation2 + $0xb1] sm:$0xff]
      %v567 = vld [vmem:[#allocation2 + $0xc1] sm:$0xff]
      %v568 = vld [vmem:[#allocation2 + $0xc9] sm:$0xff]
      %v569 = vld [vmem:[#allocation2 + $0xd9] sm:$0xff]
      %v570 = vld [vmem:[#allocation2 + $0xe1] sm:$0xff]
      %v571 = vld [vmem:[#allocation2 + $0xf1] sm:$0xff]
      %v572 = vld [vmem:[#allocation2 + $0xf9] sm:$0xff]
      %v573 = vld [vmem:[#allocation2 + $0x109] sm:$0xff]
      %v574 = vld [vmem:[#allocation2 + $0x111] sm:$0xff]
      %v575 = vld [vmem:[#allocation2 + $0x121] sm:$0xff]
      %v576 = vld [vmem:[#allocation2 + $0x129] sm:$0xff]
      %v577 = vld [vmem:[#allocation2 + $0x139] sm:$0xff]
      %v578 = vld [vmem:[#allocation2 + $0x141] sm:$0xff]
      %v579 = vld [vmem:[#allocation2 + $0x151] sm:$0xff]
      %v580 = vld [vmem:[#allocation2 + $0x159] sm:$0xff]
      %v581 = vld [vmem:[#allocation2 + $0x169] sm:$0xff]
      %v582 = vld [vmem:[#allocation2 + $0x171] sm:$0xff]
      %583 = vst [vmem:[#allocation3 + $0x8] sm:$0xff] %v551
      %584 = vst [vmem:[#allocation3 + $0x50] sm:$0xff] %v552
      %585 = vst [vmem:[#allocation3 + $0x98] sm:$0xff] %v553
      %586 = vst [vmem:[#allocation3 + $0xe0] sm:$0xff] %v554
      %587 = vst [vmem:[#allocation3 + $0x128] sm:$0xff] %v555
      %588 = vst [vmem:[#allocation3 + $0x170] sm:$0xff] %v556
      %589 = vst [vmem:[#allocation3 + $0x1b8] sm:$0xff] %v557
      %590 = vst [vmem:[#allocation3 + $0x200] sm:$0xff] %v558
      %591 = vst [vmem:[#allocation3 + $0x248] sm:$0xff] %v559
      %592 = vst [vmem:[#allocation3 + $0x290] sm:$0xff] %v560
      %593 = vst [vmem:[#allocation3 + $0x2d8] sm:$0xff] %v561
      %594 = vst [vmem:[#allocation3 + $0x320] sm:$0xff] %v562
      %595 = vst [vmem:[#allocation3 + $0x368] sm:$0xff] %v563
      %596 = vst [vmem:[#allocation3 + $0x3b0] sm:$0xff] %v564
      %597 = vst [vmem:[#allocation3 + $0x3f8] sm:$0xff] %v565
      %598 = vst [vmem:[#allocation3 + $0x440] sm:$0xff] %v566
      %599 = vst [vmem:[#allocation3 + $0x488] sm:$0xff] %v567
      %600 = vst [vmem:[#allocation3 + $0x4d0] sm:$0xff] %v568
      %601 = vst [vmem:[#allocation3 + $0x518] sm:$0xff] %v569
      %602 = vst [vmem:[#allocation3 + $0x560] sm:$0xff] %v570
      %603 = vst [vmem:[#allocation3 + $0x5a8] sm:$0xff] %v571
      %604 = vst [vmem:[#allocation3 + $0x5f0] sm:$0xff] %v572
      %605 = vst [vmem:[#allocation3 + $0x638] sm:$0xff] %v573
      %606 = vst [vmem:[#allocation3 + $0x680] sm:$0xff] %v574
      %607 = vst [vmem:[#allocation3 + $0x6c8] sm:$0xff] %v575
      %608 = vst [vmem:[#allocation3 + $0x710] sm:$0xff] %v576
      %609 = vst [vmem:[#allocation3 + $0x758] sm:$0xff] %v577
      %610 = vst [vmem:[#allocation3 + $0x7a0] sm:$0xff] %v578
      %611 = vst [vmem:[#allocation3 + $0x7e8] sm:$0xff] %v579
      %612 = vst [vmem:[#allocation3 + $0x830] sm:$0xff] %v580
      %613 = vst [vmem:[#allocation3 + $0x878] sm:$0xff] %v581
      %614 = vst [vmem:[#allocation3 + $0x8c0] sm:$0xff] %v582
      %v615 = vld [vmem:[#allocation2 + $0x2] sm:$0xff]
      %v616 = vld [vmem:[#allocation2 + $0xa] sm:$0xff]
      %v617 = vld [vmem:[#allocation2 + $0x1a] sm:$0xff]
      %v618 = vld [vmem:[#allocation2 + $0x22] sm:$0xff]
      %v619 = vld [vmem:[#allocation2 + $0x32] sm:$0xff]
      %v620 = vld [vmem:[#allocation2 + $0x3a] sm:$0xff]
      %v621 = vld [vmem:[#allocation2 + $0x4a] sm:$0xff]
      %v622 = vld [vmem:[#allocation2 + $0x52] sm:$0xff]
      %v623 = vld [vmem:[#allocation2 + $0x62] sm:$0xff]
      %v624 = vld [vmem:[#allocation2 + $0x6a] sm:$0xff]
      %v625 = vld [vmem:[#allocation2 + $0x7a] sm:$0xff]
      %v626 = vld [vmem:[#allocation2 + $0x82] sm:$0xff]
      %v627 = vld [vmem:[#allocation2 + $0x92] sm:$0xff]
      %v628 = vld [vmem:[#allocation2 + $0x9a] sm:$0xff]
      %v629 = vld [vmem:[#allocation2 + $0xaa] sm:$0xff]
      %v630 = vld [vmem:[#allocation2 + $0xb2] sm:$0xff]
      %v631 = vld [vmem:[#allocation2 + $0xc2] sm:$0xff]
      %v632 = vld [vmem:[#allocation2 + $0xca] sm:$0xff]
      %v633 = vld [vmem:[#allocation2 + $0xda] sm:$0xff]
      %v634 = vld [vmem:[#allocation2 + $0xe2] sm:$0xff]
      %v635 = vld [vmem:[#allocation2 + $0xf2] sm:$0xff]
      %v636 = vld [vmem:[#allocation2 + $0xfa] sm:$0xff]
      %v637 = vld [vmem:[#allocation2 + $0x10a] sm:$0xff]
      %v638 = vld [vmem:[#allocation2 + $0x112] sm:$0xff]
      %v639 = vld [vmem:[#allocation2 + $0x122] sm:$0xff]
      %v640 = vld [vmem:[#allocation2 + $0x12a] sm:$0xff]
      %v641 = vld [vmem:[#allocation2 + $0x13a] sm:$0xff]
      %v642 = vld [vmem:[#allocation2 + $0x142] sm:$0xff]
      %v643 = vld [vmem:[#allocation2 + $0x152] sm:$0xff]
      %v644 = vld [vmem:[#allocation2 + $0x15a] sm:$0xff]
      %v645 = vld [vmem:[#allocation2 + $0x16a] sm:$0xff]
      %v646 = vld [vmem:[#allocation2 + $0x172] sm:$0xff]
      %647 = vst [vmem:[#allocation3 + $0x10] sm:$0xff] %v615
      %648 = vst [vmem:[#allocation3 + $0x58] sm:$0xff] %v616
      %649 = vst [vmem:[#allocation3 + $0xa0] sm:$0xff] %v617
      %650 = vst [vmem:[#allocation3 + $0xe8] sm:$0xff] %v618
      %651 = vst [vmem:[#allocation3 + $0x130] sm:$0xff] %v619
      %652 = vst [vmem:[#allocation3 + $0x178] sm:$0xff] %v620
      %653 = vst [vmem:[#allocation3 + $0x1c0] sm:$0xff] %v621
      %654 = vst [vmem:[#allocation3 + $0x208] sm:$0xff] %v622
      %655 = vst [vmem:[#allocation3 + $0x250] sm:$0xff] %v623
      %656 = vst [vmem:[#allocation3 + $0x298] sm:$0xff] %v624
      %657 = vst [vmem:[#allocation3 + $0x2e0] sm:$0xff] %v625
      %658 = vst [vmem:[#allocation3 + $0x328] sm:$0xff] %v626
      %659 = vst [vmem:[#allocation3 + $0x370] sm:$0xff] %v627
      %660 = vst [vmem:[#allocation3 + $0x3b8] sm:$0xff] %v628
      %661 = vst [vmem:[#allocation3 + $0x400] sm:$0xff] %v629
      %662 = vst [vmem:[#allocation3 + $0x448] sm:$0xff] %v630
      %663 = vst [vmem:[#allocation3 + $0x490] sm:$0xff] %v631
      %664 = vst [vmem:[#allocation3 + $0x4d8] sm:$0xff] %v632
      %665 = vst [vmem:[#allocation3 + $0x520] sm:$0xff] %v633
      %666 = vst [vmem:[#allocation3 + $0x568] sm:$0xff] %v634
      %667 = vst [vmem:[#allocation3 + $0x5b0] sm:$0xff] %v635
      %668 = vst [vmem:[#allocation3 + $0x5f8] sm:$0xff] %v636
      %669 = vst [vmem:[#allocation3 + $0x640] sm:$0xff] %v637
      %670 = vst [vmem:[#allocation3 + $0x688] sm:$0xff] %v638
      %671 = vst [vmem:[#allocation3 + $0x6d0] sm:$0xff] %v639
      %672 = vst [vmem:[#allocation3 + $0x718] sm:$0xff] %v640
      %673 = vst [vmem:[#allocation3 + $0x760] sm:$0xff] %v641
      %674 = vst [vmem:[#allocation3 + $0x7a8] sm:$0xff] %v642
      %675 = vst [vmem:[#allocation3 + $0x7f0] sm:$0xff] %v643
      %676 = vst [vmem:[#allocation3 + $0x838] sm:$0xff] %v644
      %677 = vst [vmem:[#allocation3 + $0x880] sm:$0xff] %v645
      %678 = vst [vmem:[#allocation3 + $0x8c8] sm:$0xff] %v646
      %v679 = vld [vmem:[%s453] sm:$0xff]
      %v680 = vld [vmem:[%s453 + $0x8] sm:$0xff]
      %v681 = vld [vmem:[%s453 + $0x18] sm:$0xff]
      %v682 = vld [vmem:[%s453 + $0x20] sm:$0xff]
      %v683 = vld [vmem:[%s453 + $0x30] sm:$0xff]
      %v684 = vld [vmem:[%s453 + $0x38] sm:$0xff]
      %v685 = vld [vmem:[%s453 + $0x48] sm:$0xff]
      %v686 = vld [vmem:[%s453 + $0x50] sm:$0xff]
      %v687 = vld [vmem:[%s453 + $0x60] sm:$0xff]
      %v688 = vld [vmem:[%s453 + $0x68] sm:$0xff]
      %v689 = vld [vmem:[%s453 + $0x78] sm:$0xff]
      %v690 = vld [vmem:[%s453 + $0x80] sm:$0xff]
      %v691 = vld [vmem:[%s453 + $0x90] sm:$0xff]
      %v692 = vld [vmem:[%s453 + $0x98] sm:$0xff]
      %v693 = vld [vmem:[%s453 + $0xa8] sm:$0xff]
      %v694 = vld [vmem:[%s453 + $0xb0] sm:$0xff]
      %v695 = vld [vmem:[%s453 + $0xc0] sm:$0xff]
      %v696 = vld [vmem:[%s453 + $0xc8] sm:$0xff]
      %v697 = vld [vmem:[%s453 + $0xd8] sm:$0xff]
      %v698 = vld [vmem:[%s453 + $0xe0] sm:$0xff]
      %v699 = vld [vmem:[%s453 + $0xf0] sm:$0xff]
      %v700 = vld [vmem:[%s453 + $0xf8] sm:$0xff]
      %v701 = vld [vmem:[%s453 + $0x108] sm:$0xff]
      %v702 = vld [vmem:[%s453 + $0x110] sm:$0xff]
      %v703 = vld [vmem:[%s453 + $0x120] sm:$0xff]
      %v704 = vld [vmem:[%s453 + $0x128] sm:$0xff]
      %v705 = vld [vmem:[%s453 + $0x138] sm:$0xff]
      %v706 = vld [vmem:[%s453 + $0x140] sm:$0xff]
      %v707 = vld [vmem:[%s453 + $0x150] sm:$0xff]
      %v708 = vld [vmem:[%s453 + $0x158] sm:$0xff]
      %v709 = vld [vmem:[%s453 + $0x168] sm:$0xff]
      %v710 = vld [vmem:[%s453 + $0x170] sm:$0xff]
      %711 = vst [vmem:[#allocation3 + $0x18] sm:$0xff] %v679
      %712 = vst [vmem:[#allocation3 + $0x60] sm:$0xff] %v680
      %713 = vst [vmem:[#allocation3 + $0xa8] sm:$0xff] %v681
      %714 = vst [vmem:[#allocation3 + $0xf0] sm:$0xff] %v682
      %715 = vst [vmem:[#allocation3 + $0x138] sm:$0xff] %v683
      %716 = vst [vmem:[#allocation3 + $0x180] sm:$0xff] %v684
      %717 = vst [vmem:[#allocation3 + $0x1c8] sm:$0xff] %v685
      %718 = vst [vmem:[#allocation3 + $0x210] sm:$0xff] %v686
      %719 = vst [vmem:[#allocation3 + $0x258] sm:$0xff] %v687
      %720 = vst [vmem:[#allocation3 + $0x2a0] sm:$0xff] %v688
      %721 = vst [vmem:[#allocation3 + $0x2e8] sm:$0xff] %v689
      %722 = vst [vmem:[#allocation3 + $0x330] sm:$0xff] %v690
      %723 = vst [vmem:[#allocation3 + $0x378] sm:$0xff] %v691
      %724 = vst [vmem:[#allocation3 + $0x3c0] sm:$0xff] %v692
      %725 = vst [vmem:[#allocation3 + $0x408] sm:$0xff] %v693
      %726 = vst [vmem:[#allocation3 + $0x450] sm:$0xff] %v694
      %727 = vst [vmem:[#allocation3 + $0x498] sm:$0xff] %v695
      %728 = vst [vmem:[#allocation3 + $0x4e0] sm:$0xff] %v696
      %729 = vst [vmem:[#allocation3 + $0x528] sm:$0xff] %v697
      %730 = vst [vmem:[#allocation3 + $0x570] sm:$0xff] %v698
      %731 = vst [vmem:[#allocation3 + $0x5b8] sm:$0xff] %v699
      %732 = vst [vmem:[#allocation3 + $0x600] sm:$0xff] %v700
      %733 = vst [vmem:[#allocation3 + $0x648] sm:$0xff] %v701
      %734 = vst [vmem:[#allocation3 + $0x690] sm:$0xff] %v702
      %735 = vst [vmem:[#allocation3 + $0x6d8] sm:$0xff] %v703
      %736 = vst [vmem:[#allocation3 + $0x720] sm:$0xff] %v704
      %737 = vst [vmem:[#allocation3 + $0x768] sm:$0xff] %v705
      %738 = vst [vmem:[#allocation3 + $0x7b0] sm:$0xff] %v706
      %739 = vst [vmem:[#allocation3 + $0x7f8] sm:$0xff] %v707
      %740 = vst [vmem:[#allocation3 + $0x840] sm:$0xff] %v708
      %741 = vst [vmem:[#allocation3 + $0x888] sm:$0xff] %v709
      %742 = vst [vmem:[#allocation3 + $0x8d0] sm:$0xff] %v710
      %v743 = vld [vmem:[%s453 + $0x1] sm:$0xff]
      %v744 = vld [vmem:[%s453 + $0x9] sm:$0xff]
      %v745 = vld [vmem:[%s453 + $0x19] sm:$0xff]
      %v746 = vld [vmem:[%s453 + $0x21] sm:$0xff]
      %v747 = vld [vmem:[%s453 + $0x31] sm:$0xff]
      %v748 = vld [vmem:[%s453 + $0x39] sm:$0xff]
      %v749 = vld [vmem:[%s453 + $0x49] sm:$0xff]
      %v750 = vld [vmem:[%s453 + $0x51] sm:$0xff]
      %v751 = vld [vmem:[%s453 + $0x61] sm:$0xff]
      %v752 = vld [vmem:[%s453 + $0x69] sm:$0xff]
      %v753 = vld [vmem:[%s453 + $0x79] sm:$0xff]
      %v754 = vld [vmem:[%s453 + $0x81] sm:$0xff]
      %v755 = vld [vmem:[%s453 + $0x91] sm:$0xff]
      %v756 = vld [vmem:[%s453 + $0x99] sm:$0xff]
      %v757 = vld [vmem:[%s453 + $0xa9] sm:$0xff]
      %v758 = vld [vmem:[%s453 + $0xb1] sm:$0xff]
      %v759 = vld [vmem:[%s453 + $0xc1] sm:$0xff]
      %v760 = vld [vmem:[%s453 + $0xc9] sm:$0xff]
      %v761 = vld [vmem:[%s453 + $0xd9] sm:$0xff]
      %v762 = vld [vmem:[%s453 + $0xe1] sm:$0xff]
      %v763 = vld [vmem:[%s453 + $0xf1] sm:$0xff]
      %v764 = vld [vmem:[%s453 + $0xf9] sm:$0xff]
      %v765 = vld [vmem:[%s453 + $0x109] sm:$0xff]
      %v766 = vld [vmem:[%s453 + $0x111] sm:$0xff]
      %v767 = vld [vmem:[%s453 + $0x121] sm:$0xff]
      %v768 = vld [vmem:[%s453 + $0x129] sm:$0xff]
      %v769 = vld [vmem:[%s453 + $0x139] sm:$0xff]
      %v770 = vld [vmem:[%s453 + $0x141] sm:$0xff]
      %v771 = vld [vmem:[%s453 + $0x151] sm:$0xff]
      %v772 = vld [vmem:[%s453 + $0x159] sm:$0xff]
      %v773 = vld [vmem:[%s453 + $0x169] sm:$0xff]
      %v774 = vld [vmem:[%s453 + $0x171] sm:$0xff]
      %775 = vst [vmem:[#allocation3 + $0x20] sm:$0xff] %v743
      %776 = vst [vmem:[#allocation3 + $0x68] sm:$0xff] %v744
      %777 = vst [vmem:[#allocation3 + $0xb0] sm:$0xff] %v745
      %778 = vst [vmem:[#allocation3 + $0xf8] sm:$0xff] %v746
      %779 = vst [vmem:[#allocation3 + $0x140] sm:$0xff] %v747
      %780 = vst [vmem:[#allocation3 + $0x188] sm:$0xff] %v748
      %781 = vst [vmem:[#allocation3 + $0x1d0] sm:$0xff] %v749
      %782 = vst [vmem:[#allocation3 + $0x218] sm:$0xff] %v750
      %783 = vst [vmem:[#allocation3 + $0x260] sm:$0xff] %v751
      %784 = vst [vmem:[#allocation3 + $0x2a8] sm:$0xff] %v752
      %785 = vst [vmem:[#allocation3 + $0x2f0] sm:$0xff] %v753
      %786 = vst [vmem:[#allocation3 + $0x338] sm:$0xff] %v754
      %787 = vst [vmem:[#allocation3 + $0x380] sm:$0xff] %v755
      %788 = vst [vmem:[#allocation3 + $0x3c8] sm:$0xff] %v756
      %789 = vst [vmem:[#allocation3 + $0x410] sm:$0xff] %v757
      %790 = vst [vmem:[#allocation3 + $0x458] sm:$0xff] %v758
      %791 = vst [vmem:[#allocation3 + $0x4a0] sm:$0xff] %v759
      %792 = vst [vmem:[#allocation3 + $0x4e8] sm:$0xff] %v760
      %793 = vst [vmem:[#allocation3 + $0x530] sm:$0xff] %v761
      %794 = vst [vmem:[#allocation3 + $0x578] sm:$0xff] %v762
      %795 = vst [vmem:[#allocation3 + $0x5c0] sm:$0xff] %v763
      %796 = vst [vmem:[#allocation3 + $0x608] sm:$0xff] %v764
      %797 = vst [vmem:[#allocation3 + $0x650] sm:$0xff] %v765
      %798 = vst [vmem:[#allocation3 + $0x698] sm:$0xff] %v766
      %799 = vst [vmem:[#allocation3 + $0x6e0] sm:$0xff] %v767
      %800 = vst [vmem:[#allocation3 + $0x728] sm:$0xff] %v768
      %801 = vst [vmem:[#allocation3 + $0x770] sm:$0xff] %v769
      %802 = vst [vmem:[#allocation3 + $0x7b8] sm:$0xff] %v770
      %803 = vst [vmem:[#allocation3 + $0x800] sm:$0xff] %v771
      %804 = vst [vmem:[#allocation3 + $0x848] sm:$0xff] %v772
      %805 = vst [vmem:[#allocation3 + $0x890] sm:$0xff] %v773
      %806 = vst [vmem:[#allocation3 + $0x8d8] sm:$0xff] %v774
      %v807 = vld [vmem:[%s453 + $0x2] sm:$0xff]
      %v808 = vld [vmem:[%s453 + $0xa] sm:$0xff]
      %v809 = vld [vmem:[%s453 + $0x1a] sm:$0xff]
      %v810 = vld [vmem:[%s453 + $0x22] sm:$0xff]
      %v811 = vld [vmem:[%s453 + $0x32] sm:$0xff]
      %v812 = vld [vmem:[%s453 + $0x3a] sm:$0xff]
      %v813 = vld [vmem:[%s453 + $0x4a] sm:$0xff]
      %v814 = vld [vmem:[%s453 + $0x52] sm:$0xff]
      %v815 = vld [vmem:[%s453 + $0x62] sm:$0xff]
      %v816 = vld [vmem:[%s453 + $0x6a] sm:$0xff]
      %v817 = vld [vmem:[%s453 + $0x7a] sm:$0xff]
      %v818 = vld [vmem:[%s453 + $0x82] sm:$0xff]
      %v819 = vld [vmem:[%s453 + $0x92] sm:$0xff]
      %v820 = vld [vmem:[%s453 + $0x9a] sm:$0xff]
      %v821 = vld [vmem:[%s453 + $0xaa] sm:$0xff]
      %v822 = vld [vmem:[%s453 + $0xb2] sm:$0xff]
      %v823 = vld [vmem:[%s453 + $0xc2] sm:$0xff]
      %v824 = vld [vmem:[%s453 + $0xca] sm:$0xff]
      %v825 = vld [vmem:[%s453 + $0xda] sm:$0xff]
      %v826 = vld [vmem:[%s453 + $0xe2] sm:$0xff]
      %v827 = vld [vmem:[%s453 + $0xf2] sm:$0xff]
      %v828 = vld [vmem:[%s453 + $0xfa] sm:$0xff]
      %v829 = vld [vmem:[%s453 + $0x10a] sm:$0xff]
      %v830 = vld [vmem:[%s453 + $0x112] sm:$0xff]
      %v831 = vld [vmem:[%s453 + $0x122] sm:$0xff]
      %v832 = vld [vmem:[%s453 + $0x12a] sm:$0xff]
      %v833 = vld [vmem:[%s453 + $0x13a] sm:$0xff]
      %v834 = vld [vmem:[%s453 + $0x142] sm:$0xff]
      %v835 = vld [vmem:[%s453 + $0x152] sm:$0xff]
      %v836 = vld [vmem:[%s453 + $0x15a] sm:$0xff]
      %v837 = vld [vmem:[%s453 + $0x16a] sm:$0xff]
      %v838 = vld [vmem:[%s453 + $0x172] sm:$0xff]
      %839 = vst [vmem:[#allocation3 + $0x28] sm:$0xff] %v807
      %840 = vst [vmem:[#allocation3 + $0x70] sm:$0xff] %v808
      %841 = vst [vmem:[#allocation3 + $0xb8] sm:$0xff] %v809
      %842 = vst [vmem:[#allocation3 + $0x100] sm:$0xff] %v810
      %843 = vst [vmem:[#allocation3 + $0x148] sm:$0xff] %v811
      %844 = vst [vmem:[#allocation3 + $0x190] sm:$0xff] %v812
      %845 = vst [vmem:[#allocation3 + $0x1d8] sm:$0xff] %v813
      %846 = vst [vmem:[#allocation3 + $0x220] sm:$0xff] %v814
      %847 = vst [vmem:[#allocation3 + $0x268] sm:$0xff] %v815
      %848 = vst [vmem:[#allocation3 + $0x2b0] sm:$0xff] %v816
      %849 = vst [vmem:[#allocation3 + $0x2f8] sm:$0xff] %v817
      %850 = vst [vmem:[#allocation3 + $0x340] sm:$0xff] %v818
      %851 = vst [vmem:[#allocation3 + $0x388] sm:$0xff] %v819
      %852 = vst [vmem:[#allocation3 + $0x3d0] sm:$0xff] %v820
      %853 = vst [vmem:[#allocation3 + $0x418] sm:$0xff] %v821
      %854 = vst [vmem:[#allocation3 + $0x460] sm:$0xff] %v822
      %855 = vst [vmem:[#allocation3 + $0x4a8] sm:$0xff] %v823
      %856 = vst [vmem:[#allocation3 + $0x4f0] sm:$0xff] %v824
      %857 = vst [vmem:[#allocation3 + $0x538] sm:$0xff] %v825
      %858 = vst [vmem:[#allocation3 + $0x580] sm:$0xff] %v826
      %859 = vst [vmem:[#allocation3 + $0x5c8] sm:$0xff] %v827
      %860 = vst [vmem:[#allocation3 + $0x610] sm:$0xff] %v828
      %861 = vst [vmem:[#allocation3 + $0x658] sm:$0xff] %v829
      %862 = vst [vmem:[#allocation3 + $0x6a0] sm:$0xff] %v830
      %863 = vst [vmem:[#allocation3 + $0x6e8] sm:$0xff] %v831
      %864 = vst [vmem:[#allocation3 + $0x730] sm:$0xff] %v832
      %865 = vst [vmem:[#allocation3 + $0x778] sm:$0xff] %v833
      %866 = vst [vmem:[#allocation3 + $0x7c0] sm:$0xff] %v834
      %867 = vst [vmem:[#allocation3 + $0x808] sm:$0xff] %v835
      %868 = vst [vmem:[#allocation3 + $0x850] sm:$0xff] %v836
      %869 = vst [vmem:[#allocation3 + $0x898] sm:$0xff] %v837
      %870 = vst [vmem:[#allocation3 + $0x8e0] sm:$0xff] %v838
      %s871 = scalar_lea.vmem [#allocation2], 48
      %v872 = vld [vmem:[%s871] sm:$0xff]
      %v873 = vld [vmem:[%s871 + $0x8] sm:$0xff]
      %v874 = vld [vmem:[%s871 + $0x18] sm:$0xff]
      %v875 = vld [vmem:[%s871 + $0x20] sm:$0xff]
      %v876 = vld [vmem:[%s871 + $0x30] sm:$0xff]
      %v877 = vld [vmem:[%s871 + $0x38] sm:$0xff]
      %v878 = vld [vmem:[%s871 + $0x48] sm:$0xff]
      %v879 = vld [vmem:[%s871 + $0x50] sm:$0xff]
      %v880 = vld [vmem:[%s871 + $0x60] sm:$0xff]
      %v881 = vld [vmem:[%s871 + $0x68] sm:$0xff]
      %v882 = vld [vmem:[%s871 + $0x78] sm:$0xff]
      %v883 = vld [vmem:[%s871 + $0x80] sm:$0xff]
      %v884 = vld [vmem:[%s871 + $0x90] sm:$0xff]
      %v885 = vld [vmem:[%s871 + $0x98] sm:$0xff]
      %v886 = vld [vmem:[%s871 + $0xa8] sm:$0xff]
      %v887 = vld [vmem:[%s871 + $0xb0] sm:$0xff]
      %v888 = vld [vmem:[%s871 + $0xc0] sm:$0xff]
      %v889 = vld [vmem:[%s871 + $0xc8] sm:$0xff]
      %v890 = vld [vmem:[%s871 + $0xd8] sm:$0xff]
      %v891 = vld [vmem:[%s871 + $0xe0] sm:$0xff]
      %v892 = vld [vmem:[%s871 + $0xf0] sm:$0xff]
      %v893 = vld [vmem:[%s871 + $0xf8] sm:$0xff]
      %v894 = vld [vmem:[%s871 + $0x108] sm:$0xff]
      %v895 = vld [vmem:[%s871 + $0x110] sm:$0xff]
      %v896 = vld [vmem:[%s871 + $0x120] sm:$0xff]
      %v897 = vld [vmem:[%s871 + $0x128] sm:$0xff]
      %v898 = vld [vmem:[%s871 + $0x138] sm:$0xff]
      %v899 = vld [vmem:[%s871 + $0x140] sm:$0xff]
      %v900 = vld [vmem:[%s871 + $0x150] sm:$0xff]
      %v901 = vld [vmem:[%s871 + $0x158] sm:$0xff]
      %v902 = vld [vmem:[%s871 + $0x168] sm:$0xff]
      %v903 = vld [vmem:[%s871 + $0x170] sm:$0xff]
      %904 = vst [vmem:[#allocation3 + $0x30] sm:$0xff] %v872
      %905 = vst [vmem:[#allocation3 + $0x78] sm:$0xff] %v873
      %906 = vst [vmem:[#allocation3 + $0xc0] sm:$0xff] %v874
      %907 = vst [vmem:[#allocation3 + $0x108] sm:$0xff] %v875
      %908 = vst [vmem:[#allocation3 + $0x150] sm:$0xff] %v876
      %909 = vst [vmem:[#allocation3 + $0x198] sm:$0xff] %v877
      %910 = vst [vmem:[#allocation3 + $0x1e0] sm:$0xff] %v878
      %911 = vst [vmem:[#allocation3 + $0x228] sm:$0xff] %v879
      %912 = vst [vmem:[#allocation3 + $0x270] sm:$0xff] %v880
      %913 = vst [vmem:[#allocation3 + $0x2b8] sm:$0xff] %v881
      %914 = vst [vmem:[#allocation3 + $0x300] sm:$0xff] %v882
      %915 = vst [vmem:[#allocation3 + $0x348] sm:$0xff] %v883
      %916 = vst [vmem:[#allocation3 + $0x390] sm:$0xff] %v884
      %917 = vst [vmem:[#allocation3 + $0x3d8] sm:$0xff] %v885
      %918 = vst [vmem:[#allocation3 + $0x420] sm:$0xff] %v886
      %919 = vst [vmem:[#allocation3 + $0x468] sm:$0xff] %v887
      %920 = vst [vmem:[#allocation3 + $0x4b0] sm:$0xff] %v888
      %921 = vst [vmem:[#allocation3 + $0x4f8] sm:$0xff] %v889
      %922 = vst [vmem:[#allocation3 + $0x540] sm:$0xff] %v890
      %923 = vst [vmem:[#allocation3 + $0x588] sm:$0xff] %v891
      %924 = vst [vmem:[#allocation3 + $0x5d0] sm:$0xff] %v892
      %925 = vst [vmem:[#allocation3 + $0x618] sm:$0xff] %v893
      %926 = vst [vmem:[#allocation3 + $0x660] sm:$0xff] %v894
      %927 = vst [vmem:[#allocation3 + $0x6a8] sm:$0xff] %v895
      %928 = vst [vmem:[#allocation3 + $0x6f0] sm:$0xff] %v896
      %929 = vst [vmem:[#allocation3 + $0x738] sm:$0xff] %v897
      %930 = vst [vmem:[#allocation3 + $0x780] sm:$0xff] %v898
      %931 = vst [vmem:[#allocation3 + $0x7c8] sm:$0xff] %v899
      %932 = vst [vmem:[#allocation3 + $0x810] sm:$0xff] %v900
      %933 = vst [vmem:[#allocation3 + $0x858] sm:$0xff] %v901
      %934 = vst [vmem:[#allocation3 + $0x8a0] sm:$0xff] %v902
      %935 = vst [vmem:[#allocation3 + $0x8e8] sm:$0xff] %v903
      %v936 = vld [vmem:[%s871 + $0x1] sm:$0xff]
      %v937 = vld [vmem:[%s871 + $0x9] sm:$0xff]
      %v938 = vld [vmem:[%s871 + $0x19] sm:$0xff]
      %v939 = vld [vmem:[%s871 + $0x21] sm:$0xff]
      %v940 = vld [vmem:[%s871 + $0x31] sm:$0xff]
      %v941 = vld [vmem:[%s871 + $0x39] sm:$0xff]
      %v942 = vld [vmem:[%s871 + $0x49] sm:$0xff]
      %v943 = vld [vmem:[%s871 + $0x51] sm:$0xff]
      %v944 = vld [vmem:[%s871 + $0x61] sm:$0xff]
      %v945 = vld [vmem:[%s871 + $0x69] sm:$0xff]
      %v946 = vld [vmem:[%s871 + $0x79] sm:$0xff]
      %v947 = vld [vmem:[%s871 + $0x81] sm:$0xff]
      %v948 = vld [vmem:[%s871 + $0x91] sm:$0xff]
      %v949 = vld [vmem:[%s871 + $0x99] sm:$0xff]
      %v950 = vld [vmem:[%s871 + $0xa9] sm:$0xff]
      %v951 = vld [vmem:[%s871 + $0xb1] sm:$0xff]
      %v952 = vld [vmem:[%s871 + $0xc1] sm:$0xff]
      %v953 = vld [vmem:[%s871 + $0xc9] sm:$0xff]
      %v954 = vld [vmem:[%s871 + $0xd9] sm:$0xff]
      %v955 = vld [vmem:[%s871 + $0xe1] sm:$0xff]
      %v956 = vld [vmem:[%s871 + $0xf1] sm:$0xff]
      %v957 = vld [vmem:[%s871 + $0xf9] sm:$0xff]
      %v958 = vld [vmem:[%s871 + $0x109] sm:$0xff]
      %v959 = vld [vmem:[%s871 + $0x111] sm:$0xff]
      %v960 = vld [vmem:[%s871 + $0x121] sm:$0xff]
      %v961 = vld [vmem:[%s871 + $0x129] sm:$0xff]
      %v962 = vld [vmem:[%s871 + $0x139] sm:$0xff]
      %v963 = vld [vmem:[%s871 + $0x141] sm:$0xff]
      %v964 = vld [vmem:[%s871 + $0x151] sm:$0xff]
      %v965 = vld [vmem:[%s871 + $0x159] sm:$0xff]
      %v966 = vld [vmem:[%s871 + $0x169] sm:$0xff]
      %v967 = vld [vmem:[%s871 + $0x171] sm:$0xff]
      %968 = vst [vmem:[#allocation3 + $0x38] sm:$0xff] %v936
      %969 = vst [vmem:[#allocation3 + $0x80] sm:$0xff] %v937
      %970 = vst [vmem:[#allocation3 + $0xc8] sm:$0xff] %v938
      %971 = vst [vmem:[#allocation3 + $0x110] sm:$0xff] %v939
      %972 = vst [vmem:[#allocation3 + $0x158] sm:$0xff] %v940
      %973 = vst [vmem:[#allocation3 + $0x1a0] sm:$0xff] %v941
      %974 = vst [vmem:[#allocation3 + $0x1e8] sm:$0xff] %v942
      %975 = vst [vmem:[#allocation3 + $0x230] sm:$0xff] %v943
      %976 = vst [vmem:[#allocation3 + $0x278] sm:$0xff] %v944
      %977 = vst [vmem:[#allocation3 + $0x2c0] sm:$0xff] %v945
      %978 = vst [vmem:[#allocation3 + $0x308] sm:$0xff] %v946
      %979 = vst [vmem:[#allocation3 + $0x350] sm:$0xff] %v947
      %980 = vst [vmem:[#allocation3 + $0x398] sm:$0xff] %v948
      %981 = vst [vmem:[#allocation3 + $0x3e0] sm:$0xff] %v949
      %982 = vst [vmem:[#allocation3 + $0x428] sm:$0xff] %v950
      %983 = vst [vmem:[#allocation3 + $0x470] sm:$0xff] %v951
      %984 = vst [vmem:[#allocation3 + $0x4b8] sm:$0xff] %v952
      %985 = vst [vmem:[#allocation3 + $0x500] sm:$0xff] %v953
      %986 = vst [vmem:[#allocation3 + $0x548] sm:$0xff] %v954
      %987 = vst [vmem:[#allocation3 + $0x590] sm:$0xff] %v955
      %988 = vst [vmem:[#allocation3 + $0x5d8] sm:$0xff] %v956
      %989 = vst [vmem:[#allocation3 + $0x620] sm:$0xff] %v957
      %990 = vst [vmem:[#allocation3 + $0x668] sm:$0xff] %v958
      %991 = vst [vmem:[#allocation3 + $0x6b0] sm:$0xff] %v959
      %992 = vst [vmem:[#allocation3 + $0x6f8] sm:$0xff] %v960
      %993 = vst [vmem:[#allocation3 + $0x740] sm:$0xff] %v961
      %994 = vst [vmem:[#allocation3 + $0x788] sm:$0xff] %v962
      %995 = vst [vmem:[#allocation3 + $0x7d0] sm:$0xff] %v963
      %996 = vst [vmem:[#allocation3 + $0x818] sm:$0xff] %v964
      %997 = vst [vmem:[#allocation3 + $0x860] sm:$0xff] %v965
      %998 = vst [vmem:[#allocation3 + $0x8a8] sm:$0xff] %v966
      %999 = vst [vmem:[#allocation3 + $0x8f0] sm:$0xff] %v967
      %v1000 = vld [vmem:[%s871 + $0x2] sm:$0xff]
      %v1001 = vld [vmem:[%s871 + $0xa] sm:$0xff]
      %v1002 = vld [vmem:[%s871 + $0x1a] sm:$0xff]
      %v1003 = vld [vmem:[%s871 + $0x22] sm:$0xff]
      %v1004 = vld [vmem:[%s871 + $0x32] sm:$0xff]
      %v1005 = vld [vmem:[%s871 + $0x3a] sm:$0xff]
      %v1006 = vld [vmem:[%s871 + $0x4a] sm:$0xff]
      %v1007 = vld [vmem:[%s871 + $0x52] sm:$0xff]
      %v1008 = vld [vmem:[%s871 + $0x62] sm:$0xff]
      %v1009 = vld [vmem:[%s871 + $0x6a] sm:$0xff]
      %v1010 = vld [vmem:[%s871 + $0x7a] sm:$0xff]
      %v1011 = vld [vmem:[%s871 + $0x82] sm:$0xff]
      %v1012 = vld [vmem:[%s871 + $0x92] sm:$0xff]
      %v1013 = vld [vmem:[%s871 + $0x9a] sm:$0xff]
      %v1014 = vld [vmem:[%s871 + $0xaa] sm:$0xff]
      %v1015 = vld [vmem:[%s871 + $0xb2] sm:$0xff]
      %v1016 = vld [vmem:[%s871 + $0xc2] sm:$0xff]
      %v1017 = vld [vmem:[%s871 + $0xca] sm:$0xff]
      %v1018 = vld [vmem:[%s871 + $0xda] sm:$0xff]
      %v1019 = vld [vmem:[%s871 + $0xe2] sm:$0xff]
      %v1020 = vld [vmem:[%s871 + $0xf2] sm:$0xff]
      %v1021 = vld [vmem:[%s871 + $0xfa] sm:$0xff]
      %v1022 = vld [vmem:[%s871 + $0x10a] sm:$0xff]
      %v1023 = vld [vmem:[%s871 + $0x112] sm:$0xff]
      %v1024 = vld [vmem:[%s871 + $0x122] sm:$0xff]
      %v1025 = vld [vmem:[%s871 + $0x12a] sm:$0xff]
      %v1026 = vld [vmem:[%s871 + $0x13a] sm:$0xff]
      %v1027 = vld [vmem:[%s871 + $0x142] sm:$0xff]
      %v1028 = vld [vmem:[%s871 + $0x152] sm:$0xff]
      %v1029 = vld [vmem:[%s871 + $0x15a] sm:$0xff]
      %v1030 = vld [vmem:[%s871 + $0x16a] sm:$0xff]
      %v1031 = vld [vmem:[%s871 + $0x172] sm:$0xff]
      %1032 = vst [vmem:[#allocation3 + $0x40] sm:$0xff] %v1000
      %1033 = vst [vmem:[#allocation3 + $0x88] sm:$0xff] %v1001
      %1034 = vst [vmem:[#allocation3 + $0xd0] sm:$0xff] %v1002
      %1035 = vst [vmem:[#allocation3 + $0x118] sm:$0xff] %v1003
      %1036 = vst [vmem:[#allocation3 + $0x160] sm:$0xff] %v1004
      %1037 = vst [vmem:[#allocation3 + $0x1a8] sm:$0xff] %v1005
      %1038 = vst [vmem:[#allocation3 + $0x1f0] sm:$0xff] %v1006
      %1039 = vst [vmem:[#allocation3 + $0x238] sm:$0xff] %v1007
      %1040 = vst [vmem:[#allocation3 + $0x280] sm:$0xff] %v1008
      %1041 = vst [vmem:[#allocation3 + $0x2c8] sm:$0xff] %v1009
      %1042 = vst [vmem:[#allocation3 + $0x310] sm:$0xff] %v1010
      %1043 = vst [vmem:[#allocation3 + $0x358] sm:$0xff] %v1011
      %1044 = vst [vmem:[#allocation3 + $0x3a0] sm:$0xff] %v1012
      %1045 = vst [vmem:[#allocation3 + $0x3e8] sm:$0xff] %v1013
      %1046 = vst [vmem:[#allocation3 + $0x430] sm:$0xff] %v1014
      %1047 = vst [vmem:[#allocation3 + $0x478] sm:$0xff] %v1015
      %1048 = vst [vmem:[#allocation3 + $0x4c0] sm:$0xff] %v1016
      %1049 = vst [vmem:[#allocation3 + $0x508] sm:$0xff] %v1017
      %1050 = vst [vmem:[#allocation3 + $0x550] sm:$0xff] %v1018
      %1051 = vst [vmem:[#allocation3 + $0x598] sm:$0xff] %v1019
      %1052 = vst [vmem:[#allocation3 + $0x5e0] sm:$0xff] %v1020
      %1053 = vst [vmem:[#allocation3 + $0x628] sm:$0xff] %v1021
      %1054 = vst [vmem:[#allocation3 + $0x670] sm:$0xff] %v1022
      %1055 = vst [vmem:[#allocation3 + $0x6b8] sm:$0xff] %v1023
      %1056 = vst [vmem:[#allocation3 + $0x700] sm:$0xff] %v1024
      %1057 = vst [vmem:[#allocation3 + $0x748] sm:$0xff] %v1025
      %1058 = vst [vmem:[#allocation3 + $0x790] sm:$0xff] %v1026
      %1059 = vst [vmem:[#allocation3 + $0x7d8] sm:$0xff] %v1027
      %1060 = vst [vmem:[#allocation3 + $0x820] sm:$0xff] %v1028
      %1061 = vst [vmem:[#allocation3 + $0x868] sm:$0xff] %v1029
      %1062 = vst [vmem:[#allocation3 + $0x8b0] sm:$0xff] %v1030
      %1063 = vst [vmem:[#allocation3 + $0x8f8] sm:$0xff] %v1031
      %v1064 = vld [vmem:[#allocation3] sm:$0xff]
      %v1065 = vld [vmem:[#allocation3 + $0x8] sm:$0xff]
      %v1066 = vld [vmem:[#allocation3 + $0x10] sm:$0xff]
      %v1067 = vld [vmem:[#allocation3 + $0x18] sm:$0xff]
      %v1068 = vld [vmem:[#allocation3 + $0x20] sm:$0xff]
      %v1069 = vld [vmem:[#allocation3 + $0x28] sm:$0xff]
      %v1070 = vld [vmem:[#allocation3 + $0x30] sm:$0xff]
      %v1071 = vld [vmem:[#allocation3 + $0x38] sm:$0xff]
      %v1072 = vld [vmem:[#allocation3 + $0x40] sm:$0xff]
      %v1073 = vld [vmem:[#allocation3 + $0x48] sm:$0xff]
      %v1074 = vld [vmem:[#allocation3 + $0x50] sm:$0xff]
      %v1075 = vld [vmem:[#allocation3 + $0x58] sm:$0xff]
      %v1076 = vld [vmem:[#allocation3 + $0x60] sm:$0xff]
      %v1077 = vld [vmem:[#allocation3 + $0x68] sm:$0xff]
      %v1078 = vld [vmem:[#allocation3 + $0x70] sm:$0xff]
      %v1079 = vld [vmem:[#allocation3 + $0x78] sm:$0xff]
      %v1080 = vld [vmem:[#allocation3 + $0x80] sm:$0xff]
      %v1081 = vld [vmem:[#allocation3 + $0x88] sm:$0xff]
      %v1082 = vld [vmem:[#allocation3 + $0x90] sm:$0xff]
      %v1083 = vld [vmem:[#allocation3 + $0x98] sm:$0xff]
      %v1084 = vld [vmem:[#allocation3 + $0xa0] sm:$0xff]
      %v1085 = vld [vmem:[#allocation3 + $0xa8] sm:$0xff]
      %v1086 = vld [vmem:[#allocation3 + $0xb0] sm:$0xff]
      %v1087 = vld [vmem:[#allocation3 + $0xb8] sm:$0xff]
      %v1088 = vld [vmem:[#allocation3 + $0xc0] sm:$0xff]
      %v1089 = vld [vmem:[#allocation3 + $0xc8] sm:$0xff]
      %v1090 = vld [vmem:[#allocation3 + $0xd0] sm:$0xff]
      %v1091 = vld [vmem:[#allocation3 + $0xd8] sm:$0xff]
      %v1092 = vld [vmem:[#allocation3 + $0xe0] sm:$0xff]
      %v1093 = vld [vmem:[#allocation3 + $0xe8] sm:$0xff]
      %v1094 = vld [vmem:[#allocation3 + $0xf0] sm:$0xff]
      %v1095 = vld [vmem:[#allocation3 + $0xf8] sm:$0xff]
      %v1096 = vld [vmem:[#allocation3 + $0x100] sm:$0xff]
      %v1097 = vld [vmem:[#allocation3 + $0x108] sm:$0xff]
      %v1098 = vld [vmem:[#allocation3 + $0x110] sm:$0xff]
      %v1099 = vld [vmem:[#allocation3 + $0x118] sm:$0xff]
      %v1100 = vld [vmem:[#allocation3 + $0x120] sm:$0xff]
      %v1101 = vld [vmem:[#allocation3 + $0x128] sm:$0xff]
      %v1102 = vld [vmem:[#allocation3 + $0x130] sm:$0xff]
      %v1103 = vld [vmem:[#allocation3 + $0x138] sm:$0xff]
      %v1104 = vld [vmem:[#allocation3 + $0x140] sm:$0xff]
      %v1105 = vld [vmem:[#allocation3 + $0x148] sm:$0xff]
      %v1106 = vld [vmem:[#allocation3 + $0x150] sm:$0xff]
      %v1107 = vld [vmem:[#allocation3 + $0x158] sm:$0xff]
      %v1108 = vld [vmem:[#allocation3 + $0x160] sm:$0xff]
      %v1109 = vld [vmem:[#allocation3 + $0x168] sm:$0xff]
      %v1110 = vld [vmem:[#allocation3 + $0x170] sm:$0xff]
      %v1111 = vld [vmem:[#allocation3 + $0x178] sm:$0xff]
      %v1112 = vld [vmem:[#allocation3 + $0x180] sm:$0xff]
      %v1113 = vld [vmem:[#allocation3 + $0x188] sm:$0xff]
      %v1114 = vld [vmem:[#allocation3 + $0x190] sm:$0xff]
      %v1115 = vld [vmem:[#allocation3 + $0x198] sm:$0xff]
      %v1116 = vld [vmem:[#allocation3 + $0x1a0] sm:$0xff]
      %v1117 = vld [vmem:[#allocation3 + $0x1a8] sm:$0xff]
      %v1118 = vld [vmem:[#allocation3 + $0x1b0] sm:$0xff]
      %v1119 = vld [vmem:[#allocation3 + $0x1b8] sm:$0xff]
      %v1120 = vld [vmem:[#allocation3 + $0x1c0] sm:$0xff]
      %v1121 = vld [vmem:[#allocation3 + $0x1c8] sm:$0xff]
      %v1122 = vld [vmem:[#allocation3 + $0x1d0] sm:$0xff]
      %v1123 = vld [vmem:[#allocation3 + $0x1d8] sm:$0xff]
      %v1124 = vld [vmem:[#allocation3 + $0x1e0] sm:$0xff]
      %v1125 = vld [vmem:[#allocation3 + $0x1e8] sm:$0xff]
      %v1126 = vld [vmem:[#allocation3 + $0x1f0] sm:$0xff]
      %v1127 = vld [vmem:[#allocation3 + $0x1f8] sm:$0xff]
      %v1128 = vld [vmem:[#allocation3 + $0x200] sm:$0xff]
      %v1129 = vld [vmem:[#allocation3 + $0x208] sm:$0xff]
      %v1130 = vld [vmem:[#allocation3 + $0x210] sm:$0xff]
      %v1131 = vld [vmem:[#allocation3 + $0x218] sm:$0xff]
      %v1132 = vld [vmem:[#allocation3 + $0x220] sm:$0xff]
      %v1133 = vld [vmem:[#allocation3 + $0x228] sm:$0xff]
      %v1134 = vld [vmem:[#allocation3 + $0x230] sm:$0xff]
      %v1135 = vld [vmem:[#allocation3 + $0x238] sm:$0xff]
      %v1136 = vld [vmem:[#allocation3 + $0x240] sm:$0xff]
      %v1137 = vld [vmem:[#allocation3 + $0x248] sm:$0xff]
      %v1138 = vld [vmem:[#allocation3 + $0x250] sm:$0xff]
      %v1139 = vld [vmem:[#allocation3 + $0x258] sm:$0xff]
      %v1140 = vld [vmem:[#allocation3 + $0x260] sm:$0xff]
      %v1141 = vld [vmem:[#allocation3 + $0x268] sm:$0xff]
      %v1142 = vld [vmem:[#allocation3 + $0x270] sm:$0xff]
      %v1143 = vld [vmem:[#allocation3 + $0x278] sm:$0xff]
      %v1144 = vld [vmem:[#allocation3 + $0x280] sm:$0xff]
      %v1145 = vld [vmem:[#allocation3 + $0x288] sm:$0xff]
      %v1146 = vld [vmem:[#allocation3 + $0x290] sm:$0xff]
      %v1147 = vld [vmem:[#allocation3 + $0x298] sm:$0xff]
      %v1148 = vld [vmem:[#allocation3 + $0x2a0] sm:$0xff]
      %v1149 = vld [vmem:[#allocation3 + $0x2a8] sm:$0xff]
      %v1150 = vld [vmem:[#allocation3 + $0x2b0] sm:$0xff]
      %v1151 = vld [vmem:[#allocation3 + $0x2b8] sm:$0xff]
      %v1152 = vld [vmem:[#allocation3 + $0x2c0] sm:$0xff]
      %v1153 = vld [vmem:[#allocation3 + $0x2c8] sm:$0xff]
      %v1154 = vld [vmem:[#allocation3 + $0x2d0] sm:$0xff]
      %v1155 = vld [vmem:[#allocation3 + $0x2d8] sm:$0xff]
      %v1156 = vld [vmem:[#allocation3 + $0x2e0] sm:$0xff]
      %v1157 = vld [vmem:[#allocation3 + $0x2e8] sm:$0xff]
      %v1158 = vld [vmem:[#allocation3 + $0x2f0] sm:$0xff]
      %v1159 = vld [vmem:[#allocation3 + $0x2f8] sm:$0xff]
      %v1160 = vld [vmem:[#allocation3 + $0x300] sm:$0xff]
      %v1161 = vld [vmem:[#allocation3 + $0x308] sm:$0xff]
      %v1162 = vld [vmem:[#allocation3 + $0x310] sm:$0xff]
      %v1163 = vld [vmem:[#allocation3 + $0x318] sm:$0xff]
      %v1164 = vld [vmem:[#allocation3 + $0x320] sm:$0xff]
      %v1165 = vld [vmem:[#allocation3 + $0x328] sm:$0xff]
      %v1166 = vld [vmem:[#allocation3 + $0x330] sm:$0xff]
      %v1167 = vld [vmem:[#allocation3 + $0x338] sm:$0xff]
      %v1168 = vld [vmem:[#allocation3 + $0x340] sm:$0xff]
      %v1169 = vld [vmem:[#allocation3 + $0x348] sm:$0xff]
      %v1170 = vld [vmem:[#allocation3 + $0x350] sm:$0xff]
      %v1171 = vld [vmem:[#allocation3 + $0x358] sm:$0xff]
      %v1172 = vld [vmem:[#allocation3 + $0x360] sm:$0xff]
      %v1173 = vld [vmem:[#allocation3 + $0x368] sm:$0xff]
      %v1174 = vld [vmem:[#allocation3 + $0x370] sm:$0xff]
      %v1175 = vld [vmem:[#allocation3 + $0x378] sm:$0xff]
      %v1176 = vld [vmem:[#allocation3 + $0x380] sm:$0xff]
      %v1177 = vld [vmem:[#allocation3 + $0x388] sm:$0xff]
      %v1178 = vld [vmem:[#allocation3 + $0x390] sm:$0xff]
      %v1179 = vld [vmem:[#allocation3 + $0x398] sm:$0xff]
      %v1180 = vld [vmem:[#allocation3 + $0x3a0] sm:$0xff]
      %v1181 = vld [vmem:[#allocation3 + $0x3a8] sm:$0xff]
      %v1182 = vld [vmem:[#allocation3 + $0x3b0] sm:$0xff]
      %v1183 = vld [vmem:[#allocation3 + $0x3b8] sm:$0xff]
      %v1184 = vld [vmem:[#allocation3 + $0x3c0] sm:$0xff]
      %v1185 = vld [vmem:[#allocation3 + $0x3c8] sm:$0xff]
      %v1186 = vld [vmem:[#allocation3 + $0x3d0] sm:$0xff]
      %v1187 = vld [vmem:[#allocation3 + $0x3d8] sm:$0xff]
      %v1188 = vld [vmem:[#allocation3 + $0x3e0] sm:$0xff]
      %v1189 = vld [vmem:[#allocation3 + $0x3e8] sm:$0xff]
      %v1190 = vld [vmem:[#allocation3 + $0x3f0] sm:$0xff]
      %v1191 = vld [vmem:[#allocation3 + $0x3f8] sm:$0xff]
      %v1192 = vld [vmem:[#allocation3 + $0x400] sm:$0xff]
      %v1193 = vld [vmem:[#allocation3 + $0x408] sm:$0xff]
      %v1194 = vld [vmem:[#allocation3 + $0x410] sm:$0xff]
      %v1195 = vld [vmem:[#allocation3 + $0x418] sm:$0xff]
      %v1196 = vld [vmem:[#allocation3 + $0x420] sm:$0xff]
      %v1197 = vld [vmem:[#allocation3 + $0x428] sm:$0xff]
      %v1198 = vld [vmem:[#allocation3 + $0x430] sm:$0xff]
      %v1199 = vld [vmem:[#allocation3 + $0x438] sm:$0xff]
      %v1200 = vld [vmem:[#allocation3 + $0x440] sm:$0xff]
      %v1201 = vld [vmem:[#allocation3 + $0x448] sm:$0xff]
      %v1202 = vld [vmem:[#allocation3 + $0x450] sm:$0xff]
      %v1203 = vld [vmem:[#allocation3 + $0x458] sm:$0xff]
      %v1204 = vld [vmem:[#allocation3 + $0x460] sm:$0xff]
      %v1205 = vld [vmem:[#allocation3 + $0x468] sm:$0xff]
      %v1206 = vld [vmem:[#allocation3 + $0x470] sm:$0xff]
      %v1207 = vld [vmem:[#allocation3 + $0x478] sm:$0xff]
      %v1208 = vld [vmem:[#allocation3 + $0x480] sm:$0xff]
      %v1209 = vld [vmem:[#allocation3 + $0x488] sm:$0xff]
      %v1210 = vld [vmem:[#allocation3 + $0x490] sm:$0xff]
      %v1211 = vld [vmem:[#allocation3 + $0x498] sm:$0xff]
      %v1212 = vld [vmem:[#allocation3 + $0x4a0] sm:$0xff]
      %v1213 = vld [vmem:[#allocation3 + $0x4a8] sm:$0xff]
      %v1214 = vld [vmem:[#allocation3 + $0x4b0] sm:$0xff]
      %v1215 = vld [vmem:[#allocation3 + $0x4b8] sm:$0xff]
      %v1216 = vld [vmem:[#allocation3 + $0x4c0] sm:$0xff]
      %v1217 = vld [vmem:[#allocation3 + $0x4c8] sm:$0xff]
      %v1218 = vld [vmem:[#allocation3 + $0x4d0] sm:$0xff]
      %v1219 = vld [vmem:[#allocation3 + $0x4d8] sm:$0xff]
      %v1220 = vld [vmem:[#allocation3 + $0x4e0] sm:$0xff]
      %v1221 = vld [vmem:[#allocation3 + $0x4e8] sm:$0xff]
      %v1222 = vld [vmem:[#allocation3 + $0x4f0] sm:$0xff]
      %v1223 = vld [vmem:[#allocation3 + $0x4f8] sm:$0xff]
      %v1224 = vld [vmem:[#allocation3 + $0x500] sm:$0xff]
      %v1225 = vld [vmem:[#allocation3 + $0x508] sm:$0xff]
      %v1226 = vld [vmem:[#allocation3 + $0x510] sm:$0xff]
      %v1227 = vld [vmem:[#allocation3 + $0x518] sm:$0xff]
      %v1228 = vld [vmem:[#allocation3 + $0x520] sm:$0xff]
      %v1229 = vld [vmem:[#allocation3 + $0x528] sm:$0xff]
      %v1230 = vld [vmem:[#allocation3 + $0x530] sm:$0xff]
      %v1231 = vld [vmem:[#allocation3 + $0x538] sm:$0xff]
      %v1232 = vld [vmem:[#allocation3 + $0x540] sm:$0xff]
      %v1233 = vld [vmem:[#allocation3 + $0x548] sm:$0xff]
      %v1234 = vld [vmem:[#allocation3 + $0x550] sm:$0xff]
      %v1235 = vld [vmem:[#allocation3 + $0x558] sm:$0xff]
      %v1236 = vld [vmem:[#allocation3 + $0x560] sm:$0xff]
      %v1237 = vld [vmem:[#allocation3 + $0x568] sm:$0xff]
      %v1238 = vld [vmem:[#allocation3 + $0x570] sm:$0xff]
      %v1239 = vld [vmem:[#allocation3 + $0x578] sm:$0xff]
      %v1240 = vld [vmem:[#allocation3 + $0x580] sm:$0xff]
      %v1241 = vld [vmem:[#allocation3 + $0x588] sm:$0xff]
      %v1242 = vld [vmem:[#allocation3 + $0x590] sm:$0xff]
      %v1243 = vld [vmem:[#allocation3 + $0x598] sm:$0xff]
      %v1244 = vld [vmem:[#allocation3 + $0x5a0] sm:$0xff]
      %v1245 = vld [vmem:[#allocation3 + $0x5a8] sm:$0xff]
      %v1246 = vld [vmem:[#allocation3 + $0x5b0] sm:$0xff]
      %v1247 = vld [vmem:[#allocation3 + $0x5b8] sm:$0xff]
      %v1248 = vld [vmem:[#allocation3 + $0x5c0] sm:$0xff]
      %v1249 = vld [vmem:[#allocation3 + $0x5c8] sm:$0xff]
      %v1250 = vld [vmem:[#allocation3 + $0x5d0] sm:$0xff]
      %v1251 = vld [vmem:[#allocation3 + $0x5d8] sm:$0xff]
      %v1252 = vld [vmem:[#allocation3 + $0x5e0] sm:$0xff]
      %v1253 = vld [vmem:[#allocation3 + $0x5e8] sm:$0xff]
      %v1254 = vld [vmem:[#allocation3 + $0x5f0] sm:$0xff]
      %v1255 = vld [vmem:[#allocation3 + $0x5f8] sm:$0xff]
      %v1256 = vld [vmem:[#allocation3 + $0x600] sm:$0xff]
      %v1257 = vld [vmem:[#allocation3 + $0x608] sm:$0xff]
      %v1258 = vld [vmem:[#allocation3 + $0x610] sm:$0xff]
      %v1259 = vld [vmem:[#allocation3 + $0x618] sm:$0xff]
      %v1260 = vld [vmem:[#allocation3 + $0x620] sm:$0xff]
      %v1261 = vld [vmem:[#allocation3 + $0x628] sm:$0xff]
      %v1262 = vld [vmem:[#allocation3 + $0x630] sm:$0xff]
      %v1263 = vld [vmem:[#allocation3 + $0x638] sm:$0xff]
      %v1264 = vld [vmem:[#allocation3 + $0x640] sm:$0xff]
      %v1265 = vld [vmem:[#allocation3 + $0x648] sm:$0xff]
      %v1266 = vld [vmem:[#allocation3 + $0x650] sm:$0xff]
      %v1267 = vld [vmem:[#allocation3 + $0x658] sm:$0xff]
      %v1268 = vld [vmem:[#allocation3 + $0x660] sm:$0xff]
      %v1269 = vld [vmem:[#allocation3 + $0x668] sm:$0xff]
      %v1270 = vld [vmem:[#allocation3 + $0x670] sm:$0xff]
      %v1271 = vld [vmem:[#allocation3 + $0x678] sm:$0xff]
      %v1272 = vld [vmem:[#allocation3 + $0x680] sm:$0xff]
      %v1273 = vld [vmem:[#allocation3 + $0x688] sm:$0xff]
      %v1274 = vld [vmem:[#allocation3 + $0x690] sm:$0xff]
      %v1275 = vld [vmem:[#allocation3 + $0x698] sm:$0xff]
      %v1276 = vld [vmem:[#allocation3 + $0x6a0] sm:$0xff]
      %v1277 = vld [vmem:[#allocation3 + $0x6a8] sm:$0xff]
      %v1278 = vld [vmem:[#allocation3 + $0x6b0] sm:$0xff]
      %v1279 = vld [vmem:[#allocation3 + $0x6b8] sm:$0xff]
      %v1280 = vld [vmem:[#allocation3 + $0x6c0] sm:$0xff]
      %v1281 = vld [vmem:[#allocation3 + $0x6c8] sm:$0xff]
      %v1282 = vld [vmem:[#allocation3 + $0x6d0] sm:$0xff]
      %v1283 = vld [vmem:[#allocation3 + $0x6d8] sm:$0xff]
      %v1284 = vld [vmem:[#allocation3 + $0x6e0] sm:$0xff]
      %v1285 = vld [vmem:[#allocation3 + $0x6e8] sm:$0xff]
      %v1286 = vld [vmem:[#allocation3 + $0x6f0] sm:$0xff]
      %v1287 = vld [vmem:[#allocation3 + $0x6f8] sm:$0xff]
      %v1288 = vld [vmem:[#allocation3 + $0x700] sm:$0xff]
      %v1289 = vld [vmem:[#allocation3 + $0x708] sm:$0xff]
      %v1290 = vld [vmem:[#allocation3 + $0x710] sm:$0xff]
      %v1291 = vld [vmem:[#allocation3 + $0x718] sm:$0xff]
      %v1292 = vld [vmem:[#allocation3 + $0x720] sm:$0xff]
      %v1293 = vld [vmem:[#allocation3 + $0x728] sm:$0xff]
      %v1294 = vld [vmem:[#allocation3 + $0x730] sm:$0xff]
      %v1295 = vld [vmem:[#allocation3 + $0x738] sm:$0xff]
      %v1296 = vld [vmem:[#allocation3 + $0x740] sm:$0xff]
      %v1297 = vld [vmem:[#allocation3 + $0x748] sm:$0xff]
      %v1298 = vld [vmem:[#allocation3 + $0x750] sm:$0xff]
      %v1299 = vld [vmem:[#allocation3 + $0x758] sm:$0xff]
      %v1300 = vld [vmem:[#allocation3 + $0x760] sm:$0xff]
      %v1301 = vld [vmem:[#allocation3 + $0x768] sm:$0xff]
      %v1302 = vld [vmem:[#allocation3 + $0x770] sm:$0xff]
      %v1303 = vld [vmem:[#allocation3 + $0x778] sm:$0xff]
      %v1304 = vld [vmem:[#allocation3 + $0x780] sm:$0xff]
      %v1305 = vld [vmem:[#allocation3 + $0x788] sm:$0xff]
      %v1306 = vld [vmem:[#allocation3 + $0x790] sm:$0xff]
      %v1307 = vld [vmem:[#allocation3 + $0x798] sm:$0xff]
      %v1308 = vld [vmem:[#allocation3 + $0x7a0] sm:$0xff]
      %v1309 = vld [vmem:[#allocation3 + $0x7a8] sm:$0xff]
      %v1310 = vld [vmem:[#allocation3 + $0x7b0] sm:$0xff]
      %v1311 = vld [vmem:[#allocation3 + $0x7b8] sm:$0xff]
      %v1312 = vld [vmem:[#allocation3 + $0x7c0] sm:$0xff]
      %v1313 = vld [vmem:[#allocation3 + $0x7c8] sm:$0xff]
      %v1314 = vld [vmem:[#allocation3 + $0x7d0] sm:$0xff]
      %v1315 = vld [vmem:[#allocation3 + $0x7d8] sm:$0xff]
      %v1316 = vld [vmem:[#allocation3 + $0x7e0] sm:$0xff]
      %v1317 = vld [vmem:[#allocation3 + $0x7e8] sm:$0xff]
      %v1318 = vld [vmem:[#allocation3 + $0x7f0] sm:$0xff]
      %v1319 = vld [vmem:[#allocation3 + $0x7f8] sm:$0xff]
      %v1320 = vld [vmem:[#allocation3 + $0x800] sm:$0xff]
      %v1321 = vld [vmem:[#allocation3 + $0x808] sm:$0xff]
      %v1322 = vld [vmem:[#allocation3 + $0x810] sm:$0xff]
      %v1323 = vld [vmem:[#allocation3 + $0x818] sm:$0xff]
      %v1324 = vld [vmem:[#allocation3 + $0x820] sm:$0xff]
      %v1325 = vld [vmem:[#allocation3 + $0x828] sm:$0xff]
      %v1326 = vld [vmem:[#allocation3 + $0x830] sm:$0xff]
      %v1327 = vld [vmem:[#allocation3 + $0x838] sm:$0xff]
      %v1328 = vld [vmem:[#allocation3 + $0x840] sm:$0xff]
      %v1329 = vld [vmem:[#allocation3 + $0x848] sm:$0xff]
      %v1330 = vld [vmem:[#allocation3 + $0x850] sm:$0xff]
      %v1331 = vld [vmem:[#allocation3 + $0x858] sm:$0xff]
      %v1332 = vld [vmem:[#allocation3 + $0x860] sm:$0xff]
      %v1333 = vld [vmem:[#allocation3 + $0x868] sm:$0xff]
      %v1334 = vld [vmem:[#allocation3 + $0x870] sm:$0xff]
      %v1335 = vld [vmem:[#allocation3 + $0x878] sm:$0xff]
      %v1336 = vld [vmem:[#allocation3 + $0x880] sm:$0xff]
      %v1337 = vld [vmem:[#allocation3 + $0x888] sm:$0xff]
      %v1338 = vld [vmem:[#allocation3 + $0x890] sm:$0xff]
      %v1339 = vld [vmem:[#allocation3 + $0x898] sm:$0xff]
      %v1340 = vld [vmem:[#allocation3 + $0x8a0] sm:$0xff]
      %v1341 = vld [vmem:[#allocation3 + $0x8a8] sm:$0xff]
      %v1342 = vld [vmem:[#allocation3 + $0x8b0] sm:$0xff]
      %v1343 = vld [vmem:[#allocation3 + $0x8b8] sm:$0xff]
      %v1344 = vld [vmem:[#allocation3 + $0x8c0] sm:$0xff]
      %v1345 = vld [vmem:[#allocation3 + $0x8c8] sm:$0xff]
      %v1346 = vld [vmem:[#allocation3 + $0x8d0] sm:$0xff]
      %v1347 = vld [vmem:[#allocation3 + $0x8d8] sm:$0xff]
      %v1348 = vld [vmem:[#allocation3 + $0x8e0] sm:$0xff]
      %v1349 = vld [vmem:[#allocation3 + $0x8e8] sm:$0xff]
      %v1350 = vld [vmem:[#allocation3 + $0x8f0] sm:$0xff]
      %v1351 = vld [vmem:[#allocation3 + $0x8f8] sm:$0xff]
      %v1352 = vld [vmem:[%s3] sm:$0xff]
      %v1353 = vld [vmem:[%s3 + $0x8] sm:$0xff]
      %v1354 = vld [vmem:[%s3 + $0x10] sm:$0xff]
      %v1355 = vld [vmem:[%s3 + $0x18] sm:$0xff]
      %v1356 = vld [vmem:[%s3 + $0x20] sm:$0xff]
      %v1357 = vld [vmem:[%s3 + $0x28] sm:$0xff]
      %v1358 = vld [vmem:[%s3 + $0x30] sm:$0xff]
      %v1359 = vld [vmem:[%s3 + $0x38] sm:$0xff]
      %v1360 = vld [vmem:[%s3 + $0x40] sm:$0xff]
      %v1361 = vld [vmem:[%s3 + $0x48] sm:$0xff]
      %v1362 = vld [vmem:[%s3 + $0x50] sm:$0xff]
      %v1363 = vld [vmem:[%s3 + $0x58] sm:$0xff]
      %v1364 = vld [vmem:[%s3 + $0x60] sm:$0xff]
      %v1365 = vld [vmem:[%s3 + $0x68] sm:$0xff]
      %v1366 = vld [vmem:[%s3 + $0x70] sm:$0xff]
      %v1367 = vld [vmem:[%s3 + $0x78] sm:$0xff]
      %v1368 = vld [vmem:[%s3 + $0x80] sm:$0xff]
      %v1369 = vld [vmem:[%s3 + $0x88] sm:$0xff]
      %v1370 = vld [vmem:[%s3 + $0x90] sm:$0xff]
      %v1371 = vld [vmem:[%s3 + $0x98] sm:$0xff]
      %v1372 = vld [vmem:[%s3 + $0xa0] sm:$0xff]
      %v1373 = vld [vmem:[%s3 + $0xa8] sm:$0xff]
      %v1374 = vld [vmem:[%s3 + $0xb0] sm:$0xff]
      %v1375 = vld [vmem:[%s3 + $0xb8] sm:$0xff]
      %v1376 = vld [vmem:[%s3 + $0xc0] sm:$0xff]
      %v1377 = vld [vmem:[%s3 + $0xc8] sm:$0xff]
      %v1378 = vld [vmem:[%s3 + $0xd0] sm:$0xff]
      %v1379 = vld [vmem:[%s3 + $0xd8] sm:$0xff]
      %v1380 = vld [vmem:[%s3 + $0xe0] sm:$0xff]
      %v1381 = vld [vmem:[%s3 + $0xe8] sm:$0xff]
      %v1382 = vld [vmem:[%s3 + $0xf0] sm:$0xff]
      %v1383 = vld [vmem:[%s3 + $0xf8] sm:$0xff]
      %v1384 = vld [vmem:[%s3 + $0x100] sm:$0xff]
      %v1385 = vld [vmem:[%s3 + $0x108] sm:$0xff]
      %v1386 = vld [vmem:[%s3 + $0x110] sm:$0xff]
      %v1387 = vld [vmem:[%s3 + $0x118] sm:$0xff]
      %v1388 = vld [vmem:[%s3 + $0x120] sm:$0xff]
      %v1389 = vld [vmem:[%s3 + $0x128] sm:$0xff]
      %v1390 = vld [vmem:[%s3 + $0x130] sm:$0xff]
      %v1391 = vld [vmem:[%s3 + $0x138] sm:$0xff]
      %v1392 = vld [vmem:[%s3 + $0x140] sm:$0xff]
      %v1393 = vld [vmem:[%s3 + $0x148] sm:$0xff]
      %v1394 = vld [vmem:[%s3 + $0x150] sm:$0xff]
      %v1395 = vld [vmem:[%s3 + $0x158] sm:$0xff]
      %v1396 = vld [vmem:[%s3 + $0x160] sm:$0xff]
      %v1397 = vld [vmem:[%s3 + $0x168] sm:$0xff]
      %v1398 = vld [vmem:[%s3 + $0x170] sm:$0xff]
      %v1399 = vld [vmem:[%s3 + $0x178] sm:$0xff]
      %v1400 = vld [vmem:[%s3 + $0x180] sm:$0xff]
      %v1401 = vld [vmem:[%s3 + $0x188] sm:$0xff]
      %v1402 = vld [vmem:[%s3 + $0x190] sm:$0xff]
      %v1403 = vld [vmem:[%s3 + $0x198] sm:$0xff]
      %v1404 = vld [vmem:[%s3 + $0x1a0] sm:$0xff]
      %v1405 = vld [vmem:[%s3 + $0x1a8] sm:$0xff]
      %v1406 = vld [vmem:[%s3 + $0x1b0] sm:$0xff]
      %v1407 = vld [vmem:[%s3 + $0x1b8] sm:$0xff]
      %v1408 = vld [vmem:[%s3 + $0x1c0] sm:$0xff]
      %v1409 = vld [vmem:[%s3 + $0x1c8] sm:$0xff]
      %v1410 = vld [vmem:[%s3 + $0x1d0] sm:$0xff]
      %v1411 = vld [vmem:[%s3 + $0x1d8] sm:$0xff]
      %v1412 = vld [vmem:[%s3 + $0x1e0] sm:$0xff]
      %v1413 = vld [vmem:[%s3 + $0x1e8] sm:$0xff]
      %v1414 = vld [vmem:[%s3 + $0x1f0] sm:$0xff]
      %v1415 = vld [vmem:[%s3 + $0x1f8] sm:$0xff]
      %v1416 = vld [vmem:[%s3 + $0x200] sm:$0xff]
      %v1417 = vld [vmem:[%s3 + $0x208] sm:$0xff]
      %v1418 = vld [vmem:[%s3 + $0x210] sm:$0xff]
      %v1419 = vld [vmem:[%s3 + $0x218] sm:$0xff]
      %v1420 = vld [vmem:[%s3 + $0x220] sm:$0xff]
      %v1421 = vld [vmem:[%s3 + $0x228] sm:$0xff]
      %v1422 = vld [vmem:[%s3 + $0x230] sm:$0xff]
      %v1423 = vld [vmem:[%s3 + $0x238] sm:$0xff]
      %v1424 = vld [vmem:[%s3 + $0x240] sm:$0xff]
      %v1425 = vld [vmem:[%s3 + $0x248] sm:$0xff]
      %v1426 = vld [vmem:[%s3 + $0x250] sm:$0xff]
      %v1427 = vld [vmem:[%s3 + $0x258] sm:$0xff]
      %v1428 = vld [vmem:[%s3 + $0x260] sm:$0xff]
      %v1429 = vld [vmem:[%s3 + $0x268] sm:$0xff]
      %v1430 = vld [vmem:[%s3 + $0x270] sm:$0xff]
      %v1431 = vld [vmem:[%s3 + $0x278] sm:$0xff]
      %v1432 = vld [vmem:[%s3 + $0x280] sm:$0xff]
      %v1433 = vld [vmem:[%s3 + $0x288] sm:$0xff]
      %v1434 = vld [vmem:[%s3 + $0x290] sm:$0xff]
      %v1435 = vld [vmem:[%s3 + $0x298] sm:$0xff]
      %v1436 = vld [vmem:[%s3 + $0x2a0] sm:$0xff]
      %v1437 = vld [vmem:[%s3 + $0x2a8] sm:$0xff]
      %v1438 = vld [vmem:[%s3 + $0x2b0] sm:$0xff]
      %v1439 = vld [vmem:[%s3 + $0x2b8] sm:$0xff]
      %v1440 = vld [vmem:[%s3 + $0x2c0] sm:$0xff]
      %v1441 = vld [vmem:[%s3 + $0x2c8] sm:$0xff]
      %v1442 = vld [vmem:[%s3 + $0x2d0] sm:$0xff]
      %v1443 = vld [vmem:[%s3 + $0x2d8] sm:$0xff]
      %v1444 = vld [vmem:[%s3 + $0x2e0] sm:$0xff]
      %v1445 = vld [vmem:[%s3 + $0x2e8] sm:$0xff]
      %v1446 = vld [vmem:[%s3 + $0x2f0] sm:$0xff]
      %v1447 = vld [vmem:[%s3 + $0x2f8] sm:$0xff]
      %v1448 = vld [vmem:[%s3 + $0x300] sm:$0xff]
      %v1449 = vld [vmem:[%s3 + $0x308] sm:$0xff]
      %v1450 = vld [vmem:[%s3 + $0x310] sm:$0xff]
      %v1451 = vld [vmem:[%s3 + $0x318] sm:$0xff]
      %v1452 = vld [vmem:[%s3 + $0x320] sm:$0xff]
      %v1453 = vld [vmem:[%s3 + $0x328] sm:$0xff]
      %v1454 = vld [vmem:[%s3 + $0x330] sm:$0xff]
      %v1455 = vld [vmem:[%s3 + $0x338] sm:$0xff]
      %v1456 = vld [vmem:[%s3 + $0x340] sm:$0xff]
      %v1457 = vld [vmem:[%s3 + $0x348] sm:$0xff]
      %v1458 = vld [vmem:[%s3 + $0x350] sm:$0xff]
      %v1459 = vld [vmem:[%s3 + $0x358] sm:$0xff]
      %v1460 = vld [vmem:[%s3 + $0x360] sm:$0xff]
      %v1461 = vld [vmem:[%s3 + $0x368] sm:$0xff]
      %v1462 = vld [vmem:[%s3 + $0x370] sm:$0xff]
      %v1463 = vld [vmem:[%s3 + $0x378] sm:$0xff]
      %v1464 = vld [vmem:[%s3 + $0x380] sm:$0xff]
      %v1465 = vld [vmem:[%s3 + $0x388] sm:$0xff]
      %v1466 = vld [vmem:[%s3 + $0x390] sm:$0xff]
      %v1467 = vld [vmem:[%s3 + $0x398] sm:$0xff]
      %v1468 = vld [vmem:[%s3 + $0x3a0] sm:$0xff]
      %v1469 = vld [vmem:[%s3 + $0x3a8] sm:$0xff]
      %v1470 = vld [vmem:[%s3 + $0x3b0] sm:$0xff]
      %v1471 = vld [vmem:[%s3 + $0x3b8] sm:$0xff]
      %v1472 = vld [vmem:[%s3 + $0x3c0] sm:$0xff]
      %v1473 = vld [vmem:[%s3 + $0x3c8] sm:$0xff]
      %v1474 = vld [vmem:[%s3 + $0x3d0] sm:$0xff]
      %v1475 = vld [vmem:[%s3 + $0x3d8] sm:$0xff]
      %v1476 = vld [vmem:[%s3 + $0x3e0] sm:$0xff]
      %v1477 = vld [vmem:[%s3 + $0x3e8] sm:$0xff]
      %v1478 = vld [vmem:[%s3 + $0x3f0] sm:$0xff]
      %v1479 = vld [vmem:[%s3 + $0x3f8] sm:$0xff]
      %v1480 = vld [vmem:[%s3 + $0x400] sm:$0xff]
      %v1481 = vld [vmem:[%s3 + $0x408] sm:$0xff]
      %v1482 = vld [vmem:[%s3 + $0x410] sm:$0xff]
      %v1483 = vld [vmem:[%s3 + $0x418] sm:$0xff]
      %v1484 = vld [vmem:[%s3 + $0x420] sm:$0xff]
      %v1485 = vld [vmem:[%s3 + $0x428] sm:$0xff]
      %v1486 = vld [vmem:[%s3 + $0x430] sm:$0xff]
      %v1487 = vld [vmem:[%s3 + $0x438] sm:$0xff]
      %v1488 = vld [vmem:[%s3 + $0x440] sm:$0xff]
      %v1489 = vld [vmem:[%s3 + $0x448] sm:$0xff]
      %v1490 = vld [vmem:[%s3 + $0x450] sm:$0xff]
      %v1491 = vld [vmem:[%s3 + $0x458] sm:$0xff]
      %v1492 = vld [vmem:[%s3 + $0x460] sm:$0xff]
      %v1493 = vld [vmem:[%s3 + $0x468] sm:$0xff]
      %v1494 = vld [vmem:[%s3 + $0x470] sm:$0xff]
      %v1495 = vld [vmem:[%s3 + $0x478] sm:$0xff]
      %v1496 = vld [vmem:[%s4] sm:$0x1]
      %v1498 = vperm.slane %v1496, 0
      %1500 = vmatpush.msra.mxu0 %v1367
      %1501 = vmatpush.msra.mxu0 %v1366
      %1502 = vmatpush.msra.mxu0 %v1365
      %1503 = vmatpush.msra.mxu0 %v1364
      %1504 = vmatpush.msra.mxu0 %v1363
      %1505 = vmatpush.msra.mxu0 %v1362
      %1506 = vmatpush.msra.mxu0 %v1361
      %1507 = vmatpush.msra.mxu0 %v1360
      %1508 = vmatpush.msra.mxu0 %v1359
      %1509 = vmatpush.msra.mxu0 %v1358
      %1510 = vmatpush.msra.mxu0 %v1357
      %1511 = vmatpush.msra.mxu0 %v1356
      %1512 = vmatpush.msra.mxu0 %v1355
      %1513 = vmatpush.msra.mxu0 %v1354
      %1514 = vmatpush.msra.mxu0 %v1353
      %1515 = vmatpush.msra.mxu0 %v1352
      %1516 = vmatmul.f32.gmra.mxu0 %v1064
      %v1517 = vpop.f32.mrf.mxu0
      %v1518 = vadd.f32 %v1498, %v1517
      %1519 = vmatmul.f32.gmra.mxu0 %v1073
      %v1520 = vpop.f32.mrf.mxu0
      %v1521 = vadd.f32 %v1498, %v1520
      %1522 = vmatmul.f32.gmra.mxu0 %v1082
      %v1523 = vpop.f32.mrf.mxu0
      %v1524 = vadd.f32 %v1498, %v1523
      %1525 = vmatmul.f32.gmra.mxu0 %v1091
      %v1526 = vpop.f32.mrf.mxu0
      %v1527 = vadd.f32 %v1498, %v1526
      %1528 = vmatmul.f32.gmra.mxu0 %v1100
      %v1529 = vpop.f32.mrf.mxu0
      %v1530 = vadd.f32 %v1498, %v1529
      %1531 = vmatmul.f32.gmra.mxu0 %v1109
      %v1532 = vpop.f32.mrf.mxu0
      %v1533 = vadd.f32 %v1498, %v1532
      %1534 = vmatmul.f32.gmra.mxu0 %v1118
      %v1535 = vpop.f32.mrf.mxu0
      %v1536 = vadd.f32 %v1498, %v1535
      %1537 = vmatmul.f32.gmra.mxu0 %v1127
      %v1538 = vpop.f32.mrf.mxu0
      %v1539 = vadd.f32 %v1498, %v1538
      %1540 = vmatmul.f32.gmra.mxu0 %v1136
      %v1541 = vpop.f32.mrf.mxu0
      %v1542 = vadd.f32 %v1498, %v1541
      %1543 = vmatmul.f32.gmra.mxu0 %v1145
      %v1544 = vpop.f32.mrf.mxu0
      %v1545 = vadd.f32 %v1498, %v1544
      %1546 = vmatmul.f32.gmra.mxu0 %v1154
      %v1547 = vpop.f32.mrf.mxu0
      %v1548 = vadd.f32 %v1498, %v1547
      %1549 = vmatmul.f32.gmra.mxu0 %v1163
      %v1550 = vpop.f32.mrf.mxu0
      %v1551 = vadd.f32 %v1498, %v1550
      %1552 = vmatmul.f32.gmra.mxu0 %v1172
      %v1553 = vpop.f32.mrf.mxu0
      %v1554 = vadd.f32 %v1498, %v1553
      %1555 = vmatmul.f32.gmra.mxu0 %v1181
      %v1556 = vpop.f32.mrf.mxu0
      %v1557 = vadd.f32 %v1498, %v1556
      %1558 = vmatmul.f32.gmra.mxu0 %v1190
      %v1559 = vpop.f32.mrf.mxu0
      %v1560 = vadd.f32 %v1498, %v1559
      %1561 = vmatmul.f32.gmra.mxu0 %v1199
      %v1562 = vpop.f32.mrf.mxu0
      %v1563 = vadd.f32 %v1498, %v1562
      %1564 = vmatmul.f32.gmra.mxu0 %v1208
      %v1565 = vpop.f32.mrf.mxu0
      %v1566 = vadd.f32 %v1498, %v1565
      %1567 = vmatmul.f32.gmra.mxu0 %v1217
      %v1568 = vpop.f32.mrf.mxu0
      %v1569 = vadd.f32 %v1498, %v1568
      %1570 = vmatmul.f32.gmra.mxu0 %v1226
      %v1571 = vpop.f32.mrf.mxu0
      %v1572 = vadd.f32 %v1498, %v1571
      %1573 = vmatmul.f32.gmra.mxu0 %v1235
      %v1574 = vpop.f32.mrf.mxu0
      %v1575 = vadd.f32 %v1498, %v1574
      %1576 = vmatmul.f32.gmra.mxu0 %v1244
      %v1577 = vpop.f32.mrf.mxu0
      %v1578 = vadd.f32 %v1498, %v1577
      %1579 = vmatmul.f32.gmra.mxu0 %v1253
      %v1580 = vpop.f32.mrf.mxu0
      %v1581 = vadd.f32 %v1498, %v1580
      %1582 = vmatmul.f32.gmra.mxu0 %v1262
      %v1583 = vpop.f32.mrf.mxu0
      %v1584 = vadd.f32 %v1498, %v1583
      %1585 = vmatmul.f32.gmra.mxu0 %v1271
      %v1586 = vpop.f32.mrf.mxu0
      %v1587 = vadd.f32 %v1498, %v1586
      %1588 = vmatmul.f32.gmra.mxu0 %v1280
      %v1589 = vpop.f32.mrf.mxu0
      %v1590 = vadd.f32 %v1498, %v1589
      %1591 = vmatmul.f32.gmra.mxu0 %v1289
      %v1592 = vpop.f32.mrf.mxu0
      %v1593 = vadd.f32 %v1498, %v1592
      %1594 = vmatmul.f32.gmra.mxu0 %v1298
      %v1595 = vpop.f32.mrf.mxu0
      %v1596 = vadd.f32 %v1498, %v1595
      %1597 = vmatmul.f32.gmra.mxu0 %v1307
      %v1598 = vpop.f32.mrf.mxu0
      %v1599 = vadd.f32 %v1498, %v1598
      %1600 = vmatmul.f32.gmra.mxu0 %v1316
      %v1601 = vpop.f32.mrf.mxu0
      %v1602 = vadd.f32 %v1498, %v1601
      %1603 = vmatmul.f32.gmra.mxu0 %v1325
      %v1604 = vpop.f32.mrf.mxu0
      %v1605 = vadd.f32 %v1498, %v1604
      %1606 = vmatmul.f32.gmra.mxu0 %v1334
      %v1607 = vpop.f32.mrf.mxu0
      %v1608 = vadd.f32 %v1498, %v1607
      %1609 = vmatmul.f32.gmra.mxu0 %v1343
      %v1610 = vpop.f32.mrf.mxu0
      %v1611 = vadd.f32 %v1498, %v1610
      %1612 = vdwg.mxu0
      %1613 = vmatpush.msra.mxu0 %v1383
      %1614 = vmatpush.msra.mxu0 %v1382
      %1615 = vmatpush.msra.mxu0 %v1381
      %1616 = vmatpush.msra.mxu0 %v1380
      %1617 = vmatpush.msra.mxu0 %v1379
      %1618 = vmatpush.msra.mxu0 %v1378
      %1619 = vmatpush.msra.mxu0 %v1377
      %1620 = vmatpush.msra.mxu0 %v1376
      %1621 = vmatpush.msra.mxu0 %v1375
      %1622 = vmatpush.msra.mxu0 %v1374
      %1623 = vmatpush.msra.mxu0 %v1373
      %1624 = vmatpush.msra.mxu0 %v1372
      %1625 = vmatpush.msra.mxu0 %v1371
      %1626 = vmatpush.msra.mxu0 %v1370
      %1627 = vmatpush.msra.mxu0 %v1369
      %1628 = vmatpush.msra.mxu0 %v1368
      %1629 = vmatmul.f32.gmra.mxu0 %v1065
      %v1630 = vpop.f32.mrf.mxu0
      %v1631 = vadd.f32 %v1518, %v1630
      %1632 = vmatmul.f32.gmra.mxu0 %v1074
      %v1633 = vpop.f32.mrf.mxu0
      %v1634 = vadd.f32 %v1521, %v1633
      %1635 = vmatmul.f32.gmra.mxu0 %v1083
      %v1636 = vpop.f32.mrf.mxu0
      %v1637 = vadd.f32 %v1524, %v1636
      %1638 = vmatmul.f32.gmra.mxu0 %v1092
      %v1639 = vpop.f32.mrf.mxu0
      %v1640 = vadd.f32 %v1527, %v1639
      %1641 = vmatmul.f32.gmra.mxu0 %v1101
      %v1642 = vpop.f32.mrf.mxu0
      %v1643 = vadd.f32 %v1530, %v1642
      %1644 = vmatmul.f32.gmra.mxu0 %v1110
      %v1645 = vpop.f32.mrf.mxu0
      %v1646 = vadd.f32 %v1533, %v1645
      %1647 = vmatmul.f32.gmra.mxu0 %v1119
      %v1648 = vpop.f32.mrf.mxu0
      %v1649 = vadd.f32 %v1536, %v1648
      %1650 = vmatmul.f32.gmra.mxu0 %v1128
      %v1651 = vpop.f32.mrf.mxu0
      %v1652 = vadd.f32 %v1539, %v1651
      %1653 = vmatmul.f32.gmra.mxu0 %v1137
      %v1654 = vpop.f32.mrf.mxu0
      %v1655 = vadd.f32 %v1542, %v1654
      %1656 = vmatmul.f32.gmra.mxu0 %v1146
      %v1657 = vpop.f32.mrf.mxu0
      %v1658 = vadd.f32 %v1545, %v1657
      %1659 = vmatmul.f32.gmra.mxu0 %v1155
      %v1660 = vpop.f32.mrf.mxu0
      %v1661 = vadd.f32 %v1548, %v1660
      %1662 = vmatmul.f32.gmra.mxu0 %v1164
      %v1663 = vpop.f32.mrf.mxu0
      %v1664 = vadd.f32 %v1551, %v1663
      %1665 = vmatmul.f32.gmra.mxu0 %v1173
      %v1666 = vpop.f32.mrf.mxu0
      %v1667 = vadd.f32 %v1554, %v1666
      %1668 = vmatmul.f32.gmra.mxu0 %v1182
      %v1669 = vpop.f32.mrf.mxu0
      %v1670 = vadd.f32 %v1557, %v1669
      %1671 = vmatmul.f32.gmra.mxu0 %v1191
      %v1672 = vpop.f32.mrf.mxu0
      %v1673 = vadd.f32 %v1560, %v1672
      %1674 = vmatmul.f32.gmra.mxu0 %v1200
      %v1675 = vpop.f32.mrf.mxu0
      %v1676 = vadd.f32 %v1563, %v1675
      %1677 = vmatmul.f32.gmra.mxu0 %v1209
      %v1678 = vpop.f32.mrf.mxu0
      %v1679 = vadd.f32 %v1566, %v1678
      %1680 = vmatmul.f32.gmra.mxu0 %v1218
      %v1681 = vpop.f32.mrf.mxu0
      %v1682 = vadd.f32 %v1569, %v1681
      %1683 = vmatmul.f32.gmra.mxu0 %v1227
      %v1684 = vpop.f32.mrf.mxu0
      %v1685 = vadd.f32 %v1572, %v1684
      %1686 = vmatmul.f32.gmra.mxu0 %v1236
      %v1687 = vpop.f32.mrf.mxu0
      %v1688 = vadd.f32 %v1575, %v1687
      %1689 = vmatmul.f32.gmra.mxu0 %v1245
      %v1690 = vpop.f32.mrf.mxu0
      %v1691 = vadd.f32 %v1578, %v1690
      %1692 = vmatmul.f32.gmra.mxu0 %v1254
      %v1693 = vpop.f32.mrf.mxu0
      %v1694 = vadd.f32 %v1581, %v1693
      %1695 = vmatmul.f32.gmra.mxu0 %v1263
      %v1696 = vpop.f32.mrf.mxu0
      %v1697 = vadd.f32 %v1584, %v1696
      %1698 = vmatmul.f32.gmra.mxu0 %v1272
      %v1699 = vpop.f32.mrf.mxu0
      %v1700 = vadd.f32 %v1587, %v1699
      %1701 = vmatmul.f32.gmra.mxu0 %v1281
      %v1702 = vpop.f32.mrf.mxu0
      %v1703 = vadd.f32 %v1590, %v1702
      %1704 = vmatmul.f32.gmra.mxu0 %v1290
      %v1705 = vpop.f32.mrf.mxu0
      %v1706 = vadd.f32 %v1593, %v1705
      %1707 = vmatmul.f32.gmra.mxu0 %v1299
      %v1708 = vpop.f32.mrf.mxu0
      %v1709 = vadd.f32 %v1596, %v1708
      %1710 = vmatmul.f32.gmra.mxu0 %v1308
      %v1711 = vpop.f32.mrf.mxu0
      %v1712 = vadd.f32 %v1599, %v1711
      %1713 = vmatmul.f32.gmra.mxu0 %v1317
      %v1714 = vpop.f32.mrf.mxu0
      %v1715 = vadd.f32 %v1602, %v1714
      %1716 = vmatmul.f32.gmra.mxu0 %v1326
      %v1717 = vpop.f32.mrf.mxu0
      %v1718 = vadd.f32 %v1605, %v1717
      %1719 = vmatmul.f32.gmra.mxu0 %v1335
      %v1720 = vpop.f32.mrf.mxu0
      %v1721 = vadd.f32 %v1608, %v1720
      %1722 = vmatmul.f32.gmra.mxu0 %v1344
      %v1723 = vpop.f32.mrf.mxu0
      %v1724 = vadd.f32 %v1611, %v1723
      %1725 = vdwg.mxu0
      %1726 = vmatpush.msra.mxu0 %v1399
      %1727 = vmatpush.msra.mxu0 %v1398
      %1728 = vmatpush.msra.mxu0 %v1397
      %1729 = vmatpush.msra.mxu0 %v1396
      %1730 = vmatpush.msra.mxu0 %v1395
      %1731 = vmatpush.msra.mxu0 %v1394
      %1732 = vmatpush.msra.mxu0 %v1393
      %1733 = vmatpush.msra.mxu0 %v1392
      %1734 = vmatpush.msra.mxu0 %v1391
      %1735 = vmatpush.msra.mxu0 %v1390
      %1736 = vmatpush.msra.mxu0 %v1389
      %1737 = vmatpush.msra.mxu0 %v1388
      %1738 = vmatpush.msra.mxu0 %v1387
      %1739 = vmatpush.msra.mxu0 %v1386
      %1740 = vmatpush.msra.mxu0 %v1385
      %1741 = vmatpush.msra.mxu0 %v1384
      %1742 = vmatmul.f32.gmra.mxu0 %v1066
      %v1743 = vpop.f32.mrf.mxu0
      %v1744 = vadd.f32 %v1631, %v1743
      %1745 = vmatmul.f32.gmra.mxu0 %v1075
      %v1746 = vpop.f32.mrf.mxu0
      %v1747 = vadd.f32 %v1634, %v1746
      %1748 = vmatmul.f32.gmra.mxu0 %v1084
      %v1749 = vpop.f32.mrf.mxu0
      %v1750 = vadd.f32 %v1637, %v1749
      %1751 = vmatmul.f32.gmra.mxu0 %v1093
      %v1752 = vpop.f32.mrf.mxu0
      %v1753 = vadd.f32 %v1640, %v1752
      %1754 = vmatmul.f32.gmra.mxu0 %v1102
      %v1755 = vpop.f32.mrf.mxu0
      %v1756 = vadd.f32 %v1643, %v1755
      %1757 = vmatmul.f32.gmra.mxu0 %v1111
      %v1758 = vpop.f32.mrf.mxu0
      %v1759 = vadd.f32 %v1646, %v1758
      %1760 = vmatmul.f32.gmra.mxu0 %v1120
      %v1761 = vpop.f32.mrf.mxu0
      %v1762 = vadd.f32 %v1649, %v1761
      %1763 = vmatmul.f32.gmra.mxu0 %v1129
      %v1764 = vpop.f32.mrf.mxu0
      %v1765 = vadd.f32 %v1652, %v1764
      %1766 = vmatmul.f32.gmra.mxu0 %v1138
      %v1767 = vpop.f32.mrf.mxu0
      %v1768 = vadd.f32 %v1655, %v1767
      %1769 = vmatmul.f32.gmra.mxu0 %v1147
      %v1770 = vpop.f32.mrf.mxu0
      %v1771 = vadd.f32 %v1658, %v1770
      %1772 = vmatmul.f32.gmra.mxu0 %v1156
      %v1773 = vpop.f32.mrf.mxu0
      %v1774 = vadd.f32 %v1661, %v1773
      %1775 = vmatmul.f32.gmra.mxu0 %v1165
      %v1776 = vpop.f32.mrf.mxu0
      %v1777 = vadd.f32 %v1664, %v1776
      %1778 = vmatmul.f32.gmra.mxu0 %v1174
      %v1779 = vpop.f32.mrf.mxu0
      %v1780 = vadd.f32 %v1667, %v1779
      %1781 = vmatmul.f32.gmra.mxu0 %v1183
      %v1782 = vpop.f32.mrf.mxu0
      %v1783 = vadd.f32 %v1670, %v1782
      %1784 = vmatmul.f32.gmra.mxu0 %v1192
      %v1785 = vpop.f32.mrf.mxu0
      %v1786 = vadd.f32 %v1673, %v1785
      %1787 = vmatmul.f32.gmra.mxu0 %v1201
      %v1788 = vpop.f32.mrf.mxu0
      %v1789 = vadd.f32 %v1676, %v1788
      %1790 = vmatmul.f32.gmra.mxu0 %v1210
      %v1791 = vpop.f32.mrf.mxu0
      %v1792 = vadd.f32 %v1679, %v1791
      %1793 = vmatmul.f32.gmra.mxu0 %v1219
      %v1794 = vpop.f32.mrf.mxu0
      %v1795 = vadd.f32 %v1682, %v1794
      %1796 = vmatmul.f32.gmra.mxu0 %v1228
      %v1797 = vpop.f32.mrf.mxu0
      %v1798 = vadd.f32 %v1685, %v1797
      %1799 = vmatmul.f32.gmra.mxu0 %v1237
      %v1800 = vpop.f32.mrf.mxu0
      %v1801 = vadd.f32 %v1688, %v1800
      %1802 = vmatmul.f32.gmra.mxu0 %v1246
      %v1803 = vpop.f32.mrf.mxu0
      %v1804 = vadd.f32 %v1691, %v1803
      %1805 = vmatmul.f32.gmra.mxu0 %v1255
      %v1806 = vpop.f32.mrf.mxu0
      %v1807 = vadd.f32 %v1694, %v1806
      %1808 = vmatmul.f32.gmra.mxu0 %v1264
      %v1809 = vpop.f32.mrf.mxu0
      %v1810 = vadd.f32 %v1697, %v1809
      %1811 = vmatmul.f32.gmra.mxu0 %v1273
      %v1812 = vpop.f32.mrf.mxu0
      %v1813 = vadd.f32 %v1700, %v1812
      %1814 = vmatmul.f32.gmra.mxu0 %v1282
      %v1815 = vpop.f32.mrf.mxu0
      %v1816 = vadd.f32 %v1703, %v1815
      %1817 = vmatmul.f32.gmra.mxu0 %v1291
      %v1818 = vpop.f32.mrf.mxu0
      %v1819 = vadd.f32 %v1706, %v1818
      %1820 = vmatmul.f32.gmra.mxu0 %v1300
      %v1821 = vpop.f32.mrf.mxu0
      %v1822 = vadd.f32 %v1709, %v1821
      %1823 = vmatmul.f32.gmra.mxu0 %v1309
      %v1824 = vpop.f32.mrf.mxu0
      %v1825 = vadd.f32 %v1712, %v1824
      %1826 = vmatmul.f32.gmra.mxu0 %v1318
      %v1827 = vpop.f32.mrf.mxu0
      %v1828 = vadd.f32 %v1715, %v1827
      %1829 = vmatmul.f32.gmra.mxu0 %v1327
      %v1830 = vpop.f32.mrf.mxu0
      %v1831 = vadd.f32 %v1718, %v1830
      %1832 = vmatmul.f32.gmra.mxu0 %v1336
      %v1833 = vpop.f32.mrf.mxu0
      %v1834 = vadd.f32 %v1721, %v1833
      %1835 = vmatmul.f32.gmra.mxu0 %v1345
      %v1836 = vpop.f32.mrf.mxu0
      %v1837 = vadd.f32 %v1724, %v1836
      %1838 = vdwg.mxu0
      %1839 = vmatpush.msra.mxu0 %v1415
      %1840 = vmatpush.msra.mxu0 %v1414
      %1841 = vmatpush.msra.mxu0 %v1413
      %1842 = vmatpush.msra.mxu0 %v1412
      %1843 = vmatpush.msra.mxu0 %v1411
      %1844 = vmatpush.msra.mxu0 %v1410
      %1845 = vmatpush.msra.mxu0 %v1409
      %1846 = vmatpush.msra.mxu0 %v1408
      %1847 = vmatpush.msra.mxu0 %v1407
      %1848 = vmatpush.msra.mxu0 %v1406
      %1849 = vmatpush.msra.mxu0 %v1405
      %1850 = vmatpush.msra.mxu0 %v1404
      %1851 = vmatpush.msra.mxu0 %v1403
      %1852 = vmatpush.msra.mxu0 %v1402
      %1853 = vmatpush.msra.mxu0 %v1401
      %1854 = vmatpush.msra.mxu0 %v1400
      %1855 = vmatmul.f32.gmra.mxu0 %v1067
      %v1856 = vpop.f32.mrf.mxu0
      %v1857 = vadd.f32 %v1744, %v1856
      %1858 = vmatmul.f32.gmra.mxu0 %v1076
      %v1859 = vpop.f32.mrf.mxu0
      %v1860 = vadd.f32 %v1747, %v1859
      %1861 = vmatmul.f32.gmra.mxu0 %v1085
      %v1862 = vpop.f32.mrf.mxu0
      %v1863 = vadd.f32 %v1750, %v1862
      %1864 = vmatmul.f32.gmra.mxu0 %v1094
      %v1865 = vpop.f32.mrf.mxu0
      %v1866 = vadd.f32 %v1753, %v1865
      %1867 = vmatmul.f32.gmra.mxu0 %v1103
      %v1868 = vpop.f32.mrf.mxu0
      %v1869 = vadd.f32 %v1756, %v1868
      %1870 = vmatmul.f32.gmra.mxu0 %v1112
      %v1871 = vpop.f32.mrf.mxu0
      %v1872 = vadd.f32 %v1759, %v1871
      %1873 = vmatmul.f32.gmra.mxu0 %v1121
      %v1874 = vpop.f32.mrf.mxu0
      %v1875 = vadd.f32 %v1762, %v1874
      %1876 = vmatmul.f32.gmra.mxu0 %v1130
      %v1877 = vpop.f32.mrf.mxu0
      %v1878 = vadd.f32 %v1765, %v1877
      %1879 = vmatmul.f32.gmra.mxu0 %v1139
      %v1880 = vpop.f32.mrf.mxu0
      %v1881 = vadd.f32 %v1768, %v1880
      %1882 = vmatmul.f32.gmra.mxu0 %v1148
      %v1883 = vpop.f32.mrf.mxu0
      %v1884 = vadd.f32 %v1771, %v1883
      %1885 = vmatmul.f32.gmra.mxu0 %v1157
      %v1886 = vpop.f32.mrf.mxu0
      %v1887 = vadd.f32 %v1774, %v1886
      %1888 = vmatmul.f32.gmra.mxu0 %v1166
      %v1889 = vpop.f32.mrf.mxu0
      %v1890 = vadd.f32 %v1777, %v1889
      %1891 = vmatmul.f32.gmra.mxu0 %v1175
      %v1892 = vpop.f32.mrf.mxu0
      %v1893 = vadd.f32 %v1780, %v1892
      %1894 = vmatmul.f32.gmra.mxu0 %v1184
      %v1895 = vpop.f32.mrf.mxu0
      %v1896 = vadd.f32 %v1783, %v1895
      %1897 = vmatmul.f32.gmra.mxu0 %v1193
      %v1898 = vpop.f32.mrf.mxu0
      %v1899 = vadd.f32 %v1786, %v1898
      %1900 = vmatmul.f32.gmra.mxu0 %v1202
      %v1901 = vpop.f32.mrf.mxu0
      %v1902 = vadd.f32 %v1789, %v1901
      %1903 = vmatmul.f32.gmra.mxu0 %v1211
      %v1904 = vpop.f32.mrf.mxu0
      %v1905 = vadd.f32 %v1792, %v1904
      %1906 = vmatmul.f32.gmra.mxu0 %v1220
      %v1907 = vpop.f32.mrf.mxu0
      %v1908 = vadd.f32 %v1795, %v1907
      %1909 = vmatmul.f32.gmra.mxu0 %v1229
      %v1910 = vpop.f32.mrf.mxu0
      %v1911 = vadd.f32 %v1798, %v1910
      %1912 = vmatmul.f32.gmra.mxu0 %v1238
      %v1913 = vpop.f32.mrf.mxu0
      %v1914 = vadd.f32 %v1801, %v1913
      %1915 = vmatmul.f32.gmra.mxu0 %v1247
      %v1916 = vpop.f32.mrf.mxu0
      %v1917 = vadd.f32 %v1804, %v1916
      %1918 = vmatmul.f32.gmra.mxu0 %v1256
      %v1919 = vpop.f32.mrf.mxu0
      %v1920 = vadd.f32 %v1807, %v1919
      %1921 = vmatmul.f32.gmra.mxu0 %v1265
      %v1922 = vpop.f32.mrf.mxu0
      %v1923 = vadd.f32 %v1810, %v1922
      %1924 = vmatmul.f32.gmra.mxu0 %v1274
      %v1925 = vpop.f32.mrf.mxu0
      %v1926 = vadd.f32 %v1813, %v1925
      %1927 = vmatmul.f32.gmra.mxu0 %v1283
      %v1928 = vpop.f32.mrf.mxu0
      %v1929 = vadd.f32 %v1816, %v1928
      %1930 = vmatmul.f32.gmra.mxu0 %v1292
      %v1931 = vpop.f32.mrf.mxu0
      %v1932 = vadd.f32 %v1819, %v1931
      %1933 = vmatmul.f32.gmra.mxu0 %v1301
      %v1934 = vpop.f32.mrf.mxu0
      %v1935 = vadd.f32 %v1822, %v1934
      %1936 = vmatmul.f32.gmra.mxu0 %v1310
      %v1937 = vpop.f32.mrf.mxu0
      %v1938 = vadd.f32 %v1825, %v1937
      %1939 = vmatmul.f32.gmra.mxu0 %v1319
      %v1940 = vpop.f32.mrf.mxu0
      %v1941 = vadd.f32 %v1828, %v1940
      %1942 = vmatmul.f32.gmra.mxu0 %v1328
      %v1943 = vpop.f32.mrf.mxu0
      %v1944 = vadd.f32 %v1831, %v1943
      %1945 = vmatmul.f32.gmra.mxu0 %v1337
      %v1946 = vpop.f32.mrf.mxu0
      %v1947 = vadd.f32 %v1834, %v1946
      %1948 = vmatmul.f32.gmra.mxu0 %v1346
      %v1949 = vpop.f32.mrf.mxu0
      %v1950 = vadd.f32 %v1837, %v1949
      %1951 = vdwg.mxu0
      %1952 = vmatpush.msra.mxu0 %v1431
      %1953 = vmatpush.msra.mxu0 %v1430
      %1954 = vmatpush.msra.mxu0 %v1429
      %1955 = vmatpush.msra.mxu0 %v1428
      %1956 = vmatpush.msra.mxu0 %v1427
      %1957 = vmatpush.msra.mxu0 %v1426
      %1958 = vmatpush.msra.mxu0 %v1425
      %1959 = vmatpush.msra.mxu0 %v1424
      %1960 = vmatpush.msra.mxu0 %v1423
      %1961 = vmatpush.msra.mxu0 %v1422
      %1962 = vmatpush.msra.mxu0 %v1421
      %1963 = vmatpush.msra.mxu0 %v1420
      %1964 = vmatpush.msra.mxu0 %v1419
      %1965 = vmatpush.msra.mxu0 %v1418
      %1966 = vmatpush.msra.mxu0 %v1417
      %1967 = vmatpush.msra.mxu0 %v1416
      %1968 = vmatmul.f32.gmra.mxu0 %v1068
      %v1969 = vpop.f32.mrf.mxu0
      %v1970 = vadd.f32 %v1857, %v1969
      %1971 = vmatmul.f32.gmra.mxu0 %v1077
      %v1972 = vpop.f32.mrf.mxu0
      %v1973 = vadd.f32 %v1860, %v1972
      %1974 = vmatmul.f32.gmra.mxu0 %v1086
      %v1975 = vpop.f32.mrf.mxu0
      %v1976 = vadd.f32 %v1863, %v1975
      %1977 = vmatmul.f32.gmra.mxu0 %v1095
      %v1978 = vpop.f32.mrf.mxu0
      %v1979 = vadd.f32 %v1866, %v1978
      %1980 = vmatmul.f32.gmra.mxu0 %v1104
      %v1981 = vpop.f32.mrf.mxu0
      %v1982 = vadd.f32 %v1869, %v1981
      %1983 = vmatmul.f32.gmra.mxu0 %v1113
      %v1984 = vpop.f32.mrf.mxu0
      %v1985 = vadd.f32 %v1872, %v1984
      %1986 = vmatmul.f32.gmra.mxu0 %v1122
      %v1987 = vpop.f32.mrf.mxu0
      %v1988 = vadd.f32 %v1875, %v1987
      %1989 = vmatmul.f32.gmra.mxu0 %v1131
      %v1990 = vpop.f32.mrf.mxu0
      %v1991 = vadd.f32 %v1878, %v1990
      %1992 = vmatmul.f32.gmra.mxu0 %v1140
      %v1993 = vpop.f32.mrf.mxu0
      %v1994 = vadd.f32 %v1881, %v1993
      %1995 = vmatmul.f32.gmra.mxu0 %v1149
      %v1996 = vpop.f32.mrf.mxu0
      %v1997 = vadd.f32 %v1884, %v1996
      %1998 = vmatmul.f32.gmra.mxu0 %v1158
      %v1999 = vpop.f32.mrf.mxu0
      %v2000 = vadd.f32 %v1887, %v1999
      %2001 = vmatmul.f32.gmra.mxu0 %v1167
      %v2002 = vpop.f32.mrf.mxu0
      %v2003 = vadd.f32 %v1890, %v2002
      %2004 = vmatmul.f32.gmra.mxu0 %v1176
      %v2005 = vpop.f32.mrf.mxu0
      %v2006 = vadd.f32 %v1893, %v2005
      %2007 = vmatmul.f32.gmra.mxu0 %v1185
      %v2008 = vpop.f32.mrf.mxu0
      %v2009 = vadd.f32 %v1896, %v2008
      %2010 = vmatmul.f32.gmra.mxu0 %v1194
      %v2011 = vpop.f32.mrf.mxu0
      %v2012 = vadd.f32 %v1899, %v2011
      %2013 = vmatmul.f32.gmra.mxu0 %v1203
      %v2014 = vpop.f32.mrf.mxu0
      %v2015 = vadd.f32 %v1902, %v2014
      %2016 = vmatmul.f32.gmra.mxu0 %v1212
      %v2017 = vpop.f32.mrf.mxu0
      %v2018 = vadd.f32 %v1905, %v2017
      %2019 = vmatmul.f32.gmra.mxu0 %v1221
      %v2020 = vpop.f32.mrf.mxu0
      %v2021 = vadd.f32 %v1908, %v2020
      %2022 = vmatmul.f32.gmra.mxu0 %v1230
      %v2023 = vpop.f32.mrf.mxu0
      %v2024 = vadd.f32 %v1911, %v2023
      %2025 = vmatmul.f32.gmra.mxu0 %v1239
      %v2026 = vpop.f32.mrf.mxu0
      %v2027 = vadd.f32 %v1914, %v2026
      %2028 = vmatmul.f32.gmra.mxu0 %v1248
      %v2029 = vpop.f32.mrf.mxu0
      %v2030 = vadd.f32 %v1917, %v2029
      %2031 = vmatmul.f32.gmra.mxu0 %v1257
      %v2032 = vpop.f32.mrf.mxu0
      %v2033 = vadd.f32 %v1920, %v2032
      %2034 = vmatmul.f32.gmra.mxu0 %v1266
      %v2035 = vpop.f32.mrf.mxu0
      %v2036 = vadd.f32 %v1923, %v2035
      %2037 = vmatmul.f32.gmra.mxu0 %v1275
      %v2038 = vpop.f32.mrf.mxu0
      %v2039 = vadd.f32 %v1926, %v2038
      %2040 = vmatmul.f32.gmra.mxu0 %v1284
      %v2041 = vpop.f32.mrf.mxu0
      %v2042 = vadd.f32 %v1929, %v2041
      %2043 = vmatmul.f32.gmra.mxu0 %v1293
      %v2044 = vpop.f32.mrf.mxu0
      %v2045 = vadd.f32 %v1932, %v2044
      %2046 = vmatmul.f32.gmra.mxu0 %v1302
      %v2047 = vpop.f32.mrf.mxu0
      %v2048 = vadd.f32 %v1935, %v2047
      %2049 = vmatmul.f32.gmra.mxu0 %v1311
      %v2050 = vpop.f32.mrf.mxu0
      %v2051 = vadd.f32 %v1938, %v2050
      %2052 = vmatmul.f32.gmra.mxu0 %v1320
      %v2053 = vpop.f32.mrf.mxu0
      %v2054 = vadd.f32 %v1941, %v2053
      %2055 = vmatmul.f32.gmra.mxu0 %v1329
      %v2056 = vpop.f32.mrf.mxu0
      %v2057 = vadd.f32 %v1944, %v2056
      %2058 = vmatmul.f32.gmra.mxu0 %v1338
      %v2059 = vpop.f32.mrf.mxu0
      %v2060 = vadd.f32 %v1947, %v2059
      %2061 = vmatmul.f32.gmra.mxu0 %v1347
      %v2062 = vpop.f32.mrf.mxu0
      %v2063 = vadd.f32 %v1950, %v2062
      %2064 = vdwg.mxu0
      %2065 = vmatpush.msra.mxu0 %v1447
      %2066 = vmatpush.msra.mxu0 %v1446
      %2067 = vmatpush.msra.mxu0 %v1445
      %2068 = vmatpush.msra.mxu0 %v1444
      %2069 = vmatpush.msra.mxu0 %v1443
      %2070 = vmatpush.msra.mxu0 %v1442
      %2071 = vmatpush.msra.mxu0 %v1441
      %2072 = vmatpush.msra.mxu0 %v1440
      %2073 = vmatpush.msra.mxu0 %v1439
      %2074 = vmatpush.msra.mxu0 %v1438
      %2075 = vmatpush.msra.mxu0 %v1437
      %2076 = vmatpush.msra.mxu0 %v1436
      %2077 = vmatpush.msra.mxu0 %v1435
      %2078 = vmatpush.msra.mxu0 %v1434
      %2079 = vmatpush.msra.mxu0 %v1433
      %2080 = vmatpush.msra.mxu0 %v1432
      %2081 = vmatmul.f32.gmra.mxu0 %v1069
      %v2082 = vpop.f32.mrf.mxu0
      %v2083 = vadd.f32 %v1970, %v2082
      %2084 = vmatmul.f32.gmra.mxu0 %v1078
      %v2085 = vpop.f32.mrf.mxu0
      %v2086 = vadd.f32 %v1973, %v2085
      %2087 = vmatmul.f32.gmra.mxu0 %v1087
      %v2088 = vpop.f32.mrf.mxu0
      %v2089 = vadd.f32 %v1976, %v2088
      %2090 = vmatmul.f32.gmra.mxu0 %v1096
      %v2091 = vpop.f32.mrf.mxu0
      %v2092 = vadd.f32 %v1979, %v2091
      %2093 = vmatmul.f32.gmra.mxu0 %v1105
      %v2094 = vpop.f32.mrf.mxu0
      %v2095 = vadd.f32 %v1982, %v2094
      %2096 = vmatmul.f32.gmra.mxu0 %v1114
      %v2097 = vpop.f32.mrf.mxu0
      %v2098 = vadd.f32 %v1985, %v2097
      %2099 = vmatmul.f32.gmra.mxu0 %v1123
      %v2100 = vpop.f32.mrf.mxu0
      %v2101 = vadd.f32 %v1988, %v2100
      %2102 = vmatmul.f32.gmra.mxu0 %v1132
      %v2103 = vpop.f32.mrf.mxu0
      %v2104 = vadd.f32 %v1991, %v2103
      %2105 = vmatmul.f32.gmra.mxu0 %v1141
      %v2106 = vpop.f32.mrf.mxu0
      %v2107 = vadd.f32 %v1994, %v2106
      %2108 = vmatmul.f32.gmra.mxu0 %v1150
      %v2109 = vpop.f32.mrf.mxu0
      %v2110 = vadd.f32 %v1997, %v2109
      %2111 = vmatmul.f32.gmra.mxu0 %v1159
      %v2112 = vpop.f32.mrf.mxu0
      %v2113 = vadd.f32 %v2000, %v2112
      %2114 = vmatmul.f32.gmra.mxu0 %v1168
      %v2115 = vpop.f32.mrf.mxu0
      %v2116 = vadd.f32 %v2003, %v2115
      %2117 = vmatmul.f32.gmra.mxu0 %v1177
      %v2118 = vpop.f32.mrf.mxu0
      %v2119 = vadd.f32 %v2006, %v2118
      %2120 = vmatmul.f32.gmra.mxu0 %v1186
      %v2121 = vpop.f32.mrf.mxu0
      %v2122 = vadd.f32 %v2009, %v2121
      %2123 = vmatmul.f32.gmra.mxu0 %v1195
      %v2124 = vpop.f32.mrf.mxu0
      %v2125 = vadd.f32 %v2012, %v2124
      %2126 = vmatmul.f32.gmra.mxu0 %v1204
      %v2127 = vpop.f32.mrf.mxu0
      %v2128 = vadd.f32 %v2015, %v2127
      %2129 = vmatmul.f32.gmra.mxu0 %v1213
      %v2130 = vpop.f32.mrf.mxu0
      %v2131 = vadd.f32 %v2018, %v2130
      %2132 = vmatmul.f32.gmra.mxu0 %v1222
      %v2133 = vpop.f32.mrf.mxu0
      %v2134 = vadd.f32 %v2021, %v2133
      %2135 = vmatmul.f32.gmra.mxu0 %v1231
      %v2136 = vpop.f32.mrf.mxu0
      %v2137 = vadd.f32 %v2024, %v2136
      %2138 = vmatmul.f32.gmra.mxu0 %v1240
      %v2139 = vpop.f32.mrf.mxu0
      %v2140 = vadd.f32 %v2027, %v2139
      %2141 = vmatmul.f32.gmra.mxu0 %v1249
      %v2142 = vpop.f32.mrf.mxu0
      %v2143 = vadd.f32 %v2030, %v2142
      %2144 = vmatmul.f32.gmra.mxu0 %v1258
      %v2145 = vpop.f32.mrf.mxu0
      %v2146 = vadd.f32 %v2033, %v2145
      %2147 = vmatmul.f32.gmra.mxu0 %v1267
      %v2148 = vpop.f32.mrf.mxu0
      %v2149 = vadd.f32 %v2036, %v2148
      %2150 = vmatmul.f32.gmra.mxu0 %v1276
      %v2151 = vpop.f32.mrf.mxu0
      %v2152 = vadd.f32 %v2039, %v2151
      %2153 = vmatmul.f32.gmra.mxu0 %v1285
      %v2154 = vpop.f32.mrf.mxu0
      %v2155 = vadd.f32 %v2042, %v2154
      %2156 = vmatmul.f32.gmra.mxu0 %v1294
      %v2157 = vpop.f32.mrf.mxu0
      %v2158 = vadd.f32 %v2045, %v2157
      %2159 = vmatmul.f32.gmra.mxu0 %v1303
      %v2160 = vpop.f32.mrf.mxu0
      %v2161 = vadd.f32 %v2048, %v2160
      %2162 = vmatmul.f32.gmra.mxu0 %v1312
      %v2163 = vpop.f32.mrf.mxu0
      %v2164 = vadd.f32 %v2051, %v2163
      %2165 = vmatmul.f32.gmra.mxu0 %v1321
      %v2166 = vpop.f32.mrf.mxu0
      %v2167 = vadd.f32 %v2054, %v2166
      %2168 = vmatmul.f32.gmra.mxu0 %v1330
      %v2169 = vpop.f32.mrf.mxu0
      %v2170 = vadd.f32 %v2057, %v2169
      %2171 = vmatmul.f32.gmra.mxu0 %v1339
      %v2172 = vpop.f32.mrf.mxu0
      %v2173 = vadd.f32 %v2060, %v2172
      %2174 = vmatmul.f32.gmra.mxu0 %v1348
      %v2175 = vpop.f32.mrf.mxu0
      %v2176 = vadd.f32 %v2063, %v2175
      %2177 = vdwg.mxu0
      %2178 = vmatpush.msra.mxu0 %v1463
      %2179 = vmatpush.msra.mxu0 %v1462
      %2180 = vmatpush.msra.mxu0 %v1461
      %2181 = vmatpush.msra.mxu0 %v1460
      %2182 = vmatpush.msra.mxu0 %v1459
      %2183 = vmatpush.msra.mxu0 %v1458
      %2184 = vmatpush.msra.mxu0 %v1457
      %2185 = vmatpush.msra.mxu0 %v1456
      %2186 = vmatpush.msra.mxu0 %v1455
      %2187 = vmatpush.msra.mxu0 %v1454
      %2188 = vmatpush.msra.mxu0 %v1453
      %2189 = vmatpush.msra.mxu0 %v1452
      %2190 = vmatpush.msra.mxu0 %v1451
      %2191 = vmatpush.msra.mxu0 %v1450
      %2192 = vmatpush.msra.mxu0 %v1449
      %2193 = vmatpush.msra.mxu0 %v1448
      %2194 = vmatmul.f32.gmra.mxu0 %v1070
      %v2195 = vpop.f32.mrf.mxu0
      %v2196 = vadd.f32 %v2083, %v2195
      %2197 = vmatmul.f32.gmra.mxu0 %v1079
      %v2198 = vpop.f32.mrf.mxu0
      %v2199 = vadd.f32 %v2086, %v2198
      %2200 = vmatmul.f32.gmra.mxu0 %v1088
      %v2201 = vpop.f32.mrf.mxu0
      %v2202 = vadd.f32 %v2089, %v2201
      %2203 = vmatmul.f32.gmra.mxu0 %v1097
      %v2204 = vpop.f32.mrf.mxu0
      %v2205 = vadd.f32 %v2092, %v2204
      %2206 = vmatmul.f32.gmra.mxu0 %v1106
      %v2207 = vpop.f32.mrf.mxu0
      %v2208 = vadd.f32 %v2095, %v2207
      %2209 = vmatmul.f32.gmra.mxu0 %v1115
      %v2210 = vpop.f32.mrf.mxu0
      %v2211 = vadd.f32 %v2098, %v2210
      %2212 = vmatmul.f32.gmra.mxu0 %v1124
      %v2213 = vpop.f32.mrf.mxu0
      %v2214 = vadd.f32 %v2101, %v2213
      %2215 = vmatmul.f32.gmra.mxu0 %v1133
      %v2216 = vpop.f32.mrf.mxu0
      %v2217 = vadd.f32 %v2104, %v2216
      %2218 = vmatmul.f32.gmra.mxu0 %v1142
      %v2219 = vpop.f32.mrf.mxu0
      %v2220 = vadd.f32 %v2107, %v2219
      %2221 = vmatmul.f32.gmra.mxu0 %v1151
      %v2222 = vpop.f32.mrf.mxu0
      %v2223 = vadd.f32 %v2110, %v2222
      %2224 = vmatmul.f32.gmra.mxu0 %v1160
      %v2225 = vpop.f32.mrf.mxu0
      %v2226 = vadd.f32 %v2113, %v2225
      %2227 = vmatmul.f32.gmra.mxu0 %v1169
      %v2228 = vpop.f32.mrf.mxu0
      %v2229 = vadd.f32 %v2116, %v2228
      %2230 = vmatmul.f32.gmra.mxu0 %v1178
      %v2231 = vpop.f32.mrf.mxu0
      %v2232 = vadd.f32 %v2119, %v2231
      %2233 = vmatmul.f32.gmra.mxu0 %v1187
      %v2234 = vpop.f32.mrf.mxu0
      %v2235 = vadd.f32 %v2122, %v2234
      %2236 = vmatmul.f32.gmra.mxu0 %v1196
      %v2237 = vpop.f32.mrf.mxu0
      %v2238 = vadd.f32 %v2125, %v2237
      %2239 = vmatmul.f32.gmra.mxu0 %v1205
      %v2240 = vpop.f32.mrf.mxu0
      %v2241 = vadd.f32 %v2128, %v2240
      %2242 = vmatmul.f32.gmra.mxu0 %v1214
      %v2243 = vpop.f32.mrf.mxu0
      %v2244 = vadd.f32 %v2131, %v2243
      %2245 = vmatmul.f32.gmra.mxu0 %v1223
      %v2246 = vpop.f32.mrf.mxu0
      %v2247 = vadd.f32 %v2134, %v2246
      %2248 = vmatmul.f32.gmra.mxu0 %v1232
      %v2249 = vpop.f32.mrf.mxu0
      %v2250 = vadd.f32 %v2137, %v2249
      %2251 = vmatmul.f32.gmra.mxu0 %v1241
      %v2252 = vpop.f32.mrf.mxu0
      %v2253 = vadd.f32 %v2140, %v2252
      %2254 = vmatmul.f32.gmra.mxu0 %v1250
      %v2255 = vpop.f32.mrf.mxu0
      %v2256 = vadd.f32 %v2143, %v2255
      %2257 = vmatmul.f32.gmra.mxu0 %v1259
      %v2258 = vpop.f32.mrf.mxu0
      %v2259 = vadd.f32 %v2146, %v2258
      %2260 = vmatmul.f32.gmra.mxu0 %v1268
      %v2261 = vpop.f32.mrf.mxu0
      %v2262 = vadd.f32 %v2149, %v2261
      %2263 = vmatmul.f32.gmra.mxu0 %v1277
      %v2264 = vpop.f32.mrf.mxu0
      %v2265 = vadd.f32 %v2152, %v2264
      %2266 = vmatmul.f32.gmra.mxu0 %v1286
      %v2267 = vpop.f32.mrf.mxu0
      %v2268 = vadd.f32 %v2155, %v2267
      %2269 = vmatmul.f32.gmra.mxu0 %v1295
      %v2270 = vpop.f32.mrf.mxu0
      %v2271 = vadd.f32 %v2158, %v2270
      %2272 = vmatmul.f32.gmra.mxu0 %v1304
      %v2273 = vpop.f32.mrf.mxu0
      %v2274 = vadd.f32 %v2161, %v2273
      %2275 = vmatmul.f32.gmra.mxu0 %v1313
      %v2276 = vpop.f32.mrf.mxu0
      %v2277 = vadd.f32 %v2164, %v2276
      %2278 = vmatmul.f32.gmra.mxu0 %v1322
      %v2279 = vpop.f32.mrf.mxu0
      %v2280 = vadd.f32 %v2167, %v2279
      %2281 = vmatmul.f32.gmra.mxu0 %v1331
      %v2282 = vpop.f32.mrf.mxu0
      %v2283 = vadd.f32 %v2170, %v2282
      %2284 = vmatmul.f32.gmra.mxu0 %v1340
      %v2285 = vpop.f32.mrf.mxu0
      %v2286 = vadd.f32 %v2173, %v2285
      %2287 = vmatmul.f32.gmra.mxu0 %v1349
      %v2288 = vpop.f32.mrf.mxu0
      %v2289 = vadd.f32 %v2176, %v2288
      %2290 = vdwg.mxu0
      %2291 = vmatpush.msra.mxu0 %v1479
      %2292 = vmatpush.msra.mxu0 %v1478
      %2293 = vmatpush.msra.mxu0 %v1477
      %2294 = vmatpush.msra.mxu0 %v1476
      %2295 = vmatpush.msra.mxu0 %v1475
      %2296 = vmatpush.msra.mxu0 %v1474
      %2297 = vmatpush.msra.mxu0 %v1473
      %2298 = vmatpush.msra.mxu0 %v1472
      %2299 = vmatpush.msra.mxu0 %v1471
      %2300 = vmatpush.msra.mxu0 %v1470
      %2301 = vmatpush.msra.mxu0 %v1469
      %2302 = vmatpush.msra.mxu0 %v1468
      %2303 = vmatpush.msra.mxu0 %v1467
      %2304 = vmatpush.msra.mxu0 %v1466
      %2305 = vmatpush.msra.mxu0 %v1465
      %2306 = vmatpush.msra.mxu0 %v1464
      %2307 = vmatmul.f32.gmra.mxu0 %v1071
      %v2308 = vpop.f32.mrf.mxu0
      %v2309 = vadd.f32 %v2196, %v2308
      %2310 = vmatmul.f32.gmra.mxu0 %v1080
      %v2311 = vpop.f32.mrf.mxu0
      %v2312 = vadd.f32 %v2199, %v2311
      %2313 = vmatmul.f32.gmra.mxu0 %v1089
      %v2314 = vpop.f32.mrf.mxu0
      %v2315 = vadd.f32 %v2202, %v2314
      %2316 = vmatmul.f32.gmra.mxu0 %v1098
      %v2317 = vpop.f32.mrf.mxu0
      %v2318 = vadd.f32 %v2205, %v2317
      %2319 = vmatmul.f32.gmra.mxu0 %v1107
      %v2320 = vpop.f32.mrf.mxu0
      %v2321 = vadd.f32 %v2208, %v2320
      %2322 = vmatmul.f32.gmra.mxu0 %v1116
      %v2323 = vpop.f32.mrf.mxu0
      %v2324 = vadd.f32 %v2211, %v2323
      %2325 = vmatmul.f32.gmra.mxu0 %v1125
      %v2326 = vpop.f32.mrf.mxu0
      %v2327 = vadd.f32 %v2214, %v2326
      %2328 = vmatmul.f32.gmra.mxu0 %v1134
      %v2329 = vpop.f32.mrf.mxu0
      %v2330 = vadd.f32 %v2217, %v2329
      %2331 = vmatmul.f32.gmra.mxu0 %v1143
      %v2332 = vpop.f32.mrf.mxu0
      %v2333 = vadd.f32 %v2220, %v2332
      %2334 = vmatmul.f32.gmra.mxu0 %v1152
      %v2335 = vpop.f32.mrf.mxu0
      %v2336 = vadd.f32 %v2223, %v2335
      %2337 = vmatmul.f32.gmra.mxu0 %v1161
      %v2338 = vpop.f32.mrf.mxu0
      %v2339 = vadd.f32 %v2226, %v2338
      %2340 = vmatmul.f32.gmra.mxu0 %v1170
      %v2341 = vpop.f32.mrf.mxu0
      %v2342 = vadd.f32 %v2229, %v2341
      %2343 = vmatmul.f32.gmra.mxu0 %v1179
      %v2344 = vpop.f32.mrf.mxu0
      %v2345 = vadd.f32 %v2232, %v2344
      %2346 = vmatmul.f32.gmra.mxu0 %v1188
      %v2347 = vpop.f32.mrf.mxu0
      %v2348 = vadd.f32 %v2235, %v2347
      %2349 = vmatmul.f32.gmra.mxu0 %v1197
      %v2350 = vpop.f32.mrf.mxu0
      %v2351 = vadd.f32 %v2238, %v2350
      %2352 = vmatmul.f32.gmra.mxu0 %v1206
      %v2353 = vpop.f32.mrf.mxu0
      %v2354 = vadd.f32 %v2241, %v2353
      %2355 = vmatmul.f32.gmra.mxu0 %v1215
      %v2356 = vpop.f32.mrf.mxu0
      %v2357 = vadd.f32 %v2244, %v2356
      %2358 = vmatmul.f32.gmra.mxu0 %v1224
      %v2359 = vpop.f32.mrf.mxu0
      %v2360 = vadd.f32 %v2247, %v2359
      %2361 = vmatmul.f32.gmra.mxu0 %v1233
      %v2362 = vpop.f32.mrf.mxu0
      %v2363 = vadd.f32 %v2250, %v2362
      %2364 = vmatmul.f32.gmra.mxu0 %v1242
      %v2365 = vpop.f32.mrf.mxu0
      %v2366 = vadd.f32 %v2253, %v2365
      %2367 = vmatmul.f32.gmra.mxu0 %v1251
      %v2368 = vpop.f32.mrf.mxu0
      %v2369 = vadd.f32 %v2256, %v2368
      %2370 = vmatmul.f32.gmra.mxu0 %v1260
      %v2371 = vpop.f32.mrf.mxu0
      %v2372 = vadd.f32 %v2259, %v2371
      %2373 = vmatmul.f32.gmra.mxu0 %v1269
      %v2374 = vpop.f32.mrf.mxu0
      %v2375 = vadd.f32 %v2262, %v2374
      %2376 = vmatmul.f32.gmra.mxu0 %v1278
      %v2377 = vpop.f32.mrf.mxu0
      %v2378 = vadd.f32 %v2265, %v2377
      %2379 = vmatmul.f32.gmra.mxu0 %v1287
      %v2380 = vpop.f32.mrf.mxu0
      %v2381 = vadd.f32 %v2268, %v2380
      %2382 = vmatmul.f32.gmra.mxu0 %v1296
      %v2383 = vpop.f32.mrf.mxu0
      %v2384 = vadd.f32 %v2271, %v2383
      %2385 = vmatmul.f32.gmra.mxu0 %v1305
      %v2386 = vpop.f32.mrf.mxu0
      %v2387 = vadd.f32 %v2274, %v2386
      %2388 = vmatmul.f32.gmra.mxu0 %v1314
      %v2389 = vpop.f32.mrf.mxu0
      %v2390 = vadd.f32 %v2277, %v2389
      %2391 = vmatmul.f32.gmra.mxu0 %v1323
      %v2392 = vpop.f32.mrf.mxu0
      %v2393 = vadd.f32 %v2280, %v2392
      %2394 = vmatmul.f32.gmra.mxu0 %v1332
      %v2395 = vpop.f32.mrf.mxu0
      %v2396 = vadd.f32 %v2283, %v2395
      %2397 = vmatmul.f32.gmra.mxu0 %v1341
      %v2398 = vpop.f32.mrf.mxu0
      %v2399 = vadd.f32 %v2286, %v2398
      %2400 = vmatmul.f32.gmra.mxu0 %v1350
      %v2401 = vpop.f32.mrf.mxu0
      %v2402 = vadd.f32 %v2289, %v2401
      %2403 = vdwg.mxu0
      %2404 = vmatpush.msra.mxu0 %v1495
      %2405 = vmatpush.msra.mxu0 %v1494
      %2406 = vmatpush.msra.mxu0 %v1493
      %2407 = vmatpush.msra.mxu0 %v1492
      %2408 = vmatpush.msra.mxu0 %v1491
      %2409 = vmatpush.msra.mxu0 %v1490
      %2410 = vmatpush.msra.mxu0 %v1489
      %2411 = vmatpush.msra.mxu0 %v1488
      %2412 = vmatpush.msra.mxu0 %v1487
      %2413 = vmatpush.msra.mxu0 %v1486
      %2414 = vmatpush.msra.mxu0 %v1485
      %2415 = vmatpush.msra.mxu0 %v1484
      %2416 = vmatpush.msra.mxu0 %v1483
      %2417 = vmatpush.msra.mxu0 %v1482
      %2418 = vmatpush.msra.mxu0 %v1481
      %2419 = vmatpush.msra.mxu0 %v1480
      %2420 = vmatmul.f32.gmra.mxu0 %v1072
      %v2421 = vpop.f32.mrf.mxu0
      %v2422 = vadd.f32 %v2309, %v2421
      %2423 = vmatmul.f32.gmra.mxu0 %v1081
      %v2424 = vpop.f32.mrf.mxu0
      %v2425 = vadd.f32 %v2312, %v2424
      %2426 = vmatmul.f32.gmra.mxu0 %v1090
      %v2427 = vpop.f32.mrf.mxu0
      %v2428 = vadd.f32 %v2315, %v2427
      %2429 = vmatmul.f32.gmra.mxu0 %v1099
      %v2430 = vpop.f32.mrf.mxu0
      %v2431 = vadd.f32 %v2318, %v2430
      %2432 = vmatmul.f32.gmra.mxu0 %v1108
      %v2433 = vpop.f32.mrf.mxu0
      %v2434 = vadd.f32 %v2321, %v2433
      %2435 = vmatmul.f32.gmra.mxu0 %v1117
      %v2436 = vpop.f32.mrf.mxu0
      %v2437 = vadd.f32 %v2324, %v2436
      %2438 = vmatmul.f32.gmra.mxu0 %v1126
      %v2439 = vpop.f32.mrf.mxu0
      %v2440 = vadd.f32 %v2327, %v2439
      %2441 = vmatmul.f32.gmra.mxu0 %v1135
      %v2442 = vpop.f32.mrf.mxu0
      %v2443 = vadd.f32 %v2330, %v2442
      %2444 = vmatmul.f32.gmra.mxu0 %v1144
      %v2445 = vpop.f32.mrf.mxu0
      %v2446 = vadd.f32 %v2333, %v2445
      %2447 = vmatmul.f32.gmra.mxu0 %v1153
      %v2448 = vpop.f32.mrf.mxu0
      %v2449 = vadd.f32 %v2336, %v2448
      %2450 = vmatmul.f32.gmra.mxu0 %v1162
      %v2451 = vpop.f32.mrf.mxu0
      %v2452 = vadd.f32 %v2339, %v2451
      %2453 = vmatmul.f32.gmra.mxu0 %v1171
      %v2454 = vpop.f32.mrf.mxu0
      %v2455 = vadd.f32 %v2342, %v2454
      %2456 = vmatmul.f32.gmra.mxu0 %v1180
      %v2457 = vpop.f32.mrf.mxu0
      %v2458 = vadd.f32 %v2345, %v2457
      %2459 = vmatmul.f32.gmra.mxu0 %v1189
      %v2460 = vpop.f32.mrf.mxu0
      %v2461 = vadd.f32 %v2348, %v2460
      %2462 = vmatmul.f32.gmra.mxu0 %v1198
      %v2463 = vpop.f32.mrf.mxu0
      %v2464 = vadd.f32 %v2351, %v2463
      %2465 = vmatmul.f32.gmra.mxu0 %v1207
      %v2466 = vpop.f32.mrf.mxu0
      %v2467 = vadd.f32 %v2354, %v2466
      %2468 = vmatmul.f32.gmra.mxu0 %v1216
      %v2469 = vpop.f32.mrf.mxu0
      %v2470 = vadd.f32 %v2357, %v2469
      %2471 = vmatmul.f32.gmra.mxu0 %v1225
      %v2472 = vpop.f32.mrf.mxu0
      %v2473 = vadd.f32 %v2360, %v2472
      %2474 = vmatmul.f32.gmra.mxu0 %v1234
      %v2475 = vpop.f32.mrf.mxu0
      %v2476 = vadd.f32 %v2363, %v2475
      %2477 = vmatmul.f32.gmra.mxu0 %v1243
      %v2478 = vpop.f32.mrf.mxu0
      %v2479 = vadd.f32 %v2366, %v2478
      %2480 = vmatmul.f32.gmra.mxu0 %v1252
      %v2481 = vpop.f32.mrf.mxu0
      %v2482 = vadd.f32 %v2369, %v2481
      %2483 = vmatmul.f32.gmra.mxu0 %v1261
      %v2484 = vpop.f32.mrf.mxu0
      %v2485 = vadd.f32 %v2372, %v2484
      %2486 = vmatmul.f32.gmra.mxu0 %v1270
      %v2487 = vpop.f32.mrf.mxu0
      %v2488 = vadd.f32 %v2375, %v2487
      %2489 = vmatmul.f32.gmra.mxu0 %v1279
      %v2490 = vpop.f32.mrf.mxu0
      %v2491 = vadd.f32 %v2378, %v2490
      %2492 = vmatmul.f32.gmra.mxu0 %v1288
      %v2493 = vpop.f32.mrf.mxu0
      %v2494 = vadd.f32 %v2381, %v2493
      %2495 = vmatmul.f32.gmra.mxu0 %v1297
      %v2496 = vpop.f32.mrf.mxu0
      %v2497 = vadd.f32 %v2384, %v2496
      %2498 = vmatmul.f32.gmra.mxu0 %v1306
      %v2499 = vpop.f32.mrf.mxu0
      %v2500 = vadd.f32 %v2387, %v2499
      %2501 = vmatmul.f32.gmra.mxu0 %v1315
      %v2502 = vpop.f32.mrf.mxu0
      %v2503 = vadd.f32 %v2390, %v2502
      %2504 = vmatmul.f32.gmra.mxu0 %v1324
      %v2505 = vpop.f32.mrf.mxu0
      %v2506 = vadd.f32 %v2393, %v2505
      %2507 = vmatmul.f32.gmra.mxu0 %v1333
      %v2508 = vpop.f32.mrf.mxu0
      %v2509 = vadd.f32 %v2396, %v2508
      %2510 = vmatmul.f32.gmra.mxu0 %v1342
      %v2511 = vpop.f32.mrf.mxu0
      %v2512 = vadd.f32 %v2399, %v2511
      %2513 = vmatmul.f32.gmra.mxu0 %v1351
      %v2514 = vpop.f32.mrf.mxu0
      %v2515 = vadd.f32 %v2402, %v2514
      %2516 = vdwg.mxu0
      %2517 = vst.msk [vmem:[%s258] sm:$0xff] %vm454, %v2422
      %2518 = vst.msk [vmem:[%s258 + $0x8] sm:$0xff] %vm454, %v2425
      %2519 = vst.msk [vmem:[%s258 + $0x10] sm:$0xff] %vm454, %v2428
      %2520 = vst.msk [vmem:[%s258 + $0x18] sm:$0xff] %vm454, %v2431
      %2521 = vst.msk [vmem:[%s258 + $0x20] sm:$0xff] %vm454, %v2434
      %2522 = vst.msk [vmem:[%s258 + $0x28] sm:$0xff] %vm454, %v2437
      %2523 = vst.msk [vmem:[%s258 + $0x30] sm:$0xff] %vm454, %v2440
      %2524 = vst.msk [vmem:[%s258 + $0x38] sm:$0xff] %vm454, %v2443
      %2525 = vst.msk [vmem:[%s258 + $0x40] sm:$0xff] %vm454, %v2446
      %2526 = vst.msk [vmem:[%s258 + $0x48] sm:$0xff] %vm454, %v2449
      %2527 = vst.msk [vmem:[%s258 + $0x50] sm:$0xff] %vm454, %v2452
      %2528 = vst.msk [vmem:[%s258 + $0x58] sm:$0xff] %vm454, %v2455
      %2529 = vst.msk [vmem:[%s258 + $0x60] sm:$0xff] %vm454, %v2458
      %2530 = vst.msk [vmem:[%s258 + $0x68] sm:$0xff] %vm454, %v2461
      %2531 = vst.msk [vmem:[%s258 + $0x70] sm:$0xff] %vm454, %v2464
      %2532 = vst.msk [vmem:[%s258 + $0x78] sm:$0xff] %vm454, %v2467
      %2533 = vst.msk [vmem:[%s258 + $0x80] sm:$0xff] %vm454, %v2470
      %2534 = vst.msk [vmem:[%s258 + $0x88] sm:$0xff] %vm454, %v2473
      %2535 = vst.msk [vmem:[%s258 + $0x90] sm:$0xff] %vm454, %v2476
      %2536 = vst.msk [vmem:[%s258 + $0x98] sm:$0xff] %vm454, %v2479
      %2537 = vst.msk [vmem:[%s258 + $0xa0] sm:$0xff] %vm454, %v2482
      %2538 = vst.msk [vmem:[%s258 + $0xa8] sm:$0xff] %vm454, %v2485
      %2539 = vst.msk [vmem:[%s258 + $0xb0] sm:$0xff] %vm454, %v2488
      %2540 = vst.msk [vmem:[%s258 + $0xb8] sm:$0xff] %vm454, %v2491
      %2541 = vst.msk [vmem:[%s258 + $0xc0] sm:$0xff] %vm454, %v2494
      %2542 = vst.msk [vmem:[%s258 + $0xc8] sm:$0xff] %vm454, %v2497
      %2543 = vst.msk [vmem:[%s258 + $0xd0] sm:$0xff] %vm454, %v2500
      %2544 = vst.msk [vmem:[%s258 + $0xd8] sm:$0xff] %vm454, %v2503
      %2545 = vst.msk [vmem:[%s258 + $0xe0] sm:$0xff] %vm454, %v2506
      %2546 = vst.msk [vmem:[%s258 + $0xe8] sm:$0xff] %vm454, %v2509
      %2547 = vst.msk [vmem:[%s258 + $0xf0] sm:$0xff] %vm454, %v2512
      %2548 = vst.msk [vmem:[%s258 + $0xf8] sm:$0xff] %vm454, %v2515
      %v2549 = vadd.f32 %v2422, %v2425
      %v2550 = vadd.f32 %v2549, %v2428
      %v2551 = vadd.f32 %v2550, %v2431
      %v2552 = vadd.f32 %v2551, %v2434
      %v2553 = vadd.f32 %v2552, %v2437
      %v2554 = vadd.f32 %v2553, %v2440
      %v2555 = vadd.f32 %v2554, %v2443
      %v2556 = vadd.f32 %v2555, %v2446
      %v2557 = vadd.f32 %v2556, %v2449
      %v2558 = vadd.f32 %v2557, %v2452
      %v2559 = vadd.f32 %v2558, %v2455
      %v2560 = vadd.f32 %v2559, %v2458
      %v2561 = vadd.f32 %v2560, %v2461
      %v2562 = vadd.f32 %v2561, %v2464
      %v2563 = vadd.f32 %v2562, %v2467
      %v2564 = vadd.f32 %v2563, %v2470
      %v2565 = vadd.f32 %v2564, %v2473
      %v2566 = vadd.f32 %v2565, %v2476
      %v2567 = vadd.f32 %v2566, %v2479
      %v2568 = vadd.f32 %v2567, %v2482
      %v2569 = vadd.f32 %v2568, %v2485
      %v2570 = vadd.f32 %v2569, %v2488
      %v2571 = vadd.f32 %v2570, %v2491
      %v2572 = vadd.f32 %v2571, %v2494
      %v2573 = vadd.f32 %v2572, %v2497
      %v2574 = vadd.f32 %v2573, %v2500
      %v2575 = vadd.f32 %v2574, %v2503
      %v2576 = vadd.f32 %v2575, %v2506
      %v2577 = vadd.f32 %v2576, %v2509
      %v2578 = vadd.f32 %v2577, %v2512
      %v2579 = vadd.f32 %v2578, %v2515
      %v2580 = vrot.slane %v2579, 4
      %v2581 = vadd.f32 %v2579, %v2580
      %v2582 = vrot.slane %v2581, 2
      %v2583 = vadd.f32 %v2581, %v2582
      %v2584 = vrot.slane %v2583, 1
      %v2585 = vadd.f32 %v2583, %v2584
      %v2586 = vmul.f32 %v2422, %v2422
      %v2587 = vmul.f32 %v2425, %v2425
      %v2588 = vmul.f32 %v2428, %v2428
      %v2589 = vmul.f32 %v2431, %v2431
      %v2590 = vmul.f32 %v2434, %v2434
      %v2591 = vmul.f32 %v2437, %v2437
      %v2592 = vmul.f32 %v2440, %v2440
      %v2593 = vmul.f32 %v2443, %v2443
      %v2594 = vmul.f32 %v2446, %v2446
      %v2595 = vmul.f32 %v2449, %v2449
      %v2596 = vmul.f32 %v2452, %v2452
      %v2597 = vmul.f32 %v2455, %v2455
      %v2598 = vmul.f32 %v2458, %v2458
      %v2599 = vmul.f32 %v2461, %v2461
      %v2600 = vmul.f32 %v2464, %v2464
      %v2601 = vmul.f32 %v2467, %v2467
      %v2602 = vmul.f32 %v2470, %v2470
      %v2603 = vmul.f32 %v2473, %v2473
      %v2604 = vmul.f32 %v2476, %v2476
      %v2605 = vmul.f32 %v2479, %v2479
      %v2606 = vmul.f32 %v2482, %v2482
      %v2607 = vmul.f32 %v2485, %v2485
      %v2608 = vmul.f32 %v2488, %v2488
      %v2609 = vmul.f32 %v2491, %v2491
      %v2610 = vmul.f32 %v2494, %v2494
      %v2611 = vmul.f32 %v2497, %v2497
      %v2612 = vmul.f32 %v2500, %v2500
      %v2613 = vmul.f32 %v2503, %v2503
      %v2614 = vmul.f32 %v2506, %v2506
      %v2615 = vmul.f32 %v2509, %v2509
      %v2616 = vmul.f32 %v2512, %v2512
      %v2617 = vmul.f32 %v2515, %v2515
      %v2618 = vadd.f32 %v2586, %v2587
      %v2619 = vadd.f32 %v2618, %v2588
      %v2620 = vadd.f32 %v2619, %v2589
      %v2621 = vadd.f32 %v2620, %v2590
      %v2622 = vadd.f32 %v2621, %v2591
      %v2623 = vadd.f32 %v2622, %v2592
      %v2624 = vadd.f32 %v2623, %v2593
      %v2625 = vadd.f32 %v2624, %v2594
      %v2626 = vadd.f32 %v2625, %v2595
      %v2627 = vadd.f32 %v2626, %v2596
      %v2628 = vadd.f32 %v2627, %v2597
      %v2629 = vadd.f32 %v2628, %v2598
      %v2630 = vadd.f32 %v2629, %v2599
      %v2631 = vadd.f32 %v2630, %v2600
      %v2632 = vadd.f32 %v2631, %v2601
      %v2633 = vadd.f32 %v2632, %v2602
      %v2634 = vadd.f32 %v2633, %v2603
      %v2635 = vadd.f32 %v2634, %v2604
      %v2636 = vadd.f32 %v2635, %v2605
      %v2637 = vadd.f32 %v2636, %v2606
      %v2638 = vadd.f32 %v2637, %v2607
      %v2639 = vadd.f32 %v2638, %v2608
      %v2640 = vadd.f32 %v2639, %v2609
      %v2641 = vadd.f32 %v2640, %v2610
      %v2642 = vadd.f32 %v2641, %v2611
      %v2643 = vadd.f32 %v2642, %v2612
      %v2644 = vadd.f32 %v2643, %v2613
      %v2645 = vadd.f32 %v2644, %v2614
      %v2646 = vadd.f32 %v2645, %v2615
      %v2647 = vadd.f32 %v2646, %v2616
      %v2648 = vadd.f32 %v2647, %v2617
      %v2649 = vrot.slane %v2648, 4
      %v2650 = vadd.f32 %v2648, %v2649
      %v2651 = vrot.slane %v2650, 2
      %v2652 = vadd.f32 %v2650, %v2651
      %v2653 = vrot.slane %v2652, 1
      %v2654 = vadd.f32 %v2652, %v2653
      %vm2655 = vcmask 1040384
      %v2656 = vsel %vm2655, %v2585, %v2654
      %2657 = vst [vmem:[%s262] sm:$0x3] %v2656
      %p2658 = scmp.lt.s32.totalorder %s18, 1
      %s2659 = scalar_select %p2658, %s18, 1
      %s2660 = smul.addr %s2659, 32
      %s2661 = smul.addr %s2660, 8
      %s2662 = scalar_lea.vmem %s5, %s2661
      %p2663 = scmp.lt.s32.totalorder %s18, 1
      %s2664 = scalar_select %p2663, %s18, 1
      %s2665 = smul.addr %s2664, 2
      %s2666 = scalar_lea.vmem %s6, %s2665
      // Predicated region
      $region41: #{residual_block.4} parent=39 // pred_check
        %p2667 = pneg %p146
      $region42: #{residual_block.4} parent=39 // pred_check_branch
        %2669 = sbr.rel (%p2667) target = $region44
      $region43: #{residual_block.4} parent=39 // pred_region
        _
      $region44: #{residual_block.4} parent=39 // pred_fallthru
        _
      // Predicated region
      $region45: #{residual_block.4} parent=39 // pred_check
        %p2670 = pneg %p172
      $region46: #{residual_block.4} parent=39 // pred_check_branch
        %2672 = sbr.rel (%p2670) target = $region48
      $region47: #{residual_block.4} parent=39 // pred_region
        _
      $region48: #{residual_block.4} parent=39 // pred_fallthru
        _
    $region40: #{residual_block.4} parent=5 // pred_fallthru
      _
    %p2673 = scmp.le.s32.totalorder 2, %s13
    // Predicated region
    $region49: #{residual_block.4} parent=5 // pred_check
      %p2674 = pneg %p2673
    $region50: #{residual_block.4} parent=5 // pred_check_branch
      %2676 = sbr.rel (%p2674) target = $region52
    $region51: #{residual_block.4} parent=5 // pred_region
      %s2677 = ssub.s32 %s13, 2
      // Predicated region
      $region53: #{residual_block.4} parent=51 // pred_check
        %p2678 = pneg %p152
      $region54: #{residual_block.4} parent=51 // pred_check_branch
        %2680 = sbr.rel (%p2678) target = $region56
      $region55: #{residual_block.4} parent=51 // pred_region
        %p2681 = scmp.lt.s32.totalorder %s19, 1
        %s2682 = scalar_select %p2681, %s19, 1
        %s2683 = smul.addr %s2682, 32
        %s2684 = smul.addr %s2683, 8
        %s2685 = scalar_lea.vmem %s5, %s2684
      $region56: #{residual_block.4} parent=51 // pred_fallthru
        _
      // Predicated region
      $region57: #{residual_block.4} parent=51 // pred_check
        %p2686 = pneg %p178
      $region58: #{residual_block.4} parent=51 // pred_check_branch
        %2688 = sbr.rel (%p2686) target = $region60
      $region59: #{residual_block.4} parent=51 // pred_region
        %p2689 = scmp.lt.s32.totalorder %s19, 1
        %s2690 = scalar_select %p2689, %s19, 1
        %s2691 = smul.addr %s2690, 2
        %s2692 = scalar_lea.vmem %s6, %s2691
      $region60: #{residual_block.4} parent=51 // pred_fallthru
        _
    $region52: #{residual_block.4} parent=5 // pred_fallthru
      _
  $region6: #{residual_block.4} parent=0 // loop_footer
    %s17 = sadd.s32 1, %s13
  $region7: #{residual_block.4} parent=0 // loop_footer_branch
    %12 = sbr.rel target = $region3
  $region8: #{residual_block.4} parent=0 // loop_exit
    _

// kernel: residual_block.3
$region0: #{residual_block.3}
  #allocation0 [shape = 'u32[]', space=smem, size = 0x4, offset = 0x4, fixed_abs, tag = 'smem constant byte address 0x4 - core index']
  #allocation1 [shape = 'u32[72,128]{1,0:T(1,128)}', space=vmem, size = 0x9000, scoped, tag = 'internal scratch']
  #allocation2 [shape = 'f32[1,18,18,128]{3,2,1,0:T(8,128)}', space=vmem, size = 0x36000, scoped, tag = 'scratch operand']
  #allocation3 [shape = 'f32[256,1152]{1,0:T(8,128)}', space=vmem, size = 0x120000, scoped, tag = 'scratch operand']
  %s0 = inlined_call_operand.vmem [shape: f32[2,16,16,4], index: 0, kind: input, shape index: {}]
  %s1 = inlined_call_operand.vmem [shape: f32[1152,128], index: 1, kind: input, shape index: {}]
  %s2 = inlined_call_operand.vmem [shape: f32[1,128], index: 2, kind: input, shape index: {}]
  %s3 = inlined_call_operand.vmem [shape: f32[2,16,16,4], index: 3, kind: output, shape index: {0}]
  %s4 = inlined_call_operand.vmem [shape: f32[2,2,128], index: 4, kind: output, shape index: {1}]
  %5 = xla_tuple %s3, %s4
  %s6 = sld [smem:[#allocation0]]
  $region53: #{residual_block.3} parent=0
    _
  %s8 = ssub.s32 1, %s6
  %s9 = scalar_select 0, %s8, %s6
  loop: start=0, step=1, limit=4
  $region2: #{residual_block.3} parent=0 // loop_pre_header
    _
  $region3: #{residual_block.3} parent=0 // loop_header
    %s11 = sphi 0, %s15
    %p12 = scmp.ge.s32.totalorder %s11, 4
    %s21 = sphi 0, %s23
    %s24 = sphi 0, %s21
    %s25 = sphi 0, %s24
    %s41 = sphi 0, %s25
    %s45 = sphi 0, %s45
    %s47 = sphi 0, %s45
    %s48 = sphi 0, %s47
    %s62 = sphi 0, %s48
    %s66 = sphi 0, %s66
    %s68 = sphi 0, %s66
    %s69 = sphi 0, %s68
    %s83 = sphi 0, %s69
    %s89 = sphi 0, %s91
    %s92 = sphi 0, %s89
    %s93 = sphi 0, %s92
    %s109 = sphi 0, %s93
    %s115 = sphi 0, %s117
    %s118 = sphi 0, %s115
    %s119 = sphi 0, %s118
    %s135 = sphi 0, %s119
  $region4: #{residual_block.3} parent=0 // loop_header_branch
    %14 = sbr.rel (%p12) target = $region8
  $region5: #{residual_block.3} parent=0 // loop_body
    %s16 = ssub.s32 %s11, 1
    %s17 = ssub.s32 %s11, 2
    %s18 = sadd.s32 %s11, 1
    %s19 = ssub.s32 %s11, %s18
    %p20 = scmp.eq.s32.totalorder %s19, 0
    %s22 = sadd.s32 %s21, 1
    %s23 = scalar_select %p20, %s21, %s22
    %p26 = pneg %p20
    %p27 = scmp.eq.s32.totalorder %s11, 1
    %p28 = por %p26, %p27
    %p29 = scmp.ne.s32.totalorder %s21, %s24
    %p30 = scmp.eq.s32.totalorder %s11, 0
    %p31 = por %p29, %p30
    %p32 = scmp.ne.s32.totalorder %s21, %s24
    %p33 = scmp.eq.s32.totalorder %s16, 1
    %p34 = por %p32, %p33
    %p35 = scmp.ne.s32.totalorder %s24, %s25
    %p36 = scmp.eq.s32.totalorder %s16, 0
    %p37 = por %p35, %p36
    %p38 = scmp.ne.s32.totalorder %s24, %s25
    %p39 = scmp.eq.s32.totalorder %s17, 1
    %p40 = por %p38, %p39
    %p42 = scmp.ne.s32.totalorder %s25, %s41
    %p43 = scmp.eq.s32.totalorder %s17, 0
    %p44 = por %p42, %p43
    %s46 = sadd.s32 %s45, 1
    %p49 = scmp.eq.s32.totalorder %s11, 1
    %p50 = scmp.ne.s32.totalorder %s45, %s47
    %p51 = scmp.eq.s32.totalorder %s11, 0
    %p52 = por %p50, %p51
    %p53 = scmp.ne.s32.totalorder %s45, %s47
    %p54 = scmp.eq.s32.totalorder %s16, 1
    %p55 = por %p53, %p54
    %p56 = scmp.ne.s32.totalorder %s47, %s48
    %p57 = scmp.eq.s32.totalorder %s16, 0
    %p58 = por %p56, %p57
    %p59 = scmp.ne.s32.totalorder %s47, %s48
    %p60 = scmp.eq.s32.totalorder %s17, 1
    %p61 = por %p59, %p60
    %p63 = scmp.ne.s32.totalorder %s48, %s62
    %p64 = scmp.eq.s32.totalorder %s17, 0
    %p65 = por %p63, %p64
    %s67 = sadd.s32 %s66, 1
    %p70 = scmp.eq.s32.totalorder %s11, 1
    %p71 = scmp.ne.s32.totalorder %s66, %s68
    %p72 = scmp.eq.s32.totalorder %s11, 0
    %p73 = por %p71, %p72
    %p74 = scmp.ne.s32.totalorder %s66, %s68
    %p75 = scmp.eq.s32.totalorder %s16, 1
    %p76 = por %p74, %p75
    %p77 = scmp.ne.s32.totalorder %s68, %s69
    %p78 = scmp.eq.s32.totalorder %s16, 0
    %p79 = por %p77, %p78
    %p80 = scmp.ne.s32.totalorder %s68, %s69
    %p81 = scmp.eq.s32.totalorder %s17, 1
    %p82 = por %p80, %p81
    %p84 = scmp.ne.s32.totalorder %s69, %s83
    %p85 = scmp.eq.s32.totalorder %s17, 0
    %p86 = por %p84, %p85
    %s87 = ssub.s32 %s11, %s18
    %p88 = scmp.eq.s32.totalorder %s87, 0
    %s90 = sadd.s32 %s89, 1
    %s91 = scalar_select %p88, %s89, %s90
    %p94 = pneg %p88
    %p95 = scmp.eq.s32.totalorder %s11, 1
    %p96 = por %p94, %p95
    %p97 = scmp.ne.s32.totalorder %s89, %s92
    %p98 = scmp.eq.s32.totalorder %s11, 0
    %p99 = por %p97, %p98
    %p100 = scmp.ne.s32.totalorder %s89, %s92
    %p101 = scmp.eq.s32.totalorder %s16, 1
    %p102 = por %p100, %p101
    %p103 = scmp.ne.s32.totalorder %s92, %s93
    %p104 = scmp.eq.s32.totalorder %s16, 0
    %p105 = por %p103, %p104
    %p106 = scmp.ne.s32.totalorder %s92, %s93
    %p107 = scmp.eq.s32.totalorder %s17, 1
    %p108 = por %p106, %p107
    %p110 = scmp.ne.s32.totalorder %s93, %s109
    %p111 = scmp.eq.s32.totalorder %s17, 0
    %p112 = por %p110, %p111
    %s113 = ssub.s32 %s11, %s18
    %p114 = scmp.eq.s32.totalorder %s113, 0
    %s116 = sadd.s32 %s115, 1
    %s117 = scalar_select %p114, %s115, %s116
    %p120 = pneg %p114
    %p121 = scmp.eq.s32.totalorder %s11, 1
    %p122 = por %p120, %p121
    %p123 = scmp.ne.s32.totalorder %s115, %s118
    %p124 = scmp.eq.s32.totalorder %s11, 0
    %p125 = por %p123, %p124
    %p126 = scmp.ne.s32.totalorder %s115, %s118
    %p127 = scmp.eq.s32.totalorder %s16, 1
    %p128 = por %p126, %p127
    %p129 = scmp.ne.s32.totalorder %s118, %s119
    %p130 = scmp.eq.s32.totalorder %s16, 0
    %p131 = por %p129, %p130
    %p132 = scmp.ne.s32.totalorder %s118, %s119
    %p133 = scmp.eq.s32.totalorder %s17, 1
    %p134 = por %p132, %p133
    %p136 = scmp.ne.s32.totalorder %s119, %s135
    %p137 = scmp.eq.s32.totalorder %s17, 0
    %p138 = por %p136, %p137
    %p139 = scmp.le.s32.totalorder 1, %s11
    %p140 = scmp.lt.s32.totalorder %s11, 3
    %p141 = pnand %p139, %p140
    %p142 = pneg %p141
    // Predicated region
    $region9: #{residual_block.3} parent=5 // pred_check
      _
    $region10: #{residual_block.3} parent=5 // pred_check_branch
      %144 = sbr.rel (%p141) target = $region12
    $region11: #{residual_block.3} parent=5 // pred_region
      %s145 = ssub.s32 %s11, 1
      // Predicated region
      $region13: #{residual_block.3} parent=11 // pred_check
        %p146 = pneg %p58
      $region14: #{residual_block.3} parent=11 // pred_check_branch
        %148 = sbr.rel (%p146) target = $region16
      $region15: #{residual_block.3} parent=11 // pred_region
        _
      $region16: #{residual_block.3} parent=11 // pred_fallthru
        _
      // Predicated region
      $region17: #{residual_block.3} parent=11 // pred_check
        %p149 = pneg %p79
      $region18: #{residual_block.3} parent=11 // pred_check_branch
        %151 = sbr.rel (%p149) target = $region20
      $region19: #{residual_block.3} parent=11 // pred_region
        _
      $region20: #{residual_block.3} parent=11 // pred_fallthru
        _
    $region12: #{residual_block.3} parent=5 // pred_fallthru
      _
    %p152 = scmp.lt.s32.totalorder %s11, 2
    // Predicated region
    $region21: #{residual_block.3} parent=5 // pred_check
      %p153 = pneg %p152
    $region22: #{residual_block.3} parent=5 // pred_check_branch
      %155 = sbr.rel (%p153) target = $region24
    $region23: #{residual_block.3} parent=5 // pred_region
      // Predicated region
      $region25: #{residual_block.3} parent=23 // pred_check
        %p156 = pneg %p31
      $region26: #{residual_block.3} parent=23 // pred_check_branch
        %158 = sbr.rel (%p156) target = $region28
      $region27: #{residual_block.3} parent=23 // pred_region
        %p159 = scmp.lt.s32.totalorder %s11, 1
        %s160 = scalar_select %p159, %s11, 1
        %s161 = smul.addr %s160, 32
        %s162 = smul.addr %s161, 8
        %s163 = scalar_lea.vmem %s0, %s162
      $region28: #{residual_block.3} parent=23 // pred_fallthru
        _
    $region24: #{residual_block.3} parent=5 // pred_fallthru
      _
    %p164 = scmp.le.s32.totalorder 1, %s11
    %p165 = scmp.lt.s32.totalorder %s11, 3
    %p166 = pnand %p164, %p165
    %p167 = pneg %p166
    // Predicated region
    $region29: #{residual_block.3} parent=5 // pred_check
      _
    $region30: #{residual_block.3} parent=5 // pred_check_branch
      %169 = sbr.rel (%p166) target = $region32
    $region31: #{residual_block.3} parent=5 // pred_region
      %s170 = ssub.s32 %s11, 1
      %p171 = scmp.lt.s32.totalorder %s16, 1
      %s172 = scalar_select %p171, %s16, 1
      %s173 = smul.addr %s172, 32
      %s174 = smul.addr %s173, 8
      %s175 = scalar_lea.vmem %s0, %s174
      %p176 = pneg %p37
      %p177 = pneg %p34
      %p178 = pneg %p58
      %p179 = pneg %p55
      %p180 = pneg %p79
      %p181 = pneg %p76
      %p182 = pneg %p105
      %p183 = pneg %p102
      %p184 = scmp.lt.s32.totalorder %s16, 1
      %s185 = scalar_select %p184, %s16, 1
      %s186 = smul.addr %s185, 32
      %s187 = smul.addr %s186, 8
      %s188 = scalar_lea.vmem %s3, %s187
      %p189 = pneg %p131
      %p190 = pneg %p128
      %p191 = scmp.lt.s32.totalorder %s16, 1
      %s192 = scalar_select %p191, %s16, 1
      %s193 = smul.addr %s192, 2
      %s194 = scalar_lea.vmem %s4, %s193
      %p195 = scmp.lt.s32.totalorder %s16, 1
      %s196 = scalar_select %p195, %s16, 1
      %s197 = smul.addr %s196, 32
      %s198 = smul.addr %s197, 8
      %s199 = scalar_lea.vmem %s0, %s198
      %p200 = scmp.lt.s32.totalorder %s16, 1
      %s201 = scalar_select %p200, %s16, 1
      %s202 = smul.addr %s201, 32
      %s203 = smul.addr %s202, 8
      %s204 = scalar_lea.vmem %s3, %s203
      %p205 = scmp.lt.s32.totalorder %s16, 1
      %s206 = scalar_select %p205, %s16, 1
      %s207 = smul.addr %s206, 2
      %s208 = scalar_lea.vmem %s4, %s207
      %v209 = vld [vmem:[%s199] sm:$0xff]
      %v210 = vld [vmem:[%s199 + $0x8] sm:$0xff]
      %v211 = vld [vmem:[%s199 + $0x10] sm:$0xff]
      %v212 = vld [vmem:[%s199 + $0x18] sm:$0xff]
      %v213 = vld [vmem:[%s199 + $0x20] sm:$0xff]
      %v214 = vld [vmem:[%s199 + $0x28] sm:$0xff]
      %v215 = vld [vmem:[%s199 + $0x30] sm:$0xff]
      %v216 = vld [vmem:[%s199 + $0x38] sm:$0xff]
      %v217 = vld [vmem:[%s199 + $0x40] sm:$0xff]
      %v218 = vld [vmem:[%s199 + $0x48] sm:$0xff]
      %v219 = vld [vmem:[%s199 + $0x50] sm:$0xff]
      %v220 = vld [vmem:[%s199 + $0x58] sm:$0xff]
      %v221 = vld [vmem:[%s199 + $0x60] sm:$0xff]
      %v222 = vld [vmem:[%s199 + $0x68] sm:$0xff]
      %v223 = vld [vmem:[%s199 + $0x70] sm:$0xff]
      %v224 = vld [vmem:[%s199 + $0x78] sm:$0xff]
      %v225 = vld [vmem:[%s199 + $0x80] sm:$0xff]
      %v226 = vld [vmem:[%s199 + $0x88] sm:$0xff]
      %v227 = vld [vmem:[%s199 + $0x90] sm:$0xff]
      %v228 = vld [vmem:[%s199 + $0x98] sm:$0xff]
      %v229 = vld [vmem:[%s199 + $0xa0] sm:$0xff]
      %v230 = vld [vmem:[%s199 + $0xa8] sm:$0xff]
      %v231 = vld [vmem:[%s199 + $0xb0] sm:$0xff]
      %v232 = vld [vmem:[%s199 + $0xb8] sm:$0xff]
      %v233 = vld [vmem:[%s199 + $0xc0] sm:$0xff]
      %v234 = vld [vmem:[%s199 + $0xc8] sm:$0xff]
      %v235 = vld [vmem:[%s199 + $0xd0] sm:$0xff]
      %v236 = vld [vmem:[%s199 + $0xd8] sm:$0xff]
      %v237 = vld [vmem:[%s199 + $0xe0] sm:$0xff]
      %v238 = vld [vmem:[%s199 + $0xe8] sm:$0xff]
      %v239 = vld [vmem:[%s199 + $0xf0] sm:$0xff]
      %v240 = vld [vmem:[%s199 + $0xf8] sm:$0xff]
      %241 = vst [vmem:[#allocation2] sm:$0xff] 0.0
      %242 = vst [vmem:[#allocation2 + $0x8] sm:$0xff] 0.0
      %243 = vst [vmem:[#allocation2 + $0x10] sm:$0x3] 0.0
      %244 = vst [vmem:[#allocation2 + $0x18] sm:$0xff] 0.0
      %245 = vst [vmem:[#allocation2 + $0x20] sm:$0xff] 0.0
      %246 = vst [vmem:[#allocation2 + $0x28] sm:$0x3] 0.0
      %247 = vst [vmem:[#allocation2 + $0x30] sm:$0xff] 0.0
      %248 = vst [vmem:[#allocation2 + $0x38] sm:$0xff] 0.0
      %249 = vst [vmem:[#allocation2 + $0x40] sm:$0x3] 0.0
      %250 = vst [vmem:[#allocation2 + $0x48] sm:$0xff] 0.0
      %251 = vst [vmem:[#allocation2 + $0x50] sm:$0xff] 0.0
      %252 = vst [vmem:[#allocation2 + $0x58] sm:$0x3] 0.0
      %253 = vst [vmem:[#allocation2 + $0x60] sm:$0xff] 0.0
      %254 = vst [vmem:[#allocation2 + $0x68] sm:$0xff] 0.0
      %255 = vst [vmem:[#allocation2 + $0x70] sm:$0x3] 0.0
      %256 = vst [vmem:[#allocation2 + $0x78] sm:$0xff] 0.0
      %257 = vst [vmem:[#allocation2 + $0x80] sm:$0xff] 0.0
      %258 = vst [vmem:[#allocation2 + $0x88] sm:$0x3] 0.0
      %259 = vst [vmem:[#allocation2 + $0x90] sm:$0xff] 0.0
      %260 = vst [vmem:[#allocation2 + $0x98] sm:$0xff] 0.0
      %261 = vst [vmem:[#allocation2 + $0xa0] sm:$0x3] 0.0
      %262 = vst [vmem:[#allocation2 + $0xa8] sm:$0xff] 0.0
      %263 = vst [vmem:[#allocation2 + $0xb0] sm:$0xff] 0.0
      %264 = vst [vmem:[#allocation2 + $0xb8] sm:$0x3] 0.0
      %265 = vst [vmem:[#allocation2 + $0xc0] sm:$0xff] 0.0
      %266 = vst [vmem:[#allocation2 + $0xc8] sm:$0xff] 0.0
      %267 = vst [vmem:[#allocation2 + $0xd0] sm:$0x3] 0.0
      %268 = vst [vmem:[#allocation2 + $0xd8] sm:$0xff] 0.0
      %269 = vst [vmem:[#allocation2 + $0xe0] sm:$0xff] 0.0
      %270 = vst [vmem:[#allocation2 + $0xe8] sm:$0x3] 0.0
      %271 = vst [vmem:[#allocation2 + $0xf0] sm:$0xff] 0.0
      %272 = vst [vmem:[#allocation2 + $0xf8] sm:$0xff] 0.0
      %273 = vst [vmem:[#allocation2 + $0x100] sm:$0x3] 0.0
      %274 = vst [vmem:[#allocation2 + $0x108] sm:$0xff] 0.0
      %275 = vst [vmem:[#allocation2 + $0x110] sm:$0xff] 0.0
      %276 = vst [vmem:[#allocation2 + $0x118] sm:$0x3] 0.0
      %277 = vst [vmem:[#allocation2 + $0x120] sm:$0xff] 0.0
      %278 = vst [vmem:[#allocation2 + $0x128] sm:$0xff] 0.0
      %279 = vst [vmem:[#allocation2 + $0x130] sm:$0x3] 0.0
      %280 = vst [vmem:[#allocation2 + $0x138] sm:$0xff] 0.0
      %281 = vst [vmem:[#allocation2 + $0x140] sm:$0xff] 0.0
      %282 = vst [vmem:[#allocation2 + $0x148] sm:$0x3] 0.0
      %283 = vst [vmem:[#allocation2 + $0x150] sm:$0xff] 0.0
      %284 = vst [vmem:[#allocation2 + $0x158] sm:$0xff] 0.0
      %285 = vst [vmem:[#allocation2 + $0x160] sm:$0x3] 0.0
      %286 = vst [vmem:[#allocation2 + $0x168] sm:$0xff] 0.0
      %287 = vst [vmem:[#allocation2 + $0x170] sm:$0xff] 0.0
      %288 = vst [vmem:[#allocation2 + $0x178] sm:$0x3] 0.0
      %289 = vst [vmem:[#allocation2 + $0x180] sm:$0xff] 0.0
      %290 = vst [vmem:[#allocation2 + $0x188] sm:$0xff] 0.0
      %291 = vst [vmem:[#allocation2 + $0x190] sm:$0x3] 0.0
      %292 = vst [vmem:[#allocation2 + $0x198] sm:$0xff] 0.0
      %293 = vst [vmem:[#allocation2 + $0x1a0] sm:$0xff] 0.0
      %294 = vst [vmem:[#allocation2 + $0x1a8] sm:$0x3] 0.0
      %s295 = scalar_lea.vmem [#allocation2], 24
      %vm296 = vcmask 31744
      %297 = vst.msk [vmem:[%s295 + $0x1] sm:$0xff] %vm296, %v209
      %298 = vst.msk [vmem:[%s295 + $0x9] sm:$0xff] %vm296, %v210
      %299 = vst.msk [vmem:[%s295 + $0x19] sm:$0xff] %vm296, %v211
      %300 = vst.msk [vmem:[%s295 + $0x21] sm:$0xff] %vm296, %v212
      %301 = vst.msk [vmem:[%s295 + $0x31] sm:$0xff] %vm296, %v213
      %302 = vst.msk [vmem:[%s295 + $0x39] sm:$0xff] %vm296, %v214
      %303 = vst.msk [vmem:[%s295 + $0x49] sm:$0xff] %vm296, %v215
      %304 = vst.msk [vmem:[%s295 + $0x51] sm:$0xff] %vm296, %v216
      %305 = vst.msk [vmem:[%s295 + $0x61] sm:$0xff] %vm296, %v217
      %306 = vst.msk [vmem:[%s295 + $0x69] sm:$0xff] %vm296, %v218
      %307 = vst.msk [vmem:[%s295 + $0x79] sm:$0xff] %vm296, %v219
      %308 = vst.msk [vmem:[%s295 + $0x81] sm:$0xff] %vm296, %v220
      %309 = vst.msk [vmem:[%s295 + $0x91] sm:$0xff] %vm296, %v221
      %310 = vst.msk [vmem:[%s295 + $0x99] sm:$0xff] %vm296, %v222
      %311 = vst.msk [vmem:[%s295 + $0xa9] sm:$0xff] %vm296, %v223
      %312 = vst.msk [vmem:[%s295 + $0xb1] sm:$0xff] %vm296, %v224
      %313 = vst.msk [vmem:[%s295 + $0xc1] sm:$0xff] %vm296, %v225
      %314 = vst.msk [vmem:[%s295 + $0xc9] sm:$0xff] %vm296, %v226
      %315 = vst.msk [vmem:[%s295 + $0xd9] sm:$0xff] %vm296, %v227
      %316 = vst.msk [vmem:[%s295 + $0xe1] sm:$0xff] %vm296, %v228
      %317 = vst.msk [vmem:[%s295 + $0xf1] sm:$0xff] %vm296, %v229
      %318 = vst.msk [vmem:[%s295 + $0xf9] sm:$0xff] %vm296, %v230
      %319 = vst.msk [vmem:[%s295 + $0x109] sm:$0xff] %vm296, %v231
      %320 = vst.msk [vmem:[%s295 + $0x111] sm:$0xff] %vm296, %v232
      %321 = vst.msk [vmem:[%s295 + $0x121] sm:$0xff] %vm296, %v233
      %322 = vst.msk [vmem:[%s295 + $0x129] sm:$0xff] %vm296, %v234
      %323 = vst.msk [vmem:[%s295 + $0x139] sm:$0xff] %vm296, %v235
      %324 = vst.msk [vmem:[%s295 + $0x141] sm:$0xff] %vm296, %v236
      %325 = vst.msk [vmem:[%s295 + $0x151] sm:$0xff] %vm296, %v237
      %326 = vst.msk [vmem:[%s295 + $0x159] sm:$0xff] %vm296, %v238
      %327 = vst.msk [vmem:[%s295 + $0x169] sm:$0xff] %vm296, %v239
      %328 = vst.msk [vmem:[%s295 + $0x171] sm:$0xff] %vm296, %v240
      %v329 = vld [vmem:[#allocation2] sm:$0xff]
      %v330 = vld [vmem:[#allocation2 + $0x8] sm:$0xff]
      %v331 = vld [vmem:[#allocation2 + $0x18] sm:$0xff]
      %v332 = vld [vmem:[#allocation2 + $0x20] sm:$0xff]
      %v333 = vld [vmem:[#allocation2 + $0x30] sm:$0xff]
      %v334 = vld [vmem:[#allocation2 + $0x38] sm:$0xff]
      %v335 = vld [vmem:[#allocation2 + $0x48] sm:$0xff]
      %v336 = vld [vmem:[#allocation2 + $0x50] sm:$0xff]
      %v337 = vld [vmem:[#allocation2 + $0x60] sm:$0xff]
      %v338 = vld [vmem:[#allocation2 + $0x68] sm:$0xff]
      %v339 = vld [vmem:[#allocation2 + $0x78] sm:$0xff]
      %v340 = vld [vmem:[#allocation2 + $0x80] sm:$0xff]
      %v341 = vld [vmem:[#allocation2 + $0x90] sm:$0xff]
      %v342 = vld [vmem:[#allocation2 + $0x98] sm:$0xff]
      %v343 = vld [vmem:[#allocation2 + $0xa8] sm:$0xff]
      %v344 = vld [vmem:[#allocation2 + $0xb0] sm:$0xff]
      %v345 = vld [vmem:[#allocation2 + $0xc0] sm:$0xff]
      %v346 = vld [vmem:[#allocation2 + $0xc8] sm:$0xff]
      %v347 = vld [vmem:[#allocation2 + $0xd8] sm:$0xff]
      %v348 = vld [vmem:[#allocation2 + $0xe0] sm:$0xff]
      %v349 = vld [vmem:[#allocation2 + $0xf0] sm:$0xff]
      %v350 = vld [vmem:[#allocation2 + $0xf8] sm:$0xff]
      %v351 = vld [vmem:[#allocation2 + $0x108] sm:$0xff]
      %v352 = vld [vmem:[#allocation2 + $0x110] sm:$0xff]
      %v353 = vld [vmem:[#allocation2 + $0x120] sm:$0xff]
      %v354 = vld [vmem:[#allocation2 + $0x128] sm:$0xff]
      %v355 = vld [vmem:[#allocation2 + $0x138] sm:$0xff]
      %v356 = vld [vmem:[#allocation2 + $0x140] sm:$0xff]
      %v357 = vld [vmem:[#allocation2 + $0x150] sm:$0xff]
      %v358 = vld [vmem:[#allocation2 + $0x158] sm:$0xff]
      %v359 = vld [vmem:[#allocation2 + $0x168] sm:$0xff]
      %v360 = vld [vmem:[#allocation2 + $0x170] sm:$0xff]
      %361 = vst [vmem:[#allocation3] sm:$0xff] %v329
      %362 = vst [vmem:[#allocation3 + $0x48] sm:$0xff] %v330
      %363 = vst [vmem:[#allocation3 + $0x90] sm:$0xff] %v331
      %364 = vst [vmem:[#allocation3 + $0xd8] sm:$0xff] %v332
      %365 = vst [vmem:[#allocation3 + $0x120] sm:$0xff] %v333
      %366 = vst [vmem:[#allocation3 + $0x168] sm:$0xff] %v334
      %367 = vst [vmem:[#allocation3 + $0x1b0] sm:$0xff] %v335
      %368 = vst [vmem:[#allocation3 + $0x1f8] sm:$0xff] %v336
      %369 = vst [vmem:[#allocation3 + $0x240] sm:$0xff] %v337
      %370 = vst [vmem:[#allocation3 + $0x288] sm:$0xff] %v338
      %371 = vst [vmem:[#allocation3 + $0x2d0] sm:$0xff] %v339
      %372 = vst [vmem:[#allocation3 + $0x318] sm:$0xff] %v340
      %373 = vst [vmem:[#allocation3 + $0x360] sm:$0xff] %v341
      %374 = vst [vmem:[#allocation3 + $0x3a8] sm:$0xff] %v342
      %375 = vst [vmem:[#allocation3 + $0x3f0] sm:$0xff] %v343
      %376 = vst [vmem:[#allocation3 + $0x438] sm:$0xff] %v344
      %377 = vst [vmem:[#allocation3 + $0x480] sm:$0xff] %v345
      %378 = vst [vmem:[#allocation3 + $0x4c8] sm:$0xff] %v346
      %379 = vst [vmem:[#allocation3 + $0x510] sm:$0xff] %v347
      %380 = vst [vmem:[#allocation3 + $0x558] sm:$0xff] %v348
      %381 = vst [vmem:[#allocation3 + $0x5a0] sm:$0xff] %v349
      %382 = vst [vmem:[#allocation3 + $0x5e8] sm:$0xff] %v350
      %383 = vst [vmem:[#allocation3 + $0x630] sm:$0xff] %v351
      %384 = vst [vmem:[#allocation3 + $0x678] sm:$0xff] %v352
      %385 = vst [vmem:[#allocation3 + $0x6c0] sm:$0xff] %v353
      %386 = vst [vmem:[#allocation3 + $0x708] sm:$0xff] %v354
      %387 = vst [vmem:[#allocation3 + $0x750] sm:$0xff] %v355
      %388 = vst [vmem:[#allocation3 + $0x798] sm:$0xff] %v356
      %389 = vst [vmem:[#allocation3 + $0x7e0] sm:$0xff] %v357
      %390 = vst [vmem:[#allocation3 + $0x828] sm:$0xff] %v358
      %391 = vst [vmem:[#allocation3 + $0x870] sm:$0xff] %v359
      %392 = vst [vmem:[#allocation3 + $0x8b8] sm:$0xff] %v360
      %v393 = vld [vmem:[#allocation2 + $0x1] sm:$0xff]
      %v394 = vld [vmem:[#allocation2 + $0x9] sm:$0xff]
      %v395 = vld [vmem:[#allocation2 + $0x19] sm:$0xff]
      %v396 = vld [vmem:[#allocation2 + $0x21] sm:$0xff]
      %v397 = vld [vmem:[#allocation2 + $0x31] sm:$0xff]
      %v398 = vld [vmem:[#allocation2 + $0x39] sm:$0xff]
      %v399 = vld [vmem:[#allocation2 + $0x49] sm:$0xff]
      %v400 = vld [vmem:[#allocation2 + $0x51] sm:$0xff]
      %v401 = vld [vmem:[#allocation2 + $0x61] sm:$0xff]
      %v402 = vld [vmem:[#allocation2 + $0x69] sm:$0xff]
      %v403 = vld [vmem:[#allocation2 + $0x79] sm:$0xff]
      %v404 = vld [vmem:[#allocation2 + $0x81] sm:$0xff]
      %v405 = vld [vmem:[#allocation2 + $0x91] sm:$0xff]
      %v406 = vld [vmem:[#allocation2 + $0x99] sm:$0xff]
      %v407 = vld [vmem:[#allocation2 + $0xa9] sm:$0xff]
      %v408 = vld [vmem:[#allocation2 + $0xb1] sm:$0xff]
      %v409 = vld [vmem:[#allocation2 + $0xc1] sm:$0xff]
      %v410 = vld [vmem:[#allocation2 + $0xc9] sm:$0xff]
      %v411 = vld [vmem:[#allocation2 + $0xd9] sm:$0xff]
      %v412 = vld [vmem:[#allocation2 + $0xe1] sm:$0xff]
      %v413 = vld [vmem:[#allocation2 + $0xf1] sm:$0xff]
      %v414 = vld [vmem:[#allocation2 + $0xf9] sm:$0xff]
      %v415 = vld [vmem:[#allocation2 + $0x109] sm:$0xff]
      %v416 = vld [vmem:[#allocation2 + $0x111] sm:$0xff]
      %v417 = vld [vmem:[#allocation2 + $0x121] sm:$0xff]
      %v418 = vld [vmem:[#allocation2 + $0x129] sm:$0xff]
      %v419 = vld [vmem:[#allocation2 + $0x139] sm:$0xff]
      %v420 = vld [vmem:[#allocation2 + $0x141] sm:$0xff]
      %v421 = vld [vmem:[#allocation2 + $0x151] sm:$0xff]
      %v422 = vld [vmem:[#allocation2 + $0x159] sm:$0xff]
      %v423 = vld [vmem:[#allocation2 + $0x169] sm:$0xff]
      %v424 = vld [vmem:[#allocation2 + $0x171] sm:$0xff]
      %425 = vst [vmem:[#allocation3 + $0x8] sm:$0xff] %v393
      %426 = vst [vmem:[#allocation3 + $0x50] sm:$0xff] %v394
      %427 = vst [vmem:[#allocation3 + $0x98] sm:$0xff] %v395
      %428 = vst [vmem:[#allocation3 + $0xe0] sm:$0xff] %v396
      %429 = vst [vmem:[#allocation3 + $0x128] sm:$0xff] %v397
      %430 = vst [vmem:[#allocation3 + $0x170] sm:$0xff] %v398
      %431 = vst [vmem:[#allocation3 + $0x1b8] sm:$0xff] %v399
      %432 = vst [vmem:[#allocation3 + $0x200] sm:$0xff] %v400
      %433 = vst [vmem:[#allocation3 + $0x248] sm:$0xff] %v401
      %434 = vst [vmem:[#allocation3 + $0x290] sm:$0xff] %v402
      %435 = vst [vmem:[#allocation3 + $0x2d8] sm:$0xff] %v403
      %436 = vst [vmem:[#allocation3 + $0x320] sm:$0xff] %v404
      %437 = vst [vmem:[#allocation3 + $0x368] sm:$0xff] %v405
      %438 = vst [vmem:[#allocation3 + $0x3b0] sm:$0xff] %v406
      %439 = vst [vmem:[#allocation3 + $0x3f8] sm:$0xff] %v407
      %440 = vst [vmem:[#allocation3 + $0x440] sm:$0xff] %v408
      %441 = vst [vmem:[#allocation3 + $0x488] sm:$0xff] %v409
      %442 = vst [vmem:[#allocation3 + $0x4d0] sm:$0xff] %v410
      %443 = vst [vmem:[#allocation3 + $0x518] sm:$0xff] %v411
      %444 = vst [vmem:[#allocation3 + $0x560] sm:$0xff] %v412
      %445 = vst [vmem:[#allocation3 + $0x5a8] sm:$0xff] %v413
      %446 = vst [vmem:[#allocation3 + $0x5f0] sm:$0xff] %v414
      %447 = vst [vmem:[#allocation3 + $0x638] sm:$0xff] %v415
      %448 = vst [vmem:[#allocation3 + $0x680] sm:$0xff] %v416
      %449 = vst [vmem:[#allocation3 + $0x6c8] sm:$0xff] %v417
      %450 = vst [vmem:[#allocation3 + $0x710] sm:$0xff] %v418
      %451 = vst [vmem:[#allocation3 + $0x758] sm:$0xff] %v419
      %452 = vst [vmem:[#allocation3 + $0x7a0] sm:$0xff] %v420
      %453 = vst [vmem:[#allocation3 + $0x7e8] sm:$0xff] %v421
      %454 = vst [vmem:[#allocation3 + $0x830] sm:$0xff] %v422
      %455 = vst [vmem:[#allocation3 + $0x878] sm:$0xff] %v423
      %456 = vst [vmem:[#allocation3 + $0x8c0] sm:$0xff] %v424
      %v457 = vld [vmem:[#allocation2 + $0x2] sm:$0xff]
      %v458 = vld [vmem:[#allocation2 + $0xa] sm:$0xff]
      %v459 = vld [vmem:[#allocation2 + $0x1a] sm:$0xff]
      %v460 = vld [vmem:[#allocation2 + $0x22] sm:$0xff]
      %v461 = vld [vmem:[#allocation2 + $0x32] sm:$0xff]
      %v462 = vld [vmem:[#allocation2 + $0x3a] sm:$0xff]
      %v463 = vld [vmem:[#allocation2 + $0x4a] sm:$0xff]
      %v464 = vld [vmem:[#allocation2 + $0x52] sm:$0xff]
      %v465 = vld [vmem:[#allocation2 + $0x62] sm:$0xff]
      %v466 = vld [vmem:[#allocation2 + $0x6a] sm:$0xff]
      %v467 = vld [vmem:[#allocation2 + $0x7a] sm:$0xff]
      %v468 = vld [vmem:[#allocation2 + $0x82] sm:$0xff]
      %v469 = vld [vmem:[#allocation2 + $0x92] sm:$0xff]
      %v470 = vld [vmem:[#allocation2 + $0x9a] sm:$0xff]
      %v471 = vld [vmem:[#allocation2 + $0xaa] sm:$0xff]
      %v472 = vld [vmem:[#allocation2 + $0xb2] sm:$0xff]
      %v473 = vld [vmem:[#allocation2 + $0xc2] sm:$0xff]
      %v474 = vld [vmem:[#allocation2 + $0xca] sm:$0xff]
      %v475 = vld [vmem:[#allocation2 + $0xda] sm:$0xff]
      %v476 = vld [vmem:[#allocation2 + $0xe2] sm:$0xff]
      %v477 = vld [vmem:[#allocation2 + $0xf2] sm:$0xff]
      %v478 = vld [vmem:[#allocation2 + $0xfa] sm:$0xff]
      %v479 = vld [vmem:[#allocation2 + $0x10a] sm:$0xff]
      %v480 = vld [vmem:[#allocation2 + $0x112] sm:$0xff]
      %v481 = vld [vmem:[#allocation2 + $0x122] sm:$0xff]
      %v482 = vld [vmem:[#allocation2 + $0x12a] sm:$0xff]
      %v483 = vld [vmem:[#allocation2 + $0x13a] sm:$0xff]
      %v484 = vld [vmem:[#allocation2 + $0x142] sm:$0xff]
      %v485 = vld [vmem:[#allocation2 + $0x152] sm:$0xff]
      %v486 = vld [vmem:[#allocation2 + $0x15a] sm:$0xff]
      %v487 = vld [vmem:[#allocation2 + $0x16a] sm:$0xff]
      %v488 = vld [vmem:[#allocation2 + $0x172] sm:$0xff]
      %489 = vst [vmem:[#allocation3 + $0x10] sm:$0xff] %v457
      %490 = vst [vmem:[#allocation3 + $0x58] sm:$0xff] %v458
      %491 = vst [vmem:[#allocation3 + $0xa0] sm:$0xff] %v459
      %492 = vst [vmem:[#allocation3 + $0xe8] sm:$0xff] %v460
      %493 = vst [vmem:[#allocation3 + $0x130] sm:$0xff] %v461
      %494 = vst [vmem:[#allocation3 + $0x178] sm:$0xff] %v462
      %495 = vst [vmem:[#allocation3 + $0x1c0] sm:$0xff] %v463
      %496 = vst [vmem:[#allocation3 + $0x208] sm:$0xff] %v464
      %497 = vst [vmem:[#allocation3 + $0x250] sm:$0xff] %v465
      %498 = vst [vmem:[#allocation3 + $0x298] sm:$0xff] %v466
      %499 = vst [vmem:[#allocation3 + $0x2e0] sm:$0xff] %v467
      %500 = vst [vmem:[#allocation3 + $0x328] sm:$0xff] %v468
      %501 = vst [vmem:[#allocation3 + $0x370] sm:$0xff] %v469
      %502 = vst [vmem:[#allocation3 + $0x3b8] sm:$0xff] %v470
      %503 = vst [vmem:[#allocation3 + $0x400] sm:$0xff] %v471
      %504 = vst [vmem:[#allocation3 + $0x448] sm:$0xff] %v472
      %505 = vst [vmem:[#allocation3 + $0x490] sm:$0xff] %v473
      %506 = vst [vmem:[#allocation3 + $0x4d8] sm:$0xff] %v474
      %507 = vst [vmem:[#allocation3 + $0x520] sm:$0xff] %v475
      %508 = vst [vmem:[#allocation3 + $0x568] sm:$0xff] %v476
      %509 = vst [vmem:[#allocation3 + $0x5b0] sm:$0xff] %v477
      %510 = vst [vmem:[#allocation3 + $0x5f8] sm:$0xff] %v478
      %511 = vst [vmem:[#allocation3 + $0x640] sm:$0xff] %v479
      %512 = vst [vmem:[#allocation3 + $0x688] sm:$0xff] %v480
      %513 = vst [vmem:[#allocation3 + $0x6d0] sm:$0xff] %v481
      %514 = vst [vmem:[#allocation3 + $0x718] sm:$0xff] %v482
      %515 = vst [vmem:[#allocation3 + $0x760] sm:$0xff] %v483
      %516 = vst [vmem:[#allocation3 + $0x7a8] sm:$0xff] %v484
      %517 = vst [vmem:[#allocation3 + $0x7f0] sm:$0xff] %v485
      %518 = vst [vmem:[#allocation3 + $0x838] sm:$0xff] %v486
      %519 = vst [vmem:[#allocation3 + $0x880] sm:$0xff] %v487
      %520 = vst [vmem:[#allocation3 + $0x8c8] sm:$0xff] %v488
      %v521 = vld [vmem:[%s295] sm:$0xff]
      %v522 = vld [vmem:[%s295 + $0x8] sm:$0xff]
      %v523 = vld [vmem:[%s295 + $0x18] sm:$0xff]
      %v524 = vld [vmem:[%s295 + $0x20] sm:$0xff]
      %v525 = vld [vmem:[%s295 + $0x30] sm:$0xff]
      %v526 = vld [vmem:[%s295 + $0x38] sm:$0xff]
      %v527 = vld [vmem:[%s295 + $0x48] sm:$0xff]
      %v528 = vld [vmem:[%s295 + $0x50] sm:$0xff]
      %v529 = vld [vmem:[%s295 + $0x60] sm:$0xff]
      %v530 = vld [vmem:[%s295 + $0x68] sm:$0xff]
      %v531 = vld [vmem:[%s295 + $0x78] sm:$0xff]
      %v532 = vld [vmem:[%s295 + $0x80] sm:$0xff]
      %v533 = vld [vmem:[%s295 + $0x90] sm:$0xff]
      %v534 = vld [vmem:[%s295 + $0x98] sm:$0xff]
      %v535 = vld [vmem:[%s295 + $0xa8] sm:$0xff]
      %v536 = vld [vmem:[%s295 + $0xb0] sm:$0xff]
      %v537 = vld [vmem:[%s295 + $0xc0] sm:$0xff]
      %v538 = vld [vmem:[%s295 + $0xc8] sm:$0xff]
      %v539 = vld [vmem:[%s295 + $0xd8] sm:$0xff]
      %v540 = vld [vmem:[%s295 + $0xe0] sm:$0xff]
      %v541 = vld [vmem:[%s295 + $0xf0] sm:$0xff]
      %v542 = vld [vmem:[%s295 + $0xf8] sm:$0xff]
      %v543 = vld [vmem:[%s295 + $0x108] sm:$0xff]
      %v544 = vld [vmem:[%s295 + $0x110] sm:$0xff]
      %v545 = vld [vmem:[%s295 + $0x120] sm:$0xff]
      %v546 = vld [vmem:[%s295 + $0x128] sm:$0xff]
      %v547 = vld [vmem:[%s295 + $0x138] sm:$0xff]
      %v548 = vld [vmem:[%s295 + $0x140] sm:$0xff]
      %v549 = vld [vmem:[%s295 + $0x150] sm:$0xff]
      %v550 = vld [vmem:[%s295 + $0x158] sm:$0xff]
      %v551 = vld [vmem:[%s295 + $0x168] sm:$0xff]
      %v552 = vld [vmem:[%s295 + $0x170] sm:$0xff]
      %553 = vst [vmem:[#allocation3 + $0x18] sm:$0xff] %v521
      %554 = vst [vmem:[#allocation3 + $0x60] sm:$0xff] %v522
      %555 = vst [vmem:[#allocation3 + $0xa8] sm:$0xff] %v523
      %556 = vst [vmem:[#allocation3 + $0xf0] sm:$0xff] %v524
      %557 = vst [vmem:[#allocation3 + $0x138] sm:$0xff] %v525
      %558 = vst [vmem:[#allocation3 + $0x180] sm:$0xff] %v526
      %559 = vst [vmem:[#allocation3 + $0x1c8] sm:$0xff] %v527
      %560 = vst [vmem:[#allocation3 + $0x210] sm:$0xff] %v528
      %561 = vst [vmem:[#allocation3 + $0x258] sm:$0xff] %v529
      %562 = vst [vmem:[#allocation3 + $0x2a0] sm:$0xff] %v530
      %563 = vst [vmem:[#allocation3 + $0x2e8] sm:$0xff] %v531
      %564 = vst [vmem:[#allocation3 + $0x330] sm:$0xff] %v532
      %565 = vst [vmem:[#allocation3 + $0x378] sm:$0xff] %v533
      %566 = vst [vmem:[#allocation3 + $0x3c0] sm:$0xff] %v534
      %567 = vst [vmem:[#allocation3 + $0x408] sm:$0xff] %v535
      %568 = vst [vmem:[#allocation3 + $0x450] sm:$0xff] %v536
      %569 = vst [vmem:[#allocation3 + $0x498] sm:$0xff] %v537
      %570 = vst [vmem:[#allocation3 + $0x4e0] sm:$0xff] %v538
      %571 = vst [vmem:[#allocation3 + $0x528] sm:$0xff] %v539
      %572 = vst [vmem:[#allocation3 + $0x570] sm:$0xff] %v540
      %573 = vst [vmem:[#allocation3 + $0x5b8] sm:$0xff] %v541
      %574 = vst [vmem:[#allocation3 + $0x600] sm:$0xff] %v542
      %575 = vst [vmem:[#allocation3 + $0x648] sm:$0xff] %v543
      %576 = vst [vmem:[#allocation3 + $0x690] sm:$0xff] %v544
      %577 = vst [vmem:[#allocation3 + $0x6d8] sm:$0xff] %v545
      %578 = vst [vmem:[#allocation3 + $0x720] sm:$0xff] %v546
      %579 = vst [vmem:[#allocation3 + $0x768] sm:$0xff] %v547
      %580 = vst [vmem:[#allocation3 + $0x7b0] sm:$0xff] %v548
      %581 = vst [vmem:[#allocation3 + $0x7f8] sm:$0xff] %v549
      %582 = vst [vmem:[#allocation3 + $0x840] sm:$0xff] %v550
      %583 = vst [vmem:[#allocation3 + $0x888] sm:$0xff] %v551
      %584 = vst [vmem:[#allocation3 + $0x8d0] sm:$0xff] %v552
      %v585 = vld [vmem:[%s295 + $0x1] sm:$0xff]
      %v586 = vld [vmem:[%s295 + $0x9] sm:$0xff]
      %v587 = vld [vmem:[%s295 + $0x19] sm:$0xff]
      %v588 = vld [vmem:[%s295 + $0x21] sm:$0xff]
      %v589 = vld [vmem:[%s295 + $0x31] sm:$0xff]
      %v590 = vld [vmem:[%s295 + $0x39] sm:$0xff]
      %v591 = vld [vmem:[%s295 + $0x49] sm:$0xff]
      %v592 = vld [vmem:[%s295 + $0x51] sm:$0xff]
      %v593 = vld [vmem:[%s295 + $0x61] sm:$0xff]
      %v594 = vld [vmem:[%s295 + $0x69] sm:$0xff]
      %v595 = vld [vmem:[%s295 + $0x79] sm:$0xff]
      %v596 = vld [vmem:[%s295 + $0x81] sm:$0xff]
      %v597 = vld [vmem:[%s295 + $0x91] sm:$0xff]
      %v598 = vld [vmem:[%s295 + $0x99] sm:$0xff]
      %v599 = vld [vmem:[%s295 + $0xa9] sm:$0xff]
      %v600 = vld [vmem:[%s295 + $0xb1] sm:$0xff]
      %v601 = vld [vmem:[%s295 + $0xc1] sm:$0xff]
      %v602 = vld [vmem:[%s295 + $0xc9] sm:$0xff]
      %v603 = vld [vmem:[%s295 + $0xd9] sm:$0xff]
      %v604 = vld [vmem:[%s295 + $0xe1] sm:$0xff]
      %v605 = vld [vmem:[%s295 + $0xf1] sm:$0xff]
      %v606 = vld [vmem:[%s295 + $0xf9] sm:$0xff]
      %v607 = vld [vmem:[%s295 + $0x109] sm:$0xff]
      %v608 = vld [vmem:[%s295 + $0x111] sm:$0xff]
      %v609 = vld [vmem:[%s295 + $0x121] sm:$0xff]
      %v610 = vld [vmem:[%s295 + $0x129] sm:$0xff]
      %v611 = vld [vmem:[%s295 + $0x139] sm:$0xff]
      %v612 = vld [vmem:[%s295 + $0x141] sm:$0xff]
      %v613 = vld [vmem:[%s295 + $0x151] sm:$0xff]
      %v614 = vld [vmem:[%s295 + $0x159] sm:$0xff]
      %v615 = vld [vmem:[%s295 + $0x169] sm:$0xff]
      %v616 = vld [vmem:[%s295 + $0x171] sm:$0xff]
      %617 = vst [vmem:[#allocation3 + $0x20] sm:$0xff] %v585
      %618 = vst [vmem:[#allocation3 + $0x68] sm:$0xff] %v586
      %619 = vst [vmem:[#allocation3 + $0xb0] sm:$0xff] %v587
      %620 = vst [vmem:[#allocation3 + $0xf8] sm:$0xff] %v588
      %621 = vst [vmem:[#allocation3 + $0x140] sm:$0xff] %v589
      %622 = vst [vmem:[#allocation3 + $0x188] sm:$0xff] %v590
      %623 = vst [vmem:[#allocation3 + $0x1d0] sm:$0xff] %v591
      %624 = vst [vmem:[#allocation3 + $0x218] sm:$0xff] %v592
      %625 = vst [vmem:[#allocation3 + $0x260] sm:$0xff] %v593
      %626 = vst [vmem:[#allocation3 + $0x2a8] sm:$0xff] %v594
      %627 = vst [vmem:[#allocation3 + $0x2f0] sm:$0xff] %v595
      %628 = vst [vmem:[#allocation3 + $0x338] sm:$0xff] %v596
      %629 = vst [vmem:[#allocation3 + $0x380] sm:$0xff] %v597
      %630 = vst [vmem:[#allocation3 + $0x3c8] sm:$0xff] %v598
      %631 = vst [vmem:[#allocation3 + $0x410] sm:$0xff] %v599
      %632 = vst [vmem:[#allocation3 + $0x458] sm:$0xff] %v600
      %633 = vst [vmem:[#allocation3 + $0x4a0] sm:$0xff] %v601
      %634 = vst [vmem:[#allocation3 + $0x4e8] sm:$0xff] %v602
      %635 = vst [vmem:[#allocation3 + $0x530] sm:$0xff] %v603
      %636 = vst [vmem:[#allocation3 + $0x578] sm:$0xff] %v604
      %637 = vst [vmem:[#allocation3 + $0x5c0] sm:$0xff] %v605
      %638 = vst [vmem:[#allocation3 + $0x608] sm:$0xff] %v606
      %639 = vst [vmem:[#allocation3 + $0x650] sm:$0xff] %v607
      %640 = vst [vmem:[#allocation3 + $0x698] sm:$0xff] %v608
      %641 = vst [vmem:[#allocation3 + $0x6e0] sm:$0xff] %v609
      %642 = vst [vmem:[#allocation3 + $0x728] sm:$0xff] %v610
      %643 = vst [vmem:[#allocation3 + $0x770] sm:$0xff] %v611
      %644 = vst [vmem:[#allocation3 + $0x7b8] sm:$0xff] %v612
      %645 = vst [vmem:[#allocation3 + $0x800] sm:$0xff] %v613
      %646 = vst [vmem:[#allocation3 + $0x848] sm:$0xff] %v614
      %647 = vst [vmem:[#allocation3 + $0x890] sm:$0xff] %v615
      %648 = vst [vmem:[#allocation3 + $0x8d8] sm:$0xff] %v616
      %v649 = vld [vmem:[%s295 + $0x2] sm:$0xff]
      %v650 = vld [vmem:[%s295 + $0xa] sm:$0xff]
      %v651 = vld [vmem:[%s295 + $0x1a] sm:$0xff]
      %v652 = vld [vmem:[%s295 + $0x22] sm:$0xff]
      %v653 = vld [vmem:[%s295 + $0x32] sm:$0xff]
      %v654 = vld [vmem:[%s295 + $0x3a] sm:$0xff]
      %v655 = vld [vmem:[%s295 + $0x4a] sm:$0xff]
      %v656 = vld [vmem:[%s295 + $0x52] sm:$0xff]
      %v657 = vld [vmem:[%s295 + $0x62] sm:$0xff]
      %v658 = vld [vmem:[%s295 + $0x6a] sm:$0xff]
      %v659 = vld [vmem:[%s295 + $0x7a] sm:$0xff]
      %v660 = vld [vmem:[%s295 + $0x82] sm:$0xff]
      %v661 = vld [vmem:[%s295 + $0x92] sm:$0xff]
      %v662 = vld [vmem:[%s295 + $0x9a] sm:$0xff]
      %v663 = vld [vmem:[%s295 + $0xaa] sm:$0xff]
      %v664 = vld [vmem:[%s295 + $0xb2] sm:$0xff]
      %v665 = vld [vmem:[%s295 + $0xc2] sm:$0xff]
      %v666 = vld [vmem:[%s295 + $0xca] sm:$0xff]
      %v667 = vld [vmem:[%s295 + $0xda] sm:$0xff]
      %v668 = vld [vmem:[%s295 + $0xe2] sm:$0xff]
      %v669 = vld [vmem:[%s295 + $0xf2] sm:$0xff]
      %v670 = vld [vmem:[%s295 + $0xfa] sm:$0xff]
      %v671 = vld [vmem:[%s295 + $0x10a] sm:$0xff]
      %v672 = vld [vmem:[%s295 + $0x112] sm:$0xff]
      %v673 = vld [vmem:[%s295 + $0x122] sm:$0xff]
      %v674 = vld [vmem:[%s295 + $0x12a] sm:$0xff]
      %v675 = vld [vmem:[%s295 + $0x13a] sm:$0xff]
      %v676 = vld [vmem:[%s295 + $0x142] sm:$0xff]
      %v677 = vld [vmem:[%s295 + $0x152] sm:$0xff]
      %v678 = vld [vmem:[%s295 + $0x15a] sm:$0xff]
      %v679 = vld [vmem:[%s295 + $0x16a] sm:$0xff]
      %v680 = vld [vmem:[%s295 + $0x172] sm:$0xff]
      %681 = vst [vmem:[#allocation3 + $0x28] sm:$0xff] %v649
      %682 = vst [vmem:[#allocation3 + $0x70] sm:$0xff] %v650
      %683 = vst [vmem:[#allocation3 + $0xb8] sm:$0xff] %v651
      %684 = vst [vmem:[#allocation3 + $0x100] sm:$0xff] %v652
      %685 = vst [vmem:[#allocation3 + $0x148] sm:$0xff] %v653
      %686 = vst [vmem:[#allocation3 + $0x190] sm:$0xff] %v654
      %687 = vst [vmem:[#allocation3 + $0x1d8] sm:$0xff] %v655
      %688 = vst [vmem:[#allocation3 + $0x220] sm:$0xff] %v656
      %689 = vst [vmem:[#allocation3 + $0x268] sm:$0xff] %v657
      %690 = vst [vmem:[#allocation3 + $0x2b0] sm:$0xff] %v658
      %691 = vst [vmem:[#allocation3 + $0x2f8] sm:$0xff] %v659
      %692 = vst [vmem:[#allocation3 + $0x340] sm:$0xff] %v660
      %693 = vst [vmem:[#allocation3 + $0x388] sm:$0xff] %v661
      %694 = vst [vmem:[#allocation3 + $0x3d0] sm:$0xff] %v662
      %695 = vst [vmem:[#allocation3 + $0x418] sm:$0xff] %v663
      %696 = vst [vmem:[#allocation3 + $0x460] sm:$0xff] %v664
      %697 = vst [vmem:[#allocation3 + $0x4a8] sm:$0xff] %v665
      %698 = vst [vmem:[#allocation3 + $0x4f0] sm:$0xff] %v666
      %699 = vst [vmem:[#allocation3 + $0x538] sm:$0xff] %v667
      %700 = vst [vmem:[#allocation3 + $0x580] sm:$0xff] %v668
      %701 = vst [vmem:[#allocation3 + $0x5c8] sm:$0xff] %v669
      %702 = vst [vmem:[#allocation3 + $0x610] sm:$0xff] %v670
      %703 = vst [vmem:[#allocation3 + $0x658] sm:$0xff] %v671
      %704 = vst [vmem:[#allocation3 + $0x6a0] sm:$0xff] %v672
      %705 = vst [vmem:[#allocation3 + $0x6e8] sm:$0xff] %v673
      %706 = vst [vmem:[#allocation3 + $0x730] sm:$0xff] %v674
      %707 = vst [vmem:[#allocation3 + $0x778] sm:$0xff] %v675
      %708 = vst [vmem:[#allocation3 + $0x7c0] sm:$0xff] %v676
      %709 = vst [vmem:[#allocation3 + $0x808] sm:$0xff] %v677
      %710 = vst [vmem:[#allocation3 + $0x850] sm:$0xff] %v678
      %711 = vst [vmem:[#allocation3 + $0x898] sm:$0xff] %v679
      %712 = vst [vmem:[#allocation3 + $0x8e0] sm:$0xff] %v680
      %s713 = scalar_lea.vmem [#allocation2], 48
      %v714 = vld [vmem:[%s713] sm:$0xff]
      %v715 = vld [vmem:[%s713 + $0x8] sm:$0xff]
      %v716 = vld [vmem:[%s713 + $0x18] sm:$0xff]
      %v717 = vld [vmem:[%s713 + $0x20] sm:$0xff]
      %v718 = vld [vmem:[%s713 + $0x30] sm:$0xff]
      %v719 = vld [vmem:[%s713 + $0x38] sm:$0xff]
      %v720 = vld [vmem:[%s713 + $0x48] sm:$0xff]
      %v721 = vld [vmem:[%s713 + $0x50] sm:$0xff]
      %v722 = vld [vmem:[%s713 + $0x60] sm:$0xff]
      %v723 = vld [vmem:[%s713 + $0x68] sm:$0xff]
      %v724 = vld [vmem:[%s713 + $0x78] sm:$0xff]
      %v725 = vld [vmem:[%s713 + $0x80] sm:$0xff]
      %v726 = vld [vmem:[%s713 + $0x90] sm:$0xff]
      %v727 = vld [vmem:[%s713 + $0x98] sm:$0xff]
      %v728 = vld [vmem:[%s713 + $0xa8] sm:$0xff]
      %v729 = vld [vmem:[%s713 + $0xb0] sm:$0xff]
      %v730 = vld [vmem:[%s713 + $0xc0] sm:$0xff]
      %v731 = vld [vmem:[%s713 + $0xc8] sm:$0xff]
      %v732 = vld [vmem:[%s713 + $0xd8] sm:$0xff]
      %v733 = vld [vmem:[%s713 + $0xe0] sm:$0xff]
      %v734 = vld [vmem:[%s713 + $0xf0] sm:$0xff]
      %v735 = vld [vmem:[%s713 + $0xf8] sm:$0xff]
      %v736 = vld [vmem:[%s713 + $0x108] sm:$0xff]
      %v737 = vld [vmem:[%s713 + $0x110] sm:$0xff]
      %v738 = vld [vmem:[%s713 + $0x120] sm:$0xff]
      %v739 = vld [vmem:[%s713 + $0x128] sm:$0xff]
      %v740 = vld [vmem:[%s713 + $0x138] sm:$0xff]
      %v741 = vld [vmem:[%s713 + $0x140] sm:$0xff]
      %v742 = vld [vmem:[%s713 + $0x150] sm:$0xff]
      %v743 = vld [vmem:[%s713 + $0x158] sm:$0xff]
      %v744 = vld [vmem:[%s713 + $0x168] sm:$0xff]
      %v745 = vld [vmem:[%s713 + $0x170] sm:$0xff]
      %746 = vst [vmem:[#allocation3 + $0x30] sm:$0xff] %v714
      %747 = vst [vmem:[#allocation3 + $0x78] sm:$0xff] %v715
      %748 = vst [vmem:[#allocation3 + $0xc0] sm:$0xff] %v716
      %749 = vst [vmem:[#allocation3 + $0x108] sm:$0xff] %v717
      %750 = vst [vmem:[#allocation3 + $0x150] sm:$0xff] %v718
      %751 = vst [vmem:[#allocation3 + $0x198] sm:$0xff] %v719
      %752 = vst [vmem:[#allocation3 + $0x1e0] sm:$0xff] %v720
      %753 = vst [vmem:[#allocation3 + $0x228] sm:$0xff] %v721
      %754 = vst [vmem:[#allocation3 + $0x270] sm:$0xff] %v722
      %755 = vst [vmem:[#allocation3 + $0x2b8] sm:$0xff] %v723
      %756 = vst [vmem:[#allocation3 + $0x300] sm:$0xff] %v724
      %757 = vst [vmem:[#allocation3 + $0x348] sm:$0xff] %v725
      %758 = vst [vmem:[#allocation3 + $0x390] sm:$0xff] %v726
      %759 = vst [vmem:[#allocation3 + $0x3d8] sm:$0xff] %v727
      %760 = vst [vmem:[#allocation3 + $0x420] sm:$0xff] %v728
      %761 = vst [vmem:[#allocation3 + $0x468] sm:$0xff] %v729
      %762 = vst [vmem:[#allocation3 + $0x4b0] sm:$0xff] %v730
      %763 = vst [vmem:[#allocation3 + $0x4f8] sm:$0xff] %v731
      %764 = vst [vmem:[#allocation3 + $0x540] sm:$0xff] %v732
      %765 = vst [vmem:[#allocation3 + $0x588] sm:$0xff] %v733
      %766 = vst [vmem:[#allocation3 + $0x5d0] sm:$0xff] %v734
      %767 = vst [vmem:[#allocation3 + $0x618] sm:$0xff] %v735
      %768 = vst [vmem:[#allocation3 + $0x660] sm:$0xff] %v736
      %769 = vst [vmem:[#allocation3 + $0x6a8] sm:$0xff] %v737
      %770 = vst [vmem:[#allocation3 + $0x6f0] sm:$0xff] %v738
      %771 = vst [vmem:[#allocation3 + $0x738] sm:$0xff] %v739
      %772 = vst [vmem:[#allocation3 + $0x780] sm:$0xff] %v740
      %773 = vst [vmem:[#allocation3 + $0x7c8] sm:$0xff] %v741
      %774 = vst [vmem:[#allocation3 + $0x810] sm:$0xff] %v742
      %775 = vst [vmem:[#allocation3 + $0x858] sm:$0xff] %v743
      %776 = vst [vmem:[#allocation3 + $0x8a0] sm:$0xff] %v744
      %777 = vst [vmem:[#allocation3 + $0x8e8] sm:$0xff] %v745
      %v778 = vld [vmem:[%s713 + $0x1] sm:$0xff]
      %v779 = vld [vmem:[%s713 + $0x9] sm:$0xff]
      %v780 = vld [vmem:[%s713 + $0x19] sm:$0xff]
      %v781 = vld [vmem:[%s713 + $0x21] sm:$0xff]
      %v782 = vld [vmem:[%s713 + $0x31] sm:$0xff]
      %v783 = vld [vmem:[%s713 + $0x39] sm:$0xff]
      %v784 = vld [vmem:[%s713 + $0x49] sm:$0xff]
      %v785 = vld [vmem:[%s713 + $0x51] sm:$0xff]
      %v786 = vld [vmem:[%s713 + $0x61] sm:$0xff]
      %v787 = vld [vmem:[%s713 + $0x69] sm:$0xff]
      %v788 = vld [vmem:[%s713 + $0x79] sm:$0xff]
      %v789 = vld [vmem:[%s713 + $0x81] sm:$0xff]
      %v790 = vld [vmem:[%s713 + $0x91] sm:$0xff]
      %v791 = vld [vmem:[%s713 + $0x99] sm:$0xff]
      %v792 = vld [vmem:[%s713 + $0xa9] sm:$0xff]
      %v793 = vld [vmem:[%s713 + $0xb1] sm:$0xff]
      %v794 = vld [vmem:[%s713 + $0xc1] sm:$0xff]
      %v795 = vld [vmem:[%s713 + $0xc9] sm:$0xff]
      %v796 = vld [vmem:[%s713 + $0xd9] sm:$0xff]
      %v797 = vld [vmem:[%s713 + $0xe1] sm:$0xff]
      %v798 = vld [vmem:[%s713 + $0xf1] sm:$0xff]
      %v799 = vld [vmem:[%s713 + $0xf9] sm:$0xff]
      %v800 = vld [vmem:[%s713 + $0x109] sm:$0xff]
      %v801 = vld [vmem:[%s713 + $0x111] sm:$0xff]
      %v802 = vld [vmem:[%s713 + $0x121] sm:$0xff]
      %v803 = vld [vmem:[%s713 + $0x129] sm:$0xff]
      %v804 = vld [vmem:[%s713 + $0x139] sm:$0xff]
      %v805 = vld [vmem:[%s713 + $0x141] sm:$0xff]
      %v806 = vld [vmem:[%s713 + $0x151] sm:$0xff]
      %v807 = vld [vmem:[%s713 + $0x159] sm:$0xff]
      %v808 = vld [vmem:[%s713 + $0x169] sm:$0xff]
      %v809 = vld [vmem:[%s713 + $0x171] sm:$0xff]
      %810 = vst [vmem:[#allocation3 + $0x38] sm:$0xff] %v778
      %811 = vst [vmem:[#allocation3 + $0x80] sm:$0xff] %v779
      %812 = vst [vmem:[#allocation3 + $0xc8] sm:$0xff] %v780
      %813 = vst [vmem:[#allocation3 + $0x110] sm:$0xff] %v781
      %814 = vst [vmem:[#allocation3 + $0x158] sm:$0xff] %v782
      %815 = vst [vmem:[#allocation3 + $0x1a0] sm:$0xff] %v783
      %816 = vst [vmem:[#allocation3 + $0x1e8] sm:$0xff] %v784
      %817 = vst [vmem:[#allocation3 + $0x230] sm:$0xff] %v785
      %818 = vst [vmem:[#allocation3 + $0x278] sm:$0xff] %v786
      %819 = vst [vmem:[#allocation3 + $0x2c0] sm:$0xff] %v787
      %820 = vst [vmem:[#allocation3 + $0x308] sm:$0xff] %v788
      %821 = vst [vmem:[#allocation3 + $0x350] sm:$0xff] %v789
      %822 = vst [vmem:[#allocation3 + $0x398] sm:$0xff] %v790
      %823 = vst [vmem:[#allocation3 + $0x3e0] sm:$0xff] %v791
      %824 = vst [vmem:[#allocation3 + $0x428] sm:$0xff] %v792
      %825 = vst [vmem:[#allocation3 + $0x470] sm:$0xff] %v793
      %826 = vst [vmem:[#allocation3 + $0x4b8] sm:$0xff] %v794
      %827 = vst [vmem:[#allocation3 + $0x500] sm:$0xff] %v795
      %828 = vst [vmem:[#allocation3 + $0x548] sm:$0xff] %v796
      %829 = vst [vmem:[#allocation3 + $0x590] sm:$0xff] %v797
      %830 = vst [vmem:[#allocation3 + $0x5d8] sm:$0xff] %v798
      %831 = vst [vmem:[#allocation3 + $0x620] sm:$0xff] %v799
      %832 = vst [vmem:[#allocation3 + $0x668] sm:$0xff] %v800
      %833 = vst [vmem:[#allocation3 + $0x6b0] sm:$0xff] %v801
      %834 = vst [vmem:[#allocation3 + $0x6f8] sm:$0xff] %v802
      %835 = vst [vmem:[#allocation3 + $0x740] sm:$0xff] %v803
      %836 = vst [vmem:[#allocation3 + $0x788] sm:$0xff] %v804
      %837 = vst [vmem:[#allocation3 + $0x7d0] sm:$0xff] %v805
      %838 = vst [vmem:[#allocation3 + $0x818] sm:$0xff] %v806
      %839 = vst [vmem:[#allocation3 + $0x860] sm:$0xff] %v807
      %840 = vst [vmem:[#allocation3 + $0x8a8] sm:$0xff] %v808
      %841 = vst [vmem:[#allocation3 + $0x8f0] sm:$0xff] %v809
      %v842 = vld [vmem:[%s713 + $0x2] sm:$0xff]
      %v843 = vld [vmem:[%s713 + $0xa] sm:$0xff]
      %v844 = vld [vmem:[%s713 + $0x1a] sm:$0xff]
      %v845 = vld [vmem:[%s713 + $0x22] sm:$0xff]
      %v846 = vld [vmem:[%s713 + $0x32] sm:$0xff]
      %v847 = vld [vmem:[%s713 + $0x3a] sm:$0xff]
      %v848 = vld [vmem:[%s713 + $0x4a] sm:$0xff]
      %v849 = vld [vmem:[%s713 + $0x52] sm:$0xff]
      %v850 = vld [vmem:[%s713 + $0x62] sm:$0xff]
      %v851 = vld [vmem:[%s713 + $0x6a] sm:$0xff]
      %v852 = vld [vmem:[%s713 + $0x7a] sm:$0xff]
      %v853 = vld [vmem:[%s713 + $0x82] sm:$0xff]
      %v854 = vld [vmem:[%s713 + $0x92] sm:$0xff]
      %v855 = vld [vmem:[%s713 + $0x9a] sm:$0xff]
      %v856 = vld [vmem:[%s713 + $0xaa] sm:$0xff]
      %v857 = vld [vmem:[%s713 + $0xb2] sm:$0xff]
      %v858 = vld [vmem:[%s713 + $0xc2] sm:$0xff]
      %v859 = vld [vmem:[%s713 + $0xca] sm:$0xff]
      %v860 = vld [vmem:[%s713 + $0xda] sm:$0xff]
      %v861 = vld [vmem:[%s713 + $0xe2] sm:$0xff]
      %v862 = vld [vmem:[%s713 + $0xf2] sm:$0xff]
      %v863 = vld [vmem:[%s713 + $0xfa] sm:$0xff]
      %v864 = vld [vmem:[%s713 + $0x10a] sm:$0xff]
      %v865 = vld [vmem:[%s713 + $0x112] sm:$0xff]
      %v866 = vld [vmem:[%s713 + $0x122] sm:$0xff]
      %v867 = vld [vmem:[%s713 + $0x12a] sm:$0xff]
      %v868 = vld [vmem:[%s713 + $0x13a] sm:$0xff]
      %v869 = vld [vmem:[%s713 + $0x142] sm:$0xff]
      %v870 = vld [vmem:[%s713 + $0x152] sm:$0xff]
      %v871 = vld [vmem:[%s713 + $0x15a] sm:$0xff]
      %v872 = vld [vmem:[%s713 + $0x16a] sm:$0xff]
      %v873 = vld [vmem:[%s713 + $0x172] sm:$0xff]
      %874 = vst [vmem:[#allocation3 + $0x40] sm:$0xff] %v842
      %875 = vst [vmem:[#allocation3 + $0x88] sm:$0xff] %v843
      %876 = vst [vmem:[#allocation3 + $0xd0] sm:$0xff] %v844
      %877 = vst [vmem:[#allocation3 + $0x118] sm:$0xff] %v845
      %878 = vst [vmem:[#allocation3 + $0x160] sm:$0xff] %v846
      %879 = vst [vmem:[#allocation3 + $0x1a8] sm:$0xff] %v847
      %880 = vst [vmem:[#allocation3 + $0x1f0] sm:$0xff] %v848
      %881 = vst [vmem:[#allocation3 + $0x238] sm:$0xff] %v849
      %882 = vst [vmem:[#allocation3 + $0x280] sm:$0xff] %v850
      %883 = vst [vmem:[#allocation3 + $0x2c8] sm:$0xff] %v851
      %884 = vst [vmem:[#allocation3 + $0x310] sm:$0xff] %v852
      %885 = vst [vmem:[#allocation3 + $0x358] sm:$0xff] %v853
      %886 = vst [vmem:[#allocation3 + $0x3a0] sm:$0xff] %v854
      %887 = vst [vmem:[#allocation3 + $0x3e8] sm:$0xff] %v855
      %888 = vst [vmem:[#allocation3 + $0x430] sm:$0xff] %v856
      %889 = vst [vmem:[#allocation3 + $0x478] sm:$0xff] %v857
      %890 = vst [vmem:[#allocation3 + $0x4c0] sm:$0xff] %v858
      %891 = vst [vmem:[#allocation3 + $0x508] sm:$0xff] %v859
      %892 = vst [vmem:[#allocation3 + $0x550] sm:$0xff] %v860
      %893 = vst [vmem:[#allocation3 + $0x598] sm:$0xff] %v861
      %894 = vst [vmem:[#allocation3 + $0x5e0] sm:$0xff] %v862
      %895 = vst [vmem:[#allocation3 + $0x628] sm:$0xff] %v863
      %896 = vst [vmem:[#allocation3 + $0x670] sm:$0xff] %v864
      %897 = vst [vmem:[#allocation3 + $0x6b8] sm:$0xff] %v865
      %898 = vst [vmem:[#allocation3 + $0x700] sm:$0xff] %v866
      %899 = vst [vmem:[#allocation3 + $0x748] sm:$0xff] %v867
      %900 = vst [vmem:[#allocation3 + $0x790] sm:$0xff] %v868
      %901 = vst [vmem:[#allocation3 + $0x7d8] sm:$0xff] %v869
      %902 = vst [vmem:[#allocation3 + $0x820] sm:$0xff] %v870
      %903 = vst [vmem:[#allocation3 + $0x868] sm:$0xff] %v871
      %904 = vst [vmem:[#allocation3 + $0x8b0] sm:$0xff] %v872
      %905 = vst [vmem:[#allocation3 + $0x8f8] sm:$0xff] %v873
      %v906 = vld [vmem:[#allocation3] sm:$0xff]
      %v907 = vld [vmem:[#allocation3 + $0x8] sm:$0xff]
      %v908 = vld [vmem:[#allocation3 + $0x10] sm:$0xff]
      %v909 = vld [vmem:[#allocation3 + $0x18] sm:$0xff]
      %v910 = vld [vmem:[#allocation3 + $0x20] sm:$0xff]
      %v911 = vld [vmem:[#allocation3 + $0x28] sm:$0xff]
      %v912 = vld [vmem:[#allocation3 + $0x30] sm:$0xff]
      %v913 = vld [vmem:[#allocation3 + $0x38] sm:$0xff]
      %v914 = vld [vmem:[#allocation3 + $0x40] sm:$0xff]
      %v915 = vld [vmem:[#allocation3 + $0x48] sm:$0xff]
      %v916 = vld [vmem:[#allocation3 + $0x50] sm:$0xff]
      %v917 = vld [vmem:[#allocation3 + $0x58] sm:$0xff]
      %v918 = vld [vmem:[#allocation3 + $0x60] sm:$0xff]
      %v919 = vld [vmem:[#allocation3 + $0x68] sm:$0xff]
      %v920 = vld [vmem:[#allocation3 + $0x70] sm:$0xff]
      %v921 = vld [vmem:[#allocation3 + $0x78] sm:$0xff]
      %v922 = vld [vmem:[#allocation3 + $0x80] sm:$0xff]
      %v923 = vld [vmem:[#allocation3 + $0x88] sm:$0xff]
      %v924 = vld [vmem:[#allocation3 + $0x90] sm:$0xff]
      %v925 = vld [vmem:[#allocation3 + $0x98] sm:$0xff]
      %v926 = vld [vmem:[#allocation3 + $0xa0] sm:$0xff]
      %v927 = vld [vmem:[#allocation3 + $0xa8] sm:$0xff]
      %v928 = vld [vmem:[#allocation3 + $0xb0] sm:$0xff]
      %v929 = vld [vmem:[#allocation3 + $0xb8] sm:$0xff]
      %v930 = vld [vmem:[#allocation3 + $0xc0] sm:$0xff]
      %v931 = vld [vmem:[#allocation3 + $0xc8] sm:$0xff]
      %v932 = vld [vmem:[#allocation3 + $0xd0] sm:$0xff]
      %v933 = vld [vmem:[#allocation3 + $0xd8] sm:$0xff]
      %v934 = vld [vmem:[#allocation3 + $0xe0] sm:$0xff]
      %v935 = vld [vmem:[#allocation3 + $0xe8] sm:$0xff]
      %v936 = vld [vmem:[#allocation3 + $0xf0] sm:$0xff]
      %v937 = vld [vmem:[#allocation3 + $0xf8] sm:$0xff]
      %v938 = vld [vmem:[#allocation3 + $0x100] sm:$0xff]
      %v939 = vld [vmem:[#allocation3 + $0x108] sm:$0xff]
      %v940 = vld [vmem:[#allocation3 + $0x110] sm:$0xff]
      %v941 = vld [vmem:[#allocation3 + $0x118] sm:$0xff]
      %v942 = vld [vmem:[#allocation3 + $0x120] sm:$0xff]
      %v943 = vld [vmem:[#allocation3 + $0x128] sm:$0xff]
      %v944 = vld [vmem:[#allocation3 + $0x130] sm:$0xff]
      %v945 = vld [vmem:[#allocation3 + $0x138] sm:$0xff]
      %v946 = vld [vmem:[#allocation3 + $0x140] sm:$0xff]
      %v947 = vld [vmem:[#allocation3 + $0x148] sm:$0xff]
      %v948 = vld [vmem:[#allocation3 + $0x150] sm:$0xff]
      %v949 = vld [vmem:[#allocation3 + $0x158] sm:$0xff]
      %v950 = vld [vmem:[#allocation3 + $0x160] sm:$0xff]
      %v951 = vld [vmem:[#allocation3 + $0x168] sm:$0xff]
      %v952 = vld [vmem:[#allocation3 + $0x170] sm:$0xff]
      %v953 = vld [vmem:[#allocation3 + $0x178] sm:$0xff]
      %v954 = vld [vmem:[#allocation3 + $0x180] sm:$0xff]
      %v955 = vld [vmem:[#allocation3 + $0x188] sm:$0xff]
      %v956 = vld [vmem:[#allocation3 + $0x190] sm:$0xff]
      %v957 = vld [vmem:[#allocation3 + $0x198] sm:$0xff]
      %v958 = vld [vmem:[#allocation3 + $0x1a0] sm:$0xff]
      %v959 = vld [vmem:[#allocation3 + $0x1a8] sm:$0xff]
      %v960 = vld [vmem:[#allocation3 + $0x1b0] sm:$0xff]
      %v961 = vld [vmem:[#allocation3 + $0x1b8] sm:$0xff]
      %v962 = vld [vmem:[#allocation3 + $0x1c0] sm:$0xff]
      %v963 = vld [vmem:[#allocation3 + $0x1c8] sm:$0xff]
      %v964 = vld [vmem:[#allocation3 + $0x1d0] sm:$0xff]
      %v965 = vld [vmem:[#allocation3 + $0x1d8] sm:$0xff]
      %v966 = vld [vmem:[#allocation3 + $0x1e0] sm:$0xff]
      %v967 = vld [vmem:[#allocation3 + $0x1e8] sm:$0xff]
      %v968 = vld [vmem:[#allocation3 + $0x1f0] sm:$0xff]
      %v969 = vld [vmem:[#allocation3 + $0x1f8] sm:$0xff]
      %v970 = vld [vmem:[#allocation3 + $0x200] sm:$0xff]
      %v971 = vld [vmem:[#allocation3 + $0x208] sm:$0xff]
      %v972 = vld [vmem:[#allocation3 + $0x210] sm:$0xff]
      %v973 = vld [vmem:[#allocation3 + $0x218] sm:$0xff]
      %v974 = vld [vmem:[#allocation3 + $0x220] sm:$0xff]
      %v975 = vld [vmem:[#allocation3 + $0x228] sm:$0xff]
      %v976 = vld [vmem:[#allocation3 + $0x230] sm:$0xff]
      %v977 = vld [vmem:[#allocation3 + $0x238] sm:$0xff]
      %v978 = vld [vmem:[#allocation3 + $0x240] sm:$0xff]
      %v979 = vld [vmem:[#allocation3 + $0x248] sm:$0xff]
      %v980 = vld [vmem:[#allocation3 + $0x250] sm:$0xff]
      %v981 = vld [vmem:[#allocation3 + $0x258] sm:$0xff]
      %v982 = vld [vmem:[#allocation3 + $0x260] sm:$0xff]
      %v983 = vld [vmem:[#allocation3 + $0x268] sm:$0xff]
      %v984 = vld [vmem:[#allocation3 + $0x270] sm:$0xff]
      %v985 = vld [vmem:[#allocation3 + $0x278] sm:$0xff]
      %v986 = vld [vmem:[#allocation3 + $0x280] sm:$0xff]
      %v987 = vld [vmem:[#allocation3 + $0x288] sm:$0xff]
      %v988 = vld [vmem:[#allocation3 + $0x290] sm:$0xff]
      %v989 = vld [vmem:[#allocation3 + $0x298] sm:$0xff]
      %v990 = vld [vmem:[#allocation3 + $0x2a0] sm:$0xff]
      %v991 = vld [vmem:[#allocation3 + $0x2a8] sm:$0xff]
      %v992 = vld [vmem:[#allocation3 + $0x2b0] sm:$0xff]
      %v993 = vld [vmem:[#allocation3 + $0x2b8] sm:$0xff]
      %v994 = vld [vmem:[#allocation3 + $0x2c0] sm:$0xff]
      %v995 = vld [vmem:[#allocation3 + $0x2c8] sm:$0xff]
      %v996 = vld [vmem:[#allocation3 + $0x2d0] sm:$0xff]
      %v997 = vld [vmem:[#allocation3 + $0x2d8] sm:$0xff]
      %v998 = vld [vmem:[#allocation3 + $0x2e0] sm:$0xff]
      %v999 = vld [vmem:[#allocation3 + $0x2e8] sm:$0xff]
      %v1000 = vld [vmem:[#allocation3 + $0x2f0] sm:$0xff]
      %v1001 = vld [vmem:[#allocation3 + $0x2f8] sm:$0xff]
      %v1002 = vld [vmem:[#allocation3 + $0x300] sm:$0xff]
      %v1003 = vld [vmem:[#allocation3 + $0x308] sm:$0xff]
      %v1004 = vld [vmem:[#allocation3 + $0x310] sm:$0xff]
      %v1005 = vld [vmem:[#allocation3 + $0x318] sm:$0xff]
      %v1006 = vld [vmem:[#allocation3 + $0x320] sm:$0xff]
      %v1007 = vld [vmem:[#allocation3 + $0x328] sm:$0xff]
      %v1008 = vld [vmem:[#allocation3 + $0x330] sm:$0xff]
      %v1009 = vld [vmem:[#allocation3 + $0x338] sm:$0xff]
      %v1010 = vld [vmem:[#allocation3 + $0x340] sm:$0xff]
      %v1011 = vld [vmem:[#allocation3 + $0x348] sm:$0xff]
      %v1012 = vld [vmem:[#allocation3 + $0x350] sm:$0xff]
      %v1013 = vld [vmem:[#allocation3 + $0x358] sm:$0xff]
      %v1014 = vld [vmem:[#allocation3 + $0x360] sm:$0xff]
      %v1015 = vld [vmem:[#allocation3 + $0x368] sm:$0xff]
      %v1016 = vld [vmem:[#allocation3 + $0x370] sm:$0xff]
      %v1017 = vld [vmem:[#allocation3 + $0x378] sm:$0xff]
      %v1018 = vld [vmem:[#allocation3 + $0x380] sm:$0xff]
      %v1019 = vld [vmem:[#allocation3 + $0x388] sm:$0xff]
      %v1020 = vld [vmem:[#allocation3 + $0x390] sm:$0xff]
      %v1021 = vld [vmem:[#allocation3 + $0x398] sm:$0xff]
      %v1022 = vld [vmem:[#allocation3 + $0x3a0] sm:$0xff]
      %v1023 = vld [vmem:[#allocation3 + $0x3a8] sm:$0xff]
      %v1024 = vld [vmem:[#allocation3 + $0x3b0] sm:$0xff]
      %v1025 = vld [vmem:[#allocation3 + $0x3b8] sm:$0xff]
      %v1026 = vld [vmem:[#allocation3 + $0x3c0] sm:$0xff]
      %v1027 = vld [vmem:[#allocation3 + $0x3c8] sm:$0xff]
      %v1028 = vld [vmem:[#allocation3 + $0x3d0] sm:$0xff]
      %v1029 = vld [vmem:[#allocation3 + $0x3d8] sm:$0xff]
      %v1030 = vld [vmem:[#allocation3 + $0x3e0] sm:$0xff]
      %v1031 = vld [vmem:[#allocation3 + $0x3e8] sm:$0xff]
      %v1032 = vld [vmem:[#allocation3 + $0x3f0] sm:$0xff]
      %v1033 = vld [vmem:[#allocation3 + $0x3f8] sm:$0xff]
      %v1034 = vld [vmem:[#allocation3 + $0x400] sm:$0xff]
      %v1035 = vld [vmem:[#allocation3 + $0x408] sm:$0xff]
      %v1036 = vld [vmem:[#allocation3 + $0x410] sm:$0xff]
      %v1037 = vld [vmem:[#allocation3 + $0x418] sm:$0xff]
      %v1038 = vld [vmem:[#allocation3 + $0x420] sm:$0xff]
      %v1039 = vld [vmem:[#allocation3 + $0x428] sm:$0xff]
      %v1040 = vld [vmem:[#allocation3 + $0x430] sm:$0xff]
      %v1041 = vld [vmem:[#allocation3 + $0x438] sm:$0xff]
      %v1042 = vld [vmem:[#allocation3 + $0x440] sm:$0xff]
      %v1043 = vld [vmem:[#allocation3 + $0x448] sm:$0xff]
      %v1044 = vld [vmem:[#allocation3 + $0x450] sm:$0xff]
      %v1045 = vld [vmem:[#allocation3 + $0x458] sm:$0xff]
      %v1046 = vld [vmem:[#allocation3 + $0x460] sm:$0xff]
      %v1047 = vld [vmem:[#allocation3 + $0x468] sm:$0xff]
      %v1048 = vld [vmem:[#allocation3 + $0x470] sm:$0xff]
      %v1049 = vld [vmem:[#allocation3 + $0x478] sm:$0xff]
      %v1050 = vld [vmem:[#allocation3 + $0x480] sm:$0xff]
      %v1051 = vld [vmem:[#allocation3 + $0x488] sm:$0xff]
      %v1052 = vld [vmem:[#allocation3 + $0x490] sm:$0xff]
      %v1053 = vld [vmem:[#allocation3 + $0x498] sm:$0xff]
      %v1054 = vld [vmem:[#allocation3 + $0x4a0] sm:$0xff]
      %v1055 = vld [vmem:[#allocation3 + $0x4a8] sm:$0xff]
      %v1056 = vld [vmem:[#allocation3 + $0x4b0] sm:$0xff]
      %v1057 = vld [vmem:[#allocation3 + $0x4b8] sm:$0xff]
      %v1058 = vld [vmem:[#allocation3 + $0x4c0] sm:$0xff]
      %v1059 = vld [vmem:[#allocation3 + $0x4c8] sm:$0xff]
      %v1060 = vld [vmem:[#allocation3 + $0x4d0] sm:$0xff]
      %v1061 = vld [vmem:[#allocation3 + $0x4d8] sm:$0xff]
      %v1062 = vld [vmem:[#allocation3 + $0x4e0] sm:$0xff]
      %v1063 = vld [vmem:[#allocation3 + $0x4e8] sm:$0xff]
      %v1064 = vld [vmem:[#allocation3 + $0x4f0] sm:$0xff]
      %v1065 = vld [vmem:[#allocation3 + $0x4f8] sm:$0xff]
      %v1066 = vld [vmem:[#allocation3 + $0x500] sm:$0xff]
      %v1067 = vld [vmem:[#allocation3 + $0x508] sm:$0xff]
      %v1068 = vld [vmem:[#allocation3 + $0x510] sm:$0xff]
      %v1069 = vld [vmem:[#allocation3 + $0x518] sm:$0xff]
      %v1070 = vld [vmem:[#allocation3 + $0x520] sm:$0xff]
      %v1071 = vld [vmem:[#allocation3 + $0x528] sm:$0xff]
      %v1072 = vld [vmem:[#allocation3 + $0x530] sm:$0xff]
      %v1073 = vld [vmem:[#allocation3 + $0x538] sm:$0xff]
      %v1074 = vld [vmem:[#allocation3 + $0x540] sm:$0xff]
      %v1075 = vld [vmem:[#allocation3 + $0x548] sm:$0xff]
      %v1076 = vld [vmem:[#allocation3 + $0x550] sm:$0xff]
      %v1077 = vld [vmem:[#allocation3 + $0x558] sm:$0xff]
      %v1078 = vld [vmem:[#allocation3 + $0x560] sm:$0xff]
      %v1079 = vld [vmem:[#allocation3 + $0x568] sm:$0xff]
      %v1080 = vld [vmem:[#allocation3 + $0x570] sm:$0xff]
      %v1081 = vld [vmem:[#allocation3 + $0x578] sm:$0xff]
      %v1082 = vld [vmem:[#allocation3 + $0x580] sm:$0xff]
      %v1083 = vld [vmem:[#allocation3 + $0x588] sm:$0xff]
      %v1084 = vld [vmem:[#allocation3 + $0x590] sm:$0xff]
      %v1085 = vld [vmem:[#allocation3 + $0x598] sm:$0xff]
      %v1086 = vld [vmem:[#allocation3 + $0x5a0] sm:$0xff]
      %v1087 = vld [vmem:[#allocation3 + $0x5a8] sm:$0xff]
      %v1088 = vld [vmem:[#allocation3 + $0x5b0] sm:$0xff]
      %v1089 = vld [vmem:[#allocation3 + $0x5b8] sm:$0xff]
      %v1090 = vld [vmem:[#allocation3 + $0x5c0] sm:$0xff]
      %v1091 = vld [vmem:[#allocation3 + $0x5c8] sm:$0xff]
      %v1092 = vld [vmem:[#allocation3 + $0x5d0] sm:$0xff]
      %v1093 = vld [vmem:[#allocation3 + $0x5d8] sm:$0xff]
      %v1094 = vld [vmem:[#allocation3 + $0x5e0] sm:$0xff]
      %v1095 = vld [vmem:[#allocation3 + $0x5e8] sm:$0xff]
      %v1096 = vld [vmem:[#allocation3 + $0x5f0] sm:$0xff]
      %v1097 = vld [vmem:[#allocation3 + $0x5f8] sm:$0xff]
      %v1098 = vld [vmem:[#allocation3 + $0x600] sm:$0xff]
      %v1099 = vld [vmem:[#allocation3 + $0x608] sm:$0xff]
      %v1100 = vld [vmem:[#allocation3 + $0x610] sm:$0xff]
      %v1101 = vld [vmem:[#allocation3 + $0x618] sm:$0xff]
      %v1102 = vld [vmem:[#allocation3 + $0x620] sm:$0xff]
      %v1103 = vld [vmem:[#allocation3 + $0x628] sm:$0xff]
      %v1104 = vld [vmem:[#allocation3 + $0x630] sm:$0xff]
      %v1105 = vld [vmem:[#allocation3 + $0x638] sm:$0xff]
      %v1106 = vld [vmem:[#allocation3 + $0x640] sm:$0xff]
      %v1107 = vld [vmem:[#allocation3 + $0x648] sm:$0xff]
      %v1108 = vld [vmem:[#allocation3 + $0x650] sm:$0xff]
      %v1109 = vld [vmem:[#allocation3 + $0x658] sm:$0xff]
      %v1110 = vld [vmem:[#allocation3 + $0x660] sm:$0xff]
      %v1111 = vld [vmem:[#allocation3 + $0x668] sm:$0xff]
      %v1112 = vld [vmem:[#allocation3 + $0x670] sm:$0xff]
      %v1113 = vld [vmem:[#allocation3 + $0x678] sm:$0xff]
      %v1114 = vld [vmem:[#allocation3 + $0x680] sm:$0xff]
      %v1115 = vld [vmem:[#allocation3 + $0x688] sm:$0xff]
      %v1116 = vld [vmem:[#allocation3 + $0x690] sm:$0xff]
      %v1117 = vld [vmem:[#allocation3 + $0x698] sm:$0xff]
      %v1118 = vld [vmem:[#allocation3 + $0x6a0] sm:$0xff]
      %v1119 = vld [vmem:[#allocation3 + $0x6a8] sm:$0xff]
      %v1120 = vld [vmem:[#allocation3 + $0x6b0] sm:$0xff]
      %v1121 = vld [vmem:[#allocation3 + $0x6b8] sm:$0xff]
      %v1122 = vld [vmem:[#allocation3 + $0x6c0] sm:$0xff]
      %v1123 = vld [vmem:[#allocation3 + $0x6c8] sm:$0xff]
      %v1124 = vld [vmem:[#allocation3 + $0x6d0] sm:$0xff]
      %v1125 = vld [vmem:[#allocation3 + $0x6d8] sm:$0xff]
      %v1126 = vld [vmem:[#allocation3 + $0x6e0] sm:$0xff]
      %v1127 = vld [vmem:[#allocation3 + $0x6e8] sm:$0xff]
      %v1128 = vld [vmem:[#allocation3 + $0x6f0] sm:$0xff]
      %v1129 = vld [vmem:[#allocation3 + $0x6f8] sm:$0xff]
      %v1130 = vld [vmem:[#allocation3 + $0x700] sm:$0xff]
      %v1131 = vld [vmem:[#allocation3 + $0x708] sm:$0xff]
      %v1132 = vld [vmem:[#allocation3 + $0x710] sm:$0xff]
      %v1133 = vld [vmem:[#allocation3 + $0x718] sm:$0xff]
      %v1134 = vld [vmem:[#allocation3 + $0x720] sm:$0xff]
      %v1135 = vld [vmem:[#allocation3 + $0x728] sm:$0xff]
      %v1136 = vld [vmem:[#allocation3 + $0x730] sm:$0xff]
      %v1137 = vld [vmem:[#allocation3 + $0x738] sm:$0xff]
      %v1138 = vld [vmem:[#allocation3 + $0x740] sm:$0xff]
      %v1139 = vld [vmem:[#allocation3 + $0x748] sm:$0xff]
      %v1140 = vld [vmem:[#allocation3 + $0x750] sm:$0xff]
      %v1141 = vld [vmem:[#allocation3 + $0x758] sm:$0xff]
      %v1142 = vld [vmem:[#allocation3 + $0x760] sm:$0xff]
      %v1143 = vld [vmem:[#allocation3 + $0x768] sm:$0xff]
      %v1144 = vld [vmem:[#allocation3 + $0x770] sm:$0xff]
      %v1145 = vld [vmem:[#allocation3 + $0x778] sm:$0xff]
      %v1146 = vld [vmem:[#allocation3 + $0x780] sm:$0xff]
      %v1147 = vld [vmem:[#allocation3 + $0x788] sm:$0xff]
      %v1148 = vld [vmem:[#allocation3 + $0x790] sm:$0xff]
      %v1149 = vld [vmem:[#allocation3 + $0x798] sm:$0xff]
      %v1150 = vld [vmem:[#allocation3 + $0x7a0] sm:$0xff]
      %v1151 = vld [vmem:[#allocation3 + $0x7a8] sm:$0xff]
      %v1152 = vld [vmem:[#allocation3 + $0x7b0] sm:$0xff]
      %v1153 = vld [vmem:[#allocation3 + $0x7b8] sm:$0xff]
      %v1154 = vld [vmem:[#allocation3 + $0x7c0] sm:$0xff]
      %v1155 = vld [vmem:[#allocation3 + $0x7c8] sm:$0xff]
      %v1156 = vld [vmem:[#allocation3 + $0x7d0] sm:$0xff]
      %v1157 = vld [vmem:[#allocation3 + $0x7d8] sm:$0xff]
      %v1158 = vld [vmem:[#allocation3 + $0x7e0] sm:$0xff]
      %v1159 = vld [vmem:[#allocation3 + $0x7e8] sm:$0xff]
      %v1160 = vld [vmem:[#allocation3 + $0x7f0] sm:$0xff]
      %v1161 = vld [vmem:[#allocation3 + $0x7f8] sm:$0xff]
      %v1162 = vld [vmem:[#allocation3 + $0x800] sm:$0xff]
      %v1163 = vld [vmem:[#allocation3 + $0x808] sm:$0xff]
      %v1164 = vld [vmem:[#allocation3 + $0x810] sm:$0xff]
      %v1165 = vld [vmem:[#allocation3 + $0x818] sm:$0xff]
      %v1166 = vld [vmem:[#allocation3 + $0x820] sm:$0xff]
      %v1167 = vld [vmem:[#allocation3 + $0x828] sm:$0xff]
      %v1168 = vld [vmem:[#allocation3 + $0x830] sm:$0xff]
      %v1169 = vld [vmem:[#allocation3 + $0x838] sm:$0xff]
      %v1170 = vld [vmem:[#allocation3 + $0x840] sm:$0xff]
      %v1171 = vld [vmem:[#allocation3 + $0x848] sm:$0xff]
      %v1172 = vld [vmem:[#allocation3 + $0x850] sm:$0xff]
      %v1173 = vld [vmem:[#allocation3 + $0x858] sm:$0xff]
      %v1174 = vld [vmem:[#allocation3 + $0x860] sm:$0xff]
      %v1175 = vld [vmem:[#allocation3 + $0x868] sm:$0xff]
      %v1176 = vld [vmem:[#allocation3 + $0x870] sm:$0xff]
      %v1177 = vld [vmem:[#allocation3 + $0x878] sm:$0xff]
      %v1178 = vld [vmem:[#allocation3 + $0x880] sm:$0xff]
      %v1179 = vld [vmem:[#allocation3 + $0x888] sm:$0xff]
      %v1180 = vld [vmem:[#allocation3 + $0x890] sm:$0xff]
      %v1181 = vld [vmem:[#allocation3 + $0x898] sm:$0xff]
      %v1182 = vld [vmem:[#allocation3 + $0x8a0] sm:$0xff]
      %v1183 = vld [vmem:[#allocation3 + $0x8a8] sm:$0xff]
      %v1184 = vld [vmem:[#allocation3 + $0x8b0] sm:$0xff]
      %v1185 = vld [vmem:[#allocation3 + $0x8b8] sm:$0xff]
      %v1186 = vld [vmem:[#allocation3 + $0x8c0] sm:$0xff]
      %v1187 = vld [vmem:[#allocation3 + $0x8c8] sm:$0xff]
      %v1188 = vld [vmem:[#allocation3 + $0x8d0] sm:$0xff]
      %v1189 = vld [vmem:[#allocation3 + $0x8d8] sm:$0xff]
      %v1190 = vld [vmem:[#allocation3 + $0x8e0] sm:$0xff]
      %v1191 = vld [vmem:[#allocation3 + $0x8e8] sm:$0xff]
      %v1192 = vld [vmem:[#allocation3 + $0x8f0] sm:$0xff]
      %v1193 = vld [vmem:[#allocation3 + $0x8f8] sm:$0xff]
      %v1194 = vld [vmem:[%s1] sm:$0xff]
      %v1195 = vld [vmem:[%s1 + $0x8] sm:$0xff]
      %v1196 = vld [vmem:[%s1 + $0x10] sm:$0xff]
      %v1197 = vld [vmem:[%s1 + $0x18] sm:$0xff]
      %v1198 = vld [vmem:[%s1 + $0x20] sm:$0xff]
      %v1199 = vld [vmem:[%s1 + $0x28] sm:$0xff]
      %v1200 = vld [vmem:[%s1 + $0x30] sm:$0xff]
      %v1201 = vld [vmem:[%s1 + $0x38] sm:$0xff]
      %v1202 = vld [vmem:[%s1 + $0x40] sm:$0xff]
      %v1203 = vld [vmem:[%s1 + $0x48] sm:$0xff]
      %v1204 = vld [vmem:[%s1 + $0x50] sm:$0xff]
      %v1205 = vld [vmem:[%s1 + $0x58] sm:$0xff]
      %v1206 = vld [vmem:[%s1 + $0x60] sm:$0xff]
      %v1207 = vld [vmem:[%s1 + $0x68] sm:$0xff]
      %v1208 = vld [vmem:[%s1 + $0x70] sm:$0xff]
      %v1209 = vld [vmem:[%s1 + $0x78] sm:$0xff]
      %v1210 = vld [vmem:[%s1 + $0x80] sm:$0xff]
      %v1211 = vld [vmem:[%s1 + $0x88] sm:$0xff]
      %v1212 = vld [vmem:[%s1 + $0x90] sm:$0xff]
      %v1213 = vld [vmem:[%s1 + $0x98] sm:$0xff]
      %v1214 = vld [vmem:[%s1 + $0xa0] sm:$0xff]
      %v1215 = vld [vmem:[%s1 + $0xa8] sm:$0xff]
      %v1216 = vld [vmem:[%s1 + $0xb0] sm:$0xff]
      %v1217 = vld [vmem:[%s1 + $0xb8] sm:$0xff]
      %v1218 = vld [vmem:[%s1 + $0xc0] sm:$0xff]
      %v1219 = vld [vmem:[%s1 + $0xc8] sm:$0xff]
      %v1220 = vld [vmem:[%s1 + $0xd0] sm:$0xff]
      %v1221 = vld [vmem:[%s1 + $0xd8] sm:$0xff]
      %v1222 = vld [vmem:[%s1 + $0xe0] sm:$0xff]
      %v1223 = vld [vmem:[%s1 + $0xe8] sm:$0xff]
      %v1224 = vld [vmem:[%s1 + $0xf0] sm:$0xff]
      %v1225 = vld [vmem:[%s1 + $0xf8] sm:$0xff]
      %v1226 = vld [vmem:[%s1 + $0x100] sm:$0xff]
      %v1227 = vld [vmem:[%s1 + $0x108] sm:$0xff]
      %v1228 = vld [vmem:[%s1 + $0x110] sm:$0xff]
      %v1229 = vld [vmem:[%s1 + $0x118] sm:$0xff]
      %v1230 = vld [vmem:[%s1 + $0x120] sm:$0xff]
      %v1231 = vld [vmem:[%s1 + $0x128] sm:$0xff]
      %v1232 = vld [vmem:[%s1 + $0x130] sm:$0xff]
      %v1233 = vld [vmem:[%s1 + $0x138] sm:$0xff]
      %v1234 = vld [vmem:[%s1 + $0x140] sm:$0xff]
      %v1235 = vld [vmem:[%s1 + $0x148] sm:$0xff]
      %v1236 = vld [vmem:[%s1 + $0x150] sm:$0xff]
      %v1237 = vld [vmem:[%s1 + $0x158] sm:$0xff]
      %v1238 = vld [vmem:[%s1 + $0x160] sm:$0xff]
      %v1239 = vld [vmem:[%s1 + $0x168] sm:$0xff]
      %v1240 = vld [vmem:[%s1 + $0x170] sm:$0xff]
      %v1241 = vld [vmem:[%s1 + $0x178] sm:$0xff]
      %v1242 = vld [vmem:[%s1 + $0x180] sm:$0xff]
      %v1243 = vld [vmem:[%s1 + $0x188] sm:$0xff]
      %v1244 = vld [vmem:[%s1 + $0x190] sm:$0xff]
      %v1245 = vld [vmem:[%s1 + $0x198] sm:$0xff]
      %v1246 = vld [vmem:[%s1 + $0x1a0] sm:$0xff]
      %v1247 = vld [vmem:[%s1 + $0x1a8] sm:$0xff]
      %v1248 = vld [vmem:[%s1 + $0x1b0] sm:$0xff]
      %v1249 = vld [vmem:[%s1 + $0x1b8] sm:$0xff]
      %v1250 = vld [vmem:[%s1 + $0x1c0] sm:$0xff]
      %v1251 = vld [vmem:[%s1 + $0x1c8] sm:$0xff]
      %v1252 = vld [vmem:[%s1 + $0x1d0] sm:$0xff]
      %v1253 = vld [vmem:[%s1 + $0x1d8] sm:$0xff]
      %v1254 = vld [vmem:[%s1 + $0x1e0] sm:$0xff]
      %v1255 = vld [vmem:[%s1 + $0x1e8] sm:$0xff]
      %v1256 = vld [vmem:[%s1 + $0x1f0] sm:$0xff]
      %v1257 = vld [vmem:[%s1 + $0x1f8] sm:$0xff]
      %v1258 = vld [vmem:[%s1 + $0x200] sm:$0xff]
      %v1259 = vld [vmem:[%s1 + $0x208] sm:$0xff]
      %v1260 = vld [vmem:[%s1 + $0x210] sm:$0xff]
      %v1261 = vld [vmem:[%s1 + $0x218] sm:$0xff]
      %v1262 = vld [vmem:[%s1 + $0x220] sm:$0xff]
      %v1263 = vld [vmem:[%s1 + $0x228] sm:$0xff]
      %v1264 = vld [vmem:[%s1 + $0x230] sm:$0xff]
      %v1265 = vld [vmem:[%s1 + $0x238] sm:$0xff]
      %v1266 = vld [vmem:[%s1 + $0x240] sm:$0xff]
      %v1267 = vld [vmem:[%s1 + $0x248] sm:$0xff]
      %v1268 = vld [vmem:[%s1 + $0x250] sm:$0xff]
      %v1269 = vld [vmem:[%s1 + $0x258] sm:$0xff]
      %v1270 = vld [vmem:[%s1 + $0x260] sm:$0xff]
      %v1271 = vld [vmem:[%s1 + $0x268] sm:$0xff]
      %v1272 = vld [vmem:[%s1 + $0x270] sm:$0xff]
      %v1273 = vld [vmem:[%s1 + $0x278] sm:$0xff]
      %v1274 = vld [vmem:[%s1 + $0x280] sm:$0xff]
      %v1275 = vld [vmem:[%s1 + $0x288] sm:$0xff]
      %v1276 = vld [vmem:[%s1 + $0x290] sm:$0xff]
      %v1277 = vld [vmem:[%s1 + $0x298] sm:$0xff]
      %v1278 = vld [vmem:[%s1 + $0x2a0] sm:$0xff]
      %v1279 = vld [vmem:[%s1 + $0x2a8] sm:$0xff]
      %v1280 = vld [vmem:[%s1 + $0x2b0] sm:$0xff]
      %v1281 = vld [vmem:[%s1 + $0x2b8] sm:$0xff]
      %v1282 = vld [vmem:[%s1 + $0x2c0] sm:$0xff]
      %v1283 = vld [vmem:[%s1 + $0x2c8] sm:$0xff]
      %v1284 = vld [vmem:[%s1 + $0x2d0] sm:$0xff]
      %v1285 = vld [vmem:[%s1 + $0x2d8] sm:$0xff]
      %v1286 = vld [vmem:[%s1 + $0x2e0] sm:$0xff]
      %v1287 = vld [vmem:[%s1 + $0x2e8] sm:$0xff]
      %v1288 = vld [vmem:[%s1 + $0x2f0] sm:$0xff]
      %v1289 = vld [vmem:[%s1 + $0x2f8] sm:$0xff]
      %v1290 = vld [vmem:[%s1 + $0x300] sm:$0xff]
      %v1291 = vld [vmem:[%s1 + $0x308] sm:$0xff]
      %v1292 = vld [vmem:[%s1 + $0x310] sm:$0xff]
      %v1293 = vld [vmem:[%s1 + $0x318] sm:$0xff]
      %v1294 = vld [vmem:[%s1 + $0x320] sm:$0xff]
      %v1295 = vld [vmem:[%s1 + $0x328] sm:$0xff]
      %v1296 = vld [vmem:[%s1 + $0x330] sm:$0xff]
      %v1297 = vld [vmem:[%s1 + $0x338] sm:$0xff]
      %v1298 = vld [vmem:[%s1 + $0x340] sm:$0xff]
      %v1299 = vld [vmem:[%s1 + $0x348] sm:$0xff]
      %v1300 = vld [vmem:[%s1 + $0x350] sm:$0xff]
      %v1301 = vld [vmem:[%s1 + $0x358] sm:$0xff]
      %v1302 = vld [vmem:[%s1 + $0x360] sm:$0xff]
      %v1303 = vld [vmem:[%s1 + $0x368] sm:$0xff]
      %v1304 = vld [vmem:[%s1 + $0x370] sm:$0xff]
      %v1305 = vld [vmem:[%s1 + $0x378] sm:$0xff]
      %v1306 = vld [vmem:[%s1 + $0x380] sm:$0xff]
      %v1307 = vld [vmem:[%s1 + $0x388] sm:$0xff]
      %v1308 = vld [vmem:[%s1 + $0x390] sm:$0xff]
      %v1309 = vld [vmem:[%s1 + $0x398] sm:$0xff]
      %v1310 = vld [vmem:[%s1 + $0x3a0] sm:$0xff]
      %v1311 = vld [vmem:[%s1 + $0x3a8] sm:$0xff]
      %v1312 = vld [vmem:[%s1 + $0x3b0] sm:$0xff]
      %v1313 = vld [vmem:[%s1 + $0x3b8] sm:$0xff]
      %v1314 = vld [vmem:[%s1 + $0x3c0] sm:$0xff]
      %v1315 = vld [vmem:[%s1 + $0x3c8] sm:$0xff]
      %v1316 = vld [vmem:[%s1 + $0x3d0] sm:$0xff]
      %v1317 = vld [vmem:[%s1 + $0x3d8] sm:$0xff]
      %v1318 = vld [vmem:[%s1 + $0x3e0] sm:$0xff]
      %v1319 = vld [vmem:[%s1 + $0x3e8] sm:$0xff]
      %v1320 = vld [vmem:[%s1 + $0x3f0] sm:$0xff]
      %v1321 = vld [vmem:[%s1 + $0x3f8] sm:$0xff]
      %v1322 = vld [vmem:[%s1 + $0x400] sm:$0xff]
      %v1323 = vld [vmem:[%s1 + $0x408] sm:$0xff]
      %v1324 = vld [vmem:[%s1 + $0x410] sm:$0xff]
      %v1325 = vld [vmem:[%s1 + $0x418] sm:$0xff]
      %v1326 = vld [vmem:[%s1 + $0x420] sm:$0xff]
      %v1327 = vld [vmem:[%s1 + $0x428] sm:$0xff]
      %v1328 = vld [vmem:[%s1 + $0x430] sm:$0xff]
      %v1329 = vld [vmem:[%s1 + $0x438] sm:$0xff]
      %v1330 = vld [vmem:[%s1 + $0x440] sm:$0xff]
      %v1331 = vld [vmem:[%s1 + $0x448] sm:$0xff]
      %v1332 = vld [vmem:[%s1 + $0x450] sm:$0xff]
      %v1333 = vld [vmem:[%s1 + $0x458] sm:$0xff]
      %v1334 = vld [vmem:[%s1 + $0x460] sm:$0xff]
      %v1335 = vld [vmem:[%s1 + $0x468] sm:$0xff]
      %v1336 = vld [vmem:[%s1 + $0x470] sm:$0xff]
      %v1337 = vld [vmem:[%s1 + $0x478] sm:$0xff]
      %v1338 = vld [vmem:[%s2] sm:$0x1]
      %v1340 = vperm.slane %v1338, 0
      %1342 = vmatpush.msra.mxu0 %v1209
      %1343 = vmatpush.msra.mxu0 %v1208
      %1344 = vmatpush.msra.mxu0 %v1207
      %1345 = vmatpush.msra.mxu0 %v1206
      %1346 = vmatpush.msra.mxu0 %v1205
      %1347 = vmatpush.msra.mxu0 %v1204
      %1348 = vmatpush.msra.mxu0 %v1203
      %1349 = vmatpush.msra.mxu0 %v1202
      %1350 = vmatpush.msra.mxu0 %v1201
      %1351 = vmatpush.msra.mxu0 %v1200
      %1352 = vmatpush.msra.mxu0 %v1199
      %1353 = vmatpush.msra.mxu0 %v1198
      %1354 = vmatpush.msra.mxu0 %v1197
      %1355 = vmatpush.msra.mxu0 %v1196
      %1356 = vmatpush.msra.mxu0 %v1195
      %1357 = vmatpush.msra.mxu0 %v1194
      %1358 = vmatmul.f32.gmra.mxu0 %v906
      %v1359 = vpop.f32.mrf.mxu0
      %v1360 = vadd.f32 %v1340, %v1359
      %1361 = vmatmul.f32.gmra.mxu0 %v915
      %v1362 = vpop.f32.mrf.mxu0
      %v1363 = vadd.f32 %v1340, %v1362
      %1364 = vmatmul.f32.gmra.mxu0 %v924
      %v1365 = vpop.f32.mrf.mxu0
      %v1366 = vadd.f32 %v1340, %v1365
      %1367 = vmatmul.f32.gmra.mxu0 %v933
      %v1368 = vpop.f32.mrf.mxu0
      %v1369 = vadd.f32 %v1340, %v1368
      %1370 = vmatmul.f32.gmra.mxu0 %v942
      %v1371 = vpop.f32.mrf.mxu0
      %v1372 = vadd.f32 %v1340, %v1371
      %1373 = vmatmul.f32.gmra.mxu0 %v951
      %v1374 = vpop.f32.mrf.mxu0
      %v1375 = vadd.f32 %v1340, %v1374
      %1376 = vmatmul.f32.gmra.mxu0 %v960
      %v1377 = vpop.f32.mrf.mxu0
      %v1378 = vadd.f32 %v1340, %v1377
      %1379 = vmatmul.f32.gmra.mxu0 %v969
      %v1380 = vpop.f32.mrf.mxu0
      %v1381 = vadd.f32 %v1340, %v1380
      %1382 = vmatmul.f32.gmra.mxu0 %v978
      %v1383 = vpop.f32.mrf.mxu0
      %v1384 = vadd.f32 %v1340, %v1383
      %1385 = vmatmul.f32.gmra.mxu0 %v987
      %v1386 = vpop.f32.mrf.mxu0
      %v1387 = vadd.f32 %v1340, %v1386
      %1388 = vmatmul.f32.gmra.mxu0 %v996
      %v1389 = vpop.f32.mrf.mxu0
      %v1390 = vadd.f32 %v1340, %v1389
      %1391 = vmatmul.f32.gmra.mxu0 %v1005
      %v1392 = vpop.f32.mrf.mxu0
      %v1393 = vadd.f32 %v1340, %v1392
      %1394 = vmatmul.f32.gmra.mxu0 %v1014
      %v1395 = vpop.f32.mrf.mxu0
      %v1396 = vadd.f32 %v1340, %v1395
      %1397 = vmatmul.f32.gmra.mxu0 %v1023
      %v1398 = vpop.f32.mrf.mxu0
      %v1399 = vadd.f32 %v1340, %v1398
      %1400 = vmatmul.f32.gmra.mxu0 %v1032
      %v1401 = vpop.f32.mrf.mxu0
      %v1402 = vadd.f32 %v1340, %v1401
      %1403 = vmatmul.f32.gmra.mxu0 %v1041
      %v1404 = vpop.f32.mrf.mxu0
      %v1405 = vadd.f32 %v1340, %v1404
      %1406 = vmatmul.f32.gmra.mxu0 %v1050
      %v1407 = vpop.f32.mrf.mxu0
      %v1408 = vadd.f32 %v1340, %v1407
      %1409 = vmatmul.f32.gmra.mxu0 %v1059
      %v1410 = vpop.f32.mrf.mxu0
      %v1411 = vadd.f32 %v1340, %v1410
      %1412 = vmatmul.f32.gmra.mxu0 %v1068
      %v1413 = vpop.f32.mrf.mxu0
      %v1414 = vadd.f32 %v1340, %v1413
      %1415 = vmatmul.f32.gmra.mxu0 %v1077
      %v1416 = vpop.f32.mrf.mxu0
      %v1417 = vadd.f32 %v1340, %v1416
      %1418 = vmatmul.f32.gmra.mxu0 %v1086
      %v1419 = vpop.f32.mrf.mxu0
      %v1420 = vadd.f32 %v1340, %v1419
      %1421 = vmatmul.f32.gmra.mxu0 %v1095
      %v1422 = vpop.f32.mrf.mxu0
      %v1423 = vadd.f32 %v1340, %v1422
      %1424 = vmatmul.f32.gmra.mxu0 %v1104
      %v1425 = vpop.f32.mrf.mxu0
      %v1426 = vadd.f32 %v1340, %v1425
      %1427 = vmatmul.f32.gmra.mxu0 %v1113
      %v1428 = vpop.f32.mrf.mxu0
      %v1429 = vadd.f32 %v1340, %v1428
      %1430 = vmatmul.f32.gmra.mxu0 %v1122
      %v1431 = vpop.f32.mrf.mxu0
      %v1432 = vadd.f32 %v1340, %v1431
      %1433 = vmatmul.f32.gmra.mxu0 %v1131
      %v1434 = vpop.f32.mrf.mxu0
      %v1435 = vadd.f32 %v1340, %v1434
      %1436 = vmatmul.f32.gmra.mxu0 %v1140
      %v1437 = vpop.f32.mrf.mxu0
      %v1438 = vadd.f32 %v1340, %v1437
      %1439 = vmatmul.f32.gmra.mxu0 %v1149
      %v1440 = vpop.f32.mrf.mxu0
      %v1441 = vadd.f32 %v1340, %v1440
      %1442 = vmatmul.f32.gmra.mxu0 %v1158
      %v1443 = vpop.f32.mrf.mxu0
      %v1444 = vadd.f32 %v1340, %v1443
      %1445 = vmatmul.f32.gmra.mxu0 %v1167
      %v1446 = vpop.f32.mrf.mxu0
      %v1447 = vadd.f32 %v1340, %v1446
      %1448 = vmatmul.f32.gmra.mxu0 %v1176
      %v1449 = vpop.f32.mrf.mxu0
      %v1450 = vadd.f32 %v1340, %v1449
      %1451 = vmatmul.f32.gmra.mxu0 %v1185
      %v1452 = vpop.f32.mrf.mxu0
      %v1453 = vadd.f32 %v1340, %v1452
      %1454 = vdwg.mxu0
      %1455 = vmatpush.msra.mxu0 %v1225
      %1456 = vmatpush.msra.mxu0 %v1224
      %1457 = vmatpush.msra.mxu0 %v1223
      %1458 = vmatpush.msra.mxu0 %v1222
      %1459 = vmatpush.msra.mxu0 %v1221
      %1460 = vmatpush.msra.mxu0 %v1220
      %1461 = vmatpush.msra.mxu0 %v1219
      %1462 = vmatpush.msra.mxu0 %v1218
      %1463 = vmatpush.msra.mxu0 %v1217
      %1464 = vmatpush.msra.mxu0 %v1216
      %1465 = vmatpush.msra.mxu0 %v1215
      %1466 = vmatpush.msra.mxu0 %v1214
      %1467 = vmatpush.msra.mxu0 %v1213
      %1468 = vmatpush.msra.mxu0 %v1212
      %1469 = vmatpush.msra.mxu0 %v1211
      %1470 = vmatpush.msra.mxu0 %v1210
      %1471 = vmatmul.f32.gmra.mxu0 %v907
      %v1472 = vpop.f32.mrf.mxu0
      %v1473 = vadd.f32 %v1360, %v1472
      %1474 = vmatmul.f32.gmra.mxu0 %v916
      %v1475 = vpop.f32.mrf.mxu0
      %v1476 = vadd.f32 %v1363, %v1475
      %1477 = vmatmul.f32.gmra.mxu0 %v925
      %v1478 = vpop.f32.mrf.mxu0
      %v1479 = vadd.f32 %v1366, %v1478
      %1480 = vmatmul.f32.gmra.mxu0 %v934
      %v1481 = vpop.f32.mrf.mxu0
      %v1482 = vadd.f32 %v1369, %v1481
      %1483 = vmatmul.f32.gmra.mxu0 %v943
      %v1484 = vpop.f32.mrf.mxu0
      %v1485 = vadd.f32 %v1372, %v1484
      %1486 = vmatmul.f32.gmra.mxu0 %v952
      %v1487 = vpop.f32.mrf.mxu0
      %v1488 = vadd.f32 %v1375, %v1487
      %1489 = vmatmul.f32.gmra.mxu0 %v961
      %v1490 = vpop.f32.mrf.mxu0
      %v1491 = vadd.f32 %v1378, %v1490
      %1492 = vmatmul.f32.gmra.mxu0 %v970
      %v1493 = vpop.f32.mrf.mxu0
      %v1494 = vadd.f32 %v1381, %v1493
      %1495 = vmatmul.f32.gmra.mxu0 %v979
      %v1496 = vpop.f32.mrf.mxu0
      %v1497 = vadd.f32 %v1384, %v1496
      %1498 = vmatmul.f32.gmra.mxu0 %v988
      %v1499 = vpop.f32.mrf.mxu0
      %v1500 = vadd.f32 %v1387, %v1499
      %1501 = vmatmul.f32.gmra.mxu0 %v997
      %v1502 = vpop.f32.mrf.mxu0
      %v1503 = vadd.f32 %v1390, %v1502
      %1504 = vmatmul.f32.gmra.mxu0 %v1006
      %v1505 = vpop.f32.mrf.mxu0
      %v1506 = vadd.f32 %v1393, %v1505
      %1507 = vmatmul.f32.gmra.mxu0 %v1015
      %v1508 = vpop.f32.mrf.mxu0
      %v1509 = vadd.f32 %v1396, %v1508
      %1510 = vmatmul.f32.gmra.mxu0 %v1024
      %v1511 = vpop.f32.mrf.mxu0
      %v1512 = vadd.f32 %v1399, %v1511
      %1513 = vmatmul.f32.gmra.mxu0 %v1033
      %v1514 = vpop.f32.mrf.mxu0
      %v1515 = vadd.f32 %v1402, %v1514
      %1516 = vmatmul.f32.gmra.mxu0 %v1042
      %v1517 = vpop.f32.mrf.mxu0
      %v1518 = vadd.f32 %v1405, %v1517
      %1519 = vmatmul.f32.gmra.mxu0 %v1051
      %v1520 = vpop.f32.mrf.mxu0
      %v1521 = vadd.f32 %v1408, %v1520
      %1522 = vmatmul.f32.gmra.mxu0 %v1060
      %v1523 = vpop.f32.mrf.mxu0
      %v1524 = vadd.f32 %v1411, %v1523
      %1525 = vmatmul.f32.gmra.mxu0 %v1069
      %v1526 = vpop.f32.mrf.mxu0
      %v1527 = vadd.f32 %v1414, %v1526
      %1528 = vmatmul.f32.gmra.mxu0 %v1078
      %v1529 = vpop.f32.mrf.mxu0
      %v1530 = vadd.f32 %v1417, %v1529
      %1531 = vmatmul.f32.gmra.mxu0 %v1087
      %v1532 = vpop.f32.mrf.mxu0
      %v1533 = vadd.f32 %v1420, %v1532
      %1534 = vmatmul.f32.gmra.mxu0 %v1096
      %v1535 = vpop.f32.mrf.mxu0
      %v1536 = vadd.f32 %v1423, %v1535
      %1537 = vmatmul.f32.gmra.mxu0 %v1105
      %v1538 = vpop.f32.mrf.mxu0
      %v1539 = vadd.f32 %v1426, %v1538
      %1540 = vmatmul.f32.gmra.mxu0 %v1114
      %v1541 = vpop.f32.mrf.mxu0
      %v1542 = vadd.f32 %v1429, %v1541
      %1543 = vmatmul.f32.gmra.mxu0 %v1123
      %v1544 = vpop.f32.mrf.mxu0
      %v1545 = vadd.f32 %v1432, %v1544
      %1546 = vmatmul.f32.gmra.mxu0 %v1132
      %v1547 = vpop.f32.mrf.mxu0
      %v1548 = vadd.f32 %v1435, %v1547
      %1549 = vmatmul.f32.gmra.mxu0 %v1141
      %v1550 = vpop.f32.mrf.mxu0
      %v1551 = vadd.f32 %v1438, %v1550
      %1552 = vmatmul.f32.gmra.mxu0 %v1150
      %v1553 = vpop.f32.mrf.mxu0
      %v1554 = vadd.f32 %v1441, %v1553
      %1555 = vmatmul.f32.gmra.mxu0 %v1159
      %v1556 = vpop.f32.mrf.mxu0
      %v1557 = vadd.f32 %v1444, %v1556
      %1558 = vmatmul.f32.gmra.mxu0 %v1168
      %v1559 = vpop.f32.mrf.mxu0
      %v1560 = vadd.f32 %v1447, %v1559
      %1561 = vmatmul.f32.gmra.mxu0 %v1177
      %v1562 = vpop.f32.mrf.mxu0
      %v1563 = vadd.f32 %v1450, %v1562
      %1564 = vmatmul.f32.gmra.mxu0 %v1186
      %v1565 = vpop.f32.mrf.mxu0
      %v1566 = vadd.f32 %v1453, %v1565
      %1567 = vdwg.mxu0
      %1568 = vmatpush.msra.mxu0 %v1241
      %1569 = vmatpush.msra.mxu0 %v1240
      %1570 = vmatpush.msra.mxu0 %v1239
      %1571 = vmatpush.msra.mxu0 %v1238
      %1572 = vmatpush.msra.mxu0 %v1237
      %1573 = vmatpush.msra.mxu0 %v1236
      %1574 = vmatpush.msra.mxu0 %v1235
      %1575 = vmatpush.msra.mxu0 %v1234
      %1576 = vmatpush.msra.mxu0 %v1233
      %1577 = vmatpush.msra.mxu0 %v1232
      %1578 = vmatpush.msra.mxu0 %v1231
      %1579 = vmatpush.msra.mxu0 %v1230
      %1580 = vmatpush.msra.mxu0 %v1229
      %1581 = vmatpush.msra.mxu0 %v1228
      %1582 = vmatpush.msra.mxu0 %v1227
      %1583 = vmatpush.msra.mxu0 %v1226
      %1584 = vmatmul.f32.gmra.mxu0 %v908
      %v1585 = vpop.f32.mrf.mxu0
      %v1586 = vadd.f32 %v1473, %v1585
      %1587 = vmatmul.f32.gmra.mxu0 %v917
      %v1588 = vpop.f32.mrf.mxu0
      %v1589 = vadd.f32 %v1476, %v1588
      %1590 = vmatmul.f32.gmra.mxu0 %v926
      %v1591 = vpop.f32.mrf.mxu0
      %v1592 = vadd.f32 %v1479, %v1591
      %1593 = vmatmul.f32.gmra.mxu0 %v935
      %v1594 = vpop.f32.mrf.mxu0
      %v1595 = vadd.f32 %v1482, %v1594
      %1596 = vmatmul.f32.gmra.mxu0 %v944
      %v1597 = vpop.f32.mrf.mxu0
      %v1598 = vadd.f32 %v1485, %v1597
      %1599 = vmatmul.f32.gmra.mxu0 %v953
      %v1600 = vpop.f32.mrf.mxu0
      %v1601 = vadd.f32 %v1488, %v1600
      %1602 = vmatmul.f32.gmra.mxu0 %v962
      %v1603 = vpop.f32.mrf.mxu0
      %v1604 = vadd.f32 %v1491, %v1603
      %1605 = vmatmul.f32.gmra.mxu0 %v971
      %v1606 = vpop.f32.mrf.mxu0
      %v1607 = vadd.f32 %v1494, %v1606
      %1608 = vmatmul.f32.gmra.mxu0 %v980
      %v1609 = vpop.f32.mrf.mxu0
      %v1610 = vadd.f32 %v1497, %v1609
      %1611 = vmatmul.f32.gmra.mxu0 %v989
      %v1612 = vpop.f32.mrf.mxu0
      %v1613 = vadd.f32 %v1500, %v1612
      %1614 = vmatmul.f32.gmra.mxu0 %v998
      %v1615 = vpop.f32.mrf.mxu0
      %v1616 = vadd.f32 %v1503, %v1615
      %1617 = vmatmul.f32.gmra.mxu0 %v1007
      %v1618 = vpop.f32.mrf.mxu0
      %v1619 = vadd.f32 %v1506, %v1618
      %1620 = vmatmul.f32.gmra.mxu0 %v1016
      %v1621 = vpop.f32.mrf.mxu0
      %v1622 = vadd.f32 %v1509, %v1621
      %1623 = vmatmul.f32.gmra.mxu0 %v1025
      %v1624 = vpop.f32.mrf.mxu0
      %v1625 = vadd.f32 %v1512, %v1624
      %1626 = vmatmul.f32.gmra.mxu0 %v1034
      %v1627 = vpop.f32.mrf.mxu0
      %v1628 = vadd.f32 %v1515, %v1627
      %1629 = vmatmul.f32.gmra.mxu0 %v1043
      %v1630 = vpop.f32.mrf.mxu0
      %v1631 = vadd.f32 %v1518, %v1630
      %1632 = vmatmul.f32.gmra.mxu0 %v1052
      %v1633 = vpop.f32.mrf.mxu0
      %v1634 = vadd.f32 %v1521, %v1633
      %1635 = vmatmul.f32.gmra.mxu0 %v1061
      %v1636 = vpop.f32.mrf.mxu0
      %v1637 = vadd.f32 %v1524, %v1636
      %1638 = vmatmul.f32.gmra.mxu0 %v1070
      %v1639 = vpop.f32.mrf.mxu0
      %v1640 = vadd.f32 %v1527, %v1639
      %1641 = vmatmul.f32.gmra.mxu0 %v1079
      %v1642 = vpop.f32.mrf.mxu0
      %v1643 = vadd.f32 %v1530, %v1642
      %1644 = vmatmul.f32.gmra.mxu0 %v1088
      %v1645 = vpop.f32.mrf.mxu0
      %v1646 = vadd.f32 %v1533, %v1645
      %1647 = vmatmul.f32.gmra.mxu0 %v1097
      %v1648 = vpop.f32.mrf.mxu0
      %v1649 = vadd.f32 %v1536, %v1648
      %1650 = vmatmul.f32.gmra.mxu0 %v1106
      %v1651 = vpop.f32.mrf.mxu0
      %v1652 = vadd.f32 %v1539, %v1651
      %1653 = vmatmul.f32.gmra.mxu0 %v1115
      %v1654 = vpop.f32.mrf.mxu0
      %v1655 = vadd.f32 %v1542, %v1654
      %1656 = vmatmul.f32.gmra.mxu0 %v1124
      %v1657 = vpop.f32.mrf.mxu0
      %v1658 = vadd.f32 %v1545, %v1657
      %1659 = vmatmul.f32.gmra.mxu0 %v1133
      %v1660 = vpop.f32.mrf.mxu0
      %v1661 = vadd.f32 %v1548, %v1660
      %1662 = vmatmul.f32.gmra.mxu0 %v1142
      %v1663 = vpop.f32.mrf.mxu0
      %v1664 = vadd.f32 %v1551, %v1663
      %1665 = vmatmul.f32.gmra.mxu0 %v1151
      %v1666 = vpop.f32.mrf.mxu0
      %v1667 = vadd.f32 %v1554, %v1666
      %1668 = vmatmul.f32.gmra.mxu0 %v1160
      %v1669 = vpop.f32.mrf.mxu0
      %v1670 = vadd.f32 %v1557, %v1669
      %1671 = vmatmul.f32.gmra.mxu0 %v1169
      %v1672 = vpop.f32.mrf.mxu0
      %v1673 = vadd.f32 %v1560, %v1672
      %1674 = vmatmul.f32.gmra.mxu0 %v1178
      %v1675 = vpop.f32.mrf.mxu0
      %v1676 = vadd.f32 %v1563, %v1675
      %1677 = vmatmul.f32.gmra.mxu0 %v1187
      %v1678 = vpop.f32.mrf.mxu0
      %v1679 = vadd.f32 %v1566, %v1678
      %1680 = vdwg.mxu0
      %1681 = vmatpush.msra.mxu0 %v1257
      %1682 = vmatpush.msra.mxu0 %v1256
      %1683 = vmatpush.msra.mxu0 %v1255
      %1684 = vmatpush.msra.mxu0 %v1254
      %1685 = vmatpush.msra.mxu0 %v1253
      %1686 = vmatpush.msra.mxu0 %v1252
      %1687 = vmatpush.msra.mxu0 %v1251
      %1688 = vmatpush.msra.mxu0 %v1250
      %1689 = vmatpush.msra.mxu0 %v1249
      %1690 = vmatpush.msra.mxu0 %v1248
      %1691 = vmatpush.msra.mxu0 %v1247
      %1692 = vmatpush.msra.mxu0 %v1246
      %1693 = vmatpush.msra.mxu0 %v1245
      %1694 = vmatpush.msra.mxu0 %v1244
      %1695 = vmatpush.msra.mxu0 %v1243
      %1696 = vmatpush.msra.mxu0 %v1242
      %1697 = vmatmul.f32.gmra.mxu0 %v909
      %v1698 = vpop.f32.mrf.mxu0
      %v1699 = vadd.f32 %v1586, %v1698
      %1700 = vmatmul.f32.gmra.mxu0 %v918
      %v1701 = vpop.f32.mrf.mxu0
      %v1702 = vadd.f32 %v1589, %v1701
      %1703 = vmatmul.f32.gmra.mxu0 %v927
      %v1704 = vpop.f32.mrf.mxu0
      %v1705 = vadd.f32 %v1592, %v1704
      %1706 = vmatmul.f32.gmra.mxu0 %v936
      %v1707 = vpop.f32.mrf.mxu0
      %v1708 = vadd.f32 %v1595, %v1707
      %1709 = vmatmul.f32.gmra.mxu0 %v945
      %v1710 = vpop.f32.mrf.mxu0
      %v1711 = vadd.f32 %v1598, %v1710
      %1712 = vmatmul.f32.gmra.mxu0 %v954
      %v1713 = vpop.f32.mrf.mxu0
      %v1714 = vadd.f32 %v1601, %v1713
      %1715 = vmatmul.f32.gmra.mxu0 %v963
      %v1716 = vpop.f32.mrf.mxu0
      %v1717 = vadd.f32 %v1604, %v1716
      %1718 = vmatmul.f32.gmra.mxu0 %v972
      %v1719 = vpop.f32.mrf.mxu0
      %v1720 = vadd.f32 %v1607, %v1719
      %1721 = vmatmul.f32.gmra.mxu0 %v981
      %v1722 = vpop.f32.mrf.mxu0
      %v1723 = vadd.f32 %v1610, %v1722
      %1724 = vmatmul.f32.gmra.mxu0 %v990
      %v1725 = vpop.f32.mrf.mxu0
      %v1726 = vadd.f32 %v1613, %v1725
      %1727 = vmatmul.f32.gmra.mxu0 %v999
      %v1728 = vpop.f32.mrf.mxu0
      %v1729 = vadd.f32 %v1616, %v1728
      %1730 = vmatmul.f32.gmra.mxu0 %v1008
      %v1731 = vpop.f32.mrf.mxu0
      %v1732 = vadd.f32 %v1619, %v1731
      %1733 = vmatmul.f32.gmra.mxu0 %v1017
      %v1734 = vpop.f32.mrf.mxu0
      %v1735 = vadd.f32 %v1622, %v1734
      %1736 = vmatmul.f32.gmra.mxu0 %v1026
      %v1737 = vpop.f32.mrf.mxu0
      %v1738 = vadd.f32 %v1625, %v1737
      %1739 = vmatmul.f32.gmra.mxu0 %v1035
      %v1740 = vpop.f32.mrf.mxu0
      %v1741 = vadd.f32 %v1628, %v1740
      %1742 = vmatmul.f32.gmra.mxu0 %v1044
      %v1743 = vpop.f32.mrf.mxu0
      %v1744 = vadd.f32 %v1631, %v1743
      %1745 = vmatmul.f32.gmra.mxu0 %v1053
      %v1746 = vpop.f32.mrf.mxu0
      %v1747 = vadd.f32 %v1634, %v1746
      %1748 = vmatmul.f32.gmra.mxu0 %v1062
      %v1749 = vpop.f32.mrf.mxu0
      %v1750 = vadd.f32 %v1637, %v1749
      %1751 = vmatmul.f32.gmra.mxu0 %v1071
      %v1752 = vpop.f32.mrf.mxu0
      %v1753 = vadd.f32 %v1640, %v1752
      %1754 = vmatmul.f32.gmra.mxu0 %v1080
      %v1755 = vpop.f32.mrf.mxu0
      %v1756 = vadd.f32 %v1643, %v1755
      %1757 = vmatmul.f32.gmra.mxu0 %v1089
      %v1758 = vpop.f32.mrf.mxu0
      %v1759 = vadd.f32 %v1646, %v1758
      %1760 = vmatmul.f32.gmra.mxu0 %v1098
      %v1761 = vpop.f32.mrf.mxu0
      %v1762 = vadd.f32 %v1649, %v1761
      %1763 = vmatmul.f32.gmra.mxu0 %v1107
      %v1764 = vpop.f32.mrf.mxu0
      %v1765 = vadd.f32 %v1652, %v1764
      %1766 = vmatmul.f32.gmra.mxu0 %v1116
      %v1767 = vpop.f32.mrf.mxu0
      %v1768 = vadd.f32 %v1655, %v1767
      %1769 = vmatmul.f32.gmra.mxu0 %v1125
      %v1770 = vpop.f32.mrf.mxu0
      %v1771 = vadd.f32 %v1658, %v1770
      %1772 = vmatmul.f32.gmra.mxu0 %v1134
      %v1773 = vpop.f32.mrf.mxu0
      %v1774 = vadd.f32 %v1661, %v1773
      %1775 = vmatmul.f32.gmra.mxu0 %v1143
      %v1776 = vpop.f32.mrf.mxu0
      %v1777 = vadd.f32 %v1664, %v1776
      %1778 = vmatmul.f32.gmra.mxu0 %v1152
      %v1779 = vpop.f32.mrf.mxu0
      %v1780 = vadd.f32 %v1667, %v1779
      %1781 = vmatmul.f32.gmra.mxu0 %v1161
      %v1782 = vpop.f32.mrf.mxu0
      %v1783 = vadd.f32 %v1670, %v1782
      %1784 = vmatmul.f32.gmra.mxu0 %v1170
      %v1785 = vpop.f32.mrf.mxu0
      %v1786 = vadd.f32 %v1673, %v1785
      %1787 = vmatmul.f32.gmra.mxu0 %v1179
      %v1788 = vpop.f32.mrf.mxu0
      %v1789 = vadd.f32 %v1676, %v1788
      %1790 = vmatmul.f32.gmra.mxu0 %v1188
      %v1791 = vpop.f32.mrf.mxu0
      %v1792 = vadd.f32 %v1679, %v1791
      %1793 = vdwg.mxu0
      %1794 = vmatpush.msra.mxu0 %v1273
      %1795 = vmatpush.msra.mxu0 %v1272
      %1796 = vmatpush.msra.mxu0 %v1271
      %1797 = vmatpush.msra.mxu0 %v1270
      %1798 = vmatpush.msra.mxu0 %v1269
      %1799 = vmatpush.msra.mxu0 %v1268
      %1800 = vmatpush.msra.mxu0 %v1267
      %1801 = vmatpush.msra.mxu0 %v1266
      %1802 = vmatpush.msra.mxu0 %v1265
      %1803 = vmatpush.msra.mxu0 %v1264
      %1804 = vmatpush.msra.mxu0 %v1263
      %1805 = vmatpush.msra.mxu0 %v1262
      %1806 = vmatpush.msra.mxu0 %v1261
      %1807 = vmatpush.msra.mxu0 %v1260
      %1808 = vmatpush.msra.mxu0 %v1259
      %1809 = vmatpush.msra.mxu0 %v1258
      %1810 = vmatmul.f32.gmra.mxu0 %v910
      %v1811 = vpop.f32.mrf.mxu0
      %v1812 = vadd.f32 %v1699, %v1811
      %1813 = vmatmul.f32.gmra.mxu0 %v919
      %v1814 = vpop.f32.mrf.mxu0
      %v1815 = vadd.f32 %v1702, %v1814
      %1816 = vmatmul.f32.gmra.mxu0 %v928
      %v1817 = vpop.f32.mrf.mxu0
      %v1818 = vadd.f32 %v1705, %v1817
      %1819 = vmatmul.f32.gmra.mxu0 %v937
      %v1820 = vpop.f32.mrf.mxu0
      %v1821 = vadd.f32 %v1708, %v1820
      %1822 = vmatmul.f32.gmra.mxu0 %v946
      %v1823 = vpop.f32.mrf.mxu0
      %v1824 = vadd.f32 %v1711, %v1823
      %1825 = vmatmul.f32.gmra.mxu0 %v955
      %v1826 = vpop.f32.mrf.mxu0
      %v1827 = vadd.f32 %v1714, %v1826
      %1828 = vmatmul.f32.gmra.mxu0 %v964
      %v1829 = vpop.f32.mrf.mxu0
      %v1830 = vadd.f32 %v1717, %v1829
      %1831 = vmatmul.f32.gmra.mxu0 %v973
      %v1832 = vpop.f32.mrf.mxu0
      %v1833 = vadd.f32 %v1720, %v1832
      %1834 = vmatmul.f32.gmra.mxu0 %v982
      %v1835 = vpop.f32.mrf.mxu0
      %v1836 = vadd.f32 %v1723, %v1835
      %1837 = vmatmul.f32.gmra.mxu0 %v991
      %v1838 = vpop.f32.mrf.mxu0
      %v1839 = vadd.f32 %v1726, %v1838
      %1840 = vmatmul.f32.gmra.mxu0 %v1000
      %v1841 = vpop.f32.mrf.mxu0
      %v1842 = vadd.f32 %v1729, %v1841
      %1843 = vmatmul.f32.gmra.mxu0 %v1009
      %v1844 = vpop.f32.mrf.mxu0
      %v1845 = vadd.f32 %v1732, %v1844
      %1846 = vmatmul.f32.gmra.mxu0 %v1018
      %v1847 = vpop.f32.mrf.mxu0
      %v1848 = vadd.f32 %v1735, %v1847
      %1849 = vmatmul.f32.gmra.mxu0 %v1027
      %v1850 = vpop.f32.mrf.mxu0
      %v1851 = vadd.f32 %v1738, %v1850
      %1852 = vmatmul.f32.gmra.mxu0 %v1036
      %v1853 = vpop.f32.mrf.mxu0
      %v1854 = vadd.f32 %v1741, %v1853
      %1855 = vmatmul.f32.gmra.mxu0 %v1045
      %v1856 = vpop.f32.mrf.mxu0
      %v1857 = vadd.f32 %v1744, %v1856
      %1858 = vmatmul.f32.gmra.mxu0 %v1054
      %v1859 = vpop.f32.mrf.mxu0
      %v1860 = vadd.f32 %v1747, %v1859
      %1861 = vmatmul.f32.gmra.mxu0 %v1063
      %v1862 = vpop.f32.mrf.mxu0
      %v1863 = vadd.f32 %v1750, %v1862
      %1864 = vmatmul.f32.gmra.mxu0 %v1072
      %v1865 = vpop.f32.mrf.mxu0
      %v1866 = vadd.f32 %v1753, %v1865
      %1867 = vmatmul.f32.gmra.mxu0 %v1081
      %v1868 = vpop.f32.mrf.mxu0
      %v1869 = vadd.f32 %v1756, %v1868
      %1870 = vmatmul.f32.gmra.mxu0 %v1090
      %v1871 = vpop.f32.mrf.mxu0
      %v1872 = vadd.f32 %v1759, %v1871
      %1873 = vmatmul.f32.gmra.mxu0 %v1099
      %v1874 = vpop.f32.mrf.mxu0
      %v1875 = vadd.f32 %v1762, %v1874
      %1876 = vmatmul.f32.gmra.mxu0 %v1108
      %v1877 = vpop.f32.mrf.mxu0
      %v1878 = vadd.f32 %v1765, %v1877
      %1879 = vmatmul.f32.gmra.mxu0 %v1117
      %v1880 = vpop.f32.mrf.mxu0
      %v1881 = vadd.f32 %v1768, %v1880
      %1882 = vmatmul.f32.gmra.mxu0 %v1126
      %v1883 = vpop.f32.mrf.mxu0
      %v1884 = vadd.f32 %v1771, %v1883
      %1885 = vmatmul.f32.gmra.mxu0 %v1135
      %v1886 = vpop.f32.mrf.mxu0
      %v1887 = vadd.f32 %v1774, %v1886
      %1888 = vmatmul.f32.gmra.mxu0 %v1144
      %v1889 = vpop.f32.mrf.mxu0
      %v1890 = vadd.f32 %v1777, %v1889
      %1891 = vmatmul.f32.gmra.mxu0 %v1153
      %v1892 = vpop.f32.mrf.mxu0
      %v1893 = vadd.f32 %v1780, %v1892
      %1894 = vmatmul.f32.gmra.mxu0 %v1162
      %v1895 = vpop.f32.mrf.mxu0
      %v1896 = vadd.f32 %v1783, %v1895
      %1897 = vmatmul.f32.gmra.mxu0 %v1171
      %v1898 = vpop.f32.mrf.mxu0
      %v1899 = vadd.f32 %v1786, %v1898
      %1900 = vmatmul.f32.gmra.mxu0 %v1180
      %v1901 = vpop.f32.mrf.mxu0
      %v1902 = vadd.f32 %v1789, %v1901
      %1903 = vmatmul.f32.gmra.mxu0 %v1189
      %v1904 = vpop.f32.mrf.mxu0
      %v1905 = vadd.f32 %v1792, %v1904
      %1906 = vdwg.mxu0
      %1907 = vmatpush.msra.mxu0 %v1289
      %1908 = vmatpush.msra.mxu0 %v1288
      %1909 = vmatpush.msra.mxu0 %v1287
      %1910 = vmatpush.msra.mxu0 %v1286
      %1911 = vmatpush.msra.mxu0 %v1285
      %1912 = vmatpush.msra.mxu0 %v1284
      %1913 = vmatpush.msra.mxu0 %v1283
      %1914 = vmatpush.msra.mxu0 %v1282
      %1915 = vmatpush.msra.mxu0 %v1281
      %1916 = vmatpush.msra.mxu0 %v1280
      %1917 = vmatpush.msra.mxu0 %v1279
      %1918 = vmatpush.msra.mxu0 %v1278
      %1919 = vmatpush.msra.mxu0 %v1277
      %1920 = vmatpush.msra.mxu0 %v1276
      %1921 = vmatpush.msra.mxu0 %v1275
      %1922 = vmatpush.msra.mxu0 %v1274
      %1923 = vmatmul.f32.gmra.mxu0 %v911
      %v1924 = vpop.f32.mrf.mxu0
      %v1925 = vadd.f32 %v1812, %v1924
      %1926 = vmatmul.f32.gmra.mxu0 %v920
      %v1927 = vpop.f32.mrf.mxu0
      %v1928 = vadd.f32 %v1815, %v1927
      %1929 = vmatmul.f32.gmra.mxu0 %v929
      %v1930 = vpop.f32.mrf.mxu0
      %v1931 = vadd.f32 %v1818, %v1930
      %1932 = vmatmul.f32.gmra.mxu0 %v938
      %v1933 = vpop.f32.mrf.mxu0
      %v1934 = vadd.f32 %v1821, %v1933
      %1935 = vmatmul.f32.gmra.mxu0 %v947
      %v1936 = vpop.f32.mrf.mxu0
      %v1937 = vadd.f32 %v1824, %v1936
      %1938 = vmatmul.f32.gmra.mxu0 %v956
      %v1939 = vpop.f32.mrf.mxu0
      %v1940 = vadd.f32 %v1827, %v1939
      %1941 = vmatmul.f32.gmra.mxu0 %v965
      %v1942 = vpop.f32.mrf.mxu0
      %v1943 = vadd.f32 %v1830, %v1942
      %1944 = vmatmul.f32.gmra.mxu0 %v974
      %v1945 = vpop.f32.mrf.mxu0
      %v1946 = vadd.f32 %v1833, %v1945
      %1947 = vmatmul.f32.gmra.mxu0 %v983
      %v1948 = vpop.f32.mrf.mxu0
      %v1949 = vadd.f32 %v1836, %v1948
      %1950 = vmatmul.f32.gmra.mxu0 %v992
      %v1951 = vpop.f32.mrf.mxu0
      %v1952 = vadd.f32 %v1839, %v1951
      %1953 = vmatmul.f32.gmra.mxu0 %v1001
      %v1954 = vpop.f32.mrf.mxu0
      %v1955 = vadd.f32 %v1842, %v1954
      %1956 = vmatmul.f32.gmra.mxu0 %v1010
      %v1957 = vpop.f32.mrf.mxu0
      %v1958 = vadd.f32 %v1845, %v1957
      %1959 = vmatmul.f32.gmra.mxu0 %v1019
      %v1960 = vpop.f32.mrf.mxu0
      %v1961 = vadd.f32 %v1848, %v1960
      %1962 = vmatmul.f32.gmra.mxu0 %v1028
      %v1963 = vpop.f32.mrf.mxu0
      %v1964 = vadd.f32 %v1851, %v1963
      %1965 = vmatmul.f32.gmra.mxu0 %v1037
      %v1966 = vpop.f32.mrf.mxu0
      %v1967 = vadd.f32 %v1854, %v1966
      %1968 = vmatmul.f32.gmra.mxu0 %v1046
      %v1969 = vpop.f32.mrf.mxu0
      %v1970 = vadd.f32 %v1857, %v1969
      %1971 = vmatmul.f32.gmra.mxu0 %v1055
      %v1972 = vpop.f32.mrf.mxu0
      %v1973 = vadd.f32 %v1860, %v1972
      %1974 = vmatmul.f32.gmra.mxu0 %v1064
      %v1975 = vpop.f32.mrf.mxu0
      %v1976 = vadd.f32 %v1863, %v1975
      %1977 = vmatmul.f32.gmra.mxu0 %v1073
      %v1978 = vpop.f32.mrf.mxu0
      %v1979 = vadd.f32 %v1866, %v1978
      %1980 = vmatmul.f32.gmra.mxu0 %v1082
      %v1981 = vpop.f32.mrf.mxu0
      %v1982 = vadd.f32 %v1869, %v1981
      %1983 = vmatmul.f32.gmra.mxu0 %v1091
      %v1984 = vpop.f32.mrf.mxu0
      %v1985 = vadd.f32 %v1872, %v1984
      %1986 = vmatmul.f32.gmra.mxu0 %v1100
      %v1987 = vpop.f32.mrf.mxu0
      %v1988 = vadd.f32 %v1875, %v1987
      %1989 = vmatmul.f32.gmra.mxu0 %v1109
      %v1990 = vpop.f32.mrf.mxu0
      %v1991 = vadd.f32 %v1878, %v1990
      %1992 = vmatmul.f32.gmra.mxu0 %v1118
      %v1993 = vpop.f32.mrf.mxu0
      %v1994 = vadd.f32 %v1881, %v1993
      %1995 = vmatmul.f32.gmra.mxu0 %v1127
      %v1996 = vpop.f32.mrf.mxu0
      %v1997 = vadd.f32 %v1884, %v1996
      %1998 = vmatmul.f32.gmra.mxu0 %v1136
      %v1999 = vpop.f32.mrf.mxu0
      %v2000 = vadd.f32 %v1887, %v1999
      %2001 = vmatmul.f32.gmra.mxu0 %v1145
      %v2002 = vpop.f32.mrf.mxu0
      %v2003 = vadd.f32 %v1890, %v2002
      %2004 = vmatmul.f32.gmra.mxu0 %v1154
      %v2005 = vpop.f32.mrf.mxu0
      %v2006 = vadd.f32 %v1893, %v2005
      %2007 = vmatmul.f32.gmra.mxu0 %v1163
      %v2008 = vpop.f32.mrf.mxu0
      %v2009 = vadd.f32 %v1896, %v2008
      %2010 = vmatmul.f32.gmra.mxu0 %v1172
      %v2011 = vpop.f32.mrf.mxu0
      %v2012 = vadd.f32 %v1899, %v2011
      %2013 = vmatmul.f32.gmra.mxu0 %v1181
      %v2014 = vpop.f32.mrf.mxu0
      %v2015 = vadd.f32 %v1902, %v2014
      %2016 = vmatmul.f32.gmra.mxu0 %v1190
      %v2017 = vpop.f32.mrf.mxu0
      %v2018 = vadd.f32 %v1905, %v2017
      %2019 = vdwg.mxu0
      %2020 = vmatpush.msra.mxu0 %v1305
      %2021 = vmatpush.msra.mxu0 %v1304
      %2022 = vmatpush.msra.mxu0 %v1303
      %2023 = vmatpush.msra.mxu0 %v1302
      %2024 = vmatpush.msra.mxu0 %v1301
      %2025 = vmatpush.msra.mxu0 %v1300
      %2026 = vmatpush.msra.mxu0 %v1299
      %2027 = vmatpush.msra.mxu0 %v1298
      %2028 = vmatpush.msra.mxu0 %v1297
      %2029 = vmatpush.msra.mxu0 %v1296
      %2030 = vmatpush.msra.mxu0 %v1295
      %2031 = vmatpush.msra.mxu0 %v1294
      %2032 = vmatpush.msra.mxu0 %v1293
      %2033 = vmatpush.msra.mxu0 %v1292
      %2034 = vmatpush.msra.mxu0 %v1291
      %2035 = vmatpush.msra.mxu0 %v1290
      %2036 = vmatmul.f32.gmra.mxu0 %v912
      %v2037 = vpop.f32.mrf.mxu0
      %v2038 = vadd.f32 %v1925, %v2037
      %2039 = vmatmul.f32.gmra.mxu0 %v921
      %v2040 = vpop.f32.mrf.mxu0
      %v2041 = vadd.f32 %v1928, %v2040
      %2042 = vmatmul.f32.gmra.mxu0 %v930
      %v2043 = vpop.f32.mrf.mxu0
      %v2044 = vadd.f32 %v1931, %v2043
      %2045 = vmatmul.f32.gmra.mxu0 %v939
      %v2046 = vpop.f32.mrf.mxu0
      %v2047 = vadd.f32 %v1934, %v2046
      %2048 = vmatmul.f32.gmra.mxu0 %v948
      %v2049 = vpop.f32.mrf.mxu0
      %v2050 = vadd.f32 %v1937, %v2049
      %2051 = vmatmul.f32.gmra.mxu0 %v957
      %v2052 = vpop.f32.mrf.mxu0
      %v2053 = vadd.f32 %v1940, %v2052
      %2054 = vmatmul.f32.gmra.mxu0 %v966
      %v2055 = vpop.f32.mrf.mxu0
      %v2056 = vadd.f32 %v1943, %v2055
      %2057 = vmatmul.f32.gmra.mxu0 %v975
      %v2058 = vpop.f32.mrf.mxu0
      %v2059 = vadd.f32 %v1946, %v2058
      %2060 = vmatmul.f32.gmra.mxu0 %v984
      %v2061 = vpop.f32.mrf.mxu0
      %v2062 = vadd.f32 %v1949, %v2061
      %2063 = vmatmul.f32.gmra.mxu0 %v993
      %v2064 = vpop.f32.mrf.mxu0
      %v2065 = vadd.f32 %v1952, %v2064
      %2066 = vmatmul.f32.gmra.mxu0 %v1002
      %v2067 = vpop.f32.mrf.mxu0
      %v2068 = vadd.f32 %v1955, %v2067
      %2069 = vmatmul.f32.gmra.mxu0 %v1011
      %v2070 = vpop.f32.mrf.mxu0
      %v2071 = vadd.f32 %v1958, %v2070
      %2072 = vmatmul.f32.gmra.mxu0 %v1020
      %v2073 = vpop.f32.mrf.mxu0
      %v2074 = vadd.f32 %v1961, %v2073
      %2075 = vmatmul.f32.gmra.mxu0 %v1029
      %v2076 = vpop.f32.mrf.mxu0
      %v2077 = vadd.f32 %v1964, %v2076
      %2078 = vmatmul.f32.gmra.mxu0 %v1038
      %v2079 = vpop.f32.mrf.mxu0
      %v2080 = vadd.f32 %v1967, %v2079
      %2081 = vmatmul.f32.gmra.mxu0 %v1047
      %v2082 = vpop.f32.mrf.mxu0
      %v2083 = vadd.f32 %v1970, %v2082
      %2084 = vmatmul.f32.gmra.mxu0 %v1056
      %v2085 = vpop.f32.mrf.mxu0
      %v2086 = vadd.f32 %v1973, %v2085
      %2087 = vmatmul.f32.gmra.mxu0 %v1065
      %v2088 = vpop.f32.mrf.mxu0
      %v2089 = vadd.f32 %v1976, %v2088
      %2090 = vmatmul.f32.gmra.mxu0 %v1074
      %v2091 = vpop.f32.mrf.mxu0
      %v2092 = vadd.f32 %v1979, %v2091
      %2093 = vmatmul.f32.gmra.mxu0 %v1083
      %v2094 = vpop.f32.mrf.mxu0
      %v2095 = vadd.f32 %v1982, %v2094
      %2096 = vmatmul.f32.gmra.mxu0 %v1092
      %v2097 = vpop.f32.mrf.mxu0
      %v2098 = vadd.f32 %v1985, %v2097
      %2099 = vmatmul.f32.gmra.mxu0 %v1101
      %v2100 = vpop.f32.mrf.mxu0
      %v2101 = vadd.f32 %v1988, %v2100
      %2102 = vmatmul.f32.gmra.mxu0 %v1110
      %v2103 = vpop.f32.mrf.mxu0
      %v2104 = vadd.f32 %v1991, %v2103
      %2105 = vmatmul.f32.gmra.mxu0 %v1119
      %v2106 = vpop.f32.mrf.mxu0
      %v2107 = vadd.f32 %v1994, %v2106
      %2108 = vmatmul.f32.gmra.mxu0 %v1128
      %v2109 = vpop.f32.mrf.mxu0
      %v2110 = vadd.f32 %v1997, %v2109
      %2111 = vmatmul.f32.gmra.mxu0 %v1137
      %v2112 = vpop.f32.mrf.mxu0
      %v2113 = vadd.f32 %v2000, %v2112
      %2114 = vmatmul.f32.gmra.mxu0 %v1146
      %v2115 = vpop.f32.mrf.mxu0
      %v2116 = vadd.f32 %v2003, %v2115
      %2117 = vmatmul.f32.gmra.mxu0 %v1155
      %v2118 = vpop.f32.mrf.mxu0
      %v2119 = vadd.f32 %v2006, %v2118
      %2120 = vmatmul.f32.gmra.mxu0 %v1164
      %v2121 = vpop.f32.mrf.mxu0
      %v2122 = vadd.f32 %v2009, %v2121
      %2123 = vmatmul.f32.gmra.mxu0 %v1173
      %v2124 = vpop.f32.mrf.mxu0
      %v2125 = vadd.f32 %v2012, %v2124
      %2126 = vmatmul.f32.gmra.mxu0 %v1182
      %v2127 = vpop.f32.mrf.mxu0
      %v2128 = vadd.f32 %v2015, %v2127
      %2129 = vmatmul.f32.gmra.mxu0 %v1191
      %v2130 = vpop.f32.mrf.mxu0
      %v2131 = vadd.f32 %v2018, %v2130
      %2132 = vdwg.mxu0
      %2133 = vmatpush.msra.mxu0 %v1321
      %2134 = vmatpush.msra.mxu0 %v1320
      %2135 = vmatpush.msra.mxu0 %v1319
      %2136 = vmatpush.msra.mxu0 %v1318
      %2137 = vmatpush.msra.mxu0 %v1317
      %2138 = vmatpush.msra.mxu0 %v1316
      %2139 = vmatpush.msra.mxu0 %v1315
      %2140 = vmatpush.msra.mxu0 %v1314
      %2141 = vmatpush.msra.mxu0 %v1313
      %2142 = vmatpush.msra.mxu0 %v1312
      %2143 = vmatpush.msra.mxu0 %v1311
      %2144 = vmatpush.msra.mxu0 %v1310
      %2145 = vmatpush.msra.mxu0 %v1309
      %2146 = vmatpush.msra.mxu0 %v1308
      %2147 = vmatpush.msra.mxu0 %v1307
      %2148 = vmatpush.msra.mxu0 %v1306
      %2149 = vmatmul.f32.gmra.mxu0 %v913
      %v2150 = vpop.f32.mrf.mxu0
      %v2151 = vadd.f32 %v2038, %v2150
      %2152 = vmatmul.f32.gmra.mxu0 %v922
      %v2153 = vpop.f32.mrf.mxu0
      %v2154 = vadd.f32 %v2041, %v2153
      %2155 = vmatmul.f32.gmra.mxu0 %v931
      %v2156 = vpop.f32.mrf.mxu0
      %v2157 = vadd.f32 %v2044, %v2156
      %2158 = vmatmul.f32.gmra.mxu0 %v940
      %v2159 = vpop.f32.mrf.mxu0
      %v2160 = vadd.f32 %v2047, %v2159
      %2161 = vmatmul.f32.gmra.mxu0 %v949
      %v2162 = vpop.f32.mrf.mxu0
      %v2163 = vadd.f32 %v2050, %v2162
      %2164 = vmatmul.f32.gmra.mxu0 %v958
      %v2165 = vpop.f32.mrf.mxu0
      %v2166 = vadd.f32 %v2053, %v2165
      %2167 = vmatmul.f32.gmra.mxu0 %v967
      %v2168 = vpop.f32.mrf.mxu0
      %v2169 = vadd.f32 %v2056, %v2168
      %2170 = vmatmul.f32.gmra.mxu0 %v976
      %v2171 = vpop.f32.mrf.mxu0
      %v2172 = vadd.f32 %v2059, %v2171
      %2173 = vmatmul.f32.gmra.mxu0 %v985
      %v2174 = vpop.f32.mrf.mxu0
      %v2175 = vadd.f32 %v2062, %v2174
      %2176 = vmatmul.f32.gmra.mxu0 %v994
      %v2177 = vpop.f32.mrf.mxu0
      %v2178 = vadd.f32 %v2065, %v2177
      %2179 = vmatmul.f32.gmra.mxu0 %v1003
      %v2180 = vpop.f32.mrf.mxu0
      %v2181 = vadd.f32 %v2068, %v2180
      %2182 = vmatmul.f32.gmra.mxu0 %v1012
      %v2183 = vpop.f32.mrf.mxu0
      %v2184 = vadd.f32 %v2071, %v2183
      %2185 = vmatmul.f32.gmra.mxu0 %v1021
      %v2186 = vpop.f32.mrf.mxu0
      %v2187 = vadd.f32 %v2074, %v2186
      %2188 = vmatmul.f32.gmra.mxu0 %v1030
      %v2189 = vpop.f32.mrf.mxu0
      %v2190 = vadd.f32 %v2077, %v2189
      %2191 = vmatmul.f32.gmra.mxu0 %v1039
      %v2192 = vpop.f32.mrf.mxu0
      %v2193 = vadd.f32 %v2080, %v2192
      %2194 = vmatmul.f32.gmra.mxu0 %v1048
      %v2195 = vpop.f32.mrf.mxu0
      %v2196 = vadd.f32 %v2083, %v2195
      %2197 = vmatmul.f32.gmra.mxu0 %v1057
      %v2198 = vpop.f32.mrf.mxu0
      %v2199 = vadd.f32 %v2086, %v2198
      %2200 = vmatmul.f32.gmra.mxu0 %v1066
      %v2201 = vpop.f32.mrf.mxu0
      %v2202 = vadd.f32 %v2089, %v2201
      %2203 = vmatmul.f32.gmra.mxu0 %v1075
      %v2204 = vpop.f32.mrf.mxu0
      %v2205 = vadd.f32 %v2092, %v2204
      %2206 = vmatmul.f32.gmra.mxu0 %v1084
      %v2207 = vpop.f32.mrf.mxu0
      %v2208 = vadd.f32 %v2095, %v2207
      %2209 = vmatmul.f32.gmra.mxu0 %v1093
      %v2210 = vpop.f32.mrf.mxu0
      %v2211 = vadd.f32 %v2098, %v2210
      %2212 = vmatmul.f32.gmra.mxu0 %v1102
      %v2213 = vpop.f32.mrf.mxu0
      %v2214 = vadd.f32 %v2101, %v2213
      %2215 = vmatmul.f32.gmra.mxu0 %v1111
      %v2216 = vpop.f32.mrf.mxu0
      %v2217 = vadd.f32 %v2104, %v2216
      %2218 = vmatmul.f32.gmra.mxu0 %v1120
      %v2219 = vpop.f32.mrf.mxu0
      %v2220 = vadd.f32 %v2107, %v2219
      %2221 = vmatmul.f32.gmra.mxu0 %v1129
      %v2222 = vpop.f32.mrf.mxu0
      %v2223 = vadd.f32 %v2110, %v2222
      %2224 = vmatmul.f32.gmra.mxu0 %v1138
      %v2225 = vpop.f32.mrf.mxu0
      %v2226 = vadd.f32 %v2113, %v2225
      %2227 = vmatmul.f32.gmra.mxu0 %v1147
      %v2228 = vpop.f32.mrf.mxu0
      %v2229 = vadd.f32 %v2116, %v2228
      %2230 = vmatmul.f32.gmra.mxu0 %v1156
      %v2231 = vpop.f32.mrf.mxu0
      %v2232 = vadd.f32 %v2119, %v2231
      %2233 = vmatmul.f32.gmra.mxu0 %v1165
      %v2234 = vpop.f32.mrf.mxu0
      %v2235 = vadd.f32 %v2122, %v2234
      %2236 = vmatmul.f32.gmra.mxu0 %v1174
      %v2237 = vpop.f32.mrf.mxu0
      %v2238 = vadd.f32 %v2125, %v2237
      %2239 = vmatmul.f32.gmra.mxu0 %v1183
      %v2240 = vpop.f32.mrf.mxu0
      %v2241 = vadd.f32 %v2128, %v2240
      %2242 = vmatmul.f32.gmra.mxu0 %v1192
      %v2243 = vpop.f32.mrf.mxu0
      %v2244 = vadd.f32 %v2131, %v2243
      %2245 = vdwg.mxu0
      %2246 = vmatpush.msra.mxu0 %v1337
      %2247 = vmatpush.msra.mxu0 %v1336
      %2248 = vmatpush.msra.mxu0 %v1335
      %2249 = vmatpush.msra.mxu0 %v1334
      %2250 = vmatpush.msra.mxu0 %v1333
      %2251 = vmatpush.msra.mxu0 %v1332
      %2252 = vmatpush.msra.mxu0 %v1331
      %2253 = vmatpush.msra.mxu0 %v1330
      %2254 = vmatpush.msra.mxu0 %v1329
      %2255 = vmatpush.msra.mxu0 %v1328
      %2256 = vmatpush.msra.mxu0 %v1327
      %2257 = vmatpush.msra.mxu0 %v1326
      %2258 = vmatpush.msra.mxu0 %v1325
      %2259 = vmatpush.msra.mxu0 %v1324
      %2260 = vmatpush.msra.mxu0 %v1323
      %2261 = vmatpush.msra.mxu0 %v1322
      %2262 = vmatmul.f32.gmra.mxu0 %v914
      %v2263 = vpop.f32.mrf.mxu0
      %v2264 = vadd.f32 %v2151, %v2263
      %2265 = vmatmul.f32.gmra.mxu0 %v923
      %v2266 = vpop.f32.mrf.mxu0
      %v2267 = vadd.f32 %v2154, %v2266
      %2268 = vmatmul.f32.gmra.mxu0 %v932
      %v2269 = vpop.f32.mrf.mxu0
      %v2270 = vadd.f32 %v2157, %v2269
      %2271 = vmatmul.f32.gmra.mxu0 %v941
      %v2272 = vpop.f32.mrf.mxu0
      %v2273 = vadd.f32 %v2160, %v2272
      %2274 = vmatmul.f32.gmra.mxu0 %v950
      %v2275 = vpop.f32.mrf.mxu0
      %v2276 = vadd.f32 %v2163, %v2275
      %2277 = vmatmul.f32.gmra.mxu0 %v959
      %v2278 = vpop.f32.mrf.mxu0
      %v2279 = vadd.f32 %v2166, %v2278
      %2280 = vmatmul.f32.gmra.mxu0 %v968
      %v2281 = vpop.f32.mrf.mxu0
      %v2282 = vadd.f32 %v2169, %v2281
      %2283 = vmatmul.f32.gmra.mxu0 %v977
      %v2284 = vpop.f32.mrf.mxu0
      %v2285 = vadd.f32 %v2172, %v2284
      %2286 = vmatmul.f32.gmra.mxu0 %v986
      %v2287 = vpop.f32.mrf.mxu0
      %v2288 = vadd.f32 %v2175, %v2287
      %2289 = vmatmul.f32.gmra.mxu0 %v995
      %v2290 = vpop.f32.mrf.mxu0
      %v2291 = vadd.f32 %v2178, %v2290
      %2292 = vmatmul.f32.gmra.mxu0 %v1004
      %v2293 = vpop.f32.mrf.mxu0
      %v2294 = vadd.f32 %v2181, %v2293
      %2295 = vmatmul.f32.gmra.mxu0 %v1013
      %v2296 = vpop.f32.mrf.mxu0
      %v2297 = vadd.f32 %v2184, %v2296
      %2298 = vmatmul.f32.gmra.mxu0 %v1022
      %v2299 = vpop.f32.mrf.mxu0
      %v2300 = vadd.f32 %v2187, %v2299
      %2301 = vmatmul.f32.gmra.mxu0 %v1031
      %v2302 = vpop.f32.mrf.mxu0
      %v2303 = vadd.f32 %v2190, %v2302
      %2304 = vmatmul.f32.gmra.mxu0 %v1040
      %v2305 = vpop.f32.mrf.mxu0
      %v2306 = vadd.f32 %v2193, %v2305
      %2307 = vmatmul.f32.gmra.mxu0 %v1049
      %v2308 = vpop.f32.mrf.mxu0
      %v2309 = vadd.f32 %v2196, %v2308
      %2310 = vmatmul.f32.gmra.mxu0 %v1058
      %v2311 = vpop.f32.mrf.mxu0
      %v2312 = vadd.f32 %v2199, %v2311
      %2313 = vmatmul.f32.gmra.mxu0 %v1067
      %v2314 = vpop.f32.mrf.mxu0
      %v2315 = vadd.f32 %v2202, %v2314
      %2316 = vmatmul.f32.gmra.mxu0 %v1076
      %v2317 = vpop.f32.mrf.mxu0
      %v2318 = vadd.f32 %v2205, %v2317
      %2319 = vmatmul.f32.gmra.mxu0 %v1085
      %v2320 = vpop.f32.mrf.mxu0
      %v2321 = vadd.f32 %v2208, %v2320
      %2322 = vmatmul.f32.gmra.mxu0 %v1094
      %v2323 = vpop.f32.mrf.mxu0
      %v2324 = vadd.f32 %v2211, %v2323
      %2325 = vmatmul.f32.gmra.mxu0 %v1103
      %v2326 = vpop.f32.mrf.mxu0
      %v2327 = vadd.f32 %v2214, %v2326
      %2328 = vmatmul.f32.gmra.mxu0 %v1112
      %v2329 = vpop.f32.mrf.mxu0
      %v2330 = vadd.f32 %v2217, %v2329
      %2331 = vmatmul.f32.gmra.mxu0 %v1121
      %v2332 = vpop.f32.mrf.mxu0
      %v2333 = vadd.f32 %v2220, %v2332
      %2334 = vmatmul.f32.gmra.mxu0 %v1130
      %v2335 = vpop.f32.mrf.mxu0
      %v2336 = vadd.f32 %v2223, %v2335
      %2337 = vmatmul.f32.gmra.mxu0 %v1139
      %v2338 = vpop.f32.mrf.mxu0
      %v2339 = vadd.f32 %v2226, %v2338
      %2340 = vmatmul.f32.gmra.mxu0 %v1148
      %v2341 = vpop.f32.mrf.mxu0
      %v2342 = vadd.f32 %v2229, %v2341
      %2343 = vmatmul.f32.gmra.mxu0 %v1157
      %v2344 = vpop.f32.mrf.mxu0
      %v2345 = vadd.f32 %v2232, %v2344
      %2346 = vmatmul.f32.gmra.mxu0 %v1166
      %v2347 = vpop.f32.mrf.mxu0
      %v2348 = vadd.f32 %v2235, %v2347
      %2349 = vmatmul.f32.gmra.mxu0 %v1175
      %v2350 = vpop.f32.mrf.mxu0
      %v2351 = vadd.f32 %v2238, %v2350
      %2352 = vmatmul.f32.gmra.mxu0 %v1184
      %v2353 = vpop.f32.mrf.mxu0
      %v2354 = vadd.f32 %v2241, %v2353
      %2355 = vmatmul.f32.gmra.mxu0 %v1193
      %v2356 = vpop.f32.mrf.mxu0
      %v2357 = vadd.f32 %v2244, %v2356
      %2358 = vdwg.mxu0
      %2359 = vst.msk [vmem:[%s204] sm:$0xff] %vm296, %v2264
      %2360 = vst.msk [vmem:[%s204 + $0x8] sm:$0xff] %vm296, %v2267
      %2361 = vst.msk [vmem:[%s204 + $0x10] sm:$0xff] %vm296, %v2270
      %2362 = vst.msk [vmem:[%s204 + $0x18] sm:$0xff] %vm296, %v2273
      %2363 = vst.msk [vmem:[%s204 + $0x20] sm:$0xff] %vm296, %v2276
      %2364 = vst.msk [vmem:[%s204 + $0x28] sm:$0xff] %vm296, %v2279
      %2365 = vst.msk [vmem:[%s204 + $0x30] sm:$0xff] %vm296, %v2282
      %2366 = vst.msk [vmem:[%s204 + $0x38] sm:$0xff] %vm296, %v2285
      %2367 = vst.msk [vmem:[%s204 + $0x40] sm:$0xff] %vm296, %v2288
      %2368 = vst.msk [vmem:[%s204 + $0x48] sm:$0xff] %vm296, %v2291
      %2369 = vst.msk [vmem:[%s204 + $0x50] sm:$0xff] %vm296, %v2294
      %2370 = vst.msk [vmem:[%s204 + $0x58] sm:$0xff] %vm296, %v2297
      %2371 = vst.msk [vmem:[%s204 + $0x60] sm:$0xff] %vm296, %v2300
      %2372 = vst.msk [vmem:[%s204 + $0x68] sm:$0xff] %vm296, %v2303
      %2373 = vst.msk [vmem:[%s204 + $0x70] sm:$0xff] %vm296, %v2306
      %2374 = vst.msk [vmem:[%s204 + $0x78] sm:$0xff] %vm296, %v2309
      %2375 = vst.msk [vmem:[%s204 + $0x80] sm:$0xff] %vm296, %v2312
      %2376 = vst.msk [vmem:[%s204 + $0x88] sm:$0xff] %vm296, %v2315
      %2377 = vst.msk [vmem:[%s204 + $0x90] sm:$0xff] %vm296, %v2318
      %2378 = vst.msk [vmem:[%s204 + $0x98] sm:$0xff] %vm296, %v2321
      %2379 = vst.msk [vmem:[%s204 + $0xa0] sm:$0xff] %vm296, %v2324
      %2380 = vst.msk [vmem:[%s204 + $0xa8] sm:$0xff] %vm296, %v2327
      %2381 = vst.msk [vmem:[%s204 + $0xb0] sm:$0xff] %vm296, %v2330
      %2382 = vst.msk [vmem:[%s204 + $0xb8] sm:$0xff] %vm296, %v2333
      %2383 = vst.msk [vmem:[%s204 + $0xc0] sm:$0xff] %vm296, %v2336
      %2384 = vst.msk [vmem:[%s204 + $0xc8] sm:$0xff] %vm296, %v2339
      %2385 = vst.msk [vmem:[%s204 + $0xd0] sm:$0xff] %vm296, %v2342
      %2386 = vst.msk [vmem:[%s204 + $0xd8] sm:$0xff] %vm296, %v2345
      %2387 = vst.msk [vmem:[%s204 + $0xe0] sm:$0xff] %vm296, %v2348
      %2388 = vst.msk [vmem:[%s204 + $0xe8] sm:$0xff] %vm296, %v2351
      %2389 = vst.msk [vmem:[%s204 + $0xf0] sm:$0xff] %vm296, %v2354
      %2390 = vst.msk [vmem:[%s204 + $0xf8] sm:$0xff] %vm296, %v2357
      %v2391 = vadd.f32 %v2264, %v2267
      %v2392 = vadd.f32 %v2391, %v2270
      %v2393 = vadd.f32 %v2392, %v2273
      %v2394 = vadd.f32 %v2393, %v2276
      %v2395 = vadd.f32 %v2394, %v2279
      %v2396 = vadd.f32 %v2395, %v2282
      %v2397 = vadd.f32 %v2396, %v2285
      %v2398 = vadd.f32 %v2397, %v2288
      %v2399 = vadd.f32 %v2398, %v2291
      %v2400 = vadd.f32 %v2399, %v2294
      %v2401 = vadd.f32 %v2400, %v2297
      %v2402 = vadd.f32 %v2401, %v2300
      %v2403 = vadd.f32 %v2402, %v2303
      %v2404 = vadd.f32 %v2403, %v2306
      %v2405 = vadd.f32 %v2404, %v2309
      %v2406 = vadd.f32 %v2405, %v2312
      %v2407 = vadd.f32 %v2406, %v2315
      %v2408 = vadd.f32 %v2407, %v2318
      %v2409 = vadd.f32 %v2408, %v2321
      %v2410 = vadd.f32 %v2409, %v2324
      %v2411 = vadd.f32 %v2410, %v2327
      %v2412 = vadd.f32 %v2411, %v2330
      %v2413 = vadd.f32 %v2412, %v2333
      %v2414 = vadd.f32 %v2413, %v2336
      %v2415 = vadd.f32 %v2414, %v2339
      %v2416 = vadd.f32 %v2415, %v2342
      %v2417 = vadd.f32 %v2416, %v2345
      %v2418 = vadd.f32 %v2417, %v2348
      %v2419 = vadd.f32 %v2418, %v2351
      %v2420 = vadd.f32 %v2419, %v2354
      %v2421 = vadd.f32 %v2420, %v2357
      %v2422 = vrot.slane %v2421, 4
      %v2423 = vadd.f32 %v2421, %v2422
      %v2424 = vrot.slane %v2423, 2
      %v2425 = vadd.f32 %v2423, %v2424
      %v2426 = vrot.slane %v2425, 1
      %v2427 = vadd.f32 %v2425, %v2426
      %v2428 = vmul.f32 %v2264, %v2264
      %v2429 = vmul.f32 %v2267, %v2267
      %v2430 = vmul.f32 %v2270, %v2270
      %v2431 = vmul.f32 %v2273, %v2273
      %v2432 = vmul.f32 %v2276, %v2276
      %v2433 = vmul.f32 %v2279, %v2279
      %v2434 = vmul.f32 %v2282, %v2282
      %v2435 = vmul.f32 %v2285, %v2285
      %v2436 = vmul.f32 %v2288, %v2288
      %v2437 = vmul.f32 %v2291, %v2291
      %v2438 = vmul.f32 %v2294, %v2294
      %v2439 = vmul.f32 %v2297, %v2297
      %v2440 = vmul.f32 %v2300, %v2300
      %v2441 = vmul.f32 %v2303, %v2303
      %v2442 = vmul.f32 %v2306, %v2306
      %v2443 = vmul.f32 %v2309, %v2309
      %v2444 = vmul.f32 %v2312, %v2312
      %v2445 = vmul.f32 %v2315, %v2315
      %v2446 = vmul.f32 %v2318, %v2318
      %v2447 = vmul.f32 %v2321, %v2321
      %v2448 = vmul.f32 %v2324, %v2324
      %v2449 = vmul.f32 %v2327, %v2327
      %v2450 = vmul.f32 %v2330, %v2330
      %v2451 = vmul.f32 %v2333, %v2333
      %v2452 = vmul.f32 %v2336, %v2336
      %v2453 = vmul.f32 %v2339, %v2339
      %v2454 = vmul.f32 %v2342, %v2342
      %v2455 = vmul.f32 %v2345, %v2345
      %v2456 = vmul.f32 %v2348, %v2348
      %v2457 = vmul.f32 %v2351, %v2351
      %v2458 = vmul.f32 %v2354, %v2354
      %v2459 = vmul.f32 %v2357, %v2357
      %v2460 = vadd.f32 %v2428, %v2429
      %v2461 = vadd.f32 %v2460, %v2430
      %v2462 = vadd.f32 %v2461, %v2431
      %v2463 = vadd.f32 %v2462, %v2432
      %v2464 = vadd.f32 %v2463, %v2433
      %v2465 = vadd.f32 %v2464, %v2434
      %v2466 = vadd.f32 %v2465, %v2435
      %v2467 = vadd.f32 %v2466, %v2436
      %v2468 = vadd.f32 %v2467, %v2437
      %v2469 = vadd.f32 %v2468, %v2438
      %v2470 = vadd.f32 %v2469, %v2439
      %v2471 = vadd.f32 %v2470, %v2440
      %v2472 = vadd.f32 %v2471, %v2441
      %v2473 = vadd.f32 %v2472, %v2442
      %v2474 = vadd.f32 %v2473, %v2443
      %v2475 = vadd.f32 %v2474, %v2444
      %v2476 = vadd.f32 %v2475, %v2445
      %v2477 = vadd.f32 %v2476, %v2446
      %v2478 = vadd.f32 %v2477, %v2447
      %v2479 = vadd.f32 %v2478, %v2448
      %v2480 = vadd.f32 %v2479, %v2449
      %v2481 = vadd.f32 %v2480, %v2450
      %v2482 = vadd.f32 %v2481, %v2451
      %v2483 = vadd.f32 %v2482, %v2452
      %v2484 = vadd.f32 %v2483, %v2453
      %v2485 = vadd.f32 %v2484, %v2454
      %v2486 = vadd.f32 %v2485, %v2455
      %v2487 = vadd.f32 %v2486, %v2456
      %v2488 = vadd.f32 %v2487, %v2457
      %v2489 = vadd.f32 %v2488, %v2458
      %v2490 = vadd.f32 %v2489, %v2459
      %v2491 = vrot.slane %v2490, 4
      %v2492 = vadd.f32 %v2490, %v2491
      %v2493 = vrot.slane %v2492, 2
      %v2494 = vadd.f32 %v2492, %v2493
      %v2495 = vrot.slane %v2494, 1
      %v2496 = vadd.f32 %v2494, %v2495
      %vm2497 = vcmask 1040384
      %v2498 = vsel %vm2497, %v2427, %v2496
      %2499 = vst [vmem:[%s208] sm:$0x3] %v2498
      %p2500 = scmp.lt.s32.totalorder %s16, 1
      %s2501 = scalar_select %p2500, %s16, 1
      %s2502 = smul.addr %s2501, 32
      %s2503 = smul.addr %s2502, 8
      %s2504 = scalar_lea.vmem %s3, %s2503
      %p2505 = scmp.lt.s32.totalorder %s16, 1
      %s2506 = scalar_select %p2505, %s16, 1
      %s2507 = smul.addr %s2506, 2
      %s2508 = scalar_lea.vmem %s4, %s2507
      // Predicated region
      $region33: #{residual_block.3} parent=31 // pred_check
        %p2509 = pneg %p102
      $region34: #{residual_block.3} parent=31 // pred_check_branch
        %2511 = sbr.rel (%p2509) target = $region36
      $region35: #{residual_block.3} parent=31 // pred_region
        _
      $region36: #{residual_block.3} parent=31 // pred_fallthru
        _
      // Predicated region
      $region37: #{residual_block.3} parent=31 // pred_check
        %p2512 = pneg %p128
      $region38: #{residual_block.3} parent=31 // pred_check_branch
        %2514 = sbr.rel (%p2512) target = $region40
      $region39: #{residual_block.3} parent=31 // pred_region
        _
      $region40: #{residual_block.3} parent=31 // pred_fallthru
        _
    $region32: #{residual_block.3} parent=5 // pred_fallthru
      _
    %p2515 = scmp.le.s32.totalorder 2, %s11
    // Predicated region
    $region41: #{residual_block.3} parent=5 // pred_check
      %p2516 = pneg %p2515
    $region42: #{residual_block.3} parent=5 // pred_check_branch
      %2518 = sbr.rel (%p2516) target = $region44
    $region43: #{residual_block.3} parent=5 // pred_region
      %s2519 = ssub.s32 %s11, 2
      // Predicated region
      $region45: #{residual_block.3} parent=43 // pred_check
        %p2520 = pneg %p108
      $region46: #{residual_block.3} parent=43 // pred_check_branch
        %2522 = sbr.rel (%p2520) target = $region48
      $region47: #{residual_block.3} parent=43 // pred_region
        %p2523 = scmp.lt.s32.totalorder %s17, 1
        %s2524 = scalar_select %p2523, %s17, 1
        %s2525 = smul.addr %s2524, 32
        %s2526 = smul.addr %s2525, 8
        %s2527 = scalar_lea.vmem %s3, %s2526
      $region48: #{residual_block.3} parent=43 // pred_fallthru
        _
      // Predicated region
      $region49: #{residual_block.3} parent=43 // pred_check
        %p2528 = pneg %p134
      $region50: #{residual_block.3} parent=43 // pred_check_branch
        %2530 = sbr.rel (%p2528) target = $region52
      $region51: #{residual_block.3} parent=43 // pred_region
        %p2531 = scmp.lt.s32.totalorder %s17, 1
        %s2532 = scalar_select %p2531, %s17, 1
        %s2533 = smul.addr %s2532, 2
        %s2534 = scalar_lea.vmem %s4, %s2533
      $region52: #{residual_block.3} parent=43 // pred_fallthru
        _
    $region44: #{residual_block.3} parent=5 // pred_fallthru
      _
  $region6: #{residual_block.3} parent=0 // loop_footer
    %s15 = sadd.s32 1, %s11
  $region7: #{residual_block.3} parent=0 // loop_footer_branch
    %10 = sbr.rel target = $region3
  $region8: #{residual_block.3} parent=0 // loop_exit
    _

</llo_original>
